<compile_context>
chip_gen: v7x
topology: tpu7x:2x2x1
jax: 0.10.0
libtpu: 0.0.40
codegen_flags: <defaults>
</compile_context>

<pallas_src>
import math
import functools

import jax
import jax.numpy as jnp
from jax.experimental import pallas as pl
from jax.experimental.pallas import tpu as pltpu

# ----------------------------- small config -----------------------------
VOCAB = 64
V_PAD = ((VOCAB + 127) // 128) * 128     # lane-dense (128) padded vocab for the LM head
D_MODEL = 32
FFN = 64
HEADS = 4
HEAD_DIM = D_MODEL // HEADS
ENC_LAYERS = 2
DEC_LAYERS = 2
PAD_ID = 1
POS_OFFSET = 2                           # M2M100 sinusoidal position offset
NEG_INF = -1e9

# Fixed ordering of stacked weight tensors passed to the fused kernel.
PARAM_ORDER = [
    # encoder (stacked over ENC_LAYERS)
    "e_sa_ln_g", "e_sa_ln_b", "e_qkv_w", "e_qkv_b", "e_wo", "e_bo",
    "e_fc_ln_g", "e_fc_ln_b", "e_fc1_w", "e_fc1_b", "e_fc2_w", "e_fc2_b",
    "enc_ln_g", "enc_ln_b",
    # decoder (stacked over DEC_LAYERS)
    "d_sa_ln_g", "d_sa_ln_b", "d_sa_qkv_w", "d_sa_qkv_b", "d_sa_wo", "d_sa_bo",
    "d_ca_ln_g", "d_ca_ln_b", "d_ca_q_w", "d_ca_q_b", "d_ca_kv_w", "d_ca_kv_b",
    "d_ca_wo", "d_ca_bo",
    "d_fc_ln_g", "d_fc_ln_b", "d_fc1_w", "d_fc1_b", "d_fc2_w", "d_fc2_b",
    "dec_ln_g", "dec_ln_b",
]

# Weights that feed the MXU -> pre-cast to bf16 in the wrapper.
MATMUL_WEIGHTS = {
    "e_qkv_w", "e_wo", "e_fc1_w", "e_fc2_w",
    "d_sa_qkv_w", "d_sa_wo", "d_ca_q_w", "d_ca_kv_w", "d_ca_wo",
    "d_fc1_w", "d_fc2_w",
}

# ----------------------------- fused Pallas kernel -----------------------------

def _fused_forward_kernel(*args, S, T):
    """One grid step == one batch element. All activations stay in vregs/VMEM."""
    (src_ids_ref, tgt_ids_ref, pos_src_ref, pos_tgt_ref, mask_ref,
     emb_ref, *rest) = args
    out_ref = rest[-1]
    w = dict(zip(PARAM_ORDER, rest[:-1]))

    D = D_MODEL
    emb_scale = math.sqrt(D)     # folded into the one-hot values (table is tied -> can't fold there)

    # ---- fused helpers ----
    def ln(x, g, b):                                  # f32 stats (v5e has no bf16 VPU)
        mu = jnp.mean(x, axis=-1, keepdims=True)
        xc = x - mu
        var = jnp.mean(xc * xc, axis=-1, keepdims=True)
        return xc * jax.lax.rsqrt(var + 1e-5) * g + b

    def dense(x, wm, bm=None, relu=False):            # bf16 MXU operands, f32 accumulate
        y = jnp.dot(x.astype(jnp.bfloat16), wm, preferred_element_type=jnp.float32)
        if bm is not None:
            y = y + bm
        if relu:
            y = jnp.maximum(y, 0.0)
        return y

    def embed(ids_ref, pos_ref, n_tok):
        # one-hot matmul embedding lookup (gather-free, MXU friendly at toy vocab);
        # sqrt(d_model) embedding scale folded into the one-hot values.
        ids = ids_ref[0]                                              # (n_tok, 1) int32
        iota = jax.lax.broadcasted_iota(jnp.int32, (n_tok, V_PAD), 1)
        one_hot = jnp.where(iota == ids, emb_scale, 0.0).astype(jnp.bfloat16)
        tok = jnp.dot(one_hot, emb_ref[...], preferred_element_type=jnp.float32)
        return tok + pos_ref[...]                                     # (n_tok, D) f32

    def split_heads(x):
        # (Sx, D) -> (H, Sx, HEAD_DIM): heads become the leading batch dim of the einsum.
        return jnp.stack(
            [x[:, h * HEAD_DIM:(h + 1) * HEAD_DIM] for h in range(HEADS)], axis=0)

    def merge_heads(x):
        # (H, Sx, HEAD_DIM) -> (Sx, D)
        return jnp.concatenate([x[h] for h in range(HEADS)], axis=-1)

    def attention(q, k, v, mask_add):
        # q: (Sq, D); k, v: (Sk, D). attn_scale is pre-folded into the Q weights.
        qh = split_heads(q).astype(jnp.bfloat16)                      # (H, Sq, Hd)
        kh = split_heads(k).astype(jnp.bfloat16)                      # (H, Sk, Hd)
        vh = split_heads(v).astype(jnp.bfloat16)                      # (H, Sk, Hd)
        s = jnp.einsum("hqd,hkd->hqk", qh, kh,
                       preferred_element_type=jnp.float32) + mask_add  # f32 scores
        s = s - jnp.max(s, axis=-1, keepdims=True)
        p = jnp.exp(s)
        p = p * pl.reciprocal(jnp.sum(p, axis=-1, keepdims=True), approx=True)
        ctx = jnp.einsum("hqk,hkd->hqd", p.astype(jnp.bfloat16), vh,
                         preferred_element_type=jnp.float32)           # (H, Sq, Hd) f32
        return merge_heads(ctx)                                        # (Sq, D) f32

    # ---- masks computed in-kernel (never materialized in HBM), kept in f32 ----
    pad_add = (1.0 - mask_ref[...]) * NEG_INF                          # (1, 1, S)
    row = jax.lax.broadcasted_iota(jnp.int32, (T, T), 0)
    col = jax.lax.broadcasted_iota(jnp.int32, (T, T), 1)
    causal_add = jnp.where(row >= col, 0.0, NEG_INF)                   # (T, T)
    # TODO(synk): HF only applies the causal mask when decoder_attention_mask is None
    #             (matches this); cumulative-mask position ids are not reproduced.

    # ---------------- encoder ----------------
    h = embed(src_ids_ref, pos_src_ref, S)                             # (S, D) f32
    for l in range(ENC_LAYERS):
        x = ln(h, w["e_sa_ln_g"][l], w["e_sa_ln_b"][l])
        qkv = dense(x, w["e_qkv_w"][l], w["e_qkv_b"][l])               # (S, 3D)
        ctx = attention(qkv[:, 0:D], qkv[:, D:2 * D], qkv[:, 2 * D:3 * D], pad_add)
        h = h + dense(ctx, w["e_wo"][l], w["e_bo"][l])

        x = ln(h, w["e_fc_ln_g"][l], w["e_fc_ln_b"][l])
        y = dense(x, w["e_fc1_w"][l], w["e_fc1_b"][l], relu=True)
        h = h + dense(y, w["e_fc2_w"][l], w["e_fc2_b"][l])
    enc_out = ln(h, w["enc_ln_g"][...], w["enc_ln_b"][...])            # (S, D)

    # ---------------- decoder ----------------
    g = embed(tgt_ids_ref, pos_tgt_ref, T)                             # (T, D) f32
    for l in range(DEC_LAYERS):
        # masked self-attention
        x = ln(g, w["d_sa_ln_g"][l], w["d_sa_ln_b"][l])
        qkv = dense(x, w["d_sa_qkv_w"][l], w["d_sa_qkv_b"][l])         # (T, 3D)
        ctx = attention(qkv[:, 0:D], qkv[:, D:2 * D], qkv[:, 2 * D:3 * D], causal_add)
        g = g + dense(ctx, w["d_sa_wo"][l], w["d_sa_bo"][l])

        # cross-attention over encoder output
        x = ln(g, w["d_ca_ln_g"][l], w["d_ca_ln_b"][l])
        q = dense(x, w["d_ca_q_w"][l], w["d_ca_q_b"][l])               # (T, D)
        kv = dense(enc_out, w["d_ca_kv_w"][l], w["d_ca_kv_b"][l])      # (S, 2D)
        ctx = attention(q, kv[:, 0:D], kv[:, D:2 * D], pad_add)
        g = g + dense(ctx, w["d_ca_wo"][l], w["d_ca_bo"][l])

        # feed-forward
        x = ln(g, w["d_fc_ln_g"][l], w["d_fc_ln_b"][l])
        y = dense(x, w["d_fc1_w"][l], w["d_fc1_b"][l], relu=True)
        g = g + dense(y, w["d_fc2_w"][l], w["d_fc2_b"][l])
    g = ln(g, w["dec_ln_g"][...], w["dec_ln_b"][...])

    # ---- tied LM head (no bias, no emb.T input): contract last dims of g and emb ----
    logits = jnp.einsum("td,vd->tv", g.astype(jnp.bfloat16), emb_ref[...],
                        preferred_element_type=jnp.float32)            # (T, V_PAD) lane-dense
    out_ref[0] = logits

# ----------------------------- model glue -----------------------------

def sinusoidal_positions(n_pos, dim, offset=POS_OFFSET):
    half = dim // 2
    freq = jnp.exp(jnp.arange(half, dtype=jnp.float32)
                   * -(math.log(10000.0) / (half - 1)))
    pos = jnp.arange(offset, offset + n_pos, dtype=jnp.float32)[:, None]
    ang = pos * freq[None, :]
    return jnp.concatenate([jnp.sin(ang), jnp.cos(ang)], axis=-1)      # (n_pos, dim)


def _prepare_weights(params):
    """Fold attn scale into Q weights/biases, cast MXU weights to bf16, pad tied emb."""
    attn_scale = HEAD_DIM ** -0.5
    wp = dict(params)
    D = D_MODEL
    for name in ("e_qkv_w", "d_sa_qkv_w"):
        wp[name] = wp[name].at[:, :, :D].multiply(attn_scale)
    for name in ("e_qkv_b", "d_sa_qkv_b"):
        wp[name] = wp[name].at[:, :, :D].multiply(attn_scale)
    wp["d_ca_q_w"] = wp["d_ca_q_w"] * attn_scale
    wp["d_ca_q_b"] = wp["d_ca_q_b"] * attn_scale
    for name in MATMUL_WEIGHTS:
        wp[name] = wp[name].astype(jnp.bfloat16)
    emb = jnp.zeros((V_PAD, D), jnp.float32).at[:VOCAB].set(params["emb"])
    return wp, emb.astype(jnp.bfloat16)


def m2m100_forward(params, input_ids, attention_mask, decoder_input_ids):
    B, S = input_ids.shape
    T = decoder_input_ids.shape[1]
    D = D_MODEL

    pos_src = sinusoidal_positions(S, D)                       # (S, D) f32, shared
    pos_tgt = sinusoidal_positions(T, D)                       # (T, D) f32, shared

    src_ids = input_ids.astype(jnp.int32).reshape(B, S, 1)
    tgt_ids = decoder_input_ids.astype(jnp.int32).reshape(B, T, 1)
    mask_f = attention_mask.astype(jnp.float32).reshape(B, 1, S)

    wp, emb = _prepare_weights(params)

    inputs = [src_ids, tgt_ids, pos_src, pos_tgt, mask_f, emb]
    inputs += [wp[k] for k in PARAM_ORDER]
    batched_idx = {0, 1, 4}                                    # per-batch-element inputs

    in_specs = []
    for i, x in enumerate(inputs):
        if i in batched_idx:
            in_specs.append(pl.BlockSpec(
                (1,) + x.shape[1:],
                lambda b, n=x.ndim: (b,) + (0,) * (n - 1)))
        else:                                                  # weights/constants: one block, not re-fetched
            in_specs.append(pl.BlockSpec(
                x.shape, lambda b, n=x.ndim: (0,) * n))

    out = pl.pallas_call(
        functools.partial(_fused_forward_kernel, S=S, T=T),
        out_shape=jax.ShapeDtypeStruct((B, T, V_PAD), jnp.float32),
        grid=(B,),
        in_specs=in_specs,
        out_specs=pl.BlockSpec((1, T, V_PAD), lambda b: (b, 0, 0)),
        compiler_params=pltpu.CompilerParams(
            dimension_semantics=("parallel",),                 # v7x: both TCs get batch work
            vmem_limit_bytes=32 * 1024 * 1024,
        ),
    )(*inputs)
    # TODO(synk): at real m2m100_418M size this single resident call must become a
    #             layer-streaming grid (weights are already stacked per layer for that).
    return out[:, :, :VOCAB]                                   # drop lane-padding columns

# ----------------------------- parameter init -----------------------------

def init_params(key):
    ks = jax.random.split(key, 16)
    it = iter(ks)

    def w(shape):
        return 0.02 * jax.random.normal(next(it), shape, jnp.float32)

    D, F = D_MODEL, FFN
    LE, LD = ENC_LAYERS, DEC_LAYERS
    ones = lambda s: jnp.ones(s, jnp.float32)
    zeros = lambda s: jnp.zeros(s, jnp.float32)

    p = {}
    p["emb"] = w((VOCAB, D)).at[PAD_ID].set(0.0)               # padding_idx row zeroed

    # encoder (stacked over layers)
    p["e_sa_ln_g"] = ones((LE, 1, D));  p["e_sa_ln_b"] = zeros((LE, 1, D))
    p["e_qkv_w"]   = w((LE, D, 3 * D)); p["e_qkv_b"]   = zeros((LE, 1, 3 * D))
    p["e_wo"]      = w((LE, D, D));     p["e_bo"]      = zeros((LE, 1, D))
    p["e_fc_ln_g"] = ones((LE, 1, D));  p["e_fc_ln_b"] = zeros((LE, 1, D))
    p["e_fc1_w"]   = w((LE, D, F));     p["e_fc1_b"]   = zeros((LE, 1, F))
    p["e_fc2_w"]   = w((LE, F, D));     p["e_fc2_b"]   = zeros((LE, 1, D))
    p["enc_ln_g"]  = ones((1, D));      p["enc_ln_b"]  = zeros((1, D))

    # decoder (stacked over layers)
    p["d_sa_ln_g"]  = ones((LD, 1, D));  p["d_sa_ln_b"]  = zeros((LD, 1, D))
    p["d_sa_qkv_w"] = w((LD, D, 3 * D)); p["d_sa_qkv_b"] = zeros((LD, 1, 3 * D))
    p["d_sa_wo"]    = w((LD, D, D));     p["d_sa_bo"]    = zeros((LD, 1, D))
    p["d_ca_ln_g"]  = ones((LD, 1, D));  p["d_ca_ln_b"]  = zeros((LD, 1, D))
    p["d_ca_q_w"]   = w((LD, D, D));     p["d_ca_q_b"]   = zeros((LD, 1, D))
    p["d_ca_kv_w"]  = w((LD, D, 2 * D)); p["d_ca_kv_b"]  = zeros((LD, 1, 2 * D))
    p["d_ca_wo"]    = w((LD, D, D));     p["d_ca_bo"]    = zeros((LD, 1, D))
    p["d_fc_ln_g"]  = ones((LD, 1, D));  p["d_fc_ln_b"]  = zeros((LD, 1, D))
    p["d_fc1_w"]    = w((LD, D, F));     p["d_fc1_b"]    = zeros((LD, 1, F))
    p["d_fc2_w"]    = w((LD, F, D));     p["d_fc2_b"]    = zeros((LD, 1, D))
    p["dec_ln_g"]   = ones((1, D));      p["dec_ln_b"]   = zeros((1, D))
    return p

# ----------------------------- main -----------------------------

if __name__ == "__main__":
    params = init_params(jax.random.PRNGKey(0))

    B, S_SRC, S_TGT = 2, 8, 8
    k_ids, k_dec = jax.random.split(jax.random.PRNGKey(0), 2)
    input_ids = jax.random.randint(k_ids, (B, S_SRC), 4, VOCAB)
    attention_mask = jnp.ones((B, S_SRC), jnp.int32).at[1, -2:].set(0)  # pad tail of batch 1
    decoder_input_ids = jax.random.randint(k_dec, (B, S_TGT), 4, VOCAB)

    fwd = jax.jit(m2m100_forward)
    logits = fwd(params, input_ids, attention_mask, decoder_input_ids)
    jax.block_until_ready(logits)

    assert logits.shape == (B, S_TGT, VOCAB), logits.shape
    assert bool(jnp.all(jnp.isfinite(logits)))
    print("KERNEL_OK")
</pallas_src>

<mosaic_0001>
module attributes {stable_mosaic.version = 11 : i64} {
  func.func @_fused_forward_kernel(%arg0: i32, %arg1: memref<1x8x1xi32, #tpu.memory_space<vmem>>, %arg2: memref<1x8x1xi32, #tpu.memory_space<vmem>>, %arg3: memref<8x32xf32, #tpu.memory_space<vmem>>, %arg4: memref<8x32xf32, #tpu.memory_space<vmem>>, %arg5: memref<1x1x8xf32, #tpu.memory_space<vmem>>, %arg6: memref<128x32xbf16, #tpu.memory_space<vmem>>, %arg7: memref<2x1x32xf32, #tpu.memory_space<vmem>>, %arg8: memref<2x1x32xf32, #tpu.memory_space<vmem>>, %arg9: memref<2x32x96xbf16, #tpu.memory_space<vmem>>, %arg10: memref<2x1x96xf32, #tpu.memory_space<vmem>>, %arg11: memref<2x32x32xbf16, #tpu.memory_space<vmem>>, %arg12: memref<2x1x32xf32, #tpu.memory_space<vmem>>, %arg13: memref<2x1x32xf32, #tpu.memory_space<vmem>>, %arg14: memref<2x1x32xf32, #tpu.memory_space<vmem>>, %arg15: memref<2x32x64xbf16, #tpu.memory_space<vmem>>, %arg16: memref<2x1x64xf32, #tpu.memory_space<vmem>>, %arg17: memref<2x64x32xbf16, #tpu.memory_space<vmem>>, %arg18: memref<2x1x32xf32, #tpu.memory_space<vmem>>, %arg19: memref<1x32xf32, #tpu.memory_space<vmem>>, %arg20: memref<1x32xf32, #tpu.memory_space<vmem>>, %arg21: memref<2x1x32xf32, #tpu.memory_space<vmem>>, %arg22: memref<2x1x32xf32, #tpu.memory_space<vmem>>, %arg23: memref<2x32x96xbf16, #tpu.memory_space<vmem>>, %arg24: memref<2x1x96xf32, #tpu.memory_space<vmem>>, %arg25: memref<2x32x32xbf16, #tpu.memory_space<vmem>>, %arg26: memref<2x1x32xf32, #tpu.memory_space<vmem>>, %arg27: memref<2x1x32xf32, #tpu.memory_space<vmem>>, %arg28: memref<2x1x32xf32, #tpu.memory_space<vmem>>, %arg29: memref<2x32x32xbf16, #tpu.memory_space<vmem>>, %arg30: memref<2x1x32xf32, #tpu.memory_space<vmem>>, %arg31: memref<2x32x64xbf16, #tpu.memory_space<vmem>>, %arg32: memref<2x1x64xf32, #tpu.memory_space<vmem>>, %arg33: memref<2x32x32xbf16, #tpu.memory_space<vmem>>, %arg34: memref<2x1x32xf32, #tpu.memory_space<vmem>>, %arg35: memref<2x1x32xf32, #tpu.memory_space<vmem>>, %arg36: memref<2x1x32xf32, #tpu.memory_space<vmem>>, %arg37: memref<2x32x64xbf16, #tpu.memory_space<vmem>>, %arg38: memref<2x1x64xf32, #tpu.memory_space<vmem>>, %arg39: memref<2x64x32xbf16, #tpu.memory_space<vmem>>, %arg40: memref<2x1x32xf32, #tpu.memory_space<vmem>>, %arg41: memref<1x32xf32, #tpu.memory_space<vmem>>, %arg42: memref<1x32xf32, #tpu.memory_space<vmem>>, %arg43: memref<1x8x128xf32, #tpu.memory_space<vmem>>) attributes {dimension_semantics = [#tpu.dimension_semantics<parallel>], iteration_bounds = array<i64: 2>, scalar_prefetch = 0 : i64, scratch_operands = 0 : i64, tpu.core_type = #tpu.core_type<tc>, window_params = [{transform_indices = @transform_0, window_bounds = array<i64: 1, 8, 1>}, {transform_indices = @transform_1, window_bounds = array<i64: 1, 8, 1>}, {pipeline_mode = #tpu.pipeline_mode<synchronous>, transform_indices = @transform_2, window_bounds = array<i64: 8, 32>}, {pipeline_mode = #tpu.pipeline_mode<synchronous>, transform_indices = @transform_3, window_bounds = array<i64: 8, 32>}, {transform_indices = @transform_4, window_bounds = array<i64: 1, 1, 8>}, {pipeline_mode = #tpu.pipeline_mode<synchronous>, transform_indices = @transform_5, window_bounds = array<i64: 128, 32>}, {pipeline_mode = #tpu.pipeline_mode<synchronous>, transform_indices = @transform_6, window_bounds = array<i64: 2, 1, 32>}, {pipeline_mode = #tpu.pipeline_mode<synchronous>, transform_indices = @transform_7, window_bounds = array<i64: 2, 1, 32>}, {pipeline_mode = #tpu.pipeline_mode<synchronous>, transform_indices = @transform_8, window_bounds = array<i64: 2, 32, 96>}, {pipeline_mode = #tpu.pipeline_mode<synchronous>, transform_indices = @transform_9, window_bounds = array<i64: 2, 1, 96>}, {pipeline_mode = #tpu.pipeline_mode<synchronous>, transform_indices = @transform_10, window_bounds = array<i64: 2, 32, 32>}, {pipeline_mode = #tpu.pipeline_mode<synchronous>, transform_indices = @transform_11, window_bounds = array<i64: 2, 1, 32>}, {pipeline_mode = #tpu.pipeline_mode<synchronous>, transform_indices = @transform_12, window_bounds = array<i64: 2, 1, 32>}, {pipeline_mode = #tpu.pipeline_mode<synchronous>, transform_indices = @transform_13, window_bounds = array<i64: 2, 1, 32>}, {pipeline_mode = #tpu.pipeline_mode<synchronous>, transform_indices = @transform_14, window_bounds = array<i64: 2, 32, 64>}, {pipeline_mode = #tpu.pipeline_mode<synchronous>, transform_indices = @transform_15, window_bounds = array<i64: 2, 1, 64>}, {pipeline_mode = #tpu.pipeline_mode<synchronous>, transform_indices = @transform_16, window_bounds = array<i64: 2, 64, 32>}, {pipeline_mode = #tpu.pipeline_mode<synchronous>, transform_indices = @transform_17, window_bounds = array<i64: 2, 1, 32>}, {pipeline_mode = #tpu.pipeline_mode<synchronous>, transform_indices = @transform_18, window_bounds = array<i64: 1, 32>}, {pipeline_mode = #tpu.pipeline_mode<synchronous>, transform_indices = @transform_19, window_bounds = array<i64: 1, 32>}, {pipeline_mode = #tpu.pipeline_mode<synchronous>, transform_indices = @transform_20, window_bounds = array<i64: 2, 1, 32>}, {pipeline_mode = #tpu.pipeline_mode<synchronous>, transform_indices = @transform_21, window_bounds = array<i64: 2, 1, 32>}, {pipeline_mode = #tpu.pipeline_mode<synchronous>, transform_indices = @transform_22, window_bounds = array<i64: 2, 32, 96>}, {pipeline_mode = #tpu.pipeline_mode<synchronous>, transform_indices = @transform_23, window_bounds = array<i64: 2, 1, 96>}, {pipeline_mode = #tpu.pipeline_mode<synchronous>, transform_indices = @transform_24, window_bounds = array<i64: 2, 32, 32>}, {pipeline_mode = #tpu.pipeline_mode<synchronous>, transform_indices = @transform_25, window_bounds = array<i64: 2, 1, 32>}, {pipeline_mode = #tpu.pipeline_mode<synchronous>, transform_indices = @transform_26, window_bounds = array<i64: 2, 1, 32>}, {pipeline_mode = #tpu.pipeline_mode<synchronous>, transform_indices = @transform_27, window_bounds = array<i64: 2, 1, 32>}, {pipeline_mode = #tpu.pipeline_mode<synchronous>, transform_indices = @transform_28, window_bounds = array<i64: 2, 32, 32>}, {pipeline_mode = #tpu.pipeline_mode<synchronous>, transform_indices = @transform_29, window_bounds = array<i64: 2, 1, 32>}, {pipeline_mode = #tpu.pipeline_mode<synchronous>, transform_indices = @transform_30, window_bounds = array<i64: 2, 32, 64>}, {pipeline_mode = #tpu.pipeline_mode<synchronous>, transform_indices = @transform_31, window_bounds = array<i64: 2, 1, 64>}, {pipeline_mode = #tpu.pipeline_mode<synchronous>, transform_indices = @transform_32, window_bounds = array<i64: 2, 32, 32>}, {pipeline_mode = #tpu.pipeline_mode<synchronous>, transform_indices = @transform_33, window_bounds = array<i64: 2, 1, 32>}, {pipeline_mode = #tpu.pipeline_mode<synchronous>, transform_indices = @transform_34, window_bounds = array<i64: 2, 1, 32>}, {pipeline_mode = #tpu.pipeline_mode<synchronous>, transform_indices = @transform_35, window_bounds = array<i64: 2, 1, 32>}, {pipeline_mode = #tpu.pipeline_mode<synchronous>, transform_indices = @transform_36, window_bounds = array<i64: 2, 32, 64>}, {pipeline_mode = #tpu.pipeline_mode<synchronous>, transform_indices = @transform_37, window_bounds = array<i64: 2, 1, 64>}, {pipeline_mode = #tpu.pipeline_mode<synchronous>, transform_indices = @transform_38, window_bounds = array<i64: 2, 64, 32>}, {pipeline_mode = #tpu.pipeline_mode<synchronous>, transform_indices = @transform_39, window_bounds = array<i64: 2, 1, 32>}, {pipeline_mode = #tpu.pipeline_mode<synchronous>, transform_indices = @transform_40, window_bounds = array<i64: 1, 32>}, {pipeline_mode = #tpu.pipeline_mode<synchronous>, transform_indices = @transform_41, window_bounds = array<i64: 1, 32>}, {transform_indices = @transform_42, window_bounds = array<i64: 1, 8, 128>}]} {
    %c0 = arith.constant 0 : index
    %c0_0 = arith.constant 0 : index
    %c0_1 = arith.constant 0 : index
    %0 = vector.load %arg5[%c0, %c0_0, %c0_1] : memref<1x1x8xf32, #tpu.memory_space<vmem>>, vector<1x1x8xf32>
    %cst = arith.constant 1.000000e+00 : f32
    %1 = vector.broadcast %cst : f32 to vector<1x1x8xf32>
    %2 = arith.subf %1, %0 : vector<1x1x8xf32>
    %cst_2 = arith.constant -1.000000e+09 : f32
    %3 = vector.broadcast %cst_2 : f32 to vector<1x1x8xf32>
    %4 = arith.mulf %2, %3 : vector<1x1x8xf32>
    %5 = tpu.iota {dimensions = array<i32: 0>} : vector<8x8xi32>
    %6 = tpu.iota {dimensions = array<i32: 1>} : vector<8x8xi32>
    %7 = arith.cmpi sge, %5, %6 : vector<8x8xi32>
    %cst_3 = arith.constant 0.000000e+00 : f32
    %cst_4 = arith.constant -1.000000e+09 : f32
    %8 = vector.broadcast %cst_3 : f32 to vector<8x8xf32>
    %9 = vector.broadcast %cst_4 : f32 to vector<8x8xf32>
    %10 = arith.select %7, %8, %9 : vector<8x8xi1>, vector<8x8xf32>
    %c0_5 = arith.constant 0 : index
    %c0_6 = arith.constant 0 : index
    %c0_7 = arith.constant 0 : index
    %11 = vector.load %arg1[%c0_5, %c0_6, %c0_7] : memref<1x8x1xi32, #tpu.memory_space<vmem>>, vector<1x8x1xi32>
    %12 = vector.shape_cast %11 : vector<1x8x1xi32> to vector<8x1xi32>
    %13 = tpu.iota {dimensions = array<i32: 1>} : vector<8x128xi32>
    %14 = vector.broadcast %12 : vector<8x1xi32> to vector<8x128xi32>
    %15 = arith.cmpi eq, %13, %14 : vector<8x128xi32>
    %cst_8 = arith.constant 5.65685415 : f32
    %cst_9 = arith.constant 0.000000e+00 : f32
    %16 = vector.broadcast %cst_8 : f32 to vector<8x128xf32>
    %17 = vector.broadcast %cst_9 : f32 to vector<8x128xf32>
    %18 = arith.select %15, %16, %17 : vector<8x128xi1>, vector<8x128xf32>
    %19 = arith.truncf %18 : vector<8x128xf32> to vector<8x128xbf16>
    %c0_10 = arith.constant 0 : index
    %c0_11 = arith.constant 0 : index
    %20 = vector.load %arg6[%c0_10, %c0_11] : memref<128x32xbf16, #tpu.memory_space<vmem>>, vector<128x32xbf16>
    %cst_12 = arith.constant dense<0.000000e+00> : vector<8x32xf32>
    %21 = tpu.matmul %19, %20, %cst_12 {dimension_numbers = #tpu.dot_dimension_numbers<[1], [0], [0], [1], [0, 0, 1, 1], [], []>} : vector<8x128xbf16>, vector<128x32xbf16>, vector<8x32xf32> -> vector<8x32xf32>
    %c0_13 = arith.constant 0 : index
    %c0_14 = arith.constant 0 : index
    %22 = vector.load %arg3[%c0_13, %c0_14] : memref<8x32xf32, #tpu.memory_space<vmem>>, vector<8x32xf32>
    %23 = arith.addf %21, %22 : vector<8x32xf32>
    %c0_15 = arith.constant 0 : index
    %c0_16 = arith.constant 0 : index
    %c0_17 = arith.constant 0 : index
    %24 = vector.load %arg7[%c0_15, %c0_16, %c0_17] : memref<2x1x32xf32, #tpu.memory_space<vmem>>, vector<1x1x32xf32>
    %25 = vector.shape_cast %24 : vector<1x1x32xf32> to vector<1x32xf32>
    %c0_18 = arith.constant 0 : index
    %c0_19 = arith.constant 0 : index
    %c0_20 = arith.constant 0 : index
    %26 = vector.load %arg8[%c0_18, %c0_19, %c0_20] : memref<2x1x32xf32, #tpu.memory_space<vmem>>, vector<1x1x32xf32>
    %27 = vector.shape_cast %26 : vector<1x1x32xf32> to vector<1x32xf32>
    %cst_21 = arith.constant dense<0.000000e+00> : vector<8xf32>
    %28 = vector.multi_reduction <add>, %23, %cst_21 [1] : vector<8x32xf32> to vector<8xf32>
    %29 = vector.shape_cast %28 : vector<8xf32> to vector<8x1xf32>
    %cst_22 = arith.constant 3.200000e+01 : f32
    %30 = vector.broadcast %cst_22 : f32 to vector<8x1xf32>
    %31 = arith.divf %29, %30 : vector<8x1xf32>
    %32 = vector.broadcast %31 : vector<8x1xf32> to vector<8x32xf32>
    %33 = arith.subf %23, %32 : vector<8x32xf32>
    %34 = arith.mulf %33, %33 : vector<8x32xf32>
    %cst_23 = arith.constant dense<0.000000e+00> : vector<8xf32>
    %35 = vector.multi_reduction <add>, %34, %cst_23 [1] : vector<8x32xf32> to vector<8xf32>
    %36 = vector.shape_cast %35 : vector<8xf32> to vector<8x1xf32>
    %cst_24 = arith.constant 3.200000e+01 : f32
    %37 = vector.broadcast %cst_24 : f32 to vector<8x1xf32>
    %38 = arith.divf %36, %37 : vector<8x1xf32>
    %cst_25 = arith.constant 9.99999974E-6 : f32
    %39 = vector.broadcast %cst_25 : f32 to vector<8x1xf32>
    %40 = arith.addf %38, %39 : vector<8x1xf32>
    %41 = math.rsqrt %40 : vector<8x1xf32>
    %42 = vector.broadcast %41 : vector<8x1xf32> to vector<8x32xf32>
    %43 = arith.mulf %33, %42 : vector<8x32xf32>
    %44 = vector.broadcast %25 : vector<1x32xf32> to vector<8x32xf32>
    %45 = arith.mulf %43, %44 : vector<8x32xf32>
    %46 = vector.broadcast %27 : vector<1x32xf32> to vector<8x32xf32>
    %47 = arith.addf %45, %46 : vector<8x32xf32>
    %c0_26 = arith.constant 0 : index
    %c0_27 = arith.constant 0 : index
    %c0_28 = arith.constant 0 : index
    %48 = vector.load %arg9[%c0_26, %c0_27, %c0_28] : memref<2x32x96xbf16, #tpu.memory_space<vmem>>, vector<1x32x96xbf16>
    %49 = vector.shape_cast %48 : vector<1x32x96xbf16> to vector<32x96xbf16>
    %c0_29 = arith.constant 0 : index
    %c0_30 = arith.constant 0 : index
    %c0_31 = arith.constant 0 : index
    %50 = vector.load %arg10[%c0_29, %c0_30, %c0_31] : memref<2x1x96xf32, #tpu.memory_space<vmem>>, vector<1x1x96xf32>
    %51 = vector.shape_cast %50 : vector<1x1x96xf32> to vector<1x96xf32>
    %52 = arith.truncf %47 : vector<8x32xf32> to vector<8x32xbf16>
    %cst_32 = arith.constant dense<0.000000e+00> : vector<8x96xf32>
    %53 = tpu.matmul %52, %49, %cst_32 {dimension_numbers = #tpu.dot_dimension_numbers<[1], [0], [0], [1], [0, 0, 1, 1], [], []>} : vector<8x32xbf16>, vector<32x96xbf16>, vector<8x96xf32> -> vector<8x96xf32>
    %54 = vector.broadcast %51 : vector<1x96xf32> to vector<8x96xf32>
    %55 = arith.addf %53, %54 : vector<8x96xf32>
    %56 = vector.extract_strided_slice %55 {offsets = [0, 0], sizes = [8, 32], strides = [1, 1]} : vector<8x96xf32> to vector<8x32xf32>
    %57 = vector.extract_strided_slice %55 {offsets = [0, 32], sizes = [8, 32], strides = [1, 1]} : vector<8x96xf32> to vector<8x32xf32>
    %58 = vector.extract_strided_slice %55 {offsets = [0, 64], sizes = [8, 32], strides = [1, 1]} : vector<8x96xf32> to vector<8x32xf32>
    %59 = vector.extract_strided_slice %56 {offsets = [0, 0], sizes = [8, 8], strides = [1, 1]} : vector<8x32xf32> to vector<8x8xf32>
    %60 = vector.extract_strided_slice %56 {offsets = [0, 8], sizes = [8, 8], strides = [1, 1]} : vector<8x32xf32> to vector<8x8xf32>
    %61 = vector.extract_strided_slice %56 {offsets = [0, 16], sizes = [8, 8], strides = [1, 1]} : vector<8x32xf32> to vector<8x8xf32>
    %62 = vector.extract_strided_slice %56 {offsets = [0, 24], sizes = [8, 8], strides = [1, 1]} : vector<8x32xf32> to vector<8x8xf32>
    %63 = vector.shape_cast %59 : vector<8x8xf32> to vector<1x8x8xf32>
    %64 = vector.shape_cast %60 : vector<8x8xf32> to vector<1x8x8xf32>
    %65 = vector.shape_cast %61 : vector<8x8xf32> to vector<1x8x8xf32>
    %66 = vector.shape_cast %62 : vector<8x8xf32> to vector<1x8x8xf32>
    %67 = tpu.concatenate %63, %64, %65, %66 in 0 : vector<1x8x8xf32>, vector<1x8x8xf32>, vector<1x8x8xf32>, vector<1x8x8xf32> -> vector<4x8x8xf32>
    %68 = arith.truncf %67 : vector<4x8x8xf32> to vector<4x8x8xbf16>
    %69 = vector.extract_strided_slice %57 {offsets = [0, 0], sizes = [8, 8], strides = [1, 1]} : vector<8x32xf32> to vector<8x8xf32>
    %70 = vector.extract_strided_slice %57 {offsets = [0, 8], sizes = [8, 8], strides = [1, 1]} : vector<8x32xf32> to vector<8x8xf32>
    %71 = vector.extract_strided_slice %57 {offsets = [0, 16], sizes = [8, 8], strides = [1, 1]} : vector<8x32xf32> to vector<8x8xf32>
    %72 = vector.extract_strided_slice %57 {offsets = [0, 24], sizes = [8, 8], strides = [1, 1]} : vector<8x32xf32> to vector<8x8xf32>
    %73 = vector.shape_cast %69 : vector<8x8xf32> to vector<1x8x8xf32>
    %74 = vector.shape_cast %70 : vector<8x8xf32> to vector<1x8x8xf32>
    %75 = vector.shape_cast %71 : vector<8x8xf32> to vector<1x8x8xf32>
    %76 = vector.shape_cast %72 : vector<8x8xf32> to vector<1x8x8xf32>
    %77 = tpu.concatenate %73, %74, %75, %76 in 0 : vector<1x8x8xf32>, vector<1x8x8xf32>, vector<1x8x8xf32>, vector<1x8x8xf32> -> vector<4x8x8xf32>
    %78 = arith.truncf %77 : vector<4x8x8xf32> to vector<4x8x8xbf16>
    %79 = vector.extract_strided_slice %58 {offsets = [0, 0], sizes = [8, 8], strides = [1, 1]} : vector<8x32xf32> to vector<8x8xf32>
    %80 = vector.extract_strided_slice %58 {offsets = [0, 8], sizes = [8, 8], strides = [1, 1]} : vector<8x32xf32> to vector<8x8xf32>
    %81 = vector.extract_strided_slice %58 {offsets = [0, 16], sizes = [8, 8], strides = [1, 1]} : vector<8x32xf32> to vector<8x8xf32>
    %82 = vector.extract_strided_slice %58 {offsets = [0, 24], sizes = [8, 8], strides = [1, 1]} : vector<8x32xf32> to vector<8x8xf32>
    %83 = vector.shape_cast %79 : vector<8x8xf32> to vector<1x8x8xf32>
    %84 = vector.shape_cast %80 : vector<8x8xf32> to vector<1x8x8xf32>
    %85 = vector.shape_cast %81 : vector<8x8xf32> to vector<1x8x8xf32>
    %86 = vector.shape_cast %82 : vector<8x8xf32> to vector<1x8x8xf32>
    %87 = tpu.concatenate %83, %84, %85, %86 in 0 : vector<1x8x8xf32>, vector<1x8x8xf32>, vector<1x8x8xf32>, vector<1x8x8xf32> -> vector<4x8x8xf32>
    %88 = arith.truncf %87 : vector<4x8x8xf32> to vector<4x8x8xbf16>
    "tpu.trace_start"() <{level = 10 : i32, message = "hqd,hkd->hqk"}> : () -> ()
    %cst_33 = arith.constant dense<0.000000e+00> : vector<4x8x8xf32>
    %89 = tpu.matmul %68, %78, %cst_33 {dimension_numbers = #tpu.dot_dimension_numbers<[2], [2], [1], [1], [0, 0, 0, 1, 1, 1], [0], [0]>} : vector<4x8x8xbf16>, vector<4x8x8xbf16>, vector<4x8x8xf32> -> vector<4x8x8xf32>
    "tpu.trace_stop"() : () -> ()
    %90 = vector.broadcast %4 : vector<1x1x8xf32> to vector<4x8x8xf32>
    %91 = arith.addf %89, %90 : vector<4x8x8xf32>
    %cst_34 = arith.constant dense<0xFF800000> : vector<4x8xf32>
    %92 = vector.multi_reduction <maximumf>, %91, %cst_34 [2] : vector<4x8x8xf32> to vector<4x8xf32>
    %93 = vector.shape_cast %92 : vector<4x8xf32> to vector<4x8x1xf32>
    %94 = vector.broadcast %93 : vector<4x8x1xf32> to vector<4x8x8xf32>
    %95 = arith.subf %91, %94 : vector<4x8x8xf32>
    %96 = math.exp %95 : vector<4x8x8xf32>
    %cst_35 = arith.constant dense<0.000000e+00> : vector<4x8xf32>
    %97 = vector.multi_reduction <add>, %96, %cst_35 [2] : vector<4x8x8xf32> to vector<4x8xf32>
    %98 = vector.shape_cast %97 : vector<4x8xf32> to vector<4x8x1xf32>
    %99 = tpu.reciprocal %98 {approx = true} : vector<4x8x1xf32> -> vector<4x8x1xf32>
    %100 = vector.broadcast %99 : vector<4x8x1xf32> to vector<4x8x8xf32>
    %101 = arith.mulf %96, %100 : vector<4x8x8xf32>
    %102 = arith.truncf %101 : vector<4x8x8xf32> to vector<4x8x8xbf16>
    "tpu.trace_start"() <{level = 10 : i32, message = "hqk,hkd->hqd"}> : () -> ()
    %cst_36 = arith.constant dense<0.000000e+00> : vector<4x8x8xf32>
    %103 = tpu.matmul %102, %88, %cst_36 {dimension_numbers = #tpu.dot_dimension_numbers<[2], [1], [1], [2], [0, 0, 0, 1, 1, 2], [0], [0]>} : vector<4x8x8xbf16>, vector<4x8x8xbf16>, vector<4x8x8xf32> -> vector<4x8x8xf32>
    "tpu.trace_stop"() : () -> ()
    %104 = vector.extract_strided_slice %103 {offsets = [0, 0, 0], sizes = [1, 8, 8], strides = [1, 1, 1]} : vector<4x8x8xf32> to vector<1x8x8xf32>
    %105 = vector.shape_cast %104 : vector<1x8x8xf32> to vector<8x8xf32>
    %106 = vector.extract_strided_slice %103 {offsets = [1, 0, 0], sizes = [1, 8, 8], strides = [1, 1, 1]} : vector<4x8x8xf32> to vector<1x8x8xf32>
    %107 = vector.shape_cast %106 : vector<1x8x8xf32> to vector<8x8xf32>
    %108 = vector.extract_strided_slice %103 {offsets = [2, 0, 0], sizes = [1, 8, 8], strides = [1, 1, 1]} : vector<4x8x8xf32> to vector<1x8x8xf32>
    %109 = vector.shape_cast %108 : vector<1x8x8xf32> to vector<8x8xf32>
    %110 = vector.extract_strided_slice %103 {offsets = [3, 0, 0], sizes = [1, 8, 8], strides = [1, 1, 1]} : vector<4x8x8xf32> to vector<1x8x8xf32>
    %111 = vector.shape_cast %110 : vector<1x8x8xf32> to vector<8x8xf32>
    %112 = tpu.concatenate %105, %107, %109, %111 in 1 : vector<8x8xf32>, vector<8x8xf32>, vector<8x8xf32>, vector<8x8xf32> -> vector<8x32xf32>
    %c0_37 = arith.constant 0 : index
    %c0_38 = arith.constant 0 : index
    %c0_39 = arith.constant 0 : index
    %113 = vector.load %arg11[%c0_37, %c0_38, %c0_39] : memref<2x32x32xbf16, #tpu.memory_space<vmem>>, vector<1x32x32xbf16>
    %114 = vector.shape_cast %113 : vector<1x32x32xbf16> to vector<32x32xbf16>
    %c0_40 = arith.constant 0 : index
    %c0_41 = arith.constant 0 : index
    %c0_42 = arith.constant 0 : index
    %115 = vector.load %arg12[%c0_40, %c0_41, %c0_42] : memref<2x1x32xf32, #tpu.memory_space<vmem>>, vector<1x1x32xf32>
    %116 = vector.shape_cast %115 : vector<1x1x32xf32> to vector<1x32xf32>
    %117 = arith.truncf %112 : vector<8x32xf32> to vector<8x32xbf16>
    %cst_43 = arith.constant dense<0.000000e+00> : vector<8x32xf32>
    %118 = tpu.matmul %117, %114, %cst_43 {dimension_numbers = #tpu.dot_dimension_numbers<[1], [0], [0], [1], [0, 0, 1, 1], [], []>} : vector<8x32xbf16>, vector<32x32xbf16>, vector<8x32xf32> -> vector<8x32xf32>
    %119 = vector.broadcast %116 : vector<1x32xf32> to vector<8x32xf32>
    %120 = arith.addf %118, %119 : vector<8x32xf32>
    %121 = arith.addf %23, %120 : vector<8x32xf32>
    %c0_44 = arith.constant 0 : index
    %c0_45 = arith.constant 0 : index
    %c0_46 = arith.constant 0 : index
    %122 = vector.load %arg13[%c0_44, %c0_45, %c0_46] : memref<2x1x32xf32, #tpu.memory_space<vmem>>, vector<1x1x32xf32>
    %123 = vector.shape_cast %122 : vector<1x1x32xf32> to vector<1x32xf32>
    %c0_47 = arith.constant 0 : index
    %c0_48 = arith.constant 0 : index
    %c0_49 = arith.constant 0 : index
    %124 = vector.load %arg14[%c0_47, %c0_48, %c0_49] : memref<2x1x32xf32, #tpu.memory_space<vmem>>, vector<1x1x32xf32>
    %125 = vector.shape_cast %124 : vector<1x1x32xf32> to vector<1x32xf32>
    %cst_50 = arith.constant dense<0.000000e+00> : vector<8xf32>
    %126 = vector.multi_reduction <add>, %121, %cst_50 [1] : vector<8x32xf32> to vector<8xf32>
    %127 = vector.shape_cast %126 : vector<8xf32> to vector<8x1xf32>
    %cst_51 = arith.constant 3.200000e+01 : f32
    %128 = vector.broadcast %cst_51 : f32 to vector<8x1xf32>
    %129 = arith.divf %127, %128 : vector<8x1xf32>
    %130 = vector.broadcast %129 : vector<8x1xf32> to vector<8x32xf32>
    %131 = arith.subf %121, %130 : vector<8x32xf32>
    %132 = arith.mulf %131, %131 : vector<8x32xf32>
    %cst_52 = arith.constant dense<0.000000e+00> : vector<8xf32>
    %133 = vector.multi_reduction <add>, %132, %cst_52 [1] : vector<8x32xf32> to vector<8xf32>
    %134 = vector.shape_cast %133 : vector<8xf32> to vector<8x1xf32>
    %cst_53 = arith.constant 3.200000e+01 : f32
    %135 = vector.broadcast %cst_53 : f32 to vector<8x1xf32>
    %136 = arith.divf %134, %135 : vector<8x1xf32>
    %cst_54 = arith.constant 9.99999974E-6 : f32
    %137 = vector.broadcast %cst_54 : f32 to vector<8x1xf32>
    %138 = arith.addf %136, %137 : vector<8x1xf32>
    %139 = math.rsqrt %138 : vector<8x1xf32>
    %140 = vector.broadcast %139 : vector<8x1xf32> to vector<8x32xf32>
    %141 = arith.mulf %131, %140 : vector<8x32xf32>
    %142 = vector.broadcast %123 : vector<1x32xf32> to vector<8x32xf32>
    %143 = arith.mulf %141, %142 : vector<8x32xf32>
    %144 = vector.broadcast %125 : vector<1x32xf32> to vector<8x32xf32>
    %145 = arith.addf %143, %144 : vector<8x32xf32>
    %c0_55 = arith.constant 0 : index
    %c0_56 = arith.constant 0 : index
    %c0_57 = arith.constant 0 : index
    %146 = vector.load %arg15[%c0_55, %c0_56, %c0_57] : memref<2x32x64xbf16, #tpu.memory_space<vmem>>, vector<1x32x64xbf16>
    %147 = vector.shape_cast %146 : vector<1x32x64xbf16> to vector<32x64xbf16>
    %c0_58 = arith.constant 0 : index
    %c0_59 = arith.constant 0 : index
    %c0_60 = arith.constant 0 : index
    %148 = vector.load %arg16[%c0_58, %c0_59, %c0_60] : memref<2x1x64xf32, #tpu.memory_space<vmem>>, vector<1x1x64xf32>
    %149 = vector.shape_cast %148 : vector<1x1x64xf32> to vector<1x64xf32>
    %150 = arith.truncf %145 : vector<8x32xf32> to vector<8x32xbf16>
    %cst_61 = arith.constant dense<0.000000e+00> : vector<8x64xf32>
    %151 = tpu.matmul %150, %147, %cst_61 {dimension_numbers = #tpu.dot_dimension_numbers<[1], [0], [0], [1], [0, 0, 1, 1], [], []>} : vector<8x32xbf16>, vector<32x64xbf16>, vector<8x64xf32> -> vector<8x64xf32>
    %152 = vector.broadcast %149 : vector<1x64xf32> to vector<8x64xf32>
    %153 = arith.addf %151, %152 : vector<8x64xf32>
    %cst_62 = arith.constant 0.000000e+00 : f32
    %154 = vector.broadcast %cst_62 : f32 to vector<8x64xf32>
    %155 = arith.maximumf %153, %154 : vector<8x64xf32>
    %c0_63 = arith.constant 0 : index
    %c0_64 = arith.constant 0 : index
    %c0_65 = arith.constant 0 : index
    %156 = vector.load %arg17[%c0_63, %c0_64, %c0_65] : memref<2x64x32xbf16, #tpu.memory_space<vmem>>, vector<1x64x32xbf16>
    %157 = vector.shape_cast %156 : vector<1x64x32xbf16> to vector<64x32xbf16>
    %c0_66 = arith.constant 0 : index
    %c0_67 = arith.constant 0 : index
    %c0_68 = arith.constant 0 : index
    %158 = vector.load %arg18[%c0_66, %c0_67, %c0_68] : memref<2x1x32xf32, #tpu.memory_space<vmem>>, vector<1x1x32xf32>
    %159 = vector.shape_cast %158 : vector<1x1x32xf32> to vector<1x32xf32>
    %160 = arith.truncf %155 : vector<8x64xf32> to vector<8x64xbf16>
    %cst_69 = arith.constant dense<0.000000e+00> : vector<8x32xf32>
    %161 = tpu.matmul %160, %157, %cst_69 {dimension_numbers = #tpu.dot_dimension_numbers<[1], [0], [0], [1], [0, 0, 1, 1], [], []>} : vector<8x64xbf16>, vector<64x32xbf16>, vector<8x32xf32> -> vector<8x32xf32>
    %162 = vector.broadcast %159 : vector<1x32xf32> to vector<8x32xf32>
    %163 = arith.addf %161, %162 : vector<8x32xf32>
    %164 = arith.addf %121, %163 : vector<8x32xf32>
    %c1 = arith.constant 1 : index
    %c0_70 = arith.constant 0 : index
    %c0_71 = arith.constant 0 : index
    %165 = vector.load %arg7[%c1, %c0_70, %c0_71] : memref<2x1x32xf32, #tpu.memory_space<vmem>>, vector<1x1x32xf32>
    %166 = vector.shape_cast %165 : vector<1x1x32xf32> to vector<1x32xf32>
    %c1_72 = arith.constant 1 : index
    %c0_73 = arith.constant 0 : index
    %c0_74 = arith.constant 0 : index
    %167 = vector.load %arg8[%c1_72, %c0_73, %c0_74] : memref<2x1x32xf32, #tpu.memory_space<vmem>>, vector<1x1x32xf32>
    %168 = vector.shape_cast %167 : vector<1x1x32xf32> to vector<1x32xf32>
    %cst_75 = arith.constant dense<0.000000e+00> : vector<8xf32>
    %169 = vector.multi_reduction <add>, %164, %cst_75 [1] : vector<8x32xf32> to vector<8xf32>
    %170 = vector.shape_cast %169 : vector<8xf32> to vector<8x1xf32>
    %cst_76 = arith.constant 3.200000e+01 : f32
    %171 = vector.broadcast %cst_76 : f32 to vector<8x1xf32>
    %172 = arith.divf %170, %171 : vector<8x1xf32>
    %173 = vector.broadcast %172 : vector<8x1xf32> to vector<8x32xf32>
    %174 = arith.subf %164, %173 : vector<8x32xf32>
    %175 = arith.mulf %174, %174 : vector<8x32xf32>
    %cst_77 = arith.constant dense<0.000000e+00> : vector<8xf32>
    %176 = vector.multi_reduction <add>, %175, %cst_77 [1] : vector<8x32xf32> to vector<8xf32>
    %177 = vector.shape_cast %176 : vector<8xf32> to vector<8x1xf32>
    %cst_78 = arith.constant 3.200000e+01 : f32
    %178 = vector.broadcast %cst_78 : f32 to vector<8x1xf32>
    %179 = arith.divf %177, %178 : vector<8x1xf32>
    %cst_79 = arith.constant 9.99999974E-6 : f32
    %180 = vector.broadcast %cst_79 : f32 to vector<8x1xf32>
    %181 = arith.addf %179, %180 : vector<8x1xf32>
    %182 = math.rsqrt %181 : vector<8x1xf32>
    %183 = vector.broadcast %182 : vector<8x1xf32> to vector<8x32xf32>
    %184 = arith.mulf %174, %183 : vector<8x32xf32>
    %185 = vector.broadcast %166 : vector<1x32xf32> to vector<8x32xf32>
    %186 = arith.mulf %184, %185 : vector<8x32xf32>
    %187 = vector.broadcast %168 : vector<1x32xf32> to vector<8x32xf32>
    %188 = arith.addf %186, %187 : vector<8x32xf32>
    %c1_80 = arith.constant 1 : index
    %c0_81 = arith.constant 0 : index
    %c0_82 = arith.constant 0 : index
    %189 = vector.load %arg9[%c1_80, %c0_81, %c0_82] : memref<2x32x96xbf16, #tpu.memory_space<vmem>>, vector<1x32x96xbf16>
    %190 = vector.shape_cast %189 : vector<1x32x96xbf16> to vector<32x96xbf16>
    %c1_83 = arith.constant 1 : index
    %c0_84 = arith.constant 0 : index
    %c0_85 = arith.constant 0 : index
    %191 = vector.load %arg10[%c1_83, %c0_84, %c0_85] : memref<2x1x96xf32, #tpu.memory_space<vmem>>, vector<1x1x96xf32>
    %192 = vector.shape_cast %191 : vector<1x1x96xf32> to vector<1x96xf32>
    %193 = arith.truncf %188 : vector<8x32xf32> to vector<8x32xbf16>
    %cst_86 = arith.constant dense<0.000000e+00> : vector<8x96xf32>
    %194 = tpu.matmul %193, %190, %cst_86 {dimension_numbers = #tpu.dot_dimension_numbers<[1], [0], [0], [1], [0, 0, 1, 1], [], []>} : vector<8x32xbf16>, vector<32x96xbf16>, vector<8x96xf32> -> vector<8x96xf32>
    %195 = vector.broadcast %192 : vector<1x96xf32> to vector<8x96xf32>
    %196 = arith.addf %194, %195 : vector<8x96xf32>
    %197 = vector.extract_strided_slice %196 {offsets = [0, 0], sizes = [8, 32], strides = [1, 1]} : vector<8x96xf32> to vector<8x32xf32>
    %198 = vector.extract_strided_slice %196 {offsets = [0, 32], sizes = [8, 32], strides = [1, 1]} : vector<8x96xf32> to vector<8x32xf32>
    %199 = vector.extract_strided_slice %196 {offsets = [0, 64], sizes = [8, 32], strides = [1, 1]} : vector<8x96xf32> to vector<8x32xf32>
    %200 = vector.extract_strided_slice %197 {offsets = [0, 0], sizes = [8, 8], strides = [1, 1]} : vector<8x32xf32> to vector<8x8xf32>
    %201 = vector.extract_strided_slice %197 {offsets = [0, 8], sizes = [8, 8], strides = [1, 1]} : vector<8x32xf32> to vector<8x8xf32>
    %202 = vector.extract_strided_slice %197 {offsets = [0, 16], sizes = [8, 8], strides = [1, 1]} : vector<8x32xf32> to vector<8x8xf32>
    %203 = vector.extract_strided_slice %197 {offsets = [0, 24], sizes = [8, 8], strides = [1, 1]} : vector<8x32xf32> to vector<8x8xf32>
    %204 = vector.shape_cast %200 : vector<8x8xf32> to vector<1x8x8xf32>
    %205 = vector.shape_cast %201 : vector<8x8xf32> to vector<1x8x8xf32>
    %206 = vector.shape_cast %202 : vector<8x8xf32> to vector<1x8x8xf32>
    %207 = vector.shape_cast %203 : vector<8x8xf32> to vector<1x8x8xf32>
    %208 = tpu.concatenate %204, %205, %206, %207 in 0 : vector<1x8x8xf32>, vector<1x8x8xf32>, vector<1x8x8xf32>, vector<1x8x8xf32> -> vector<4x8x8xf32>
    %209 = arith.truncf %208 : vector<4x8x8xf32> to vector<4x8x8xbf16>
    %210 = vector.extract_strided_slice %198 {offsets = [0, 0], sizes = [8, 8], strides = [1, 1]} : vector<8x32xf32> to vector<8x8xf32>
    %211 = vector.extract_strided_slice %198 {offsets = [0, 8], sizes = [8, 8], strides = [1, 1]} : vector<8x32xf32> to vector<8x8xf32>
    %212 = vector.extract_strided_slice %198 {offsets = [0, 16], sizes = [8, 8], strides = [1, 1]} : vector<8x32xf32> to vector<8x8xf32>
    %213 = vector.extract_strided_slice %198 {offsets = [0, 24], sizes = [8, 8], strides = [1, 1]} : vector<8x32xf32> to vector<8x8xf32>
    %214 = vector.shape_cast %210 : vector<8x8xf32> to vector<1x8x8xf32>
    %215 = vector.shape_cast %211 : vector<8x8xf32> to vector<1x8x8xf32>
    %216 = vector.shape_cast %212 : vector<8x8xf32> to vector<1x8x8xf32>
    %217 = vector.shape_cast %213 : vector<8x8xf32> to vector<1x8x8xf32>
    %218 = tpu.concatenate %214, %215, %216, %217 in 0 : vector<1x8x8xf32>, vector<1x8x8xf32>, vector<1x8x8xf32>, vector<1x8x8xf32> -> vector<4x8x8xf32>
    %219 = arith.truncf %218 : vector<4x8x8xf32> to vector<4x8x8xbf16>
    %220 = vector.extract_strided_slice %199 {offsets = [0, 0], sizes = [8, 8], strides = [1, 1]} : vector<8x32xf32> to vector<8x8xf32>
    %221 = vector.extract_strided_slice %199 {offsets = [0, 8], sizes = [8, 8], strides = [1, 1]} : vector<8x32xf32> to vector<8x8xf32>
    %222 = vector.extract_strided_slice %199 {offsets = [0, 16], sizes = [8, 8], strides = [1, 1]} : vector<8x32xf32> to vector<8x8xf32>
    %223 = vector.extract_strided_slice %199 {offsets = [0, 24], sizes = [8, 8], strides = [1, 1]} : vector<8x32xf32> to vector<8x8xf32>
    %224 = vector.shape_cast %220 : vector<8x8xf32> to vector<1x8x8xf32>
    %225 = vector.shape_cast %221 : vector<8x8xf32> to vector<1x8x8xf32>
    %226 = vector.shape_cast %222 : vector<8x8xf32> to vector<1x8x8xf32>
    %227 = vector.shape_cast %223 : vector<8x8xf32> to vector<1x8x8xf32>
    %228 = tpu.concatenate %224, %225, %226, %227 in 0 : vector<1x8x8xf32>, vector<1x8x8xf32>, vector<1x8x8xf32>, vector<1x8x8xf32> -> vector<4x8x8xf32>
    %229 = arith.truncf %228 : vector<4x8x8xf32> to vector<4x8x8xbf16>
    "tpu.trace_start"() <{level = 10 : i32, message = "hqd,hkd->hqk"}> : () -> ()
    %cst_87 = arith.constant dense<0.000000e+00> : vector<4x8x8xf32>
    %230 = tpu.matmul %209, %219, %cst_87 {dimension_numbers = #tpu.dot_dimension_numbers<[2], [2], [1], [1], [0, 0, 0, 1, 1, 1], [0], [0]>} : vector<4x8x8xbf16>, vector<4x8x8xbf16>, vector<4x8x8xf32> -> vector<4x8x8xf32>
    "tpu.trace_stop"() : () -> ()
    %231 = vector.broadcast %4 : vector<1x1x8xf32> to vector<4x8x8xf32>
    %232 = arith.addf %230, %231 : vector<4x8x8xf32>
    %cst_88 = arith.constant dense<0xFF800000> : vector<4x8xf32>
    %233 = vector.multi_reduction <maximumf>, %232, %cst_88 [2] : vector<4x8x8xf32> to vector<4x8xf32>
    %234 = vector.shape_cast %233 : vector<4x8xf32> to vector<4x8x1xf32>
    %235 = vector.broadcast %234 : vector<4x8x1xf32> to vector<4x8x8xf32>
    %236 = arith.subf %232, %235 : vector<4x8x8xf32>
    %237 = math.exp %236 : vector<4x8x8xf32>
    %cst_89 = arith.constant dense<0.000000e+00> : vector<4x8xf32>
    %238 = vector.multi_reduction <add>, %237, %cst_89 [2] : vector<4x8x8xf32> to vector<4x8xf32>
    %239 = vector.shape_cast %238 : vector<4x8xf32> to vector<4x8x1xf32>
    %240 = tpu.reciprocal %239 {approx = true} : vector<4x8x1xf32> -> vector<4x8x1xf32>
    %241 = vector.broadcast %240 : vector<4x8x1xf32> to vector<4x8x8xf32>
    %242 = arith.mulf %237, %241 : vector<4x8x8xf32>
    %243 = arith.truncf %242 : vector<4x8x8xf32> to vector<4x8x8xbf16>
    "tpu.trace_start"() <{level = 10 : i32, message = "hqk,hkd->hqd"}> : () -> ()
    %cst_90 = arith.constant dense<0.000000e+00> : vector<4x8x8xf32>
    %244 = tpu.matmul %243, %229, %cst_90 {dimension_numbers = #tpu.dot_dimension_numbers<[2], [1], [1], [2], [0, 0, 0, 1, 1, 2], [0], [0]>} : vector<4x8x8xbf16>, vector<4x8x8xbf16>, vector<4x8x8xf32> -> vector<4x8x8xf32>
    "tpu.trace_stop"() : () -> ()
    %245 = vector.extract_strided_slice %244 {offsets = [0, 0, 0], sizes = [1, 8, 8], strides = [1, 1, 1]} : vector<4x8x8xf32> to vector<1x8x8xf32>
    %246 = vector.shape_cast %245 : vector<1x8x8xf32> to vector<8x8xf32>
    %247 = vector.extract_strided_slice %244 {offsets = [1, 0, 0], sizes = [1, 8, 8], strides = [1, 1, 1]} : vector<4x8x8xf32> to vector<1x8x8xf32>
    %248 = vector.shape_cast %247 : vector<1x8x8xf32> to vector<8x8xf32>
    %249 = vector.extract_strided_slice %244 {offsets = [2, 0, 0], sizes = [1, 8, 8], strides = [1, 1, 1]} : vector<4x8x8xf32> to vector<1x8x8xf32>
    %250 = vector.shape_cast %249 : vector<1x8x8xf32> to vector<8x8xf32>
    %251 = vector.extract_strided_slice %244 {offsets = [3, 0, 0], sizes = [1, 8, 8], strides = [1, 1, 1]} : vector<4x8x8xf32> to vector<1x8x8xf32>
    %252 = vector.shape_cast %251 : vector<1x8x8xf32> to vector<8x8xf32>
    %253 = tpu.concatenate %246, %248, %250, %252 in 1 : vector<8x8xf32>, vector<8x8xf32>, vector<8x8xf32>, vector<8x8xf32> -> vector<8x32xf32>
    %c1_91 = arith.constant 1 : index
    %c0_92 = arith.constant 0 : index
    %c0_93 = arith.constant 0 : index
    %254 = vector.load %arg11[%c1_91, %c0_92, %c0_93] : memref<2x32x32xbf16, #tpu.memory_space<vmem>>, vector<1x32x32xbf16>
    %255 = vector.shape_cast %254 : vector<1x32x32xbf16> to vector<32x32xbf16>
    %c1_94 = arith.constant 1 : index
    %c0_95 = arith.constant 0 : index
    %c0_96 = arith.constant 0 : index
    %256 = vector.load %arg12[%c1_94, %c0_95, %c0_96] : memref<2x1x32xf32, #tpu.memory_space<vmem>>, vector<1x1x32xf32>
    %257 = vector.shape_cast %256 : vector<1x1x32xf32> to vector<1x32xf32>
    %258 = arith.truncf %253 : vector<8x32xf32> to vector<8x32xbf16>
    %cst_97 = arith.constant dense<0.000000e+00> : vector<8x32xf32>
    %259 = tpu.matmul %258, %255, %cst_97 {dimension_numbers = #tpu.dot_dimension_numbers<[1], [0], [0], [1], [0, 0, 1, 1], [], []>} : vector<8x32xbf16>, vector<32x32xbf16>, vector<8x32xf32> -> vector<8x32xf32>
    %260 = vector.broadcast %257 : vector<1x32xf32> to vector<8x32xf32>
    %261 = arith.addf %259, %260 : vector<8x32xf32>
    %262 = arith.addf %164, %261 : vector<8x32xf32>
    %c1_98 = arith.constant 1 : index
    %c0_99 = arith.constant 0 : index
    %c0_100 = arith.constant 0 : index
    %263 = vector.load %arg13[%c1_98, %c0_99, %c0_100] : memref<2x1x32xf32, #tpu.memory_space<vmem>>, vector<1x1x32xf32>
    %264 = vector.shape_cast %263 : vector<1x1x32xf32> to vector<1x32xf32>
    %c1_101 = arith.constant 1 : index
    %c0_102 = arith.constant 0 : index
    %c0_103 = arith.constant 0 : index
    %265 = vector.load %arg14[%c1_101, %c0_102, %c0_103] : memref<2x1x32xf32, #tpu.memory_space<vmem>>, vector<1x1x32xf32>
    %266 = vector.shape_cast %265 : vector<1x1x32xf32> to vector<1x32xf32>
    %cst_104 = arith.constant dense<0.000000e+00> : vector<8xf32>
    %267 = vector.multi_reduction <add>, %262, %cst_104 [1] : vector<8x32xf32> to vector<8xf32>
    %268 = vector.shape_cast %267 : vector<8xf32> to vector<8x1xf32>
    %cst_105 = arith.constant 3.200000e+01 : f32
    %269 = vector.broadcast %cst_105 : f32 to vector<8x1xf32>
    %270 = arith.divf %268, %269 : vector<8x1xf32>
    %271 = vector.broadcast %270 : vector<8x1xf32> to vector<8x32xf32>
    %272 = arith.subf %262, %271 : vector<8x32xf32>
    %273 = arith.mulf %272, %272 : vector<8x32xf32>
    %cst_106 = arith.constant dense<0.000000e+00> : vector<8xf32>
    %274 = vector.multi_reduction <add>, %273, %cst_106 [1] : vector<8x32xf32> to vector<8xf32>
    %275 = vector.shape_cast %274 : vector<8xf32> to vector<8x1xf32>
    %cst_107 = arith.constant 3.200000e+01 : f32
    %276 = vector.broadcast %cst_107 : f32 to vector<8x1xf32>
    %277 = arith.divf %275, %276 : vector<8x1xf32>
    %cst_108 = arith.constant 9.99999974E-6 : f32
    %278 = vector.broadcast %cst_108 : f32 to vector<8x1xf32>
    %279 = arith.addf %277, %278 : vector<8x1xf32>
    %280 = math.rsqrt %279 : vector<8x1xf32>
    %281 = vector.broadcast %280 : vector<8x1xf32> to vector<8x32xf32>
    %282 = arith.mulf %272, %281 : vector<8x32xf32>
    %283 = vector.broadcast %264 : vector<1x32xf32> to vector<8x32xf32>
    %284 = arith.mulf %282, %283 : vector<8x32xf32>
    %285 = vector.broadcast %266 : vector<1x32xf32> to vector<8x32xf32>
    %286 = arith.addf %284, %285 : vector<8x32xf32>
    %c1_109 = arith.constant 1 : index
    %c0_110 = arith.constant 0 : index
    %c0_111 = arith.constant 0 : index
    %287 = vector.load %arg15[%c1_109, %c0_110, %c0_111] : memref<2x32x64xbf16, #tpu.memory_space<vmem>>, vector<1x32x64xbf16>
    %288 = vector.shape_cast %287 : vector<1x32x64xbf16> to vector<32x64xbf16>
    %c1_112 = arith.constant 1 : index
    %c0_113 = arith.constant 0 : index
    %c0_114 = arith.constant 0 : index
    %289 = vector.load %arg16[%c1_112, %c0_113, %c0_114] : memref<2x1x64xf32, #tpu.memory_space<vmem>>, vector<1x1x64xf32>
    %290 = vector.shape_cast %289 : vector<1x1x64xf32> to vector<1x64xf32>
    %291 = arith.truncf %286 : vector<8x32xf32> to vector<8x32xbf16>
    %cst_115 = arith.constant dense<0.000000e+00> : vector<8x64xf32>
    %292 = tpu.matmul %291, %288, %cst_115 {dimension_numbers = #tpu.dot_dimension_numbers<[1], [0], [0], [1], [0, 0, 1, 1], [], []>} : vector<8x32xbf16>, vector<32x64xbf16>, vector<8x64xf32> -> vector<8x64xf32>
    %293 = vector.broadcast %290 : vector<1x64xf32> to vector<8x64xf32>
    %294 = arith.addf %292, %293 : vector<8x64xf32>
    %cst_116 = arith.constant 0.000000e+00 : f32
    %295 = vector.broadcast %cst_116 : f32 to vector<8x64xf32>
    %296 = arith.maximumf %294, %295 : vector<8x64xf32>
    %c1_117 = arith.constant 1 : index
    %c0_118 = arith.constant 0 : index
    %c0_119 = arith.constant 0 : index
    %297 = vector.load %arg17[%c1_117, %c0_118, %c0_119] : memref<2x64x32xbf16, #tpu.memory_space<vmem>>, vector<1x64x32xbf16>
    %298 = vector.shape_cast %297 : vector<1x64x32xbf16> to vector<64x32xbf16>
    %c1_120 = arith.constant 1 : index
    %c0_121 = arith.constant 0 : index
    %c0_122 = arith.constant 0 : index
    %299 = vector.load %arg18[%c1_120, %c0_121, %c0_122] : memref<2x1x32xf32, #tpu.memory_space<vmem>>, vector<1x1x32xf32>
    %300 = vector.shape_cast %299 : vector<1x1x32xf32> to vector<1x32xf32>
    %301 = arith.truncf %296 : vector<8x64xf32> to vector<8x64xbf16>
    %cst_123 = arith.constant dense<0.000000e+00> : vector<8x32xf32>
    %302 = tpu.matmul %301, %298, %cst_123 {dimension_numbers = #tpu.dot_dimension_numbers<[1], [0], [0], [1], [0, 0, 1, 1], [], []>} : vector<8x64xbf16>, vector<64x32xbf16>, vector<8x32xf32> -> vector<8x32xf32>
    %303 = vector.broadcast %300 : vector<1x32xf32> to vector<8x32xf32>
    %304 = arith.addf %302, %303 : vector<8x32xf32>
    %305 = arith.addf %262, %304 : vector<8x32xf32>
    %c0_124 = arith.constant 0 : index
    %c0_125 = arith.constant 0 : index
    %306 = vector.load %arg19[%c0_124, %c0_125] : memref<1x32xf32, #tpu.memory_space<vmem>>, vector<1x32xf32>
    %c0_126 = arith.constant 0 : index
    %c0_127 = arith.constant 0 : index
    %307 = vector.load %arg20[%c0_126, %c0_127] : memref<1x32xf32, #tpu.memory_space<vmem>>, vector<1x32xf32>
    %cst_128 = arith.constant dense<0.000000e+00> : vector<8xf32>
    %308 = vector.multi_reduction <add>, %305, %cst_128 [1] : vector<8x32xf32> to vector<8xf32>
    %309 = vector.shape_cast %308 : vector<8xf32> to vector<8x1xf32>
    %cst_129 = arith.constant 3.200000e+01 : f32
    %310 = vector.broadcast %cst_129 : f32 to vector<8x1xf32>
    %311 = arith.divf %309, %310 : vector<8x1xf32>
    %312 = vector.broadcast %311 : vector<8x1xf32> to vector<8x32xf32>
    %313 = arith.subf %305, %312 : vector<8x32xf32>
    %314 = arith.mulf %313, %313 : vector<8x32xf32>
    %cst_130 = arith.constant dense<0.000000e+00> : vector<8xf32>
    %315 = vector.multi_reduction <add>, %314, %cst_130 [1] : vector<8x32xf32> to vector<8xf32>
    %316 = vector.shape_cast %315 : vector<8xf32> to vector<8x1xf32>
    %cst_131 = arith.constant 3.200000e+01 : f32
    %317 = vector.broadcast %cst_131 : f32 to vector<8x1xf32>
    %318 = arith.divf %316, %317 : vector<8x1xf32>
    %cst_132 = arith.constant 9.99999974E-6 : f32
    %319 = vector.broadcast %cst_132 : f32 to vector<8x1xf32>
    %320 = arith.addf %318, %319 : vector<8x1xf32>
    %321 = math.rsqrt %320 : vector<8x1xf32>
    %322 = vector.broadcast %321 : vector<8x1xf32> to vector<8x32xf32>
    %323 = arith.mulf %313, %322 : vector<8x32xf32>
    %324 = vector.broadcast %306 : vector<1x32xf32> to vector<8x32xf32>
    %325 = arith.mulf %323, %324 : vector<8x32xf32>
    %326 = vector.broadcast %307 : vector<1x32xf32> to vector<8x32xf32>
    %327 = arith.addf %325, %326 : vector<8x32xf32>
    %c0_133 = arith.constant 0 : index
    %c0_134 = arith.constant 0 : index
    %c0_135 = arith.constant 0 : index
    %328 = vector.load %arg2[%c0_133, %c0_134, %c0_135] : memref<1x8x1xi32, #tpu.memory_space<vmem>>, vector<1x8x1xi32>
    %329 = vector.shape_cast %328 : vector<1x8x1xi32> to vector<8x1xi32>
    %330 = tpu.iota {dimensions = array<i32: 1>} : vector<8x128xi32>
    %331 = vector.broadcast %329 : vector<8x1xi32> to vector<8x128xi32>
    %332 = arith.cmpi eq, %330, %331 : vector<8x128xi32>
    %cst_136 = arith.constant 5.65685415 : f32
    %cst_137 = arith.constant 0.000000e+00 : f32
    %333 = vector.broadcast %cst_136 : f32 to vector<8x128xf32>
    %334 = vector.broadcast %cst_137 : f32 to vector<8x128xf32>
    %335 = arith.select %332, %333, %334 : vector<8x128xi1>, vector<8x128xf32>
    %336 = arith.truncf %335 : vector<8x128xf32> to vector<8x128xbf16>
    %c0_138 = arith.constant 0 : index
    %c0_139 = arith.constant 0 : index
    %337 = vector.load %arg6[%c0_138, %c0_139] : memref<128x32xbf16, #tpu.memory_space<vmem>>, vector<128x32xbf16>
    %cst_140 = arith.constant dense<0.000000e+00> : vector<8x32xf32>
    %338 = tpu.matmul %336, %337, %cst_140 {dimension_numbers = #tpu.dot_dimension_numbers<[1], [0], [0], [1], [0, 0, 1, 1], [], []>} : vector<8x128xbf16>, vector<128x32xbf16>, vector<8x32xf32> -> vector<8x32xf32>
    %c0_141 = arith.constant 0 : index
    %c0_142 = arith.constant 0 : index
    %339 = vector.load %arg4[%c0_141, %c0_142] : memref<8x32xf32, #tpu.memory_space<vmem>>, vector<8x32xf32>
    %340 = arith.addf %338, %339 : vector<8x32xf32>
    %c0_143 = arith.constant 0 : index
    %c0_144 = arith.constant 0 : index
    %c0_145 = arith.constant 0 : index
    %341 = vector.load %arg21[%c0_143, %c0_144, %c0_145] : memref<2x1x32xf32, #tpu.memory_space<vmem>>, vector<1x1x32xf32>
    %342 = vector.shape_cast %341 : vector<1x1x32xf32> to vector<1x32xf32>
    %c0_146 = arith.constant 0 : index
    %c0_147 = arith.constant 0 : index
    %c0_148 = arith.constant 0 : index
    %343 = vector.load %arg22[%c0_146, %c0_147, %c0_148] : memref<2x1x32xf32, #tpu.memory_space<vmem>>, vector<1x1x32xf32>
    %344 = vector.shape_cast %343 : vector<1x1x32xf32> to vector<1x32xf32>
    %cst_149 = arith.constant dense<0.000000e+00> : vector<8xf32>
    %345 = vector.multi_reduction <add>, %340, %cst_149 [1] : vector<8x32xf32> to vector<8xf32>
    %346 = vector.shape_cast %345 : vector<8xf32> to vector<8x1xf32>
    %cst_150 = arith.constant 3.200000e+01 : f32
    %347 = vector.broadcast %cst_150 : f32 to vector<8x1xf32>
    %348 = arith.divf %346, %347 : vector<8x1xf32>
    %349 = vector.broadcast %348 : vector<8x1xf32> to vector<8x32xf32>
    %350 = arith.subf %340, %349 : vector<8x32xf32>
    %351 = arith.mulf %350, %350 : vector<8x32xf32>
    %cst_151 = arith.constant dense<0.000000e+00> : vector<8xf32>
    %352 = vector.multi_reduction <add>, %351, %cst_151 [1] : vector<8x32xf32> to vector<8xf32>
    %353 = vector.shape_cast %352 : vector<8xf32> to vector<8x1xf32>
    %cst_152 = arith.constant 3.200000e+01 : f32
    %354 = vector.broadcast %cst_152 : f32 to vector<8x1xf32>
    %355 = arith.divf %353, %354 : vector<8x1xf32>
    %cst_153 = arith.constant 9.99999974E-6 : f32
    %356 = vector.broadcast %cst_153 : f32 to vector<8x1xf32>
    %357 = arith.addf %355, %356 : vector<8x1xf32>
    %358 = math.rsqrt %357 : vector<8x1xf32>
    %359 = vector.broadcast %358 : vector<8x1xf32> to vector<8x32xf32>
    %360 = arith.mulf %350, %359 : vector<8x32xf32>
    %361 = vector.broadcast %342 : vector<1x32xf32> to vector<8x32xf32>
    %362 = arith.mulf %360, %361 : vector<8x32xf32>
    %363 = vector.broadcast %344 : vector<1x32xf32> to vector<8x32xf32>
    %364 = arith.addf %362, %363 : vector<8x32xf32>
    %c0_154 = arith.constant 0 : index
    %c0_155 = arith.constant 0 : index
    %c0_156 = arith.constant 0 : index
    %365 = vector.load %arg23[%c0_154, %c0_155, %c0_156] : memref<2x32x96xbf16, #tpu.memory_space<vmem>>, vector<1x32x96xbf16>
    %366 = vector.shape_cast %365 : vector<1x32x96xbf16> to vector<32x96xbf16>
    %c0_157 = arith.constant 0 : index
    %c0_158 = arith.constant 0 : index
    %c0_159 = arith.constant 0 : index
    %367 = vector.load %arg24[%c0_157, %c0_158, %c0_159] : memref<2x1x96xf32, #tpu.memory_space<vmem>>, vector<1x1x96xf32>
    %368 = vector.shape_cast %367 : vector<1x1x96xf32> to vector<1x96xf32>
    %369 = arith.truncf %364 : vector<8x32xf32> to vector<8x32xbf16>
    %cst_160 = arith.constant dense<0.000000e+00> : vector<8x96xf32>
    %370 = tpu.matmul %369, %366, %cst_160 {dimension_numbers = #tpu.dot_dimension_numbers<[1], [0], [0], [1], [0, 0, 1, 1], [], []>} : vector<8x32xbf16>, vector<32x96xbf16>, vector<8x96xf32> -> vector<8x96xf32>
    %371 = vector.broadcast %368 : vector<1x96xf32> to vector<8x96xf32>
    %372 = arith.addf %370, %371 : vector<8x96xf32>
    %373 = vector.extract_strided_slice %372 {offsets = [0, 0], sizes = [8, 32], strides = [1, 1]} : vector<8x96xf32> to vector<8x32xf32>
    %374 = vector.extract_strided_slice %372 {offsets = [0, 32], sizes = [8, 32], strides = [1, 1]} : vector<8x96xf32> to vector<8x32xf32>
    %375 = vector.extract_strided_slice %372 {offsets = [0, 64], sizes = [8, 32], strides = [1, 1]} : vector<8x96xf32> to vector<8x32xf32>
    %376 = vector.extract_strided_slice %373 {offsets = [0, 0], sizes = [8, 8], strides = [1, 1]} : vector<8x32xf32> to vector<8x8xf32>
    %377 = vector.extract_strided_slice %373 {offsets = [0, 8], sizes = [8, 8], strides = [1, 1]} : vector<8x32xf32> to vector<8x8xf32>
    %378 = vector.extract_strided_slice %373 {offsets = [0, 16], sizes = [8, 8], strides = [1, 1]} : vector<8x32xf32> to vector<8x8xf32>
    %379 = vector.extract_strided_slice %373 {offsets = [0, 24], sizes = [8, 8], strides = [1, 1]} : vector<8x32xf32> to vector<8x8xf32>
    %380 = vector.shape_cast %376 : vector<8x8xf32> to vector<1x8x8xf32>
    %381 = vector.shape_cast %377 : vector<8x8xf32> to vector<1x8x8xf32>
    %382 = vector.shape_cast %378 : vector<8x8xf32> to vector<1x8x8xf32>
    %383 = vector.shape_cast %379 : vector<8x8xf32> to vector<1x8x8xf32>
    %384 = tpu.concatenate %380, %381, %382, %383 in 0 : vector<1x8x8xf32>, vector<1x8x8xf32>, vector<1x8x8xf32>, vector<1x8x8xf32> -> vector<4x8x8xf32>
    %385 = arith.truncf %384 : vector<4x8x8xf32> to vector<4x8x8xbf16>
    %386 = vector.extract_strided_slice %374 {offsets = [0, 0], sizes = [8, 8], strides = [1, 1]} : vector<8x32xf32> to vector<8x8xf32>
    %387 = vector.extract_strided_slice %374 {offsets = [0, 8], sizes = [8, 8], strides = [1, 1]} : vector<8x32xf32> to vector<8x8xf32>
    %388 = vector.extract_strided_slice %374 {offsets = [0, 16], sizes = [8, 8], strides = [1, 1]} : vector<8x32xf32> to vector<8x8xf32>
    %389 = vector.extract_strided_slice %374 {offsets = [0, 24], sizes = [8, 8], strides = [1, 1]} : vector<8x32xf32> to vector<8x8xf32>
    %390 = vector.shape_cast %386 : vector<8x8xf32> to vector<1x8x8xf32>
    %391 = vector.shape_cast %387 : vector<8x8xf32> to vector<1x8x8xf32>
    %392 = vector.shape_cast %388 : vector<8x8xf32> to vector<1x8x8xf32>
    %393 = vector.shape_cast %389 : vector<8x8xf32> to vector<1x8x8xf32>
    %394 = tpu.concatenate %390, %391, %392, %393 in 0 : vector<1x8x8xf32>, vector<1x8x8xf32>, vector<1x8x8xf32>, vector<1x8x8xf32> -> vector<4x8x8xf32>
    %395 = arith.truncf %394 : vector<4x8x8xf32> to vector<4x8x8xbf16>
    %396 = vector.extract_strided_slice %375 {offsets = [0, 0], sizes = [8, 8], strides = [1, 1]} : vector<8x32xf32> to vector<8x8xf32>
    %397 = vector.extract_strided_slice %375 {offsets = [0, 8], sizes = [8, 8], strides = [1, 1]} : vector<8x32xf32> to vector<8x8xf32>
    %398 = vector.extract_strided_slice %375 {offsets = [0, 16], sizes = [8, 8], strides = [1, 1]} : vector<8x32xf32> to vector<8x8xf32>
    %399 = vector.extract_strided_slice %375 {offsets = [0, 24], sizes = [8, 8], strides = [1, 1]} : vector<8x32xf32> to vector<8x8xf32>
    %400 = vector.shape_cast %396 : vector<8x8xf32> to vector<1x8x8xf32>
    %401 = vector.shape_cast %397 : vector<8x8xf32> to vector<1x8x8xf32>
    %402 = vector.shape_cast %398 : vector<8x8xf32> to vector<1x8x8xf32>
    %403 = vector.shape_cast %399 : vector<8x8xf32> to vector<1x8x8xf32>
    %404 = tpu.concatenate %400, %401, %402, %403 in 0 : vector<1x8x8xf32>, vector<1x8x8xf32>, vector<1x8x8xf32>, vector<1x8x8xf32> -> vector<4x8x8xf32>
    %405 = arith.truncf %404 : vector<4x8x8xf32> to vector<4x8x8xbf16>
    "tpu.trace_start"() <{level = 10 : i32, message = "hqd,hkd->hqk"}> : () -> ()
    %cst_161 = arith.constant dense<0.000000e+00> : vector<4x8x8xf32>
    %406 = tpu.matmul %385, %395, %cst_161 {dimension_numbers = #tpu.dot_dimension_numbers<[2], [2], [1], [1], [0, 0, 0, 1, 1, 1], [0], [0]>} : vector<4x8x8xbf16>, vector<4x8x8xbf16>, vector<4x8x8xf32> -> vector<4x8x8xf32>
    "tpu.trace_stop"() : () -> ()
    %407 = vector.shape_cast %10 : vector<8x8xf32> to vector<1x8x8xf32>
    %408 = vector.broadcast %407 : vector<1x8x8xf32> to vector<4x8x8xf32>
    %409 = arith.addf %406, %408 : vector<4x8x8xf32>
    %cst_162 = arith.constant dense<0xFF800000> : vector<4x8xf32>
    %410 = vector.multi_reduction <maximumf>, %409, %cst_162 [2] : vector<4x8x8xf32> to vector<4x8xf32>
    %411 = vector.shape_cast %410 : vector<4x8xf32> to vector<4x8x1xf32>
    %412 = vector.broadcast %411 : vector<4x8x1xf32> to vector<4x8x8xf32>
    %413 = arith.subf %409, %412 : vector<4x8x8xf32>
    %414 = math.exp %413 : vector<4x8x8xf32>
    %cst_163 = arith.constant dense<0.000000e+00> : vector<4x8xf32>
    %415 = vector.multi_reduction <add>, %414, %cst_163 [2] : vector<4x8x8xf32> to vector<4x8xf32>
    %416 = vector.shape_cast %415 : vector<4x8xf32> to vector<4x8x1xf32>
    %417 = tpu.reciprocal %416 {approx = true} : vector<4x8x1xf32> -> vector<4x8x1xf32>
    %418 = vector.broadcast %417 : vector<4x8x1xf32> to vector<4x8x8xf32>
    %419 = arith.mulf %414, %418 : vector<4x8x8xf32>
    %420 = arith.truncf %419 : vector<4x8x8xf32> to vector<4x8x8xbf16>
    "tpu.trace_start"() <{level = 10 : i32, message = "hqk,hkd->hqd"}> : () -> ()
    %cst_164 = arith.constant dense<0.000000e+00> : vector<4x8x8xf32>
    %421 = tpu.matmul %420, %405, %cst_164 {dimension_numbers = #tpu.dot_dimension_numbers<[2], [1], [1], [2], [0, 0, 0, 1, 1, 2], [0], [0]>} : vector<4x8x8xbf16>, vector<4x8x8xbf16>, vector<4x8x8xf32> -> vector<4x8x8xf32>
    "tpu.trace_stop"() : () -> ()
    %422 = vector.extract_strided_slice %421 {offsets = [0, 0, 0], sizes = [1, 8, 8], strides = [1, 1, 1]} : vector<4x8x8xf32> to vector<1x8x8xf32>
    %423 = vector.shape_cast %422 : vector<1x8x8xf32> to vector<8x8xf32>
    %424 = vector.extract_strided_slice %421 {offsets = [1, 0, 0], sizes = [1, 8, 8], strides = [1, 1, 1]} : vector<4x8x8xf32> to vector<1x8x8xf32>
    %425 = vector.shape_cast %424 : vector<1x8x8xf32> to vector<8x8xf32>
    %426 = vector.extract_strided_slice %421 {offsets = [2, 0, 0], sizes = [1, 8, 8], strides = [1, 1, 1]} : vector<4x8x8xf32> to vector<1x8x8xf32>
    %427 = vector.shape_cast %426 : vector<1x8x8xf32> to vector<8x8xf32>
    %428 = vector.extract_strided_slice %421 {offsets = [3, 0, 0], sizes = [1, 8, 8], strides = [1, 1, 1]} : vector<4x8x8xf32> to vector<1x8x8xf32>
    %429 = vector.shape_cast %428 : vector<1x8x8xf32> to vector<8x8xf32>
    %430 = tpu.concatenate %423, %425, %427, %429 in 1 : vector<8x8xf32>, vector<8x8xf32>, vector<8x8xf32>, vector<8x8xf32> -> vector<8x32xf32>
    %c0_165 = arith.constant 0 : index
    %c0_166 = arith.constant 0 : index
    %c0_167 = arith.constant 0 : index
    %431 = vector.load %arg25[%c0_165, %c0_166, %c0_167] : memref<2x32x32xbf16, #tpu.memory_space<vmem>>, vector<1x32x32xbf16>
    %432 = vector.shape_cast %431 : vector<1x32x32xbf16> to vector<32x32xbf16>
    %c0_168 = arith.constant 0 : index
    %c0_169 = arith.constant 0 : index
    %c0_170 = arith.constant 0 : index
    %433 = vector.load %arg26[%c0_168, %c0_169, %c0_170] : memref<2x1x32xf32, #tpu.memory_space<vmem>>, vector<1x1x32xf32>
    %434 = vector.shape_cast %433 : vector<1x1x32xf32> to vector<1x32xf32>
    %435 = arith.truncf %430 : vector<8x32xf32> to vector<8x32xbf16>
    %cst_171 = arith.constant dense<0.000000e+00> : vector<8x32xf32>
    %436 = tpu.matmul %435, %432, %cst_171 {dimension_numbers = #tpu.dot_dimension_numbers<[1], [0], [0], [1], [0, 0, 1, 1], [], []>} : vector<8x32xbf16>, vector<32x32xbf16>, vector<8x32xf32> -> vector<8x32xf32>
    %437 = vector.broadcast %434 : vector<1x32xf32> to vector<8x32xf32>
    %438 = arith.addf %436, %437 : vector<8x32xf32>
    %439 = arith.addf %340, %438 : vector<8x32xf32>
    %c0_172 = arith.constant 0 : index
    %c0_173 = arith.constant 0 : index
    %c0_174 = arith.constant 0 : index
    %440 = vector.load %arg27[%c0_172, %c0_173, %c0_174] : memref<2x1x32xf32, #tpu.memory_space<vmem>>, vector<1x1x32xf32>
    %441 = vector.shape_cast %440 : vector<1x1x32xf32> to vector<1x32xf32>
    %c0_175 = arith.constant 0 : index
    %c0_176 = arith.constant 0 : index
    %c0_177 = arith.constant 0 : index
    %442 = vector.load %arg28[%c0_175, %c0_176, %c0_177] : memref<2x1x32xf32, #tpu.memory_space<vmem>>, vector<1x1x32xf32>
    %443 = vector.shape_cast %442 : vector<1x1x32xf32> to vector<1x32xf32>
    %cst_178 = arith.constant dense<0.000000e+00> : vector<8xf32>
    %444 = vector.multi_reduction <add>, %439, %cst_178 [1] : vector<8x32xf32> to vector<8xf32>
    %445 = vector.shape_cast %444 : vector<8xf32> to vector<8x1xf32>
    %cst_179 = arith.constant 3.200000e+01 : f32
    %446 = vector.broadcast %cst_179 : f32 to vector<8x1xf32>
    %447 = arith.divf %445, %446 : vector<8x1xf32>
    %448 = vector.broadcast %447 : vector<8x1xf32> to vector<8x32xf32>
    %449 = arith.subf %439, %448 : vector<8x32xf32>
    %450 = arith.mulf %449, %449 : vector<8x32xf32>
    %cst_180 = arith.constant dense<0.000000e+00> : vector<8xf32>
    %451 = vector.multi_reduction <add>, %450, %cst_180 [1] : vector<8x32xf32> to vector<8xf32>
    %452 = vector.shape_cast %451 : vector<8xf32> to vector<8x1xf32>
    %cst_181 = arith.constant 3.200000e+01 : f32
    %453 = vector.broadcast %cst_181 : f32 to vector<8x1xf32>
    %454 = arith.divf %452, %453 : vector<8x1xf32>
    %cst_182 = arith.constant 9.99999974E-6 : f32
    %455 = vector.broadcast %cst_182 : f32 to vector<8x1xf32>
    %456 = arith.addf %454, %455 : vector<8x1xf32>
    %457 = math.rsqrt %456 : vector<8x1xf32>
    %458 = vector.broadcast %457 : vector<8x1xf32> to vector<8x32xf32>
    %459 = arith.mulf %449, %458 : vector<8x32xf32>
    %460 = vector.broadcast %441 : vector<1x32xf32> to vector<8x32xf32>
    %461 = arith.mulf %459, %460 : vector<8x32xf32>
    %462 = vector.broadcast %443 : vector<1x32xf32> to vector<8x32xf32>
    %463 = arith.addf %461, %462 : vector<8x32xf32>
    %c0_183 = arith.constant 0 : index
    %c0_184 = arith.constant 0 : index
    %c0_185 = arith.constant 0 : index
    %464 = vector.load %arg29[%c0_183, %c0_184, %c0_185] : memref<2x32x32xbf16, #tpu.memory_space<vmem>>, vector<1x32x32xbf16>
    %465 = vector.shape_cast %464 : vector<1x32x32xbf16> to vector<32x32xbf16>
    %c0_186 = arith.constant 0 : index
    %c0_187 = arith.constant 0 : index
    %c0_188 = arith.constant 0 : index
    %466 = vector.load %arg30[%c0_186, %c0_187, %c0_188] : memref<2x1x32xf32, #tpu.memory_space<vmem>>, vector<1x1x32xf32>
    %467 = vector.shape_cast %466 : vector<1x1x32xf32> to vector<1x32xf32>
    %468 = arith.truncf %463 : vector<8x32xf32> to vector<8x32xbf16>
    %cst_189 = arith.constant dense<0.000000e+00> : vector<8x32xf32>
    %469 = tpu.matmul %468, %465, %cst_189 {dimension_numbers = #tpu.dot_dimension_numbers<[1], [0], [0], [1], [0, 0, 1, 1], [], []>} : vector<8x32xbf16>, vector<32x32xbf16>, vector<8x32xf32> -> vector<8x32xf32>
    %470 = vector.broadcast %467 : vector<1x32xf32> to vector<8x32xf32>
    %471 = arith.addf %469, %470 : vector<8x32xf32>
    %c0_190 = arith.constant 0 : index
    %c0_191 = arith.constant 0 : index
    %c0_192 = arith.constant 0 : index
    %472 = vector.load %arg31[%c0_190, %c0_191, %c0_192] : memref<2x32x64xbf16, #tpu.memory_space<vmem>>, vector<1x32x64xbf16>
    %473 = vector.shape_cast %472 : vector<1x32x64xbf16> to vector<32x64xbf16>
    %c0_193 = arith.constant 0 : index
    %c0_194 = arith.constant 0 : index
    %c0_195 = arith.constant 0 : index
    %474 = vector.load %arg32[%c0_193, %c0_194, %c0_195] : memref<2x1x64xf32, #tpu.memory_space<vmem>>, vector<1x1x64xf32>
    %475 = vector.shape_cast %474 : vector<1x1x64xf32> to vector<1x64xf32>
    %476 = arith.truncf %327 : vector<8x32xf32> to vector<8x32xbf16>
    %cst_196 = arith.constant dense<0.000000e+00> : vector<8x64xf32>
    %477 = tpu.matmul %476, %473, %cst_196 {dimension_numbers = #tpu.dot_dimension_numbers<[1], [0], [0], [1], [0, 0, 1, 1], [], []>} : vector<8x32xbf16>, vector<32x64xbf16>, vector<8x64xf32> -> vector<8x64xf32>
    %478 = vector.broadcast %475 : vector<1x64xf32> to vector<8x64xf32>
    %479 = arith.addf %477, %478 : vector<8x64xf32>
    %480 = vector.extract_strided_slice %479 {offsets = [0, 0], sizes = [8, 32], strides = [1, 1]} : vector<8x64xf32> to vector<8x32xf32>
    %481 = vector.extract_strided_slice %479 {offsets = [0, 32], sizes = [8, 32], strides = [1, 1]} : vector<8x64xf32> to vector<8x32xf32>
    %482 = vector.extract_strided_slice %471 {offsets = [0, 0], sizes = [8, 8], strides = [1, 1]} : vector<8x32xf32> to vector<8x8xf32>
    %483 = vector.extract_strided_slice %471 {offsets = [0, 8], sizes = [8, 8], strides = [1, 1]} : vector<8x32xf32> to vector<8x8xf32>
    %484 = vector.extract_strided_slice %471 {offsets = [0, 16], sizes = [8, 8], strides = [1, 1]} : vector<8x32xf32> to vector<8x8xf32>
    %485 = vector.extract_strided_slice %471 {offsets = [0, 24], sizes = [8, 8], strides = [1, 1]} : vector<8x32xf32> to vector<8x8xf32>
    %486 = vector.shape_cast %482 : vector<8x8xf32> to vector<1x8x8xf32>
    %487 = vector.shape_cast %483 : vector<8x8xf32> to vector<1x8x8xf32>
    %488 = vector.shape_cast %484 : vector<8x8xf32> to vector<1x8x8xf32>
    %489 = vector.shape_cast %485 : vector<8x8xf32> to vector<1x8x8xf32>
    %490 = tpu.concatenate %486, %487, %488, %489 in 0 : vector<1x8x8xf32>, vector<1x8x8xf32>, vector<1x8x8xf32>, vector<1x8x8xf32> -> vector<4x8x8xf32>
    %491 = arith.truncf %490 : vector<4x8x8xf32> to vector<4x8x8xbf16>
    %492 = vector.extract_strided_slice %480 {offsets = [0, 0], sizes = [8, 8], strides = [1, 1]} : vector<8x32xf32> to vector<8x8xf32>
    %493 = vector.extract_strided_slice %480 {offsets = [0, 8], sizes = [8, 8], strides = [1, 1]} : vector<8x32xf32> to vector<8x8xf32>
    %494 = vector.extract_strided_slice %480 {offsets = [0, 16], sizes = [8, 8], strides = [1, 1]} : vector<8x32xf32> to vector<8x8xf32>
    %495 = vector.extract_strided_slice %480 {offsets = [0, 24], sizes = [8, 8], strides = [1, 1]} : vector<8x32xf32> to vector<8x8xf32>
    %496 = vector.shape_cast %492 : vector<8x8xf32> to vector<1x8x8xf32>
    %497 = vector.shape_cast %493 : vector<8x8xf32> to vector<1x8x8xf32>
    %498 = vector.shape_cast %494 : vector<8x8xf32> to vector<1x8x8xf32>
    %499 = vector.shape_cast %495 : vector<8x8xf32> to vector<1x8x8xf32>
    %500 = tpu.concatenate %496, %497, %498, %499 in 0 : vector<1x8x8xf32>, vector<1x8x8xf32>, vector<1x8x8xf32>, vector<1x8x8xf32> -> vector<4x8x8xf32>
    %501 = arith.truncf %500 : vector<4x8x8xf32> to vector<4x8x8xbf16>
    %502 = vector.extract_strided_slice %481 {offsets = [0, 0], sizes = [8, 8], strides = [1, 1]} : vector<8x32xf32> to vector<8x8xf32>
    %503 = vector.extract_strided_slice %481 {offsets = [0, 8], sizes = [8, 8], strides = [1, 1]} : vector<8x32xf32> to vector<8x8xf32>
    %504 = vector.extract_strided_slice %481 {offsets = [0, 16], sizes = [8, 8], strides = [1, 1]} : vector<8x32xf32> to vector<8x8xf32>
    %505 = vector.extract_strided_slice %481 {offsets = [0, 24], sizes = [8, 8], strides = [1, 1]} : vector<8x32xf32> to vector<8x8xf32>
    %506 = vector.shape_cast %502 : vector<8x8xf32> to vector<1x8x8xf32>
    %507 = vector.shape_cast %503 : vector<8x8xf32> to vector<1x8x8xf32>
    %508 = vector.shape_cast %504 : vector<8x8xf32> to vector<1x8x8xf32>
    %509 = vector.shape_cast %505 : vector<8x8xf32> to vector<1x8x8xf32>
    %510 = tpu.concatenate %506, %507, %508, %509 in 0 : vector<1x8x8xf32>, vector<1x8x8xf32>, vector<1x8x8xf32>, vector<1x8x8xf32> -> vector<4x8x8xf32>
    %511 = arith.truncf %510 : vector<4x8x8xf32> to vector<4x8x8xbf16>
    "tpu.trace_start"() <{level = 10 : i32, message = "hqd,hkd->hqk"}> : () -> ()
    %cst_197 = arith.constant dense<0.000000e+00> : vector<4x8x8xf32>
    %512 = tpu.matmul %491, %501, %cst_197 {dimension_numbers = #tpu.dot_dimension_numbers<[2], [2], [1], [1], [0, 0, 0, 1, 1, 1], [0], [0]>} : vector<4x8x8xbf16>, vector<4x8x8xbf16>, vector<4x8x8xf32> -> vector<4x8x8xf32>
    "tpu.trace_stop"() : () -> ()
    %513 = vector.broadcast %4 : vector<1x1x8xf32> to vector<4x8x8xf32>
    %514 = arith.addf %512, %513 : vector<4x8x8xf32>
    %cst_198 = arith.constant dense<0xFF800000> : vector<4x8xf32>
    %515 = vector.multi_reduction <maximumf>, %514, %cst_198 [2] : vector<4x8x8xf32> to vector<4x8xf32>
    %516 = vector.shape_cast %515 : vector<4x8xf32> to vector<4x8x1xf32>
    %517 = vector.broadcast %516 : vector<4x8x1xf32> to vector<4x8x8xf32>
    %518 = arith.subf %514, %517 : vector<4x8x8xf32>
    %519 = math.exp %518 : vector<4x8x8xf32>
    %cst_199 = arith.constant dense<0.000000e+00> : vector<4x8xf32>
    %520 = vector.multi_reduction <add>, %519, %cst_199 [2] : vector<4x8x8xf32> to vector<4x8xf32>
    %521 = vector.shape_cast %520 : vector<4x8xf32> to vector<4x8x1xf32>
    %522 = tpu.reciprocal %521 {approx = true} : vector<4x8x1xf32> -> vector<4x8x1xf32>
    %523 = vector.broadcast %522 : vector<4x8x1xf32> to vector<4x8x8xf32>
    %524 = arith.mulf %519, %523 : vector<4x8x8xf32>
    %525 = arith.truncf %524 : vector<4x8x8xf32> to vector<4x8x8xbf16>
    "tpu.trace_start"() <{level = 10 : i32, message = "hqk,hkd->hqd"}> : () -> ()
    %cst_200 = arith.constant dense<0.000000e+00> : vector<4x8x8xf32>
    %526 = tpu.matmul %525, %511, %cst_200 {dimension_numbers = #tpu.dot_dimension_numbers<[2], [1], [1], [2], [0, 0, 0, 1, 1, 2], [0], [0]>} : vector<4x8x8xbf16>, vector<4x8x8xbf16>, vector<4x8x8xf32> -> vector<4x8x8xf32>
    "tpu.trace_stop"() : () -> ()
    %527 = vector.extract_strided_slice %526 {offsets = [0, 0, 0], sizes = [1, 8, 8], strides = [1, 1, 1]} : vector<4x8x8xf32> to vector<1x8x8xf32>
    %528 = vector.shape_cast %527 : vector<1x8x8xf32> to vector<8x8xf32>
    %529 = vector.extract_strided_slice %526 {offsets = [1, 0, 0], sizes = [1, 8, 8], strides = [1, 1, 1]} : vector<4x8x8xf32> to vector<1x8x8xf32>
    %530 = vector.shape_cast %529 : vector<1x8x8xf32> to vector<8x8xf32>
    %531 = vector.extract_strided_slice %526 {offsets = [2, 0, 0], sizes = [1, 8, 8], strides = [1, 1, 1]} : vector<4x8x8xf32> to vector<1x8x8xf32>
    %532 = vector.shape_cast %531 : vector<1x8x8xf32> to vector<8x8xf32>
    %533 = vector.extract_strided_slice %526 {offsets = [3, 0, 0], sizes = [1, 8, 8], strides = [1, 1, 1]} : vector<4x8x8xf32> to vector<1x8x8xf32>
    %534 = vector.shape_cast %533 : vector<1x8x8xf32> to vector<8x8xf32>
    %535 = tpu.concatenate %528, %530, %532, %534 in 1 : vector<8x8xf32>, vector<8x8xf32>, vector<8x8xf32>, vector<8x8xf32> -> vector<8x32xf32>
    %c0_201 = arith.constant 0 : index
    %c0_202 = arith.constant 0 : index
    %c0_203 = arith.constant 0 : index
    %536 = vector.load %arg33[%c0_201, %c0_202, %c0_203] : memref<2x32x32xbf16, #tpu.memory_space<vmem>>, vector<1x32x32xbf16>
    %537 = vector.shape_cast %536 : vector<1x32x32xbf16> to vector<32x32xbf16>
    %c0_204 = arith.constant 0 : index
    %c0_205 = arith.constant 0 : index
    %c0_206 = arith.constant 0 : index
    %538 = vector.load %arg34[%c0_204, %c0_205, %c0_206] : memref<2x1x32xf32, #tpu.memory_space<vmem>>, vector<1x1x32xf32>
    %539 = vector.shape_cast %538 : vector<1x1x32xf32> to vector<1x32xf32>
    %540 = arith.truncf %535 : vector<8x32xf32> to vector<8x32xbf16>
    %cst_207 = arith.constant dense<0.000000e+00> : vector<8x32xf32>
    %541 = tpu.matmul %540, %537, %cst_207 {dimension_numbers = #tpu.dot_dimension_numbers<[1], [0], [0], [1], [0, 0, 1, 1], [], []>} : vector<8x32xbf16>, vector<32x32xbf16>, vector<8x32xf32> -> vector<8x32xf32>
    %542 = vector.broadcast %539 : vector<1x32xf32> to vector<8x32xf32>
    %543 = arith.addf %541, %542 : vector<8x32xf32>
    %544 = arith.addf %439, %543 : vector<8x32xf32>
    %c0_208 = arith.constant 0 : index
    %c0_209 = arith.constant 0 : index
    %c0_210 = arith.constant 0 : index
    %545 = vector.load %arg35[%c0_208, %c0_209, %c0_210] : memref<2x1x32xf32, #tpu.memory_space<vmem>>, vector<1x1x32xf32>
    %546 = vector.shape_cast %545 : vector<1x1x32xf32> to vector<1x32xf32>
    %c0_211 = arith.constant 0 : index
    %c0_212 = arith.constant 0 : index
    %c0_213 = arith.constant 0 : index
    %547 = vector.load %arg36[%c0_211, %c0_212, %c0_213] : memref<2x1x32xf32, #tpu.memory_space<vmem>>, vector<1x1x32xf32>
    %548 = vector.shape_cast %547 : vector<1x1x32xf32> to vector<1x32xf32>
    %cst_214 = arith.constant dense<0.000000e+00> : vector<8xf32>
    %549 = vector.multi_reduction <add>, %544, %cst_214 [1] : vector<8x32xf32> to vector<8xf32>
    %550 = vector.shape_cast %549 : vector<8xf32> to vector<8x1xf32>
    %cst_215 = arith.constant 3.200000e+01 : f32
    %551 = vector.broadcast %cst_215 : f32 to vector<8x1xf32>
    %552 = arith.divf %550, %551 : vector<8x1xf32>
    %553 = vector.broadcast %552 : vector<8x1xf32> to vector<8x32xf32>
    %554 = arith.subf %544, %553 : vector<8x32xf32>
    %555 = arith.mulf %554, %554 : vector<8x32xf32>
    %cst_216 = arith.constant dense<0.000000e+00> : vector<8xf32>
    %556 = vector.multi_reduction <add>, %555, %cst_216 [1] : vector<8x32xf32> to vector<8xf32>
    %557 = vector.shape_cast %556 : vector<8xf32> to vector<8x1xf32>
    %cst_217 = arith.constant 3.200000e+01 : f32
    %558 = vector.broadcast %cst_217 : f32 to vector<8x1xf32>
    %559 = arith.divf %557, %558 : vector<8x1xf32>
    %cst_218 = arith.constant 9.99999974E-6 : f32
    %560 = vector.broadcast %cst_218 : f32 to vector<8x1xf32>
    %561 = arith.addf %559, %560 : vector<8x1xf32>
    %562 = math.rsqrt %561 : vector<8x1xf32>
    %563 = vector.broadcast %562 : vector<8x1xf32> to vector<8x32xf32>
    %564 = arith.mulf %554, %563 : vector<8x32xf32>
    %565 = vector.broadcast %546 : vector<1x32xf32> to vector<8x32xf32>
    %566 = arith.mulf %564, %565 : vector<8x32xf32>
    %567 = vector.broadcast %548 : vector<1x32xf32> to vector<8x32xf32>
    %568 = arith.addf %566, %567 : vector<8x32xf32>
    %c0_219 = arith.constant 0 : index
    %c0_220 = arith.constant 0 : index
    %c0_221 = arith.constant 0 : index
    %569 = vector.load %arg37[%c0_219, %c0_220, %c0_221] : memref<2x32x64xbf16, #tpu.memory_space<vmem>>, vector<1x32x64xbf16>
    %570 = vector.shape_cast %569 : vector<1x32x64xbf16> to vector<32x64xbf16>
    %c0_222 = arith.constant 0 : index
    %c0_223 = arith.constant 0 : index
    %c0_224 = arith.constant 0 : index
    %571 = vector.load %arg38[%c0_222, %c0_223, %c0_224] : memref<2x1x64xf32, #tpu.memory_space<vmem>>, vector<1x1x64xf32>
    %572 = vector.shape_cast %571 : vector<1x1x64xf32> to vector<1x64xf32>
    %573 = arith.truncf %568 : vector<8x32xf32> to vector<8x32xbf16>
    %cst_225 = arith.constant dense<0.000000e+00> : vector<8x64xf32>
    %574 = tpu.matmul %573, %570, %cst_225 {dimension_numbers = #tpu.dot_dimension_numbers<[1], [0], [0], [1], [0, 0, 1, 1], [], []>} : vector<8x32xbf16>, vector<32x64xbf16>, vector<8x64xf32> -> vector<8x64xf32>
    %575 = vector.broadcast %572 : vector<1x64xf32> to vector<8x64xf32>
    %576 = arith.addf %574, %575 : vector<8x64xf32>
    %cst_226 = arith.constant 0.000000e+00 : f32
    %577 = vector.broadcast %cst_226 : f32 to vector<8x64xf32>
    %578 = arith.maximumf %576, %577 : vector<8x64xf32>
    %c0_227 = arith.constant 0 : index
    %c0_228 = arith.constant 0 : index
    %c0_229 = arith.constant 0 : index
    %579 = vector.load %arg39[%c0_227, %c0_228, %c0_229] : memref<2x64x32xbf16, #tpu.memory_space<vmem>>, vector<1x64x32xbf16>
    %580 = vector.shape_cast %579 : vector<1x64x32xbf16> to vector<64x32xbf16>
    %c0_230 = arith.constant 0 : index
    %c0_231 = arith.constant 0 : index
    %c0_232 = arith.constant 0 : index
    %581 = vector.load %arg40[%c0_230, %c0_231, %c0_232] : memref<2x1x32xf32, #tpu.memory_space<vmem>>, vector<1x1x32xf32>
    %582 = vector.shape_cast %581 : vector<1x1x32xf32> to vector<1x32xf32>
    %583 = arith.truncf %578 : vector<8x64xf32> to vector<8x64xbf16>
    %cst_233 = arith.constant dense<0.000000e+00> : vector<8x32xf32>
    %584 = tpu.matmul %583, %580, %cst_233 {dimension_numbers = #tpu.dot_dimension_numbers<[1], [0], [0], [1], [0, 0, 1, 1], [], []>} : vector<8x64xbf16>, vector<64x32xbf16>, vector<8x32xf32> -> vector<8x32xf32>
    %585 = vector.broadcast %582 : vector<1x32xf32> to vector<8x32xf32>
    %586 = arith.addf %584, %585 : vector<8x32xf32>
    %587 = arith.addf %544, %586 : vector<8x32xf32>
    %c1_234 = arith.constant 1 : index
    %c0_235 = arith.constant 0 : index
    %c0_236 = arith.constant 0 : index
    %588 = vector.load %arg21[%c1_234, %c0_235, %c0_236] : memref<2x1x32xf32, #tpu.memory_space<vmem>>, vector<1x1x32xf32>
    %589 = vector.shape_cast %588 : vector<1x1x32xf32> to vector<1x32xf32>
    %c1_237 = arith.constant 1 : index
    %c0_238 = arith.constant 0 : index
    %c0_239 = arith.constant 0 : index
    %590 = vector.load %arg22[%c1_237, %c0_238, %c0_239] : memref<2x1x32xf32, #tpu.memory_space<vmem>>, vector<1x1x32xf32>
    %591 = vector.shape_cast %590 : vector<1x1x32xf32> to vector<1x32xf32>
    %cst_240 = arith.constant dense<0.000000e+00> : vector<8xf32>
    %592 = vector.multi_reduction <add>, %587, %cst_240 [1] : vector<8x32xf32> to vector<8xf32>
    %593 = vector.shape_cast %592 : vector<8xf32> to vector<8x1xf32>
    %cst_241 = arith.constant 3.200000e+01 : f32
    %594 = vector.broadcast %cst_241 : f32 to vector<8x1xf32>
    %595 = arith.divf %593, %594 : vector<8x1xf32>
    %596 = vector.broadcast %595 : vector<8x1xf32> to vector<8x32xf32>
    %597 = arith.subf %587, %596 : vector<8x32xf32>
    %598 = arith.mulf %597, %597 : vector<8x32xf32>
    %cst_242 = arith.constant dense<0.000000e+00> : vector<8xf32>
    %599 = vector.multi_reduction <add>, %598, %cst_242 [1] : vector<8x32xf32> to vector<8xf32>
    %600 = vector.shape_cast %599 : vector<8xf32> to vector<8x1xf32>
    %cst_243 = arith.constant 3.200000e+01 : f32
    %601 = vector.broadcast %cst_243 : f32 to vector<8x1xf32>
    %602 = arith.divf %600, %601 : vector<8x1xf32>
    %cst_244 = arith.constant 9.99999974E-6 : f32
    %603 = vector.broadcast %cst_244 : f32 to vector<8x1xf32>
    %604 = arith.addf %602, %603 : vector<8x1xf32>
    %605 = math.rsqrt %604 : vector<8x1xf32>
    %606 = vector.broadcast %605 : vector<8x1xf32> to vector<8x32xf32>
    %607 = arith.mulf %597, %606 : vector<8x32xf32>
    %608 = vector.broadcast %589 : vector<1x32xf32> to vector<8x32xf32>
    %609 = arith.mulf %607, %608 : vector<8x32xf32>
    %610 = vector.broadcast %591 : vector<1x32xf32> to vector<8x32xf32>
    %611 = arith.addf %609, %610 : vector<8x32xf32>
    %c1_245 = arith.constant 1 : index
    %c0_246 = arith.constant 0 : index
    %c0_247 = arith.constant 0 : index
    %612 = vector.load %arg23[%c1_245, %c0_246, %c0_247] : memref<2x32x96xbf16, #tpu.memory_space<vmem>>, vector<1x32x96xbf16>
    %613 = vector.shape_cast %612 : vector<1x32x96xbf16> to vector<32x96xbf16>
    %c1_248 = arith.constant 1 : index
    %c0_249 = arith.constant 0 : index
    %c0_250 = arith.constant 0 : index
    %614 = vector.load %arg24[%c1_248, %c0_249, %c0_250] : memref<2x1x96xf32, #tpu.memory_space<vmem>>, vector<1x1x96xf32>
    %615 = vector.shape_cast %614 : vector<1x1x96xf32> to vector<1x96xf32>
    %616 = arith.truncf %611 : vector<8x32xf32> to vector<8x32xbf16>
    %cst_251 = arith.constant dense<0.000000e+00> : vector<8x96xf32>
    %617 = tpu.matmul %616, %613, %cst_251 {dimension_numbers = #tpu.dot_dimension_numbers<[1], [0], [0], [1], [0, 0, 1, 1], [], []>} : vector<8x32xbf16>, vector<32x96xbf16>, vector<8x96xf32> -> vector<8x96xf32>
    %618 = vector.broadcast %615 : vector<1x96xf32> to vector<8x96xf32>
    %619 = arith.addf %617, %618 : vector<8x96xf32>
    %620 = vector.extract_strided_slice %619 {offsets = [0, 0], sizes = [8, 32], strides = [1, 1]} : vector<8x96xf32> to vector<8x32xf32>
    %621 = vector.extract_strided_slice %619 {offsets = [0, 32], sizes = [8, 32], strides = [1, 1]} : vector<8x96xf32> to vector<8x32xf32>
    %622 = vector.extract_strided_slice %619 {offsets = [0, 64], sizes = [8, 32], strides = [1, 1]} : vector<8x96xf32> to vector<8x32xf32>
    %623 = vector.extract_strided_slice %620 {offsets = [0, 0], sizes = [8, 8], strides = [1, 1]} : vector<8x32xf32> to vector<8x8xf32>
    %624 = vector.extract_strided_slice %620 {offsets = [0, 8], sizes = [8, 8], strides = [1, 1]} : vector<8x32xf32> to vector<8x8xf32>
    %625 = vector.extract_strided_slice %620 {offsets = [0, 16], sizes = [8, 8], strides = [1, 1]} : vector<8x32xf32> to vector<8x8xf32>
    %626 = vector.extract_strided_slice %620 {offsets = [0, 24], sizes = [8, 8], strides = [1, 1]} : vector<8x32xf32> to vector<8x8xf32>
    %627 = vector.shape_cast %623 : vector<8x8xf32> to vector<1x8x8xf32>
    %628 = vector.shape_cast %624 : vector<8x8xf32> to vector<1x8x8xf32>
    %629 = vector.shape_cast %625 : vector<8x8xf32> to vector<1x8x8xf32>
    %630 = vector.shape_cast %626 : vector<8x8xf32> to vector<1x8x8xf32>
    %631 = tpu.concatenate %627, %628, %629, %630 in 0 : vector<1x8x8xf32>, vector<1x8x8xf32>, vector<1x8x8xf32>, vector<1x8x8xf32> -> vector<4x8x8xf32>
    %632 = arith.truncf %631 : vector<4x8x8xf32> to vector<4x8x8xbf16>
    %633 = vector.extract_strided_slice %621 {offsets = [0, 0], sizes = [8, 8], strides = [1, 1]} : vector<8x32xf32> to vector<8x8xf32>
    %634 = vector.extract_strided_slice %621 {offsets = [0, 8], sizes = [8, 8], strides = [1, 1]} : vector<8x32xf32> to vector<8x8xf32>
    %635 = vector.extract_strided_slice %621 {offsets = [0, 16], sizes = [8, 8], strides = [1, 1]} : vector<8x32xf32> to vector<8x8xf32>
    %636 = vector.extract_strided_slice %621 {offsets = [0, 24], sizes = [8, 8], strides = [1, 1]} : vector<8x32xf32> to vector<8x8xf32>
    %637 = vector.shape_cast %633 : vector<8x8xf32> to vector<1x8x8xf32>
    %638 = vector.shape_cast %634 : vector<8x8xf32> to vector<1x8x8xf32>
    %639 = vector.shape_cast %635 : vector<8x8xf32> to vector<1x8x8xf32>
    %640 = vector.shape_cast %636 : vector<8x8xf32> to vector<1x8x8xf32>
    %641 = tpu.concatenate %637, %638, %639, %640 in 0 : vector<1x8x8xf32>, vector<1x8x8xf32>, vector<1x8x8xf32>, vector<1x8x8xf32> -> vector<4x8x8xf32>
    %642 = arith.truncf %641 : vector<4x8x8xf32> to vector<4x8x8xbf16>
    %643 = vector.extract_strided_slice %622 {offsets = [0, 0], sizes = [8, 8], strides = [1, 1]} : vector<8x32xf32> to vector<8x8xf32>
    %644 = vector.extract_strided_slice %622 {offsets = [0, 8], sizes = [8, 8], strides = [1, 1]} : vector<8x32xf32> to vector<8x8xf32>
    %645 = vector.extract_strided_slice %622 {offsets = [0, 16], sizes = [8, 8], strides = [1, 1]} : vector<8x32xf32> to vector<8x8xf32>
    %646 = vector.extract_strided_slice %622 {offsets = [0, 24], sizes = [8, 8], strides = [1, 1]} : vector<8x32xf32> to vector<8x8xf32>
    %647 = vector.shape_cast %643 : vector<8x8xf32> to vector<1x8x8xf32>
    %648 = vector.shape_cast %644 : vector<8x8xf32> to vector<1x8x8xf32>
    %649 = vector.shape_cast %645 : vector<8x8xf32> to vector<1x8x8xf32>
    %650 = vector.shape_cast %646 : vector<8x8xf32> to vector<1x8x8xf32>
    %651 = tpu.concatenate %647, %648, %649, %650 in 0 : vector<1x8x8xf32>, vector<1x8x8xf32>, vector<1x8x8xf32>, vector<1x8x8xf32> -> vector<4x8x8xf32>
    %652 = arith.truncf %651 : vector<4x8x8xf32> to vector<4x8x8xbf16>
    "tpu.trace_start"() <{level = 10 : i32, message = "hqd,hkd->hqk"}> : () -> ()
    %cst_252 = arith.constant dense<0.000000e+00> : vector<4x8x8xf32>
    %653 = tpu.matmul %632, %642, %cst_252 {dimension_numbers = #tpu.dot_dimension_numbers<[2], [2], [1], [1], [0, 0, 0, 1, 1, 1], [0], [0]>} : vector<4x8x8xbf16>, vector<4x8x8xbf16>, vector<4x8x8xf32> -> vector<4x8x8xf32>
    "tpu.trace_stop"() : () -> ()
    %654 = vector.shape_cast %10 : vector<8x8xf32> to vector<1x8x8xf32>
    %655 = vector.broadcast %654 : vector<1x8x8xf32> to vector<4x8x8xf32>
    %656 = arith.addf %653, %655 : vector<4x8x8xf32>
    %cst_253 = arith.constant dense<0xFF800000> : vector<4x8xf32>
    %657 = vector.multi_reduction <maximumf>, %656, %cst_253 [2] : vector<4x8x8xf32> to vector<4x8xf32>
    %658 = vector.shape_cast %657 : vector<4x8xf32> to vector<4x8x1xf32>
    %659 = vector.broadcast %658 : vector<4x8x1xf32> to vector<4x8x8xf32>
    %660 = arith.subf %656, %659 : vector<4x8x8xf32>
    %661 = math.exp %660 : vector<4x8x8xf32>
    %cst_254 = arith.constant dense<0.000000e+00> : vector<4x8xf32>
    %662 = vector.multi_reduction <add>, %661, %cst_254 [2] : vector<4x8x8xf32> to vector<4x8xf32>
    %663 = vector.shape_cast %662 : vector<4x8xf32> to vector<4x8x1xf32>
    %664 = tpu.reciprocal %663 {approx = true} : vector<4x8x1xf32> -> vector<4x8x1xf32>
    %665 = vector.broadcast %664 : vector<4x8x1xf32> to vector<4x8x8xf32>
    %666 = arith.mulf %661, %665 : vector<4x8x8xf32>
    %667 = arith.truncf %666 : vector<4x8x8xf32> to vector<4x8x8xbf16>
    "tpu.trace_start"() <{level = 10 : i32, message = "hqk,hkd->hqd"}> : () -> ()
    %cst_255 = arith.constant dense<0.000000e+00> : vector<4x8x8xf32>
    %668 = tpu.matmul %667, %652, %cst_255 {dimension_numbers = #tpu.dot_dimension_numbers<[2], [1], [1], [2], [0, 0, 0, 1, 1, 2], [0], [0]>} : vector<4x8x8xbf16>, vector<4x8x8xbf16>, vector<4x8x8xf32> -> vector<4x8x8xf32>
    "tpu.trace_stop"() : () -> ()
    %669 = vector.extract_strided_slice %668 {offsets = [0, 0, 0], sizes = [1, 8, 8], strides = [1, 1, 1]} : vector<4x8x8xf32> to vector<1x8x8xf32>
    %670 = vector.shape_cast %669 : vector<1x8x8xf32> to vector<8x8xf32>
    %671 = vector.extract_strided_slice %668 {offsets = [1, 0, 0], sizes = [1, 8, 8], strides = [1, 1, 1]} : vector<4x8x8xf32> to vector<1x8x8xf32>
    %672 = vector.shape_cast %671 : vector<1x8x8xf32> to vector<8x8xf32>
    %673 = vector.extract_strided_slice %668 {offsets = [2, 0, 0], sizes = [1, 8, 8], strides = [1, 1, 1]} : vector<4x8x8xf32> to vector<1x8x8xf32>
    %674 = vector.shape_cast %673 : vector<1x8x8xf32> to vector<8x8xf32>
    %675 = vector.extract_strided_slice %668 {offsets = [3, 0, 0], sizes = [1, 8, 8], strides = [1, 1, 1]} : vector<4x8x8xf32> to vector<1x8x8xf32>
    %676 = vector.shape_cast %675 : vector<1x8x8xf32> to vector<8x8xf32>
    %677 = tpu.concatenate %670, %672, %674, %676 in 1 : vector<8x8xf32>, vector<8x8xf32>, vector<8x8xf32>, vector<8x8xf32> -> vector<8x32xf32>
    %c1_256 = arith.constant 1 : index
    %c0_257 = arith.constant 0 : index
    %c0_258 = arith.constant 0 : index
    %678 = vector.load %arg25[%c1_256, %c0_257, %c0_258] : memref<2x32x32xbf16, #tpu.memory_space<vmem>>, vector<1x32x32xbf16>
    %679 = vector.shape_cast %678 : vector<1x32x32xbf16> to vector<32x32xbf16>
    %c1_259 = arith.constant 1 : index
    %c0_260 = arith.constant 0 : index
    %c0_261 = arith.constant 0 : index
    %680 = vector.load %arg26[%c1_259, %c0_260, %c0_261] : memref<2x1x32xf32, #tpu.memory_space<vmem>>, vector<1x1x32xf32>
    %681 = vector.shape_cast %680 : vector<1x1x32xf32> to vector<1x32xf32>
    %682 = arith.truncf %677 : vector<8x32xf32> to vector<8x32xbf16>
    %cst_262 = arith.constant dense<0.000000e+00> : vector<8x32xf32>
    %683 = tpu.matmul %682, %679, %cst_262 {dimension_numbers = #tpu.dot_dimension_numbers<[1], [0], [0], [1], [0, 0, 1, 1], [], []>} : vector<8x32xbf16>, vector<32x32xbf16>, vector<8x32xf32> -> vector<8x32xf32>
    %684 = vector.broadcast %681 : vector<1x32xf32> to vector<8x32xf32>
    %685 = arith.addf %683, %684 : vector<8x32xf32>
    %686 = arith.addf %587, %685 : vector<8x32xf32>
    %c1_263 = arith.constant 1 : index
    %c0_264 = arith.constant 0 : index
    %c0_265 = arith.constant 0 : index
    %687 = vector.load %arg27[%c1_263, %c0_264, %c0_265] : memref<2x1x32xf32, #tpu.memory_space<vmem>>, vector<1x1x32xf32>
    %688 = vector.shape_cast %687 : vector<1x1x32xf32> to vector<1x32xf32>
    %c1_266 = arith.constant 1 : index
    %c0_267 = arith.constant 0 : index
    %c0_268 = arith.constant 0 : index
    %689 = vector.load %arg28[%c1_266, %c0_267, %c0_268] : memref<2x1x32xf32, #tpu.memory_space<vmem>>, vector<1x1x32xf32>
    %690 = vector.shape_cast %689 : vector<1x1x32xf32> to vector<1x32xf32>
    %cst_269 = arith.constant dense<0.000000e+00> : vector<8xf32>
    %691 = vector.multi_reduction <add>, %686, %cst_269 [1] : vector<8x32xf32> to vector<8xf32>
    %692 = vector.shape_cast %691 : vector<8xf32> to vector<8x1xf32>
    %cst_270 = arith.constant 3.200000e+01 : f32
    %693 = vector.broadcast %cst_270 : f32 to vector<8x1xf32>
    %694 = arith.divf %692, %693 : vector<8x1xf32>
    %695 = vector.broadcast %694 : vector<8x1xf32> to vector<8x32xf32>
    %696 = arith.subf %686, %695 : vector<8x32xf32>
    %697 = arith.mulf %696, %696 : vector<8x32xf32>
    %cst_271 = arith.constant dense<0.000000e+00> : vector<8xf32>
    %698 = vector.multi_reduction <add>, %697, %cst_271 [1] : vector<8x32xf32> to vector<8xf32>
    %699 = vector.shape_cast %698 : vector<8xf32> to vector<8x1xf32>
    %cst_272 = arith.constant 3.200000e+01 : f32
    %700 = vector.broadcast %cst_272 : f32 to vector<8x1xf32>
    %701 = arith.divf %699, %700 : vector<8x1xf32>
    %cst_273 = arith.constant 9.99999974E-6 : f32
    %702 = vector.broadcast %cst_273 : f32 to vector<8x1xf32>
    %703 = arith.addf %701, %702 : vector<8x1xf32>
    %704 = math.rsqrt %703 : vector<8x1xf32>
    %705 = vector.broadcast %704 : vector<8x1xf32> to vector<8x32xf32>
    %706 = arith.mulf %696, %705 : vector<8x32xf32>
    %707 = vector.broadcast %688 : vector<1x32xf32> to vector<8x32xf32>
    %708 = arith.mulf %706, %707 : vector<8x32xf32>
    %709 = vector.broadcast %690 : vector<1x32xf32> to vector<8x32xf32>
    %710 = arith.addf %708, %709 : vector<8x32xf32>
    %c1_274 = arith.constant 1 : index
    %c0_275 = arith.constant 0 : index
    %c0_276 = arith.constant 0 : index
    %711 = vector.load %arg29[%c1_274, %c0_275, %c0_276] : memref<2x32x32xbf16, #tpu.memory_space<vmem>>, vector<1x32x32xbf16>
    %712 = vector.shape_cast %711 : vector<1x32x32xbf16> to vector<32x32xbf16>
    %c1_277 = arith.constant 1 : index
    %c0_278 = arith.constant 0 : index
    %c0_279 = arith.constant 0 : index
    %713 = vector.load %arg30[%c1_277, %c0_278, %c0_279] : memref<2x1x32xf32, #tpu.memory_space<vmem>>, vector<1x1x32xf32>
    %714 = vector.shape_cast %713 : vector<1x1x32xf32> to vector<1x32xf32>
    %715 = arith.truncf %710 : vector<8x32xf32> to vector<8x32xbf16>
    %cst_280 = arith.constant dense<0.000000e+00> : vector<8x32xf32>
    %716 = tpu.matmul %715, %712, %cst_280 {dimension_numbers = #tpu.dot_dimension_numbers<[1], [0], [0], [1], [0, 0, 1, 1], [], []>} : vector<8x32xbf16>, vector<32x32xbf16>, vector<8x32xf32> -> vector<8x32xf32>
    %717 = vector.broadcast %714 : vector<1x32xf32> to vector<8x32xf32>
    %718 = arith.addf %716, %717 : vector<8x32xf32>
    %c1_281 = arith.constant 1 : index
    %c0_282 = arith.constant 0 : index
    %c0_283 = arith.constant 0 : index
    %719 = vector.load %arg31[%c1_281, %c0_282, %c0_283] : memref<2x32x64xbf16, #tpu.memory_space<vmem>>, vector<1x32x64xbf16>
    %720 = vector.shape_cast %719 : vector<1x32x64xbf16> to vector<32x64xbf16>
    %c1_284 = arith.constant 1 : index
    %c0_285 = arith.constant 0 : index
    %c0_286 = arith.constant 0 : index
    %721 = vector.load %arg32[%c1_284, %c0_285, %c0_286] : memref<2x1x64xf32, #tpu.memory_space<vmem>>, vector<1x1x64xf32>
    %722 = vector.shape_cast %721 : vector<1x1x64xf32> to vector<1x64xf32>
    %723 = arith.truncf %327 : vector<8x32xf32> to vector<8x32xbf16>
    %cst_287 = arith.constant dense<0.000000e+00> : vector<8x64xf32>
    %724 = tpu.matmul %723, %720, %cst_287 {dimension_numbers = #tpu.dot_dimension_numbers<[1], [0], [0], [1], [0, 0, 1, 1], [], []>} : vector<8x32xbf16>, vector<32x64xbf16>, vector<8x64xf32> -> vector<8x64xf32>
    %725 = vector.broadcast %722 : vector<1x64xf32> to vector<8x64xf32>
    %726 = arith.addf %724, %725 : vector<8x64xf32>
    %727 = vector.extract_strided_slice %726 {offsets = [0, 0], sizes = [8, 32], strides = [1, 1]} : vector<8x64xf32> to vector<8x32xf32>
    %728 = vector.extract_strided_slice %726 {offsets = [0, 32], sizes = [8, 32], strides = [1, 1]} : vector<8x64xf32> to vector<8x32xf32>
    %729 = vector.extract_strided_slice %718 {offsets = [0, 0], sizes = [8, 8], strides = [1, 1]} : vector<8x32xf32> to vector<8x8xf32>
    %730 = vector.extract_strided_slice %718 {offsets = [0, 8], sizes = [8, 8], strides = [1, 1]} : vector<8x32xf32> to vector<8x8xf32>
    %731 = vector.extract_strided_slice %718 {offsets = [0, 16], sizes = [8, 8], strides = [1, 1]} : vector<8x32xf32> to vector<8x8xf32>
    %732 = vector.extract_strided_slice %718 {offsets = [0, 24], sizes = [8, 8], strides = [1, 1]} : vector<8x32xf32> to vector<8x8xf32>
    %733 = vector.shape_cast %729 : vector<8x8xf32> to vector<1x8x8xf32>
    %734 = vector.shape_cast %730 : vector<8x8xf32> to vector<1x8x8xf32>
    %735 = vector.shape_cast %731 : vector<8x8xf32> to vector<1x8x8xf32>
    %736 = vector.shape_cast %732 : vector<8x8xf32> to vector<1x8x8xf32>
    %737 = tpu.concatenate %733, %734, %735, %736 in 0 : vector<1x8x8xf32>, vector<1x8x8xf32>, vector<1x8x8xf32>, vector<1x8x8xf32> -> vector<4x8x8xf32>
    %738 = arith.truncf %737 : vector<4x8x8xf32> to vector<4x8x8xbf16>
    %739 = vector.extract_strided_slice %727 {offsets = [0, 0], sizes = [8, 8], strides = [1, 1]} : vector<8x32xf32> to vector<8x8xf32>
    %740 = vector.extract_strided_slice %727 {offsets = [0, 8], sizes = [8, 8], strides = [1, 1]} : vector<8x32xf32> to vector<8x8xf32>
    %741 = vector.extract_strided_slice %727 {offsets = [0, 16], sizes = [8, 8], strides = [1, 1]} : vector<8x32xf32> to vector<8x8xf32>
    %742 = vector.extract_strided_slice %727 {offsets = [0, 24], sizes = [8, 8], strides = [1, 1]} : vector<8x32xf32> to vector<8x8xf32>
    %743 = vector.shape_cast %739 : vector<8x8xf32> to vector<1x8x8xf32>
    %744 = vector.shape_cast %740 : vector<8x8xf32> to vector<1x8x8xf32>
    %745 = vector.shape_cast %741 : vector<8x8xf32> to vector<1x8x8xf32>
    %746 = vector.shape_cast %742 : vector<8x8xf32> to vector<1x8x8xf32>
    %747 = tpu.concatenate %743, %744, %745, %746 in 0 : vector<1x8x8xf32>, vector<1x8x8xf32>, vector<1x8x8xf32>, vector<1x8x8xf32> -> vector<4x8x8xf32>
    %748 = arith.truncf %747 : vector<4x8x8xf32> to vector<4x8x8xbf16>
    %749 = vector.extract_strided_slice %728 {offsets = [0, 0], sizes = [8, 8], strides = [1, 1]} : vector<8x32xf32> to vector<8x8xf32>
    %750 = vector.extract_strided_slice %728 {offsets = [0, 8], sizes = [8, 8], strides = [1, 1]} : vector<8x32xf32> to vector<8x8xf32>
    %751 = vector.extract_strided_slice %728 {offsets = [0, 16], sizes = [8, 8], strides = [1, 1]} : vector<8x32xf32> to vector<8x8xf32>
    %752 = vector.extract_strided_slice %728 {offsets = [0, 24], sizes = [8, 8], strides = [1, 1]} : vector<8x32xf32> to vector<8x8xf32>
    %753 = vector.shape_cast %749 : vector<8x8xf32> to vector<1x8x8xf32>
    %754 = vector.shape_cast %750 : vector<8x8xf32> to vector<1x8x8xf32>
    %755 = vector.shape_cast %751 : vector<8x8xf32> to vector<1x8x8xf32>
    %756 = vector.shape_cast %752 : vector<8x8xf32> to vector<1x8x8xf32>
    %757 = tpu.concatenate %753, %754, %755, %756 in 0 : vector<1x8x8xf32>, vector<1x8x8xf32>, vector<1x8x8xf32>, vector<1x8x8xf32> -> vector<4x8x8xf32>
    %758 = arith.truncf %757 : vector<4x8x8xf32> to vector<4x8x8xbf16>
    "tpu.trace_start"() <{level = 10 : i32, message = "hqd,hkd->hqk"}> : () -> ()
    %cst_288 = arith.constant dense<0.000000e+00> : vector<4x8x8xf32>
    %759 = tpu.matmul %738, %748, %cst_288 {dimension_numbers = #tpu.dot_dimension_numbers<[2], [2], [1], [1], [0, 0, 0, 1, 1, 1], [0], [0]>} : vector<4x8x8xbf16>, vector<4x8x8xbf16>, vector<4x8x8xf32> -> vector<4x8x8xf32>
    "tpu.trace_stop"() : () -> ()
    %760 = vector.broadcast %4 : vector<1x1x8xf32> to vector<4x8x8xf32>
    %761 = arith.addf %759, %760 : vector<4x8x8xf32>
    %cst_289 = arith.constant dense<0xFF800000> : vector<4x8xf32>
    %762 = vector.multi_reduction <maximumf>, %761, %cst_289 [2] : vector<4x8x8xf32> to vector<4x8xf32>
    %763 = vector.shape_cast %762 : vector<4x8xf32> to vector<4x8x1xf32>
    %764 = vector.broadcast %763 : vector<4x8x1xf32> to vector<4x8x8xf32>
    %765 = arith.subf %761, %764 : vector<4x8x8xf32>
    %766 = math.exp %765 : vector<4x8x8xf32>
    %cst_290 = arith.constant dense<0.000000e+00> : vector<4x8xf32>
    %767 = vector.multi_reduction <add>, %766, %cst_290 [2] : vector<4x8x8xf32> to vector<4x8xf32>
    %768 = vector.shape_cast %767 : vector<4x8xf32> to vector<4x8x1xf32>
    %769 = tpu.reciprocal %768 {approx = true} : vector<4x8x1xf32> -> vector<4x8x1xf32>
    %770 = vector.broadcast %769 : vector<4x8x1xf32> to vector<4x8x8xf32>
    %771 = arith.mulf %766, %770 : vector<4x8x8xf32>
    %772 = arith.truncf %771 : vector<4x8x8xf32> to vector<4x8x8xbf16>
    "tpu.trace_start"() <{level = 10 : i32, message = "hqk,hkd->hqd"}> : () -> ()
    %cst_291 = arith.constant dense<0.000000e+00> : vector<4x8x8xf32>
    %773 = tpu.matmul %772, %758, %cst_291 {dimension_numbers = #tpu.dot_dimension_numbers<[2], [1], [1], [2], [0, 0, 0, 1, 1, 2], [0], [0]>} : vector<4x8x8xbf16>, vector<4x8x8xbf16>, vector<4x8x8xf32> -> vector<4x8x8xf32>
    "tpu.trace_stop"() : () -> ()
    %774 = vector.extract_strided_slice %773 {offsets = [0, 0, 0], sizes = [1, 8, 8], strides = [1, 1, 1]} : vector<4x8x8xf32> to vector<1x8x8xf32>
    %775 = vector.shape_cast %774 : vector<1x8x8xf32> to vector<8x8xf32>
    %776 = vector.extract_strided_slice %773 {offsets = [1, 0, 0], sizes = [1, 8, 8], strides = [1, 1, 1]} : vector<4x8x8xf32> to vector<1x8x8xf32>
    %777 = vector.shape_cast %776 : vector<1x8x8xf32> to vector<8x8xf32>
    %778 = vector.extract_strided_slice %773 {offsets = [2, 0, 0], sizes = [1, 8, 8], strides = [1, 1, 1]} : vector<4x8x8xf32> to vector<1x8x8xf32>
    %779 = vector.shape_cast %778 : vector<1x8x8xf32> to vector<8x8xf32>
    %780 = vector.extract_strided_slice %773 {offsets = [3, 0, 0], sizes = [1, 8, 8], strides = [1, 1, 1]} : vector<4x8x8xf32> to vector<1x8x8xf32>
    %781 = vector.shape_cast %780 : vector<1x8x8xf32> to vector<8x8xf32>
    %782 = tpu.concatenate %775, %777, %779, %781 in 1 : vector<8x8xf32>, vector<8x8xf32>, vector<8x8xf32>, vector<8x8xf32> -> vector<8x32xf32>
    %c1_292 = arith.constant 1 : index
    %c0_293 = arith.constant 0 : index
    %c0_294 = arith.constant 0 : index
    %783 = vector.load %arg33[%c1_292, %c0_293, %c0_294] : memref<2x32x32xbf16, #tpu.memory_space<vmem>>, vector<1x32x32xbf16>
    %784 = vector.shape_cast %783 : vector<1x32x32xbf16> to vector<32x32xbf16>
    %c1_295 = arith.constant 1 : index
    %c0_296 = arith.constant 0 : index
    %c0_297 = arith.constant 0 : index
    %785 = vector.load %arg34[%c1_295, %c0_296, %c0_297] : memref<2x1x32xf32, #tpu.memory_space<vmem>>, vector<1x1x32xf32>
    %786 = vector.shape_cast %785 : vector<1x1x32xf32> to vector<1x32xf32>
    %787 = arith.truncf %782 : vector<8x32xf32> to vector<8x32xbf16>
    %cst_298 = arith.constant dense<0.000000e+00> : vector<8x32xf32>
    %788 = tpu.matmul %787, %784, %cst_298 {dimension_numbers = #tpu.dot_dimension_numbers<[1], [0], [0], [1], [0, 0, 1, 1], [], []>} : vector<8x32xbf16>, vector<32x32xbf16>, vector<8x32xf32> -> vector<8x32xf32>
    %789 = vector.broadcast %786 : vector<1x32xf32> to vector<8x32xf32>
    %790 = arith.addf %788, %789 : vector<8x32xf32>
    %791 = arith.addf %686, %790 : vector<8x32xf32>
    %c1_299 = arith.constant 1 : index
    %c0_300 = arith.constant 0 : index
    %c0_301 = arith.constant 0 : index
    %792 = vector.load %arg35[%c1_299, %c0_300, %c0_301] : memref<2x1x32xf32, #tpu.memory_space<vmem>>, vector<1x1x32xf32>
    %793 = vector.shape_cast %792 : vector<1x1x32xf32> to vector<1x32xf32>
    %c1_302 = arith.constant 1 : index
    %c0_303 = arith.constant 0 : index
    %c0_304 = arith.constant 0 : index
    %794 = vector.load %arg36[%c1_302, %c0_303, %c0_304] : memref<2x1x32xf32, #tpu.memory_space<vmem>>, vector<1x1x32xf32>
    %795 = vector.shape_cast %794 : vector<1x1x32xf32> to vector<1x32xf32>
    %cst_305 = arith.constant dense<0.000000e+00> : vector<8xf32>
    %796 = vector.multi_reduction <add>, %791, %cst_305 [1] : vector<8x32xf32> to vector<8xf32>
    %797 = vector.shape_cast %796 : vector<8xf32> to vector<8x1xf32>
    %cst_306 = arith.constant 3.200000e+01 : f32
    %798 = vector.broadcast %cst_306 : f32 to vector<8x1xf32>
    %799 = arith.divf %797, %798 : vector<8x1xf32>
    %800 = vector.broadcast %799 : vector<8x1xf32> to vector<8x32xf32>
    %801 = arith.subf %791, %800 : vector<8x32xf32>
    %802 = arith.mulf %801, %801 : vector<8x32xf32>
    %cst_307 = arith.constant dense<0.000000e+00> : vector<8xf32>
    %803 = vector.multi_reduction <add>, %802, %cst_307 [1] : vector<8x32xf32> to vector<8xf32>
    %804 = vector.shape_cast %803 : vector<8xf32> to vector<8x1xf32>
    %cst_308 = arith.constant 3.200000e+01 : f32
    %805 = vector.broadcast %cst_308 : f32 to vector<8x1xf32>
    %806 = arith.divf %804, %805 : vector<8x1xf32>
    %cst_309 = arith.constant 9.99999974E-6 : f32
    %807 = vector.broadcast %cst_309 : f32 to vector<8x1xf32>
    %808 = arith.addf %806, %807 : vector<8x1xf32>
    %809 = math.rsqrt %808 : vector<8x1xf32>
    %810 = vector.broadcast %809 : vector<8x1xf32> to vector<8x32xf32>
    %811 = arith.mulf %801, %810 : vector<8x32xf32>
    %812 = vector.broadcast %793 : vector<1x32xf32> to vector<8x32xf32>
    %813 = arith.mulf %811, %812 : vector<8x32xf32>
    %814 = vector.broadcast %795 : vector<1x32xf32> to vector<8x32xf32>
    %815 = arith.addf %813, %814 : vector<8x32xf32>
    %c1_310 = arith.constant 1 : index
    %c0_311 = arith.constant 0 : index
    %c0_312 = arith.constant 0 : index
    %816 = vector.load %arg37[%c1_310, %c0_311, %c0_312] : memref<2x32x64xbf16, #tpu.memory_space<vmem>>, vector<1x32x64xbf16>
    %817 = vector.shape_cast %816 : vector<1x32x64xbf16> to vector<32x64xbf16>
    %c1_313 = arith.constant 1 : index
    %c0_314 = arith.constant 0 : index
    %c0_315 = arith.constant 0 : index
    %818 = vector.load %arg38[%c1_313, %c0_314, %c0_315] : memref<2x1x64xf32, #tpu.memory_space<vmem>>, vector<1x1x64xf32>
    %819 = vector.shape_cast %818 : vector<1x1x64xf32> to vector<1x64xf32>
    %820 = arith.truncf %815 : vector<8x32xf32> to vector<8x32xbf16>
    %cst_316 = arith.constant dense<0.000000e+00> : vector<8x64xf32>
    %821 = tpu.matmul %820, %817, %cst_316 {dimension_numbers = #tpu.dot_dimension_numbers<[1], [0], [0], [1], [0, 0, 1, 1], [], []>} : vector<8x32xbf16>, vector<32x64xbf16>, vector<8x64xf32> -> vector<8x64xf32>
    %822 = vector.broadcast %819 : vector<1x64xf32> to vector<8x64xf32>
    %823 = arith.addf %821, %822 : vector<8x64xf32>
    %cst_317 = arith.constant 0.000000e+00 : f32
    %824 = vector.broadcast %cst_317 : f32 to vector<8x64xf32>
    %825 = arith.maximumf %823, %824 : vector<8x64xf32>
    %c1_318 = arith.constant 1 : index
    %c0_319 = arith.constant 0 : index
    %c0_320 = arith.constant 0 : index
    %826 = vector.load %arg39[%c1_318, %c0_319, %c0_320] : memref<2x64x32xbf16, #tpu.memory_space<vmem>>, vector<1x64x32xbf16>
    %827 = vector.shape_cast %826 : vector<1x64x32xbf16> to vector<64x32xbf16>
    %c1_321 = arith.constant 1 : index
    %c0_322 = arith.constant 0 : index
    %c0_323 = arith.constant 0 : index
    %828 = vector.load %arg40[%c1_321, %c0_322, %c0_323] : memref<2x1x32xf32, #tpu.memory_space<vmem>>, vector<1x1x32xf32>
    %829 = vector.shape_cast %828 : vector<1x1x32xf32> to vector<1x32xf32>
    %830 = arith.truncf %825 : vector<8x64xf32> to vector<8x64xbf16>
    %cst_324 = arith.constant dense<0.000000e+00> : vector<8x32xf32>
    %831 = tpu.matmul %830, %827, %cst_324 {dimension_numbers = #tpu.dot_dimension_numbers<[1], [0], [0], [1], [0, 0, 1, 1], [], []>} : vector<8x64xbf16>, vector<64x32xbf16>, vector<8x32xf32> -> vector<8x32xf32>
    %832 = vector.broadcast %829 : vector<1x32xf32> to vector<8x32xf32>
    %833 = arith.addf %831, %832 : vector<8x32xf32>
    %834 = arith.addf %791, %833 : vector<8x32xf32>
    %c0_325 = arith.constant 0 : index
    %c0_326 = arith.constant 0 : index
    %835 = vector.load %arg41[%c0_325, %c0_326] : memref<1x32xf32, #tpu.memory_space<vmem>>, vector<1x32xf32>
    %c0_327 = arith.constant 0 : index
    %c0_328 = arith.constant 0 : index
    %836 = vector.load %arg42[%c0_327, %c0_328] : memref<1x32xf32, #tpu.memory_space<vmem>>, vector<1x32xf32>
    %cst_329 = arith.constant dense<0.000000e+00> : vector<8xf32>
    %837 = vector.multi_reduction <add>, %834, %cst_329 [1] : vector<8x32xf32> to vector<8xf32>
    %838 = vector.shape_cast %837 : vector<8xf32> to vector<8x1xf32>
    %cst_330 = arith.constant 3.200000e+01 : f32
    %839 = vector.broadcast %cst_330 : f32 to vector<8x1xf32>
    %840 = arith.divf %838, %839 : vector<8x1xf32>
    %841 = vector.broadcast %840 : vector<8x1xf32> to vector<8x32xf32>
    %842 = arith.subf %834, %841 : vector<8x32xf32>
    %843 = arith.mulf %842, %842 : vector<8x32xf32>
    %cst_331 = arith.constant dense<0.000000e+00> : vector<8xf32>
    %844 = vector.multi_reduction <add>, %843, %cst_331 [1] : vector<8x32xf32> to vector<8xf32>
    %845 = vector.shape_cast %844 : vector<8xf32> to vector<8x1xf32>
    %cst_332 = arith.constant 3.200000e+01 : f32
    %846 = vector.broadcast %cst_332 : f32 to vector<8x1xf32>
    %847 = arith.divf %845, %846 : vector<8x1xf32>
    %cst_333 = arith.constant 9.99999974E-6 : f32
    %848 = vector.broadcast %cst_333 : f32 to vector<8x1xf32>
    %849 = arith.addf %847, %848 : vector<8x1xf32>
    %850 = math.rsqrt %849 : vector<8x1xf32>
    %851 = vector.broadcast %850 : vector<8x1xf32> to vector<8x32xf32>
    %852 = arith.mulf %842, %851 : vector<8x32xf32>
    %853 = vector.broadcast %835 : vector<1x32xf32> to vector<8x32xf32>
    %854 = arith.mulf %852, %853 : vector<8x32xf32>
    %855 = vector.broadcast %836 : vector<1x32xf32> to vector<8x32xf32>
    %856 = arith.addf %854, %855 : vector<8x32xf32>
    %857 = arith.truncf %856 : vector<8x32xf32> to vector<8x32xbf16>
    %c0_334 = arith.constant 0 : index
    %c0_335 = arith.constant 0 : index
    %858 = vector.load %arg6[%c0_334, %c0_335] : memref<128x32xbf16, #tpu.memory_space<vmem>>, vector<128x32xbf16>
    "tpu.trace_start"() <{level = 10 : i32, message = "td,vd->tv"}> : () -> ()
    %cst_336 = arith.constant dense<0.000000e+00> : vector<8x128xf32>
    %859 = tpu.matmul %857, %858, %cst_336 {dimension_numbers = #tpu.dot_dimension_numbers<[1], [1], [0], [0], [0, 0, 1, 0], [], []>} : vector<8x32xbf16>, vector<128x32xbf16>, vector<8x128xf32> -> vector<8x128xf32>
    "tpu.trace_stop"() : () -> ()
    %c0_337 = arith.constant 0 : index
    %c0_338 = arith.constant 0 : index
    %c0_339 = arith.constant 0 : index
    %860 = vector.load %arg43[%c0_337, %c0_338, %c0_339] : memref<1x8x128xf32, #tpu.memory_space<vmem>>, vector<1x8x128xf32>
    %861 = vector.shape_cast %860 : vector<1x8x128xf32> to vector<8x128xf32>
    %862 = vector.shape_cast %859 : vector<8x128xf32> to vector<1x8x128xf32>
    tpu.vector_store %arg43[%c0_337, %c0_338, %c0_339], %862 {strides = array<i32>} : memref<1x8x128xf32, #tpu.memory_space<vmem>>, vector<1x8x128xf32>,
    return
  }
  func.func @transform_0(%arg0: i32) -> (i32, i32, i32) {
    %c0_i32 = arith.constant 0 : i32
    %c0_i32_0 = arith.constant 0 : i32
    %c0_i32_1 = arith.constant 0 : i32
    return %arg0, %c0_i32, %c0_i32_0 : i32, i32, i32
  }
  func.func @transform_1(%arg0: i32) -> (i32, i32, i32) {
    %c0_i32 = arith.constant 0 : i32
    %c0_i32_0 = arith.constant 0 : i32
    %c0_i32_1 = arith.constant 0 : i32
    return %arg0, %c0_i32, %c0_i32_0 : i32, i32, i32
  }
  func.func @transform_2(%arg0: i32) -> (i32, i32) {
    %c0_i32 = arith.constant 0 : i32
    %c0_i32_0 = arith.constant 0 : i32
    %c0_i32_1 = arith.constant 0 : i32
    return %c0_i32, %c0_i32_0 : i32, i32
  }
  func.func @transform_3(%arg0: i32) -> (i32, i32) {
    %c0_i32 = arith.constant 0 : i32
    %c0_i32_0 = arith.constant 0 : i32
    %c0_i32_1 = arith.constant 0 : i32
    return %c0_i32, %c0_i32_0 : i32, i32
  }
  func.func @transform_4(%arg0: i32) -> (i32, i32, i32) {
    %c0_i32 = arith.constant 0 : i32
    %c0_i32_0 = arith.constant 0 : i32
    %c0_i32_1 = arith.constant 0 : i32
    return %arg0, %c0_i32, %c0_i32_0 : i32, i32, i32
  }
  func.func @transform_5(%arg0: i32) -> (i32, i32) {
    %c0_i32 = arith.constant 0 : i32
    %c0_i32_0 = arith.constant 0 : i32
    %c0_i32_1 = arith.constant 0 : i32
    return %c0_i32, %c0_i32_0 : i32, i32
  }
  func.func @transform_6(%arg0: i32) -> (i32, i32, i32) {
    %c0_i32 = arith.constant 0 : i32
    %c0_i32_0 = arith.constant 0 : i32
    %c0_i32_1 = arith.constant 0 : i32
    %c0_i32_2 = arith.constant 0 : i32
    return %c0_i32, %c0_i32_0, %c0_i32_1 : i32, i32, i32
  }
  func.func @transform_7(%arg0: i32) -> (i32, i32, i32) {
    %c0_i32 = arith.constant 0 : i32
    %c0_i32_0 = arith.constant 0 : i32
    %c0_i32_1 = arith.constant 0 : i32
    %c0_i32_2 = arith.constant 0 : i32
    return %c0_i32, %c0_i32_0, %c0_i32_1 : i32, i32, i32
  }
  func.func @transform_8(%arg0: i32) -> (i32, i32, i32) {
    %c0_i32 = arith.constant 0 : i32
    %c0_i32_0 = arith.constant 0 : i32
    %c0_i32_1 = arith.constant 0 : i32
    %c0_i32_2 = arith.constant 0 : i32
    return %c0_i32, %c0_i32_0, %c0_i32_1 : i32, i32, i32
  }
  func.func @transform_9(%arg0: i32) -> (i32, i32, i32) {
    %c0_i32 = arith.constant 0 : i32
    %c0_i32_0 = arith.constant 0 : i32
    %c0_i32_1 = arith.constant 0 : i32
    %c0_i32_2 = arith.constant 0 : i32
    return %c0_i32, %c0_i32_0, %c0_i32_1 : i32, i32, i32
  }
  func.func @transform_10(%arg0: i32) -> (i32, i32, i32) {
    %c0_i32 = arith.constant 0 : i32
    %c0_i32_0 = arith.constant 0 : i32
    %c0_i32_1 = arith.constant 0 : i32
    %c0_i32_2 = arith.constant 0 : i32
    return %c0_i32, %c0_i32_0, %c0_i32_1 : i32, i32, i32
  }
  func.func @transform_11(%arg0: i32) -> (i32, i32, i32) {
    %c0_i32 = arith.constant 0 : i32
    %c0_i32_0 = arith.constant 0 : i32
    %c0_i32_1 = arith.constant 0 : i32
    %c0_i32_2 = arith.constant 0 : i32
    return %c0_i32, %c0_i32_0, %c0_i32_1 : i32, i32, i32
  }
  func.func @transform_12(%arg0: i32) -> (i32, i32, i32) {
    %c0_i32 = arith.constant 0 : i32
    %c0_i32_0 = arith.constant 0 : i32
    %c0_i32_1 = arith.constant 0 : i32
    %c0_i32_2 = arith.constant 0 : i32
    return %c0_i32, %c0_i32_0, %c0_i32_1 : i32, i32, i32
  }
  func.func @transform_13(%arg0: i32) -> (i32, i32, i32) {
    %c0_i32 = arith.constant 0 : i32
    %c0_i32_0 = arith.constant 0 : i32
    %c0_i32_1 = arith.constant 0 : i32
    %c0_i32_2 = arith.constant 0 : i32
    return %c0_i32, %c0_i32_0, %c0_i32_1 : i32, i32, i32
  }
  func.func @transform_14(%arg0: i32) -> (i32, i32, i32) {
    %c0_i32 = arith.constant 0 : i32
    %c0_i32_0 = arith.constant 0 : i32
    %c0_i32_1 = arith.constant 0 : i32
    %c0_i32_2 = arith.constant 0 : i32
    return %c0_i32, %c0_i32_0, %c0_i32_1 : i32, i32, i32
  }
  func.func @transform_15(%arg0: i32) -> (i32, i32, i32) {
    %c0_i32 = arith.constant 0 : i32
    %c0_i32_0 = arith.constant 0 : i32
    %c0_i32_1 = arith.constant 0 : i32
    %c0_i32_2 = arith.constant 0 : i32
    return %c0_i32, %c0_i32_0, %c0_i32_1 : i32, i32, i32
  }
  func.func @transform_16(%arg0: i32) -> (i32, i32, i32) {
    %c0_i32 = arith.constant 0 : i32
    %c0_i32_0 = arith.constant 0 : i32
    %c0_i32_1 = arith.constant 0 : i32
    %c0_i32_2 = arith.constant 0 : i32
    return %c0_i32, %c0_i32_0, %c0_i32_1 : i32, i32, i32
  }
  func.func @transform_17(%arg0: i32) -> (i32, i32, i32) {
    %c0_i32 = arith.constant 0 : i32
    %c0_i32_0 = arith.constant 0 : i32
    %c0_i32_1 = arith.constant 0 : i32
    %c0_i32_2 = arith.constant 0 : i32
    return %c0_i32, %c0_i32_0, %c0_i32_1 : i32, i32, i32
  }
  func.func @transform_18(%arg0: i32) -> (i32, i32) {
    %c0_i32 = arith.constant 0 : i32
    %c0_i32_0 = arith.constant 0 : i32
    %c0_i32_1 = arith.constant 0 : i32
    return %c0_i32, %c0_i32_0 : i32, i32
  }
  func.func @transform_19(%arg0: i32) -> (i32, i32) {
    %c0_i32 = arith.constant 0 : i32
    %c0_i32_0 = arith.constant 0 : i32
    %c0_i32_1 = arith.constant 0 : i32
    return %c0_i32, %c0_i32_0 : i32, i32
  }
  func.func @transform_20(%arg0: i32) -> (i32, i32, i32) {
    %c0_i32 = arith.constant 0 : i32
    %c0_i32_0 = arith.constant 0 : i32
    %c0_i32_1 = arith.constant 0 : i32
    %c0_i32_2 = arith.constant 0 : i32
    return %c0_i32, %c0_i32_0, %c0_i32_1 : i32, i32, i32
  }
  func.func @transform_21(%arg0: i32) -> (i32, i32, i32) {
    %c0_i32 = arith.constant 0 : i32
    %c0_i32_0 = arith.constant 0 : i32
    %c0_i32_1 = arith.constant 0 : i32
    %c0_i32_2 = arith.constant 0 : i32
    return %c0_i32, %c0_i32_0, %c0_i32_1 : i32, i32, i32
  }
  func.func @transform_22(%arg0: i32) -> (i32, i32, i32) {
    %c0_i32 = arith.constant 0 : i32
    %c0_i32_0 = arith.constant 0 : i32
    %c0_i32_1 = arith.constant 0 : i32
    %c0_i32_2 = arith.constant 0 : i32
    return %c0_i32, %c0_i32_0, %c0_i32_1 : i32, i32, i32
  }
  func.func @transform_23(%arg0: i32) -> (i32, i32, i32) {
    %c0_i32 = arith.constant 0 : i32
    %c0_i32_0 = arith.constant 0 : i32
    %c0_i32_1 = arith.constant 0 : i32
    %c0_i32_2 = arith.constant 0 : i32
    return %c0_i32, %c0_i32_0, %c0_i32_1 : i32, i32, i32
  }
  func.func @transform_24(%arg0: i32) -> (i32, i32, i32) {
    %c0_i32 = arith.constant 0 : i32
    %c0_i32_0 = arith.constant 0 : i32
    %c0_i32_1 = arith.constant 0 : i32
    %c0_i32_2 = arith.constant 0 : i32
    return %c0_i32, %c0_i32_0, %c0_i32_1 : i32, i32, i32
  }
  func.func @transform_25(%arg0: i32) -> (i32, i32, i32) {
    %c0_i32 = arith.constant 0 : i32
    %c0_i32_0 = arith.constant 0 : i32
    %c0_i32_1 = arith.constant 0 : i32
    %c0_i32_2 = arith.constant 0 : i32
    return %c0_i32, %c0_i32_0, %c0_i32_1 : i32, i32, i32
  }
  func.func @transform_26(%arg0: i32) -> (i32, i32, i32) {
    %c0_i32 = arith.constant 0 : i32
    %c0_i32_0 = arith.constant 0 : i32
    %c0_i32_1 = arith.constant 0 : i32
    %c0_i32_2 = arith.constant 0 : i32
    return %c0_i32, %c0_i32_0, %c0_i32_1 : i32, i32, i32
  }
  func.func @transform_27(%arg0: i32) -> (i32, i32, i32) {
    %c0_i32 = arith.constant 0 : i32
    %c0_i32_0 = arith.constant 0 : i32
    %c0_i32_1 = arith.constant 0 : i32
    %c0_i32_2 = arith.constant 0 : i32
    return %c0_i32, %c0_i32_0, %c0_i32_1 : i32, i32, i32
  }
  func.func @transform_28(%arg0: i32) -> (i32, i32, i32) {
    %c0_i32 = arith.constant 0 : i32
    %c0_i32_0 = arith.constant 0 : i32
    %c0_i32_1 = arith.constant 0 : i32
    %c0_i32_2 = arith.constant 0 : i32
    return %c0_i32, %c0_i32_0, %c0_i32_1 : i32, i32, i32
  }
  func.func @transform_29(%arg0: i32) -> (i32, i32, i32) {
    %c0_i32 = arith.constant 0 : i32
    %c0_i32_0 = arith.constant 0 : i32
    %c0_i32_1 = arith.constant 0 : i32
    %c0_i32_2 = arith.constant 0 : i32
    return %c0_i32, %c0_i32_0, %c0_i32_1 : i32, i32, i32
  }
  func.func @transform_30(%arg0: i32) -> (i32, i32, i32) {
    %c0_i32 = arith.constant 0 : i32
    %c0_i32_0 = arith.constant 0 : i32
    %c0_i32_1 = arith.constant 0 : i32
    %c0_i32_2 = arith.constant 0 : i32
    return %c0_i32, %c0_i32_0, %c0_i32_1 : i32, i32, i32
  }
  func.func @transform_31(%arg0: i32) -> (i32, i32, i32) {
    %c0_i32 = arith.constant 0 : i32
    %c0_i32_0 = arith.constant 0 : i32
    %c0_i32_1 = arith.constant 0 : i32
    %c0_i32_2 = arith.constant 0 : i32
    return %c0_i32, %c0_i32_0, %c0_i32_1 : i32, i32, i32
  }
  func.func @transform_32(%arg0: i32) -> (i32, i32, i32) {
    %c0_i32 = arith.constant 0 : i32
    %c0_i32_0 = arith.constant 0 : i32
    %c0_i32_1 = arith.constant 0 : i32
    %c0_i32_2 = arith.constant 0 : i32
    return %c0_i32, %c0_i32_0, %c0_i32_1 : i32, i32, i32
  }
  func.func @transform_33(%arg0: i32) -> (i32, i32, i32) {
    %c0_i32 = arith.constant 0 : i32
    %c0_i32_0 = arith.constant 0 : i32
    %c0_i32_1 = arith.constant 0 : i32
    %c0_i32_2 = arith.constant 0 : i32
    return %c0_i32, %c0_i32_0, %c0_i32_1 : i32, i32, i32
  }
  func.func @transform_34(%arg0: i32) -> (i32, i32, i32) {
    %c0_i32 = arith.constant 0 : i32
    %c0_i32_0 = arith.constant 0 : i32
    %c0_i32_1 = arith.constant 0 : i32
    %c0_i32_2 = arith.constant 0 : i32
    return %c0_i32, %c0_i32_0, %c0_i32_1 : i32, i32, i32
  }
  func.func @transform_35(%arg0: i32) -> (i32, i32, i32) {
    %c0_i32 = arith.constant 0 : i32
    %c0_i32_0 = arith.constant 0 : i32
    %c0_i32_1 = arith.constant 0 : i32
    %c0_i32_2 = arith.constant 0 : i32
    return %c0_i32, %c0_i32_0, %c0_i32_1 : i32, i32, i32
  }
  func.func @transform_36(%arg0: i32) -> (i32, i32, i32) {
    %c0_i32 = arith.constant 0 : i32
    %c0_i32_0 = arith.constant 0 : i32
    %c0_i32_1 = arith.constant 0 : i32
    %c0_i32_2 = arith.constant 0 : i32
    return %c0_i32, %c0_i32_0, %c0_i32_1 : i32, i32, i32
  }
  func.func @transform_37(%arg0: i32) -> (i32, i32, i32) {
    %c0_i32 = arith.constant 0 : i32
    %c0_i32_0 = arith.constant 0 : i32
    %c0_i32_1 = arith.constant 0 : i32
    %c0_i32_2 = arith.constant 0 : i32
    return %c0_i32, %c0_i32_0, %c0_i32_1 : i32, i32, i32
  }
  func.func @transform_38(%arg0: i32) -> (i32, i32, i32) {
    %c0_i32 = arith.constant 0 : i32
    %c0_i32_0 = arith.constant 0 : i32
    %c0_i32_1 = arith.constant 0 : i32
    %c0_i32_2 = arith.constant 0 : i32
    return %c0_i32, %c0_i32_0, %c0_i32_1 : i32, i32, i32
  }
  func.func @transform_39(%arg0: i32) -> (i32, i32, i32) {
    %c0_i32 = arith.constant 0 : i32
    %c0_i32_0 = arith.constant 0 : i32
    %c0_i32_1 = arith.constant 0 : i32
    %c0_i32_2 = arith.constant 0 : i32
    return %c0_i32, %c0_i32_0, %c0_i32_1 : i32, i32, i32
  }
  func.func @transform_40(%arg0: i32) -> (i32, i32) {
    %c0_i32 = arith.constant 0 : i32
    %c0_i32_0 = arith.constant 0 : i32
    %c0_i32_1 = arith.constant 0 : i32
    return %c0_i32, %c0_i32_0 : i32, i32
  }
  func.func @transform_41(%arg0: i32) -> (i32, i32) {
    %c0_i32 = arith.constant 0 : i32
    %c0_i32_0 = arith.constant 0 : i32
    %c0_i32_1 = arith.constant 0 : i32
    return %c0_i32, %c0_i32_0 : i32, i32
  }
  func.func @transform_42(%arg0: i32) -> (i32, i32, i32) {
    %c0_i32 = arith.constant 0 : i32
    %c0_i32_0 = arith.constant 0 : i32
    %c0_i32_1 = arith.constant 0 : i32
    return %arg0, %c0_i32, %c0_i32_0 : i32, i32, i32
  }
}

</mosaic_0001>

<llo_original>
// kernel: m2m100_forward.1
$region0: #{m2m100_forward.1}
  #allocation0 [shape = 'u32[]', space=smem, size = 0x4, offset = 0x4, fixed_abs, tag = 'smem constant byte address 0x4 - core index']
  #allocation1 [shape = 'u32[144,128]{1,0:T(1,128)}', space=vmem, size = 0x12000, scoped, tag = 'internal scratch']
  %s0 = inlined_call_operand.smem [shape: u32[43], index: -1, kind: input, shape index: {}]
  %s1 = sld [smem:[%s0]]
  %s2 = scalar_lea.smem %s0, 1
  %s3 = sld [smem:[%s2]]
  %s4 = scalar_lea.smem %s0, 2
  %s5 = sld [smem:[%s4]]
  %s6 = scalar_lea.smem %s0, 3
  %s7 = sld [smem:[%s6]]
  %s8 = scalar_lea.smem %s0, 4
  %s9 = sld [smem:[%s8]]
  %s10 = scalar_lea.smem %s0, 5
  %s11 = sld [smem:[%s10]]
  %s12 = scalar_lea.smem %s0, 6
  %s13 = sld [smem:[%s12]]
  %s14 = scalar_lea.smem %s0, 7
  %s15 = sld [smem:[%s14]]
  %s16 = scalar_lea.smem %s0, 8
  %s17 = sld [smem:[%s16]]
  %s18 = scalar_lea.smem %s0, 9
  %s19 = sld [smem:[%s18]]
  %s20 = scalar_lea.smem %s0, 10
  %s21 = sld [smem:[%s20]]
  %s22 = scalar_lea.smem %s0, 11
  %s23 = sld [smem:[%s22]]
  %s24 = scalar_lea.smem %s0, 12
  %s25 = sld [smem:[%s24]]
  %s26 = scalar_lea.smem %s0, 13
  %s27 = sld [smem:[%s26]]
  %s28 = scalar_lea.smem %s0, 14
  %s29 = sld [smem:[%s28]]
  %s30 = scalar_lea.smem %s0, 15
  %s31 = sld [smem:[%s30]]
  %s32 = scalar_lea.smem %s0, 16
  %s33 = sld [smem:[%s32]]
  %s34 = scalar_lea.smem %s0, 17
  %s35 = sld [smem:[%s34]]
  %s36 = scalar_lea.smem %s0, 18
  %s37 = sld [smem:[%s36]]
  %s38 = scalar_lea.smem %s0, 19
  %s39 = sld [smem:[%s38]]
  %s40 = scalar_lea.smem %s0, 20
  %s41 = sld [smem:[%s40]]
  %s42 = scalar_lea.smem %s0, 21
  %s43 = sld [smem:[%s42]]
  %s44 = scalar_lea.smem %s0, 22
  %s45 = sld [smem:[%s44]]
  %s46 = scalar_lea.smem %s0, 23
  %s47 = sld [smem:[%s46]]
  %s48 = scalar_lea.smem %s0, 24
  %s49 = sld [smem:[%s48]]
  %s50 = scalar_lea.smem %s0, 25
  %s51 = sld [smem:[%s50]]
  %s52 = scalar_lea.smem %s0, 26
  %s53 = sld [smem:[%s52]]
  %s54 = scalar_lea.smem %s0, 27
  %s55 = sld [smem:[%s54]]
  %s56 = scalar_lea.smem %s0, 28
  %s57 = sld [smem:[%s56]]
  %s58 = scalar_lea.smem %s0, 29
  %s59 = sld [smem:[%s58]]
  %s60 = scalar_lea.smem %s0, 30
  %s61 = sld [smem:[%s60]]
  %s62 = scalar_lea.smem %s0, 31
  %s63 = sld [smem:[%s62]]
  %s64 = scalar_lea.smem %s0, 32
  %s65 = sld [smem:[%s64]]
  %s66 = scalar_lea.smem %s0, 33
  %s67 = sld [smem:[%s66]]
  %s68 = scalar_lea.smem %s0, 34
  %s69 = sld [smem:[%s68]]
  %s70 = scalar_lea.smem %s0, 35
  %s71 = sld [smem:[%s70]]
  %s72 = scalar_lea.smem %s0, 36
  %s73 = sld [smem:[%s72]]
  %s74 = scalar_lea.smem %s0, 37
  %s75 = sld [smem:[%s74]]
  %s76 = scalar_lea.smem %s0, 38
  %s77 = sld [smem:[%s76]]
  %s78 = scalar_lea.smem %s0, 39
  %s79 = sld [smem:[%s78]]
  %s80 = scalar_lea.smem %s0, 40
  %s81 = sld [smem:[%s80]]
  %s82 = scalar_lea.smem %s0, 41
  %s83 = sld [smem:[%s82]]
  %s84 = scalar_lea.smem %s0, 42
  %s85 = sld [smem:[%s84]]
  %s86 = sld [smem:[#allocation0]]
  $region201: #{m2m100_forward.1} parent=0
    _
  %s88 = ssub.s32 1, %s86
  %s89 = scalar_select 0, %s88, %s86
  $region1: #{m2m100_forward.1} parent=0
    #allocation2 [shape = 'u8[8192]{0}', space=vmem, size = 0x2000, scoped, tag = 'output window, operand 0']
    #allocation3 [shape = 's32[2]{0}', space=sflag, size = 0x8, scoped, tag = 'scoped memory for m2m100_forward.1']
    %90 = vsyncpa [#allocation3], 0
    %s91 = scalar_lea.sflag [#allocation3], 1
    %92 = vsyncpa %s91, 0
    loop: start=0, step=1, limit=4
    $region2: #{m2m100_forward.1} parent=1 // loop_pre_header
      _
    $region3: #{m2m100_forward.1} parent=1 // loop_header
      %s94 = sphi 0, %s98
      %p95 = scmp.ge.s32.totalorder %s94, 4
      %s104 = sphi 0, %s106
      %s107 = sphi 0, %s104
      %s108 = sphi 0, %s107
      %s124 = sphi 0, %s108
      %s130 = sphi 0, %s132
      %s133 = sphi 0, %s130
      %s134 = sphi 0, %s133
      %s150 = sphi 0, %s134
      %s154 = sphi 0, %s154
      %s156 = sphi 0, %s154
      %s157 = sphi 0, %s156
      %s171 = sphi 0, %s157
      %s175 = sphi 0, %s175
      %s177 = sphi 0, %s175
      %s178 = sphi 0, %s177
      %s192 = sphi 0, %s178
      %s198 = sphi 0, %s200
      %s201 = sphi 0, %s198
      %s202 = sphi 0, %s201
      %s218 = sphi 0, %s202
      %s222 = sphi 0, %s222
      %s224 = sphi 0, %s222
      %s225 = sphi 0, %s224
      %s239 = sphi 0, %s225
      %s243 = sphi 0, %s243
      %s245 = sphi 0, %s243
      %s246 = sphi 0, %s245
      %s260 = sphi 0, %s246
      %s264 = sphi 0, %s264
      %s266 = sphi 0, %s264
      %s267 = sphi 0, %s266
      %s281 = sphi 0, %s267
      %s285 = sphi 0, %s285
      %s287 = sphi 0, %s285
      %s288 = sphi 0, %s287
      %s302 = sphi 0, %s288
      %s306 = sphi 0, %s306
      %s308 = sphi 0, %s306
      %s309 = sphi 0, %s308
      %s323 = sphi 0, %s309
      %s327 = sphi 0, %s327
      %s329 = sphi 0, %s327
      %s330 = sphi 0, %s329
      %s344 = sphi 0, %s330
      %s348 = sphi 0, %s348
      %s350 = sphi 0, %s348
      %s351 = sphi 0, %s350
      %s365 = sphi 0, %s351
      %s369 = sphi 0, %s369
      %s371 = sphi 0, %s369
      %s372 = sphi 0, %s371
      %s386 = sphi 0, %s372
      %s390 = sphi 0, %s390
      %s392 = sphi 0, %s390
      %s393 = sphi 0, %s392
      %s407 = sphi 0, %s393
      %s411 = sphi 0, %s411
      %s413 = sphi 0, %s411
      %s414 = sphi 0, %s413
      %s428 = sphi 0, %s414
      %s432 = sphi 0, %s432
      %s434 = sphi 0, %s432
      %s435 = sphi 0, %s434
      %s449 = sphi 0, %s435
      %s453 = sphi 0, %s453
      %s455 = sphi 0, %s453
      %s456 = sphi 0, %s455
      %s470 = sphi 0, %s456
      %s474 = sphi 0, %s474
      %s476 = sphi 0, %s474
      %s477 = sphi 0, %s476
      %s491 = sphi 0, %s477
      %s495 = sphi 0, %s495
      %s497 = sphi 0, %s495
      %s498 = sphi 0, %s497
      %s512 = sphi 0, %s498
      %s516 = sphi 0, %s516
      %s518 = sphi 0, %s516
      %s519 = sphi 0, %s518
      %s533 = sphi 0, %s519
      %s537 = sphi 0, %s537
      %s539 = sphi 0, %s537
      %s540 = sphi 0, %s539
      %s554 = sphi 0, %s540
      %s558 = sphi 0, %s558
      %s560 = sphi 0, %s558
      %s561 = sphi 0, %s560
      %s575 = sphi 0, %s561
      %s579 = sphi 0, %s579
      %s581 = sphi 0, %s579
      %s582 = sphi 0, %s581
      %s596 = sphi 0, %s582
      %s600 = sphi 0, %s600
      %s602 = sphi 0, %s600
      %s603 = sphi 0, %s602
      %s617 = sphi 0, %s603
      %s621 = sphi 0, %s621
      %s623 = sphi 0, %s621
      %s624 = sphi 0, %s623
      %s638 = sphi 0, %s624
      %s642 = sphi 0, %s642
      %s644 = sphi 0, %s642
      %s645 = sphi 0, %s644
      %s659 = sphi 0, %s645
      %s663 = sphi 0, %s663
      %s665 = sphi 0, %s663
      %s666 = sphi 0, %s665
      %s680 = sphi 0, %s666
      %s684 = sphi 0, %s684
      %s686 = sphi 0, %s684
      %s687 = sphi 0, %s686
      %s701 = sphi 0, %s687
      %s705 = sphi 0, %s705
      %s707 = sphi 0, %s705
      %s708 = sphi 0, %s707
      %s722 = sphi 0, %s708
      %s726 = sphi 0, %s726
      %s728 = sphi 0, %s726
      %s729 = sphi 0, %s728
      %s743 = sphi 0, %s729
      %s747 = sphi 0, %s747
      %s749 = sphi 0, %s747
      %s750 = sphi 0, %s749
      %s764 = sphi 0, %s750
      %s768 = sphi 0, %s768
      %s770 = sphi 0, %s768
      %s771 = sphi 0, %s770
      %s785 = sphi 0, %s771
      %s789 = sphi 0, %s789
      %s791 = sphi 0, %s789
      %s792 = sphi 0, %s791
      %s806 = sphi 0, %s792
      %s810 = sphi 0, %s810
      %s812 = sphi 0, %s810
      %s813 = sphi 0, %s812
      %s827 = sphi 0, %s813
      %s831 = sphi 0, %s831
      %s833 = sphi 0, %s831
      %s834 = sphi 0, %s833
      %s848 = sphi 0, %s834
      %s852 = sphi 0, %s852
      %s854 = sphi 0, %s852
      %s855 = sphi 0, %s854
      %s869 = sphi 0, %s855
      %s873 = sphi 0, %s873
      %s875 = sphi 0, %s873
      %s876 = sphi 0, %s875
      %s890 = sphi 0, %s876
      %s894 = sphi 0, %s894
      %s896 = sphi 0, %s894
      %s897 = sphi 0, %s896
      %s911 = sphi 0, %s897
      %s915 = sphi 0, %s915
      %s917 = sphi 0, %s915
      %s918 = sphi 0, %s917
      %s932 = sphi 0, %s918
      %s936 = sphi 0, %s936
      %s938 = sphi 0, %s936
      %s939 = sphi 0, %s938
      %s953 = sphi 0, %s939
      %s957 = sphi 0, %s957
      %s959 = sphi 0, %s957
      %s960 = sphi 0, %s959
      %s974 = sphi 0, %s960
      %s978 = sphi 0, %s978
      %s980 = sphi 0, %s978
      %s981 = sphi 0, %s980
      %s995 = sphi 0, %s981
      %s1001 = sphi 0, %s1003
      %s1004 = sphi 0, %s1001
      %s1005 = sphi 0, %s1004
      %s1021 = sphi 0, %s1005
    $region4: #{m2m100_forward.1} parent=1 // loop_header_branch
      %97 = sbr.rel (%p95) target = $region8
    $region5: #{m2m100_forward.1} parent=1 // loop_body
      %s99 = ssub.s32 %s94, 1
      %s100 = ssub.s32 %s94, 2
      %s101 = sadd.s32 %s94, 1
      %s102 = ssub.s32 %s94, %s101
      %p103 = scmp.eq.s32.totalorder %s102, 0
      %s105 = sadd.s32 %s104, 1
      %s106 = scalar_select %p103, %s104, %s105
      %p109 = pneg %p103
      %p110 = scmp.eq.s32.totalorder %s94, 1
      %p111 = por %p109, %p110
      %p112 = scmp.ne.s32.totalorder %s104, %s107
      %p113 = scmp.eq.s32.totalorder %s94, 0
      %p114 = por %p112, %p113
      %p115 = scmp.ne.s32.totalorder %s104, %s107
      %p116 = scmp.eq.s32.totalorder %s99, 1
      %p117 = por %p115, %p116
      %p118 = scmp.ne.s32.totalorder %s107, %s108
      %p119 = scmp.eq.s32.totalorder %s99, 0
      %p120 = por %p118, %p119
      %p121 = scmp.ne.s32.totalorder %s107, %s108
      %p122 = scmp.eq.s32.totalorder %s100, 1
      %p123 = por %p121, %p122
      %p125 = scmp.ne.s32.totalorder %s108, %s124
      %p126 = scmp.eq.s32.totalorder %s100, 0
      %p127 = por %p125, %p126
      %s128 = ssub.s32 %s94, %s101
      %p129 = scmp.eq.s32.totalorder %s128, 0
      %s131 = sadd.s32 %s130, 1
      %s132 = scalar_select %p129, %s130, %s131
      %p135 = pneg %p129
      %p136 = scmp.eq.s32.totalorder %s94, 1
      %p137 = por %p135, %p136
      %p138 = scmp.ne.s32.totalorder %s130, %s133
      %p139 = scmp.eq.s32.totalorder %s94, 0
      %p140 = por %p138, %p139
      %p141 = scmp.ne.s32.totalorder %s130, %s133
      %p142 = scmp.eq.s32.totalorder %s99, 1
      %p143 = por %p141, %p142
      %p144 = scmp.ne.s32.totalorder %s133, %s134
      %p145 = scmp.eq.s32.totalorder %s99, 0
      %p146 = por %p144, %p145
      %p147 = scmp.ne.s32.totalorder %s133, %s134
      %p148 = scmp.eq.s32.totalorder %s100, 1
      %p149 = por %p147, %p148
      %p151 = scmp.ne.s32.totalorder %s134, %s150
      %p152 = scmp.eq.s32.totalorder %s100, 0
      %p153 = por %p151, %p152
      %s155 = sadd.s32 %s154, 1
      %p158 = scmp.eq.s32.totalorder %s94, 1
      %p159 = scmp.ne.s32.totalorder %s154, %s156
      %p160 = scmp.eq.s32.totalorder %s94, 0
      %p161 = por %p159, %p160
      %p162 = scmp.ne.s32.totalorder %s154, %s156
      %p163 = scmp.eq.s32.totalorder %s99, 1
      %p164 = por %p162, %p163
      %p165 = scmp.ne.s32.totalorder %s156, %s157
      %p166 = scmp.eq.s32.totalorder %s99, 0
      %p167 = por %p165, %p166
      %p168 = scmp.ne.s32.totalorder %s156, %s157
      %p169 = scmp.eq.s32.totalorder %s100, 1
      %p170 = por %p168, %p169
      %p172 = scmp.ne.s32.totalorder %s157, %s171
      %p173 = scmp.eq.s32.totalorder %s100, 0
      %p174 = por %p172, %p173
      %s176 = sadd.s32 %s175, 1
      %p179 = scmp.eq.s32.totalorder %s94, 1
      %p180 = scmp.ne.s32.totalorder %s175, %s177
      %p181 = scmp.eq.s32.totalorder %s94, 0
      %p182 = por %p180, %p181
      %p183 = scmp.ne.s32.totalorder %s175, %s177
      %p184 = scmp.eq.s32.totalorder %s99, 1
      %p185 = por %p183, %p184
      %p186 = scmp.ne.s32.totalorder %s177, %s178
      %p187 = scmp.eq.s32.totalorder %s99, 0
      %p188 = por %p186, %p187
      %p189 = scmp.ne.s32.totalorder %s177, %s178
      %p190 = scmp.eq.s32.totalorder %s100, 1
      %p191 = por %p189, %p190
      %p193 = scmp.ne.s32.totalorder %s178, %s192
      %p194 = scmp.eq.s32.totalorder %s100, 0
      %p195 = por %p193, %p194
      %s196 = ssub.s32 %s94, %s101
      %p197 = scmp.eq.s32.totalorder %s196, 0
      %s199 = sadd.s32 %s198, 1
      %s200 = scalar_select %p197, %s198, %s199
      %p203 = pneg %p197
      %p204 = scmp.eq.s32.totalorder %s94, 1
      %p205 = por %p203, %p204
      %p206 = scmp.ne.s32.totalorder %s198, %s201
      %p207 = scmp.eq.s32.totalorder %s94, 0
      %p208 = por %p206, %p207
      %p209 = scmp.ne.s32.totalorder %s198, %s201
      %p210 = scmp.eq.s32.totalorder %s99, 1
      %p211 = por %p209, %p210
      %p212 = scmp.ne.s32.totalorder %s201, %s202
      %p213 = scmp.eq.s32.totalorder %s99, 0
      %p214 = por %p212, %p213
      %p215 = scmp.ne.s32.totalorder %s201, %s202
      %p216 = scmp.eq.s32.totalorder %s100, 1
      %p217 = por %p215, %p216
      %p219 = scmp.ne.s32.totalorder %s202, %s218
      %p220 = scmp.eq.s32.totalorder %s100, 0
      %p221 = por %p219, %p220
      %s223 = sadd.s32 %s222, 1
      %p226 = scmp.eq.s32.totalorder %s94, 1
      %p227 = scmp.ne.s32.totalorder %s222, %s224
      %p228 = scmp.eq.s32.totalorder %s94, 0
      %p229 = por %p227, %p228
      %p230 = scmp.ne.s32.totalorder %s222, %s224
      %p231 = scmp.eq.s32.totalorder %s99, 1
      %p232 = por %p230, %p231
      %p233 = scmp.ne.s32.totalorder %s224, %s225
      %p234 = scmp.eq.s32.totalorder %s99, 0
      %p235 = por %p233, %p234
      %p236 = scmp.ne.s32.totalorder %s224, %s225
      %p237 = scmp.eq.s32.totalorder %s100, 1
      %p238 = por %p236, %p237
      %p240 = scmp.ne.s32.totalorder %s225, %s239
      %p241 = scmp.eq.s32.totalorder %s100, 0
      %p242 = por %p240, %p241
      %s244 = sadd.s32 %s243, 1
      %p247 = scmp.eq.s32.totalorder %s94, 1
      %p248 = scmp.ne.s32.totalorder %s243, %s245
      %p249 = scmp.eq.s32.totalorder %s94, 0
      %p250 = por %p248, %p249
      %p251 = scmp.ne.s32.totalorder %s243, %s245
      %p252 = scmp.eq.s32.totalorder %s99, 1
      %p253 = por %p251, %p252
      %p254 = scmp.ne.s32.totalorder %s245, %s246
      %p255 = scmp.eq.s32.totalorder %s99, 0
      %p256 = por %p254, %p255
      %p257 = scmp.ne.s32.totalorder %s245, %s246
      %p258 = scmp.eq.s32.totalorder %s100, 1
      %p259 = por %p257, %p258
      %p261 = scmp.ne.s32.totalorder %s246, %s260
      %p262 = scmp.eq.s32.totalorder %s100, 0
      %p263 = por %p261, %p262
      %s265 = sadd.s32 %s264, 1
      %p268 = scmp.eq.s32.totalorder %s94, 1
      %p269 = scmp.ne.s32.totalorder %s264, %s266
      %p270 = scmp.eq.s32.totalorder %s94, 0
      %p271 = por %p269, %p270
      %p272 = scmp.ne.s32.totalorder %s264, %s266
      %p273 = scmp.eq.s32.totalorder %s99, 1
      %p274 = por %p272, %p273
      %p275 = scmp.ne.s32.totalorder %s266, %s267
      %p276 = scmp.eq.s32.totalorder %s99, 0
      %p277 = por %p275, %p276
      %p278 = scmp.ne.s32.totalorder %s266, %s267
      %p279 = scmp.eq.s32.totalorder %s100, 1
      %p280 = por %p278, %p279
      %p282 = scmp.ne.s32.totalorder %s267, %s281
      %p283 = scmp.eq.s32.totalorder %s100, 0
      %p284 = por %p282, %p283
      %s286 = sadd.s32 %s285, 1
      %p289 = scmp.eq.s32.totalorder %s94, 1
      %p290 = scmp.ne.s32.totalorder %s285, %s287
      %p291 = scmp.eq.s32.totalorder %s94, 0
      %p292 = por %p290, %p291
      %p293 = scmp.ne.s32.totalorder %s285, %s287
      %p294 = scmp.eq.s32.totalorder %s99, 1
      %p295 = por %p293, %p294
      %p296 = scmp.ne.s32.totalorder %s287, %s288
      %p297 = scmp.eq.s32.totalorder %s99, 0
      %p298 = por %p296, %p297
      %p299 = scmp.ne.s32.totalorder %s287, %s288
      %p300 = scmp.eq.s32.totalorder %s100, 1
      %p301 = por %p299, %p300
      %p303 = scmp.ne.s32.totalorder %s288, %s302
      %p304 = scmp.eq.s32.totalorder %s100, 0
      %p305 = por %p303, %p304
      %s307 = sadd.s32 %s306, 1
      %p310 = scmp.eq.s32.totalorder %s94, 1
      %p311 = scmp.ne.s32.totalorder %s306, %s308
      %p312 = scmp.eq.s32.totalorder %s94, 0
      %p313 = por %p311, %p312
      %p314 = scmp.ne.s32.totalorder %s306, %s308
      %p315 = scmp.eq.s32.totalorder %s99, 1
      %p316 = por %p314, %p315
      %p317 = scmp.ne.s32.totalorder %s308, %s309
      %p318 = scmp.eq.s32.totalorder %s99, 0
      %p319 = por %p317, %p318
      %p320 = scmp.ne.s32.totalorder %s308, %s309
      %p321 = scmp.eq.s32.totalorder %s100, 1
      %p322 = por %p320, %p321
      %p324 = scmp.ne.s32.totalorder %s309, %s323
      %p325 = scmp.eq.s32.totalorder %s100, 0
      %p326 = por %p324, %p325
      %s328 = sadd.s32 %s327, 1
      %p331 = scmp.eq.s32.totalorder %s94, 1
      %p332 = scmp.ne.s32.totalorder %s327, %s329
      %p333 = scmp.eq.s32.totalorder %s94, 0
      %p334 = por %p332, %p333
      %p335 = scmp.ne.s32.totalorder %s327, %s329
      %p336 = scmp.eq.s32.totalorder %s99, 1
      %p337 = por %p335, %p336
      %p338 = scmp.ne.s32.totalorder %s329, %s330
      %p339 = scmp.eq.s32.totalorder %s99, 0
      %p340 = por %p338, %p339
      %p341 = scmp.ne.s32.totalorder %s329, %s330
      %p342 = scmp.eq.s32.totalorder %s100, 1
      %p343 = por %p341, %p342
      %p345 = scmp.ne.s32.totalorder %s330, %s344
      %p346 = scmp.eq.s32.totalorder %s100, 0
      %p347 = por %p345, %p346
      %s349 = sadd.s32 %s348, 1
      %p352 = scmp.eq.s32.totalorder %s94, 1
      %p353 = scmp.ne.s32.totalorder %s348, %s350
      %p354 = scmp.eq.s32.totalorder %s94, 0
      %p355 = por %p353, %p354
      %p356 = scmp.ne.s32.totalorder %s348, %s350
      %p357 = scmp.eq.s32.totalorder %s99, 1
      %p358 = por %p356, %p357
      %p359 = scmp.ne.s32.totalorder %s350, %s351
      %p360 = scmp.eq.s32.totalorder %s99, 0
      %p361 = por %p359, %p360
      %p362 = scmp.ne.s32.totalorder %s350, %s351
      %p363 = scmp.eq.s32.totalorder %s100, 1
      %p364 = por %p362, %p363
      %p366 = scmp.ne.s32.totalorder %s351, %s365
      %p367 = scmp.eq.s32.totalorder %s100, 0
      %p368 = por %p366, %p367
      %s370 = sadd.s32 %s369, 1
      %p373 = scmp.eq.s32.totalorder %s94, 1
      %p374 = scmp.ne.s32.totalorder %s369, %s371
      %p375 = scmp.eq.s32.totalorder %s94, 0
      %p376 = por %p374, %p375
      %p377 = scmp.ne.s32.totalorder %s369, %s371
      %p378 = scmp.eq.s32.totalorder %s99, 1
      %p379 = por %p377, %p378
      %p380 = scmp.ne.s32.totalorder %s371, %s372
      %p381 = scmp.eq.s32.totalorder %s99, 0
      %p382 = por %p380, %p381
      %p383 = scmp.ne.s32.totalorder %s371, %s372
      %p384 = scmp.eq.s32.totalorder %s100, 1
      %p385 = por %p383, %p384
      %p387 = scmp.ne.s32.totalorder %s372, %s386
      %p388 = scmp.eq.s32.totalorder %s100, 0
      %p389 = por %p387, %p388
      %s391 = sadd.s32 %s390, 1
      %p394 = scmp.eq.s32.totalorder %s94, 1
      %p395 = scmp.ne.s32.totalorder %s390, %s392
      %p396 = scmp.eq.s32.totalorder %s94, 0
      %p397 = por %p395, %p396
      %p398 = scmp.ne.s32.totalorder %s390, %s392
      %p399 = scmp.eq.s32.totalorder %s99, 1
      %p400 = por %p398, %p399
      %p401 = scmp.ne.s32.totalorder %s392, %s393
      %p402 = scmp.eq.s32.totalorder %s99, 0
      %p403 = por %p401, %p402
      %p404 = scmp.ne.s32.totalorder %s392, %s393
      %p405 = scmp.eq.s32.totalorder %s100, 1
      %p406 = por %p404, %p405
      %p408 = scmp.ne.s32.totalorder %s393, %s407
      %p409 = scmp.eq.s32.totalorder %s100, 0
      %p410 = por %p408, %p409
      %s412 = sadd.s32 %s411, 1
      %p415 = scmp.eq.s32.totalorder %s94, 1
      %p416 = scmp.ne.s32.totalorder %s411, %s413
      %p417 = scmp.eq.s32.totalorder %s94, 0
      %p418 = por %p416, %p417
      %p419 = scmp.ne.s32.totalorder %s411, %s413
      %p420 = scmp.eq.s32.totalorder %s99, 1
      %p421 = por %p419, %p420
      %p422 = scmp.ne.s32.totalorder %s413, %s414
      %p423 = scmp.eq.s32.totalorder %s99, 0
      %p424 = por %p422, %p423
      %p425 = scmp.ne.s32.totalorder %s413, %s414
      %p426 = scmp.eq.s32.totalorder %s100, 1
      %p427 = por %p425, %p426
      %p429 = scmp.ne.s32.totalorder %s414, %s428
      %p430 = scmp.eq.s32.totalorder %s100, 0
      %p431 = por %p429, %p430
      %s433 = sadd.s32 %s432, 1
      %p436 = scmp.eq.s32.totalorder %s94, 1
      %p437 = scmp.ne.s32.totalorder %s432, %s434
      %p438 = scmp.eq.s32.totalorder %s94, 0
      %p439 = por %p437, %p438
      %p440 = scmp.ne.s32.totalorder %s432, %s434
      %p441 = scmp.eq.s32.totalorder %s99, 1
      %p442 = por %p440, %p441
      %p443 = scmp.ne.s32.totalorder %s434, %s435
      %p444 = scmp.eq.s32.totalorder %s99, 0
      %p445 = por %p443, %p444
      %p446 = scmp.ne.s32.totalorder %s434, %s435
      %p447 = scmp.eq.s32.totalorder %s100, 1
      %p448 = por %p446, %p447
      %p450 = scmp.ne.s32.totalorder %s435, %s449
      %p451 = scmp.eq.s32.totalorder %s100, 0
      %p452 = por %p450, %p451
      %s454 = sadd.s32 %s453, 1
      %p457 = scmp.eq.s32.totalorder %s94, 1
      %p458 = scmp.ne.s32.totalorder %s453, %s455
      %p459 = scmp.eq.s32.totalorder %s94, 0
      %p460 = por %p458, %p459
      %p461 = scmp.ne.s32.totalorder %s453, %s455
      %p462 = scmp.eq.s32.totalorder %s99, 1
      %p463 = por %p461, %p462
      %p464 = scmp.ne.s32.totalorder %s455, %s456
      %p465 = scmp.eq.s32.totalorder %s99, 0
      %p466 = por %p464, %p465
      %p467 = scmp.ne.s32.totalorder %s455, %s456
      %p468 = scmp.eq.s32.totalorder %s100, 1
      %p469 = por %p467, %p468
      %p471 = scmp.ne.s32.totalorder %s456, %s470
      %p472 = scmp.eq.s32.totalorder %s100, 0
      %p473 = por %p471, %p472
      %s475 = sadd.s32 %s474, 1
      %p478 = scmp.eq.s32.totalorder %s94, 1
      %p479 = scmp.ne.s32.totalorder %s474, %s476
      %p480 = scmp.eq.s32.totalorder %s94, 0
      %p481 = por %p479, %p480
      %p482 = scmp.ne.s32.totalorder %s474, %s476
      %p483 = scmp.eq.s32.totalorder %s99, 1
      %p484 = por %p482, %p483
      %p485 = scmp.ne.s32.totalorder %s476, %s477
      %p486 = scmp.eq.s32.totalorder %s99, 0
      %p487 = por %p485, %p486
      %p488 = scmp.ne.s32.totalorder %s476, %s477
      %p489 = scmp.eq.s32.totalorder %s100, 1
      %p490 = por %p488, %p489
      %p492 = scmp.ne.s32.totalorder %s477, %s491
      %p493 = scmp.eq.s32.totalorder %s100, 0
      %p494 = por %p492, %p493
      %s496 = sadd.s32 %s495, 1
      %p499 = scmp.eq.s32.totalorder %s94, 1
      %p500 = scmp.ne.s32.totalorder %s495, %s497
      %p501 = scmp.eq.s32.totalorder %s94, 0
      %p502 = por %p500, %p501
      %p503 = scmp.ne.s32.totalorder %s495, %s497
      %p504 = scmp.eq.s32.totalorder %s99, 1
      %p505 = por %p503, %p504
      %p506 = scmp.ne.s32.totalorder %s497, %s498
      %p507 = scmp.eq.s32.totalorder %s99, 0
      %p508 = por %p506, %p507
      %p509 = scmp.ne.s32.totalorder %s497, %s498
      %p510 = scmp.eq.s32.totalorder %s100, 1
      %p511 = por %p509, %p510
      %p513 = scmp.ne.s32.totalorder %s498, %s512
      %p514 = scmp.eq.s32.totalorder %s100, 0
      %p515 = por %p513, %p514
      %s517 = sadd.s32 %s516, 1
      %p520 = scmp.eq.s32.totalorder %s94, 1
      %p521 = scmp.ne.s32.totalorder %s516, %s518
      %p522 = scmp.eq.s32.totalorder %s94, 0
      %p523 = por %p521, %p522
      %p524 = scmp.ne.s32.totalorder %s516, %s518
      %p525 = scmp.eq.s32.totalorder %s99, 1
      %p526 = por %p524, %p525
      %p527 = scmp.ne.s32.totalorder %s518, %s519
      %p528 = scmp.eq.s32.totalorder %s99, 0
      %p529 = por %p527, %p528
      %p530 = scmp.ne.s32.totalorder %s518, %s519
      %p531 = scmp.eq.s32.totalorder %s100, 1
      %p532 = por %p530, %p531
      %p534 = scmp.ne.s32.totalorder %s519, %s533
      %p535 = scmp.eq.s32.totalorder %s100, 0
      %p536 = por %p534, %p535
      %s538 = sadd.s32 %s537, 1
      %p541 = scmp.eq.s32.totalorder %s94, 1
      %p542 = scmp.ne.s32.totalorder %s537, %s539
      %p543 = scmp.eq.s32.totalorder %s94, 0
      %p544 = por %p542, %p543
      %p545 = scmp.ne.s32.totalorder %s537, %s539
      %p546 = scmp.eq.s32.totalorder %s99, 1
      %p547 = por %p545, %p546
      %p548 = scmp.ne.s32.totalorder %s539, %s540
      %p549 = scmp.eq.s32.totalorder %s99, 0
      %p550 = por %p548, %p549
      %p551 = scmp.ne.s32.totalorder %s539, %s540
      %p552 = scmp.eq.s32.totalorder %s100, 1
      %p553 = por %p551, %p552
      %p555 = scmp.ne.s32.totalorder %s540, %s554
      %p556 = scmp.eq.s32.totalorder %s100, 0
      %p557 = por %p555, %p556
      %s559 = sadd.s32 %s558, 1
      %p562 = scmp.eq.s32.totalorder %s94, 1
      %p563 = scmp.ne.s32.totalorder %s558, %s560
      %p564 = scmp.eq.s32.totalorder %s94, 0
      %p565 = por %p563, %p564
      %p566 = scmp.ne.s32.totalorder %s558, %s560
      %p567 = scmp.eq.s32.totalorder %s99, 1
      %p568 = por %p566, %p567
      %p569 = scmp.ne.s32.totalorder %s560, %s561
      %p570 = scmp.eq.s32.totalorder %s99, 0
      %p571 = por %p569, %p570
      %p572 = scmp.ne.s32.totalorder %s560, %s561
      %p573 = scmp.eq.s32.totalorder %s100, 1
      %p574 = por %p572, %p573
      %p576 = scmp.ne.s32.totalorder %s561, %s575
      %p577 = scmp.eq.s32.totalorder %s100, 0
      %p578 = por %p576, %p577
      %s580 = sadd.s32 %s579, 1
      %p583 = scmp.eq.s32.totalorder %s94, 1
      %p584 = scmp.ne.s32.totalorder %s579, %s581
      %p585 = scmp.eq.s32.totalorder %s94, 0
      %p586 = por %p584, %p585
      %p587 = scmp.ne.s32.totalorder %s579, %s581
      %p588 = scmp.eq.s32.totalorder %s99, 1
      %p589 = por %p587, %p588
      %p590 = scmp.ne.s32.totalorder %s581, %s582
      %p591 = scmp.eq.s32.totalorder %s99, 0
      %p592 = por %p590, %p591
      %p593 = scmp.ne.s32.totalorder %s581, %s582
      %p594 = scmp.eq.s32.totalorder %s100, 1
      %p595 = por %p593, %p594
      %p597 = scmp.ne.s32.totalorder %s582, %s596
      %p598 = scmp.eq.s32.totalorder %s100, 0
      %p599 = por %p597, %p598
      %s601 = sadd.s32 %s600, 1
      %p604 = scmp.eq.s32.totalorder %s94, 1
      %p605 = scmp.ne.s32.totalorder %s600, %s602
      %p606 = scmp.eq.s32.totalorder %s94, 0
      %p607 = por %p605, %p606
      %p608 = scmp.ne.s32.totalorder %s600, %s602
      %p609 = scmp.eq.s32.totalorder %s99, 1
      %p610 = por %p608, %p609
      %p611 = scmp.ne.s32.totalorder %s602, %s603
      %p612 = scmp.eq.s32.totalorder %s99, 0
      %p613 = por %p611, %p612
      %p614 = scmp.ne.s32.totalorder %s602, %s603
      %p615 = scmp.eq.s32.totalorder %s100, 1
      %p616 = por %p614, %p615
      %p618 = scmp.ne.s32.totalorder %s603, %s617
      %p619 = scmp.eq.s32.totalorder %s100, 0
      %p620 = por %p618, %p619
      %s622 = sadd.s32 %s621, 1
      %p625 = scmp.eq.s32.totalorder %s94, 1
      %p626 = scmp.ne.s32.totalorder %s621, %s623
      %p627 = scmp.eq.s32.totalorder %s94, 0
      %p628 = por %p626, %p627
      %p629 = scmp.ne.s32.totalorder %s621, %s623
      %p630 = scmp.eq.s32.totalorder %s99, 1
      %p631 = por %p629, %p630
      %p632 = scmp.ne.s32.totalorder %s623, %s624
      %p633 = scmp.eq.s32.totalorder %s99, 0
      %p634 = por %p632, %p633
      %p635 = scmp.ne.s32.totalorder %s623, %s624
      %p636 = scmp.eq.s32.totalorder %s100, 1
      %p637 = por %p635, %p636
      %p639 = scmp.ne.s32.totalorder %s624, %s638
      %p640 = scmp.eq.s32.totalorder %s100, 0
      %p641 = por %p639, %p640
      %s643 = sadd.s32 %s642, 1
      %p646 = scmp.eq.s32.totalorder %s94, 1
      %p647 = scmp.ne.s32.totalorder %s642, %s644
      %p648 = scmp.eq.s32.totalorder %s94, 0
      %p649 = por %p647, %p648
      %p650 = scmp.ne.s32.totalorder %s642, %s644
      %p651 = scmp.eq.s32.totalorder %s99, 1
      %p652 = por %p650, %p651
      %p653 = scmp.ne.s32.totalorder %s644, %s645
      %p654 = scmp.eq.s32.totalorder %s99, 0
      %p655 = por %p653, %p654
      %p656 = scmp.ne.s32.totalorder %s644, %s645
      %p657 = scmp.eq.s32.totalorder %s100, 1
      %p658 = por %p656, %p657
      %p660 = scmp.ne.s32.totalorder %s645, %s659
      %p661 = scmp.eq.s32.totalorder %s100, 0
      %p662 = por %p660, %p661
      %s664 = sadd.s32 %s663, 1
      %p667 = scmp.eq.s32.totalorder %s94, 1
      %p668 = scmp.ne.s32.totalorder %s663, %s665
      %p669 = scmp.eq.s32.totalorder %s94, 0
      %p670 = por %p668, %p669
      %p671 = scmp.ne.s32.totalorder %s663, %s665
      %p672 = scmp.eq.s32.totalorder %s99, 1
      %p673 = por %p671, %p672
      %p674 = scmp.ne.s32.totalorder %s665, %s666
      %p675 = scmp.eq.s32.totalorder %s99, 0
      %p676 = por %p674, %p675
      %p677 = scmp.ne.s32.totalorder %s665, %s666
      %p678 = scmp.eq.s32.totalorder %s100, 1
      %p679 = por %p677, %p678
      %p681 = scmp.ne.s32.totalorder %s666, %s680
      %p682 = scmp.eq.s32.totalorder %s100, 0
      %p683 = por %p681, %p682
      %s685 = sadd.s32 %s684, 1
      %p688 = scmp.eq.s32.totalorder %s94, 1
      %p689 = scmp.ne.s32.totalorder %s684, %s686
      %p690 = scmp.eq.s32.totalorder %s94, 0
      %p691 = por %p689, %p690
      %p692 = scmp.ne.s32.totalorder %s684, %s686
      %p693 = scmp.eq.s32.totalorder %s99, 1
      %p694 = por %p692, %p693
      %p695 = scmp.ne.s32.totalorder %s686, %s687
      %p696 = scmp.eq.s32.totalorder %s99, 0
      %p697 = por %p695, %p696
      %p698 = scmp.ne.s32.totalorder %s686, %s687
      %p699 = scmp.eq.s32.totalorder %s100, 1
      %p700 = por %p698, %p699
      %p702 = scmp.ne.s32.totalorder %s687, %s701
      %p703 = scmp.eq.s32.totalorder %s100, 0
      %p704 = por %p702, %p703
      %s706 = sadd.s32 %s705, 1
      %p709 = scmp.eq.s32.totalorder %s94, 1
      %p710 = scmp.ne.s32.totalorder %s705, %s707
      %p711 = scmp.eq.s32.totalorder %s94, 0
      %p712 = por %p710, %p711
      %p713 = scmp.ne.s32.totalorder %s705, %s707
      %p714 = scmp.eq.s32.totalorder %s99, 1
      %p715 = por %p713, %p714
      %p716 = scmp.ne.s32.totalorder %s707, %s708
      %p717 = scmp.eq.s32.totalorder %s99, 0
      %p718 = por %p716, %p717
      %p719 = scmp.ne.s32.totalorder %s707, %s708
      %p720 = scmp.eq.s32.totalorder %s100, 1
      %p721 = por %p719, %p720
      %p723 = scmp.ne.s32.totalorder %s708, %s722
      %p724 = scmp.eq.s32.totalorder %s100, 0
      %p725 = por %p723, %p724
      %s727 = sadd.s32 %s726, 1
      %p730 = scmp.eq.s32.totalorder %s94, 1
      %p731 = scmp.ne.s32.totalorder %s726, %s728
      %p732 = scmp.eq.s32.totalorder %s94, 0
      %p733 = por %p731, %p732
      %p734 = scmp.ne.s32.totalorder %s726, %s728
      %p735 = scmp.eq.s32.totalorder %s99, 1
      %p736 = por %p734, %p735
      %p737 = scmp.ne.s32.totalorder %s728, %s729
      %p738 = scmp.eq.s32.totalorder %s99, 0
      %p739 = por %p737, %p738
      %p740 = scmp.ne.s32.totalorder %s728, %s729
      %p741 = scmp.eq.s32.totalorder %s100, 1
      %p742 = por %p740, %p741
      %p744 = scmp.ne.s32.totalorder %s729, %s743
      %p745 = scmp.eq.s32.totalorder %s100, 0
      %p746 = por %p744, %p745
      %s748 = sadd.s32 %s747, 1
      %p751 = scmp.eq.s32.totalorder %s94, 1
      %p752 = scmp.ne.s32.totalorder %s747, %s749
      %p753 = scmp.eq.s32.totalorder %s94, 0
      %p754 = por %p752, %p753
      %p755 = scmp.ne.s32.totalorder %s747, %s749
      %p756 = scmp.eq.s32.totalorder %s99, 1
      %p757 = por %p755, %p756
      %p758 = scmp.ne.s32.totalorder %s749, %s750
      %p759 = scmp.eq.s32.totalorder %s99, 0
      %p760 = por %p758, %p759
      %p761 = scmp.ne.s32.totalorder %s749, %s750
      %p762 = scmp.eq.s32.totalorder %s100, 1
      %p763 = por %p761, %p762
      %p765 = scmp.ne.s32.totalorder %s750, %s764
      %p766 = scmp.eq.s32.totalorder %s100, 0
      %p767 = por %p765, %p766
      %s769 = sadd.s32 %s768, 1
      %p772 = scmp.eq.s32.totalorder %s94, 1
      %p773 = scmp.ne.s32.totalorder %s768, %s770
      %p774 = scmp.eq.s32.totalorder %s94, 0
      %p775 = por %p773, %p774
      %p776 = scmp.ne.s32.totalorder %s768, %s770
      %p777 = scmp.eq.s32.totalorder %s99, 1
      %p778 = por %p776, %p777
      %p779 = scmp.ne.s32.totalorder %s770, %s771
      %p780 = scmp.eq.s32.totalorder %s99, 0
      %p781 = por %p779, %p780
      %p782 = scmp.ne.s32.totalorder %s770, %s771
      %p783 = scmp.eq.s32.totalorder %s100, 1
      %p784 = por %p782, %p783
      %p786 = scmp.ne.s32.totalorder %s771, %s785
      %p787 = scmp.eq.s32.totalorder %s100, 0
      %p788 = por %p786, %p787
      %s790 = sadd.s32 %s789, 1
      %p793 = scmp.eq.s32.totalorder %s94, 1
      %p794 = scmp.ne.s32.totalorder %s789, %s791
      %p795 = scmp.eq.s32.totalorder %s94, 0
      %p796 = por %p794, %p795
      %p797 = scmp.ne.s32.totalorder %s789, %s791
      %p798 = scmp.eq.s32.totalorder %s99, 1
      %p799 = por %p797, %p798
      %p800 = scmp.ne.s32.totalorder %s791, %s792
      %p801 = scmp.eq.s32.totalorder %s99, 0
      %p802 = por %p800, %p801
      %p803 = scmp.ne.s32.totalorder %s791, %s792
      %p804 = scmp.eq.s32.totalorder %s100, 1
      %p805 = por %p803, %p804
      %p807 = scmp.ne.s32.totalorder %s792, %s806
      %p808 = scmp.eq.s32.totalorder %s100, 0
      %p809 = por %p807, %p808
      %s811 = sadd.s32 %s810, 1
      %p814 = scmp.eq.s32.totalorder %s94, 1
      %p815 = scmp.ne.s32.totalorder %s810, %s812
      %p816 = scmp.eq.s32.totalorder %s94, 0
      %p817 = por %p815, %p816
      %p818 = scmp.ne.s32.totalorder %s810, %s812
      %p819 = scmp.eq.s32.totalorder %s99, 1
      %p820 = por %p818, %p819
      %p821 = scmp.ne.s32.totalorder %s812, %s813
      %p822 = scmp.eq.s32.totalorder %s99, 0
      %p823 = por %p821, %p822
      %p824 = scmp.ne.s32.totalorder %s812, %s813
      %p825 = scmp.eq.s32.totalorder %s100, 1
      %p826 = por %p824, %p825
      %p828 = scmp.ne.s32.totalorder %s813, %s827
      %p829 = scmp.eq.s32.totalorder %s100, 0
      %p830 = por %p828, %p829
      %s832 = sadd.s32 %s831, 1
      %p835 = scmp.eq.s32.totalorder %s94, 1
      %p836 = scmp.ne.s32.totalorder %s831, %s833
      %p837 = scmp.eq.s32.totalorder %s94, 0
      %p838 = por %p836, %p837
      %p839 = scmp.ne.s32.totalorder %s831, %s833
      %p840 = scmp.eq.s32.totalorder %s99, 1
      %p841 = por %p839, %p840
      %p842 = scmp.ne.s32.totalorder %s833, %s834
      %p843 = scmp.eq.s32.totalorder %s99, 0
      %p844 = por %p842, %p843
      %p845 = scmp.ne.s32.totalorder %s833, %s834
      %p846 = scmp.eq.s32.totalorder %s100, 1
      %p847 = por %p845, %p846
      %p849 = scmp.ne.s32.totalorder %s834, %s848
      %p850 = scmp.eq.s32.totalorder %s100, 0
      %p851 = por %p849, %p850
      %s853 = sadd.s32 %s852, 1
      %p856 = scmp.eq.s32.totalorder %s94, 1
      %p857 = scmp.ne.s32.totalorder %s852, %s854
      %p858 = scmp.eq.s32.totalorder %s94, 0
      %p859 = por %p857, %p858
      %p860 = scmp.ne.s32.totalorder %s852, %s854
      %p861 = scmp.eq.s32.totalorder %s99, 1
      %p862 = por %p860, %p861
      %p863 = scmp.ne.s32.totalorder %s854, %s855
      %p864 = scmp.eq.s32.totalorder %s99, 0
      %p865 = por %p863, %p864
      %p866 = scmp.ne.s32.totalorder %s854, %s855
      %p867 = scmp.eq.s32.totalorder %s100, 1
      %p868 = por %p866, %p867
      %p870 = scmp.ne.s32.totalorder %s855, %s869
      %p871 = scmp.eq.s32.totalorder %s100, 0
      %p872 = por %p870, %p871
      %s874 = sadd.s32 %s873, 1
      %p877 = scmp.eq.s32.totalorder %s94, 1
      %p878 = scmp.ne.s32.totalorder %s873, %s875
      %p879 = scmp.eq.s32.totalorder %s94, 0
      %p880 = por %p878, %p879
      %p881 = scmp.ne.s32.totalorder %s873, %s875
      %p882 = scmp.eq.s32.totalorder %s99, 1
      %p883 = por %p881, %p882
      %p884 = scmp.ne.s32.totalorder %s875, %s876
      %p885 = scmp.eq.s32.totalorder %s99, 0
      %p886 = por %p884, %p885
      %p887 = scmp.ne.s32.totalorder %s875, %s876
      %p888 = scmp.eq.s32.totalorder %s100, 1
      %p889 = por %p887, %p888
      %p891 = scmp.ne.s32.totalorder %s876, %s890
      %p892 = scmp.eq.s32.totalorder %s100, 0
      %p893 = por %p891, %p892
      %s895 = sadd.s32 %s894, 1
      %p898 = scmp.eq.s32.totalorder %s94, 1
      %p899 = scmp.ne.s32.totalorder %s894, %s896
      %p900 = scmp.eq.s32.totalorder %s94, 0
      %p901 = por %p899, %p900
      %p902 = scmp.ne.s32.totalorder %s894, %s896
      %p903 = scmp.eq.s32.totalorder %s99, 1
      %p904 = por %p902, %p903
      %p905 = scmp.ne.s32.totalorder %s896, %s897
      %p906 = scmp.eq.s32.totalorder %s99, 0
      %p907 = por %p905, %p906
      %p908 = scmp.ne.s32.totalorder %s896, %s897
      %p909 = scmp.eq.s32.totalorder %s100, 1
      %p910 = por %p908, %p909
      %p912 = scmp.ne.s32.totalorder %s897, %s911
      %p913 = scmp.eq.s32.totalorder %s100, 0
      %p914 = por %p912, %p913
      %s916 = sadd.s32 %s915, 1
      %p919 = scmp.eq.s32.totalorder %s94, 1
      %p920 = scmp.ne.s32.totalorder %s915, %s917
      %p921 = scmp.eq.s32.totalorder %s94, 0
      %p922 = por %p920, %p921
      %p923 = scmp.ne.s32.totalorder %s915, %s917
      %p924 = scmp.eq.s32.totalorder %s99, 1
      %p925 = por %p923, %p924
      %p926 = scmp.ne.s32.totalorder %s917, %s918
      %p927 = scmp.eq.s32.totalorder %s99, 0
      %p928 = por %p926, %p927
      %p929 = scmp.ne.s32.totalorder %s917, %s918
      %p930 = scmp.eq.s32.totalorder %s100, 1
      %p931 = por %p929, %p930
      %p933 = scmp.ne.s32.totalorder %s918, %s932
      %p934 = scmp.eq.s32.totalorder %s100, 0
      %p935 = por %p933, %p934
      %s937 = sadd.s32 %s936, 1
      %p940 = scmp.eq.s32.totalorder %s94, 1
      %p941 = scmp.ne.s32.totalorder %s936, %s938
      %p942 = scmp.eq.s32.totalorder %s94, 0
      %p943 = por %p941, %p942
      %p944 = scmp.ne.s32.totalorder %s936, %s938
      %p945 = scmp.eq.s32.totalorder %s99, 1
      %p946 = por %p944, %p945
      %p947 = scmp.ne.s32.totalorder %s938, %s939
      %p948 = scmp.eq.s32.totalorder %s99, 0
      %p949 = por %p947, %p948
      %p950 = scmp.ne.s32.totalorder %s938, %s939
      %p951 = scmp.eq.s32.totalorder %s100, 1
      %p952 = por %p950, %p951
      %p954 = scmp.ne.s32.totalorder %s939, %s953
      %p955 = scmp.eq.s32.totalorder %s100, 0
      %p956 = por %p954, %p955
      %s958 = sadd.s32 %s957, 1
      %p961 = scmp.eq.s32.totalorder %s94, 1
      %p962 = scmp.ne.s32.totalorder %s957, %s959
      %p963 = scmp.eq.s32.totalorder %s94, 0
      %p964 = por %p962, %p963
      %p965 = scmp.ne.s32.totalorder %s957, %s959
      %p966 = scmp.eq.s32.totalorder %s99, 1
      %p967 = por %p965, %p966
      %p968 = scmp.ne.s32.totalorder %s959, %s960
      %p969 = scmp.eq.s32.totalorder %s99, 0
      %p970 = por %p968, %p969
      %p971 = scmp.ne.s32.totalorder %s959, %s960
      %p972 = scmp.eq.s32.totalorder %s100, 1
      %p973 = por %p971, %p972
      %p975 = scmp.ne.s32.totalorder %s960, %s974
      %p976 = scmp.eq.s32.totalorder %s100, 0
      %p977 = por %p975, %p976
      %s979 = sadd.s32 %s978, 1
      %p982 = scmp.eq.s32.totalorder %s94, 1
      %p983 = scmp.ne.s32.totalorder %s978, %s980
      %p984 = scmp.eq.s32.totalorder %s94, 0
      %p985 = por %p983, %p984
      %p986 = scmp.ne.s32.totalorder %s978, %s980
      %p987 = scmp.eq.s32.totalorder %s99, 1
      %p988 = por %p986, %p987
      %p989 = scmp.ne.s32.totalorder %s980, %s981
      %p990 = scmp.eq.s32.totalorder %s99, 0
      %p991 = por %p989, %p990
      %p992 = scmp.ne.s32.totalorder %s980, %s981
      %p993 = scmp.eq.s32.totalorder %s100, 1
      %p994 = por %p992, %p993
      %p996 = scmp.ne.s32.totalorder %s981, %s995
      %p997 = scmp.eq.s32.totalorder %s100, 0
      %p998 = por %p996, %p997
      %s999 = ssub.s32 %s94, %s101
      %p1000 = scmp.eq.s32.totalorder %s999, 0
      %s1002 = sadd.s32 %s1001, 1
      %s1003 = scalar_select %p1000, %s1001, %s1002
      %p1006 = pneg %p1000
      %p1007 = scmp.eq.s32.totalorder %s94, 1
      %p1008 = por %p1006, %p1007
      %p1009 = scmp.ne.s32.totalorder %s1001, %s1004
      %p1010 = scmp.eq.s32.totalorder %s94, 0
      %p1011 = por %p1009, %p1010
      %p1012 = scmp.ne.s32.totalorder %s1001, %s1004
      %p1013 = scmp.eq.s32.totalorder %s99, 1
      %p1014 = por %p1012, %p1013
      %p1015 = scmp.ne.s32.totalorder %s1004, %s1005
      %p1016 = scmp.eq.s32.totalorder %s99, 0
      %p1017 = por %p1015, %p1016
      %p1018 = scmp.ne.s32.totalorder %s1004, %s1005
      %p1019 = scmp.eq.s32.totalorder %s100, 1
      %p1020 = por %p1018, %p1019
      %p1022 = scmp.ne.s32.totalorder %s1005, %s1021
      %p1023 = scmp.eq.s32.totalorder %s100, 0
      %p1024 = por %p1022, %p1023
      %p1025 = scmp.le.s32.totalorder 1, %s94
      %p1026 = scmp.lt.s32.totalorder %s94, 3
      %p1027 = pnand %p1025, %p1026
      %p1028 = pneg %p1027
      // Predicated region
      $region9: #{m2m100_forward.1} parent=5 // pred_check
        _
      $region10: #{m2m100_forward.1} parent=5 // pred_check_branch
        %1030 = sbr.rel (%p1027) target = $region12
      $region11: #{m2m100_forward.1} parent=5 // pred_region
        %s1031 = ssub.s32 %s94, 1
        // Predicated region
        $region13: #{m2m100_forward.1} parent=11 // pred_check
          %p1032 = pneg %p167
        $region14: #{m2m100_forward.1} parent=11 // pred_check_branch
          %1034 = sbr.rel (%p1032) target = $region16
        $region15: #{m2m100_forward.1} parent=11 // pred_region
          _
        $region16: #{m2m100_forward.1} parent=11 // pred_fallthru
          _
        // Predicated region
        $region17: #{m2m100_forward.1} parent=11 // pred_check
          %p1035 = pneg %p188
        $region18: #{m2m100_forward.1} parent=11 // pred_check_branch
          %1037 = sbr.rel (%p1035) target = $region20
        $region19: #{m2m100_forward.1} parent=11 // pred_region
          _
        $region20: #{m2m100_forward.1} parent=11 // pred_fallthru
          _
        // Predicated region
        $region21: #{m2m100_forward.1} parent=11 // pred_check
          %p1038 = pneg %p235
        $region22: #{m2m100_forward.1} parent=11 // pred_check_branch
          %1040 = sbr.rel (%p1038) target = $region24
        $region23: #{m2m100_forward.1} parent=11 // pred_region
          _
        $region24: #{m2m100_forward.1} parent=11 // pred_fallthru
          _
        // Predicated region
        $region25: #{m2m100_forward.1} parent=11 // pred_check
          %p1041 = pneg %p256
        $region26: #{m2m100_forward.1} parent=11 // pred_check_branch
          %1043 = sbr.rel (%p1041) target = $region28
        $region27: #{m2m100_forward.1} parent=11 // pred_region
          _
        $region28: #{m2m100_forward.1} parent=11 // pred_fallthru
          _
        // Predicated region
        $region29: #{m2m100_forward.1} parent=11 // pred_check
          %p1044 = pneg %p277
        $region30: #{m2m100_forward.1} parent=11 // pred_check_branch
          %1046 = sbr.rel (%p1044) target = $region32
        $region31: #{m2m100_forward.1} parent=11 // pred_region
          _
        $region32: #{m2m100_forward.1} parent=11 // pred_fallthru
          _
        // Predicated region
        $region33: #{m2m100_forward.1} parent=11 // pred_check
          %p1047 = pneg %p298
        $region34: #{m2m100_forward.1} parent=11 // pred_check_branch
          %1049 = sbr.rel (%p1047) target = $region36
        $region35: #{m2m100_forward.1} parent=11 // pred_region
          _
        $region36: #{m2m100_forward.1} parent=11 // pred_fallthru
          _
        // Predicated region
        $region37: #{m2m100_forward.1} parent=11 // pred_check
          %p1050 = pneg %p319
        $region38: #{m2m100_forward.1} parent=11 // pred_check_branch
          %1052 = sbr.rel (%p1050) target = $region40
        $region39: #{m2m100_forward.1} parent=11 // pred_region
          _
        $region40: #{m2m100_forward.1} parent=11 // pred_fallthru
          _
        // Predicated region
        $region41: #{m2m100_forward.1} parent=11 // pred_check
          %p1053 = pneg %p340
        $region42: #{m2m100_forward.1} parent=11 // pred_check_branch
          %1055 = sbr.rel (%p1053) target = $region44
        $region43: #{m2m100_forward.1} parent=11 // pred_region
          _
        $region44: #{m2m100_forward.1} parent=11 // pred_fallthru
          _
        // Predicated region
        $region45: #{m2m100_forward.1} parent=11 // pred_check
          %p1056 = pneg %p361
        $region46: #{m2m100_forward.1} parent=11 // pred_check_branch
          %1058 = sbr.rel (%p1056) target = $region48
        $region47: #{m2m100_forward.1} parent=11 // pred_region
          _
        $region48: #{m2m100_forward.1} parent=11 // pred_fallthru
          _
        // Predicated region
        $region49: #{m2m100_forward.1} parent=11 // pred_check
          %p1059 = pneg %p382
        $region50: #{m2m100_forward.1} parent=11 // pred_check_branch
          %1061 = sbr.rel (%p1059) target = $region52
        $region51: #{m2m100_forward.1} parent=11 // pred_region
          _
        $region52: #{m2m100_forward.1} parent=11 // pred_fallthru
          _
        // Predicated region
        $region53: #{m2m100_forward.1} parent=11 // pred_check
          %p1062 = pneg %p403
        $region54: #{m2m100_forward.1} parent=11 // pred_check_branch
          %1064 = sbr.rel (%p1062) target = $region56
        $region55: #{m2m100_forward.1} parent=11 // pred_region
          _
        $region56: #{m2m100_forward.1} parent=11 // pred_fallthru
          _
        // Predicated region
        $region57: #{m2m100_forward.1} parent=11 // pred_check
          %p1065 = pneg %p424
        $region58: #{m2m100_forward.1} parent=11 // pred_check_branch
          %1067 = sbr.rel (%p1065) target = $region60
        $region59: #{m2m100_forward.1} parent=11 // pred_region
          _
        $region60: #{m2m100_forward.1} parent=11 // pred_fallthru
          _
        // Predicated region
        $region61: #{m2m100_forward.1} parent=11 // pred_check
          %p1068 = pneg %p445
        $region62: #{m2m100_forward.1} parent=11 // pred_check_branch
          %1070 = sbr.rel (%p1068) target = $region64
        $region63: #{m2m100_forward.1} parent=11 // pred_region
          _
        $region64: #{m2m100_forward.1} parent=11 // pred_fallthru
          _
        // Predicated region
        $region65: #{m2m100_forward.1} parent=11 // pred_check
          %p1071 = pneg %p466
        $region66: #{m2m100_forward.1} parent=11 // pred_check_branch
          %1073 = sbr.rel (%p1071) target = $region68
        $region67: #{m2m100_forward.1} parent=11 // pred_region
          _
        $region68: #{m2m100_forward.1} parent=11 // pred_fallthru
          _
        // Predicated region
        $region69: #{m2m100_forward.1} parent=11 // pred_check
          %p1074 = pneg %p487
        $region70: #{m2m100_forward.1} parent=11 // pred_check_branch
          %1076 = sbr.rel (%p1074) target = $region72
        $region71: #{m2m100_forward.1} parent=11 // pred_region
          _
        $region72: #{m2m100_forward.1} parent=11 // pred_fallthru
          _
        // Predicated region
        $region73: #{m2m100_forward.1} parent=11 // pred_check
          %p1077 = pneg %p508
        $region74: #{m2m100_forward.1} parent=11 // pred_check_branch
          %1079 = sbr.rel (%p1077) target = $region76
        $region75: #{m2m100_forward.1} parent=11 // pred_region
          _
        $region76: #{m2m100_forward.1} parent=11 // pred_fallthru
          _
        // Predicated region
        $region77: #{m2m100_forward.1} parent=11 // pred_check
          %p1080 = pneg %p529
        $region78: #{m2m100_forward.1} parent=11 // pred_check_branch
          %1082 = sbr.rel (%p1080) target = $region80
        $region79: #{m2m100_forward.1} parent=11 // pred_region
          _
        $region80: #{m2m100_forward.1} parent=11 // pred_fallthru
          _
        // Predicated region
        $region81: #{m2m100_forward.1} parent=11 // pred_check
          %p1083 = pneg %p550
        $region82: #{m2m100_forward.1} parent=11 // pred_check_branch
          %1085 = sbr.rel (%p1083) target = $region84
        $region83: #{m2m100_forward.1} parent=11 // pred_region
          _
        $region84: #{m2m100_forward.1} parent=11 // pred_fallthru
          _
        // Predicated region
        $region85: #{m2m100_forward.1} parent=11 // pred_check
          %p1086 = pneg %p571
        $region86: #{m2m100_forward.1} parent=11 // pred_check_branch
          %1088 = sbr.rel (%p1086) target = $region88
        $region87: #{m2m100_forward.1} parent=11 // pred_region
          _
        $region88: #{m2m100_forward.1} parent=11 // pred_fallthru
          _
        // Predicated region
        $region89: #{m2m100_forward.1} parent=11 // pred_check
          %p1089 = pneg %p592
        $region90: #{m2m100_forward.1} parent=11 // pred_check_branch
          %1091 = sbr.rel (%p1089) target = $region92
        $region91: #{m2m100_forward.1} parent=11 // pred_region
          _
        $region92: #{m2m100_forward.1} parent=11 // pred_fallthru
          _
        // Predicated region
        $region93: #{m2m100_forward.1} parent=11 // pred_check
          %p1092 = pneg %p613
        $region94: #{m2m100_forward.1} parent=11 // pred_check_branch
          %1094 = sbr.rel (%p1092) target = $region96
        $region95: #{m2m100_forward.1} parent=11 // pred_region
          _
        $region96: #{m2m100_forward.1} parent=11 // pred_fallthru
          _
        // Predicated region
        $region97: #{m2m100_forward.1} parent=11 // pred_check
          %p1095 = pneg %p634
        $region98: #{m2m100_forward.1} parent=11 // pred_check_branch
          %1097 = sbr.rel (%p1095) target = $region100
        $region99: #{m2m100_forward.1} parent=11 // pred_region
          _
        $region100: #{m2m100_forward.1} parent=11 // pred_fallthru
          _
        // Predicated region
        $region101: #{m2m100_forward.1} parent=11 // pred_check
          %p1098 = pneg %p655
        $region102: #{m2m100_forward.1} parent=11 // pred_check_branch
          %1100 = sbr.rel (%p1098) target = $region104
        $region103: #{m2m100_forward.1} parent=11 // pred_region
          _
        $region104: #{m2m100_forward.1} parent=11 // pred_fallthru
          _
        // Predicated region
        $region105: #{m2m100_forward.1} parent=11 // pred_check
          %p1101 = pneg %p676
        $region106: #{m2m100_forward.1} parent=11 // pred_check_branch
          %1103 = sbr.rel (%p1101) target = $region108
        $region107: #{m2m100_forward.1} parent=11 // pred_region
          _
        $region108: #{m2m100_forward.1} parent=11 // pred_fallthru
          _
        // Predicated region
        $region109: #{m2m100_forward.1} parent=11 // pred_check
          %p1104 = pneg %p697
        $region110: #{m2m100_forward.1} parent=11 // pred_check_branch
          %1106 = sbr.rel (%p1104) target = $region112
        $region111: #{m2m100_forward.1} parent=11 // pred_region
          _
        $region112: #{m2m100_forward.1} parent=11 // pred_fallthru
          _
        // Predicated region
        $region113: #{m2m100_forward.1} parent=11 // pred_check
          %p1107 = pneg %p718
        $region114: #{m2m100_forward.1} parent=11 // pred_check_branch
          %1109 = sbr.rel (%p1107) target = $region116
        $region115: #{m2m100_forward.1} parent=11 // pred_region
          _
        $region116: #{m2m100_forward.1} parent=11 // pred_fallthru
          _
        // Predicated region
        $region117: #{m2m100_forward.1} parent=11 // pred_check
          %p1110 = pneg %p739
        $region118: #{m2m100_forward.1} parent=11 // pred_check_branch
          %1112 = sbr.rel (%p1110) target = $region120
        $region119: #{m2m100_forward.1} parent=11 // pred_region
          _
        $region120: #{m2m100_forward.1} parent=11 // pred_fallthru
          _
        // Predicated region
        $region121: #{m2m100_forward.1} parent=11 // pred_check
          %p1113 = pneg %p760
        $region122: #{m2m100_forward.1} parent=11 // pred_check_branch
          %1115 = sbr.rel (%p1113) target = $region124
        $region123: #{m2m100_forward.1} parent=11 // pred_region
          _
        $region124: #{m2m100_forward.1} parent=11 // pred_fallthru
          _
        // Predicated region
        $region125: #{m2m100_forward.1} parent=11 // pred_check
          %p1116 = pneg %p781
        $region126: #{m2m100_forward.1} parent=11 // pred_check_branch
          %1118 = sbr.rel (%p1116) target = $region128
        $region127: #{m2m100_forward.1} parent=11 // pred_region
          _
        $region128: #{m2m100_forward.1} parent=11 // pred_fallthru
          _
        // Predicated region
        $region129: #{m2m100_forward.1} parent=11 // pred_check
          %p1119 = pneg %p802
        $region130: #{m2m100_forward.1} parent=11 // pred_check_branch
          %1121 = sbr.rel (%p1119) target = $region132
        $region131: #{m2m100_forward.1} parent=11 // pred_region
          _
        $region132: #{m2m100_forward.1} parent=11 // pred_fallthru
          _
        // Predicated region
        $region133: #{m2m100_forward.1} parent=11 // pred_check
          %p1122 = pneg %p823
        $region134: #{m2m100_forward.1} parent=11 // pred_check_branch
          %1124 = sbr.rel (%p1122) target = $region136
        $region135: #{m2m100_forward.1} parent=11 // pred_region
          _
        $region136: #{m2m100_forward.1} parent=11 // pred_fallthru
          _
        // Predicated region
        $region137: #{m2m100_forward.1} parent=11 // pred_check
          %p1125 = pneg %p844
        $region138: #{m2m100_forward.1} parent=11 // pred_check_branch
          %1127 = sbr.rel (%p1125) target = $region140
        $region139: #{m2m100_forward.1} parent=11 // pred_region
          _
        $region140: #{m2m100_forward.1} parent=11 // pred_fallthru
          _
        // Predicated region
        $region141: #{m2m100_forward.1} parent=11 // pred_check
          %p1128 = pneg %p865
        $region142: #{m2m100_forward.1} parent=11 // pred_check_branch
          %1130 = sbr.rel (%p1128) target = $region144
        $region143: #{m2m100_forward.1} parent=11 // pred_region
          _
        $region144: #{m2m100_forward.1} parent=11 // pred_fallthru
          _
        // Predicated region
        $region145: #{m2m100_forward.1} parent=11 // pred_check
          %p1131 = pneg %p886
        $region146: #{m2m100_forward.1} parent=11 // pred_check_branch
          %1133 = sbr.rel (%p1131) target = $region148
        $region147: #{m2m100_forward.1} parent=11 // pred_region
          _
        $region148: #{m2m100_forward.1} parent=11 // pred_fallthru
          _
        // Predicated region
        $region149: #{m2m100_forward.1} parent=11 // pred_check
          %p1134 = pneg %p907
        $region150: #{m2m100_forward.1} parent=11 // pred_check_branch
          %1136 = sbr.rel (%p1134) target = $region152
        $region151: #{m2m100_forward.1} parent=11 // pred_region
          _
        $region152: #{m2m100_forward.1} parent=11 // pred_fallthru
          _
        // Predicated region
        $region153: #{m2m100_forward.1} parent=11 // pred_check
          %p1137 = pneg %p928
        $region154: #{m2m100_forward.1} parent=11 // pred_check_branch
          %1139 = sbr.rel (%p1137) target = $region156
        $region155: #{m2m100_forward.1} parent=11 // pred_region
          _
        $region156: #{m2m100_forward.1} parent=11 // pred_fallthru
          _
        // Predicated region
        $region157: #{m2m100_forward.1} parent=11 // pred_check
          %p1140 = pneg %p949
        $region158: #{m2m100_forward.1} parent=11 // pred_check_branch
          %1142 = sbr.rel (%p1140) target = $region160
        $region159: #{m2m100_forward.1} parent=11 // pred_region
          _
        $region160: #{m2m100_forward.1} parent=11 // pred_fallthru
          _
        // Predicated region
        $region161: #{m2m100_forward.1} parent=11 // pred_check
          %p1143 = pneg %p970
        $region162: #{m2m100_forward.1} parent=11 // pred_check_branch
          %1145 = sbr.rel (%p1143) target = $region164
        $region163: #{m2m100_forward.1} parent=11 // pred_region
          _
        $region164: #{m2m100_forward.1} parent=11 // pred_fallthru
          _
        // Predicated region
        $region165: #{m2m100_forward.1} parent=11 // pred_check
          %p1146 = pneg %p991
        $region166: #{m2m100_forward.1} parent=11 // pred_check_branch
          %1148 = sbr.rel (%p1146) target = $region168
        $region167: #{m2m100_forward.1} parent=11 // pred_region
          _
        $region168: #{m2m100_forward.1} parent=11 // pred_fallthru
          _
      $region12: #{m2m100_forward.1} parent=5 // pred_fallthru
        _
      %p1149 = scmp.lt.s32.totalorder %s94, 2
      // Predicated region
      $region169: #{m2m100_forward.1} parent=5 // pred_check
        %p1150 = pneg %p1149
      $region170: #{m2m100_forward.1} parent=5 // pred_check_branch
        %1152 = sbr.rel (%p1150) target = $region172
      $region171: #{m2m100_forward.1} parent=5 // pred_region
        // Predicated region
        $region173: #{m2m100_forward.1} parent=171 // pred_check
          %p1153 = pneg %p114
        $region174: #{m2m100_forward.1} parent=171 // pred_check_branch
          %1155 = sbr.rel (%p1153) target = $region176
        $region175: #{m2m100_forward.1} parent=171 // pred_region
          %p1156 = scmp.lt.s32.totalorder %s94, 1
          %s1157 = scalar_select %p1156, %s94, 1
          %s1158 = smul.addr %s1157, 8
          %s1159 = scalar_lea.vmem %s1, %s1158
        $region176: #{m2m100_forward.1} parent=171 // pred_fallthru
          _
        // Predicated region
        $region177: #{m2m100_forward.1} parent=171 // pred_check
          %p1160 = pneg %p140
        $region178: #{m2m100_forward.1} parent=171 // pred_check_branch
          %1162 = sbr.rel (%p1160) target = $region180
        $region179: #{m2m100_forward.1} parent=171 // pred_region
          %p1163 = scmp.lt.s32.totalorder %s94, 1
          %s1164 = scalar_select %p1163, %s94, 1
          %s1165 = smul.addr %s1164, 8
          %s1166 = scalar_lea.vmem %s3, %s1165
        $region180: #{m2m100_forward.1} parent=171 // pred_fallthru
          _
        // Predicated region
        $region181: #{m2m100_forward.1} parent=171 // pred_check
          %p1167 = pneg %p208
        $region182: #{m2m100_forward.1} parent=171 // pred_check_branch
          %1169 = sbr.rel (%p1167) target = $region184
        $region183: #{m2m100_forward.1} parent=171 // pred_region
          %p1170 = scmp.lt.s32.totalorder %s94, 1
          %s1171 = scalar_select %p1170, %s94, 1
          %s1172 = scalar_lea.vmem %s9, %s1171
        $region184: #{m2m100_forward.1} parent=171 // pred_fallthru
          _
      $region172: #{m2m100_forward.1} parent=5 // pred_fallthru
        _
      %p1173 = scmp.le.s32.totalorder 1, %s94
      %p1174 = scmp.lt.s32.totalorder %s94, 3
      %p1175 = pnand %p1173, %p1174
      %p1176 = pneg %p1175
      // Predicated region
      $region185: #{m2m100_forward.1} parent=5 // pred_check
        _
      $region186: #{m2m100_forward.1} parent=5 // pred_check_branch
        %1178 = sbr.rel (%p1175) target = $region188
      $region187: #{m2m100_forward.1} parent=5 // pred_region
        %s1179 = ssub.s32 %s94, 1
        %p1180 = scmp.lt.s32.totalorder %s99, 1
        %s1181 = scalar_select %p1180, %s99, 1
        %s1182 = smul.addr %s1181, 8
        %s1183 = scalar_lea.vmem %s1, %s1182
        %p1184 = pneg %p120
        %p1185 = pneg %p117
        %p1186 = scmp.lt.s32.totalorder %s99, 1
        %s1187 = scalar_select %p1186, %s99, 1
        %s1188 = smul.addr %s1187, 8
        %s1189 = scalar_lea.vmem %s3, %s1188
        %p1190 = pneg %p146
        %p1191 = pneg %p143
        %p1192 = pneg %p167
        %p1193 = pneg %p164
        %p1194 = pneg %p188
        %p1195 = pneg %p185
        %p1196 = scmp.lt.s32.totalorder %s99, 1
        %s1197 = scalar_select %p1196, %s99, 1
        %s1198 = scalar_lea.vmem %s9, %s1197
        %p1199 = pneg %p214
        %p1200 = pneg %p211
        %p1201 = pneg %p235
        %p1202 = pneg %p232
        %p1203 = pneg %p256
        %p1204 = pneg %p253
        %p1205 = pneg %p277
        %p1206 = pneg %p274
        %p1207 = pneg %p298
        %p1208 = pneg %p295
        %p1209 = pneg %p319
        %p1210 = pneg %p316
        %p1211 = pneg %p340
        %p1212 = pneg %p337
        %p1213 = pneg %p361
        %p1214 = pneg %p358
        %p1215 = pneg %p382
        %p1216 = pneg %p379
        %p1217 = pneg %p403
        %p1218 = pneg %p400
        %p1219 = pneg %p424
        %p1220 = pneg %p421
        %p1221 = pneg %p445
        %p1222 = pneg %p442
        %p1223 = pneg %p466
        %p1224 = pneg %p463
        %p1225 = pneg %p487
        %p1226 = pneg %p484
        %p1227 = pneg %p508
        %p1228 = pneg %p505
        %p1229 = pneg %p529
        %p1230 = pneg %p526
        %p1231 = pneg %p550
        %p1232 = pneg %p547
        %p1233 = pneg %p571
        %p1234 = pneg %p568
        %p1235 = pneg %p592
        %p1236 = pneg %p589
        %p1237 = pneg %p613
        %p1238 = pneg %p610
        %p1239 = pneg %p634
        %p1240 = pneg %p631
        %p1241 = pneg %p655
        %p1242 = pneg %p652
        %p1243 = pneg %p676
        %p1244 = pneg %p673
        %p1245 = pneg %p697
        %p1246 = pneg %p694
        %p1247 = pneg %p718
        %p1248 = pneg %p715
        %p1249 = pneg %p739
        %p1250 = pneg %p736
        %p1251 = pneg %p760
        %p1252 = pneg %p757
        %p1253 = pneg %p781
        %p1254 = pneg %p778
        %p1255 = pneg %p802
        %p1256 = pneg %p799
        %p1257 = pneg %p823
        %p1258 = pneg %p820
        %p1259 = pneg %p844
        %p1260 = pneg %p841
        %p1261 = pneg %p865
        %p1262 = pneg %p862
        %p1263 = pneg %p886
        %p1264 = pneg %p883
        %p1265 = pneg %p907
        %p1266 = pneg %p904
        %p1267 = pneg %p928
        %p1268 = pneg %p925
        %p1269 = pneg %p949
        %p1270 = pneg %p946
        %p1271 = pneg %p970
        %p1272 = pneg %p967
        %p1273 = pneg %p991
        %p1274 = pneg %p988
        %p1275 = pneg %p1017
        %p1276 = pneg %p1014
        %s1277 = sand.u32 %s1004, 1
        %s1278 = scalar_lea.sflag [#allocation3], %s1277
        %s1279 = sand.u32 %s1004, 1
        %s1280 = smul.addr %s1279, 8
        %s1281 = scalar_lea.vmem [#allocation2], %s1280
        %p1282 = scmp.lt.s32.totalorder %s99, 1
        %s1283 = scalar_select %p1282, %s99, 1
        %s1284 = smul.addr %s1283, 8
        %s1285 = scalar_lea.vmem %s1, %s1284
        %p1286 = scmp.lt.s32.totalorder %s99, 1
        %s1287 = scalar_select %p1286, %s99, 1
        %s1288 = smul.addr %s1287, 8
        %s1289 = scalar_lea.vmem %s3, %s1288
        %p1290 = scmp.lt.s32.totalorder %s99, 1
        %s1291 = scalar_select %p1290, %s99, 1
        %s1292 = scalar_lea.vmem %s9, %s1291
        %v1294 = vld [vmem:[%s1292] sm:$0x1]
        %v1295 = vsub.f32 1.0, %v1294
        %v1296 = vmul.f32 %v1295, -1e+09
        %v1297 = vlaneseq
        %v1298 = vshrl.u32 %v1297, 7
        %v1299 = vlaneseq
        %v1300 = vand.u32 %v1299, 127
        %vm1301 = vcmp.ge.s32.totalorder %v1298, %v1300
        %v1302 = vsel %vm1301, 0.0, -1e+09
        %v1303 = vld [vmem:[%s1285] sm:$0xff]
        %1304 = vset.pattern.permute.xlu0 0
        %1305 = vperm.xlu0 %1304, %v1303
        %v1306 = vpop.permute.xlu0 %1305
        %vm1307 = vcmp.eq.s32.totalorder %v1300, %v1306
        %v1308 = vsel %vm1307, 5.656854, 0.0
        %v1309 = vpack.c.bf16 %v1308, %v1308
        %v1310 = vld [vmem:[%s11] sm:$0xf]
        %v1311 = vld [vmem:[%s11 + $0x4] sm:$0xf]
        %v1312 = vld [vmem:[%s11 + $0x8] sm:$0xf]
        %v1313 = vld [vmem:[%s11 + $0xc] sm:$0xf]
        %v1314 = vld [vmem:[%s11 + $0x10] sm:$0xf]
        %v1315 = vld [vmem:[%s11 + $0x14] sm:$0xf]
        %v1316 = vld [vmem:[%s11 + $0x18] sm:$0xf]
        %v1317 = vld [vmem:[%s11 + $0x1c] sm:$0xf]
        %v1318 = vld [vmem:[%s11 + $0x20] sm:$0xf]
        %v1319 = vld [vmem:[%s11 + $0x24] sm:$0xf]
        %v1320 = vld [vmem:[%s11 + $0x28] sm:$0xf]
        %v1321 = vld [vmem:[%s11 + $0x2c] sm:$0xf]
        %v1322 = vld [vmem:[%s11 + $0x30] sm:$0xf]
        %v1323 = vld [vmem:[%s11 + $0x34] sm:$0xf]
        %v1324 = vld [vmem:[%s11 + $0x38] sm:$0xf]
        %v1325 = vld [vmem:[%s11 + $0x3c] sm:$0xf]
        %v1326 = vld [vmem:[%s5] sm:$0xff]
        %v1343 = vunpack.c.l.b16 %v1310
        %v1344 = vunpack.c.l.b16 %v1311
        %v1345 = vunpack.c.l.b16 %v1312
        %v1346 = vunpack.c.l.b16 %v1313
        %v1347 = vunpack.c.l.b16 %v1314
        %v1348 = vunpack.c.l.b16 %v1315
        %v1349 = vunpack.c.l.b16 %v1316
        %v1350 = vunpack.c.l.b16 %v1317
        %v1351 = vunpack.c.l.b16 %v1318
        %v1352 = vunpack.c.l.b16 %v1319
        %v1353 = vunpack.c.l.b16 %v1320
        %v1354 = vunpack.c.l.b16 %v1321
        %v1355 = vunpack.c.l.b16 %v1322
        %v1356 = vunpack.c.l.b16 %v1323
        %v1357 = vunpack.c.l.b16 %v1324
        %v1358 = vunpack.c.l.b16 %v1325
        %v1359 = vpack.c.b16 %v1344, %v1343
        %v1360 = vpack.c.b16 %v1346, %v1345
        %v1361 = vpack.c.b16 %v1348, %v1347
        %v1362 = vpack.c.b16 %v1350, %v1349
        %v1363 = vpack.c.b16 %v1352, %v1351
        %v1364 = vpack.c.b16 %v1354, %v1353
        %v1365 = vpack.c.b16 %v1356, %v1355
        %v1366 = vpack.c.b16 %v1358, %v1357
        %1375 = vmatprep.subr.bf16.mxu0 0
        %1376 = vmatpush1.bf16.msra.mxu0 %v1359
        %1377 = vmatprep.subr.bf16.mxu0 0
        %1378 = vmatpush1.bf16.msra.mxu0 %v1360
        %1379 = vmatprep.subr.bf16.mxu0 0
        %1380 = vmatpush1.bf16.msra.mxu0 %v1361
        %1381 = vmatprep.subr.bf16.mxu0 0
        %1382 = vmatpush1.bf16.msra.mxu0 %v1362
        %1383 = vmatprep.subr.bf16.mxu0 0
        %1384 = vmatpush1.bf16.msra.mxu0 %v1363
        %1385 = vmatprep.subr.bf16.mxu0 0
        %1386 = vmatpush1.bf16.msra.mxu0 %v1364
        %1387 = vmatprep.subr.bf16.mxu0 0
        %1388 = vmatpush1.bf16.msra.mxu0 %v1365
        %1389 = vmatprep.subr.bf16.mxu0 0
        %1390 = vmatpush1.bf16.msra.mxu0 %v1366
        %1391 = vmatprep.subr.bf16.mxu0 0
        %1392 = vmatpush1.bf16.msra.mxu0 0
        %1393 = vmatprep.subr.bf16.mxu0 0
        %1394 = vmatpush1.bf16.msra.mxu0 0
        %1395 = vmatprep.subr.bf16.mxu0 0
        %1396 = vmatpush1.bf16.msra.mxu0 0
        %1397 = vmatprep.subr.bf16.mxu0 0
        %1398 = vmatpush1.bf16.msra.mxu0 0
        %1399 = vmatprep.subr.bf16.mxu0 0
        %1400 = vmatpush1.bf16.msra.mxu0 0
        %1401 = vmatprep.subr.bf16.mxu0 0
        %1402 = vmatpush1.bf16.msra.mxu0 0
        %1403 = vmatprep.subr.bf16.mxu0 0
        %1404 = vmatpush1.bf16.msra.mxu0 0
        %1405 = vmatprep.subr.bf16.mxu0 0
        %1406 = vmatpush1.bf16.msra.mxu0 0
        %1407 = vmatprep.mubr.bf16.mxu0 0
        %1408 = vmatmul.mubr.bf16.gmra.mrb[0].mxu0 %v1309
        %v1409 = vpop.f32.mrb[0].mxu0
        %v1410 = vadd.f32 %v1326, %v1409
        %v1411 = vpop.f32.mrb[0].mxu0
        %v1412 = vpop.f32.mrb[0].mxu0
        %v1413 = vpop.f32.mrb[0].mxu0
        %1414 = vdwg.mxu0
        %v1415 = vld [vmem:[%s13] sm:$0x1]
        %v1416 = vld [vmem:[%s15] sm:$0x1]
        %vm1417 = vcmask 261120
        %v1418 = vsel %vm1417, %v1410, 0.0
        %1419 = vadd.xlane.f32.xlu0 %v1418
        %v1420 = vpop.xlane.xlu0 %1419
        %v1421 = vrcp.pop 32.0
        %v1422 = vmul.f32 %v1420, %v1421
        %v1423 = vsub.f32 %v1410, %v1422
        %v1424 = vmul.f32 %v1423, %v1423
        %v1425 = vsel %vm1417, %v1424, 0.0
        %1426 = vadd.xlane.f32.xlu0 %v1425
        %v1427 = vpop.xlane.xlu0 %1426
        %v1428 = vmul.f32 %v1427, %v1421
        %v1429 = vadd.f32 %v1428, 1e-05
        %v1430 = vrsqrt.pop %v1429
        %v1431 = vmul.f32 %v1423, %v1430
        %v1433 = vlaneseq
        %v1434 = vshrl.u32 %v1433, 7
        %v1435 = vsub.s32 0, %v1434
        %v1436 = vrot.slane %v1415, %v1435
        %v1438 = vmul.f32 %v1431, %v1436
        %v1440 = vlaneseq
        %v1441 = vshrl.u32 %v1440, 7
        %v1442 = vsub.s32 0, %v1441
        %v1443 = vrot.slane %v1416, %v1442
        %v1445 = vadd.f32 %v1438, %v1443
        %v1446 = vld [vmem:[%s17] sm:$0xf]
        %v1447 = vld [vmem:[%s17 + $0x4] sm:$0xf]
        %v1448 = vld [vmem:[%s17 + $0x8] sm:$0xf]
        %v1449 = vld [vmem:[%s17 + $0xc] sm:$0xf]
        %v1450 = vld [vmem:[%s19] sm:$0x1]
        %v1451 = vpack.c.bf16 %v1445, %v1445
        %v1453 = vlaneseq
        %v1454 = vshrl.u32 %v1453, 7
        %v1455 = vsub.s32 0, %v1454
        %v1456 = vrot.slane %v1450, %v1455
        %v1462 = vunpack.c.l.b16 %v1446
        %v1463 = vunpack.c.l.b16 %v1447
        %v1464 = vunpack.c.l.b16 %v1448
        %v1465 = vunpack.c.l.b16 %v1449
        %v1466 = vpack.c.b16 %v1463, %v1462
        %v1467 = vpack.c.b16 %v1465, %v1464
        %v1471 = vsel %vm1417, %v1451, 0
        %1473 = vmatprep.subr.bf16.mxu0 0
        %1474 = vmatpush1.bf16.msra.mxu0 %v1466
        %1475 = vmatprep.subr.bf16.mxu0 0
        %1476 = vmatpush1.bf16.msra.mxu0 %v1467
        %1477 = vmatprep.subr.bf16.mxu0 0
        %1478 = vmatpush1.bf16.msra.mxu0 0
        %1479 = vmatprep.subr.bf16.mxu0 0
        %1480 = vmatpush1.bf16.msra.mxu0 0
        %1481 = vmatprep.subr.bf16.mxu0 0
        %1482 = vmatpush1.bf16.msra.mxu0 0
        %1483 = vmatprep.subr.bf16.mxu0 0
        %1484 = vmatpush1.bf16.msra.mxu0 0
        %1485 = vmatprep.subr.bf16.mxu0 0
        %1486 = vmatpush1.bf16.msra.mxu0 0
        %1487 = vmatprep.subr.bf16.mxu0 0
        %1488 = vmatpush1.bf16.msra.mxu0 0
        %1489 = vmatprep.subr.bf16.mxu0 0
        %1490 = vmatpush1.bf16.msra.mxu0 0
        %1491 = vmatprep.subr.bf16.mxu0 0
        %1492 = vmatpush1.bf16.msra.mxu0 0
        %1493 = vmatprep.subr.bf16.mxu0 0
        %1494 = vmatpush1.bf16.msra.mxu0 0
        %1495 = vmatprep.subr.bf16.mxu0 0
        %1496 = vmatpush1.bf16.msra.mxu0 0
        %1497 = vmatprep.subr.bf16.mxu0 0
        %1498 = vmatpush1.bf16.msra.mxu0 0
        %1499 = vmatprep.subr.bf16.mxu0 0
        %1500 = vmatpush1.bf16.msra.mxu0 0
        %1501 = vmatprep.subr.bf16.mxu0 0
        %1502 = vmatpush1.bf16.msra.mxu0 0
        %1503 = vmatprep.subr.bf16.mxu0 0
        %1504 = vmatpush1.bf16.msra.mxu0 0
        %1505 = vmatprep.mubr.bf16.mxu0 0
        %1506 = vmatmul.mubr.bf16.gmra.mrb[0].mxu0 %v1471
        %v1507 = vpop.f32.mrb[0].mxu0
        %v1508 = vadd.f32 %v1456, %v1507
        %v1509 = vpop.f32.mrb[0].mxu0
        %v1510 = vpop.f32.mrb[0].mxu0
        %v1511 = vpop.f32.mrb[0].mxu0
        %1512 = vdwg.mxu0
        %1514 = vrot.lane.b32.xlu0 %v1508, 120
        %v1515 = vpop.permute.xlu0 %1514
        %1517 = vrot.lane.b32.xlu0 %v1508, 112
        %v1518 = vpop.permute.xlu0 %1517
        %1520 = vrot.lane.b32.xlu0 %v1508, 104
        %v1521 = vpop.permute.xlu0 %1520
        %v1523 = vpack.c.bf16 %v1508, %v1508
        %v1524 = vpack.c.bf16 %v1515, %v1515
        %v1525 = vpack.c.bf16 %v1518, %v1518
        %v1526 = vpack.c.bf16 %v1521, %v1521
        %v1528 = vlaneseq
        %v1529 = vshrl.u32 %v1528, 7
        %v1530 = vsub.s32 0, %v1529
        %v1531 = vrot.slane %v1296, %v1530
        %1534 = vrot.lane.b32.xlu0 %v1523, 96
        %v1535 = vpop.permute.xlu0 %1534
        %vm1536 = vcmask 64512
        %v1538 = vsel %vm1536, %v1523, 0
        %v1541 = vsel %vm1536, %v1535, 0
        %1543 = vmatprep.subr.bf16.mxu0 0
        %1544 = vmatpush1.bf16.xpose.msra.mxu0 %v1541
        %1545 = vmatprep.subr.bf16.mxu0 0
        %1546 = vmatpush1.bf16.xpose.msra.mxu0 0
        %1547 = vmatprep.subr.bf16.mxu0 0
        %1548 = vmatpush1.bf16.xpose.msra.mxu0 0
        %1549 = vmatprep.subr.bf16.mxu0 0
        %1550 = vmatpush1.bf16.xpose.msra.mxu0 0
        %1551 = vmatprep.subr.bf16.mxu0 0
        %1552 = vmatpush1.bf16.xpose.msra.mxu0 0
        %1553 = vmatprep.subr.bf16.mxu0 0
        %1554 = vmatpush1.bf16.xpose.msra.mxu0 0
        %1555 = vmatprep.subr.bf16.mxu0 0
        %1556 = vmatpush1.bf16.xpose.msra.mxu0 0
        %1557 = vmatprep.subr.bf16.mxu0 0
        %1558 = vmatpush1.bf16.xpose.msra.mxu0 0
        %1559 = vmatprep.subr.bf16.mxu0 0
        %1560 = vmatpush1.bf16.xpose.msra.mxu0 0
        %1561 = vmatprep.subr.bf16.mxu0 0
        %1562 = vmatpush1.bf16.xpose.msra.mxu0 0
        %1563 = vmatprep.subr.bf16.mxu0 0
        %1564 = vmatpush1.bf16.xpose.msra.mxu0 0
        %1565 = vmatprep.subr.bf16.mxu0 0
        %1566 = vmatpush1.bf16.xpose.msra.mxu0 0
        %1567 = vmatprep.subr.bf16.mxu0 0
        %1568 = vmatpush1.bf16.xpose.msra.mxu0 0
        %1569 = vmatprep.subr.bf16.mxu0 0
        %1570 = vmatpush1.bf16.xpose.msra.mxu0 0
        %1571 = vmatprep.subr.bf16.mxu0 0
        %1572 = vmatpush1.bf16.xpose.msra.mxu0 0
        %1573 = vmatprep.subr.bf16.mxu0 0
        %1574 = vmatpush1.bf16.xpose.msra.mxu0 0
        %1575 = vmatprep.mubr.bf16.mxu0 0
        %1576 = vmatmul.mubr.bf16.gmra.mrb[0].mxu0 %v1538
        %v1577 = vpop.f32.mrb[0].mxu0
        %v1578 = vadd.f32 %v1531, %v1577
        %v1579 = vpop.f32.mrb[0].mxu0
        %v1580 = vpop.f32.mrb[0].mxu0
        %v1581 = vpop.f32.mrb[0].mxu0
        %1582 = vdwg.mxu0
        %1584 = vrot.lane.b32.xlu0 %v1524, 96
        %v1585 = vpop.permute.xlu0 %1584
        %v1587 = vsel %vm1536, %v1524, 0
        %v1590 = vsel %vm1536, %v1585, 0
        %1592 = vmatprep.subr.bf16.mxu0 0
        %1593 = vmatpush1.bf16.xpose.msra.mxu0 %v1590
        %1594 = vmatprep.subr.bf16.mxu0 0
        %1595 = vmatpush1.bf16.xpose.msra.mxu0 0
        %1596 = vmatprep.subr.bf16.mxu0 0
        %1597 = vmatpush1.bf16.xpose.msra.mxu0 0
        %1598 = vmatprep.subr.bf16.mxu0 0
        %1599 = vmatpush1.bf16.xpose.msra.mxu0 0
        %1600 = vmatprep.subr.bf16.mxu0 0
        %1601 = vmatpush1.bf16.xpose.msra.mxu0 0
        %1602 = vmatprep.subr.bf16.mxu0 0
        %1603 = vmatpush1.bf16.xpose.msra.mxu0 0
        %1604 = vmatprep.subr.bf16.mxu0 0
        %1605 = vmatpush1.bf16.xpose.msra.mxu0 0
        %1606 = vmatprep.subr.bf16.mxu0 0
        %1607 = vmatpush1.bf16.xpose.msra.mxu0 0
        %1608 = vmatprep.subr.bf16.mxu0 0
        %1609 = vmatpush1.bf16.xpose.msra.mxu0 0
        %1610 = vmatprep.subr.bf16.mxu0 0
        %1611 = vmatpush1.bf16.xpose.msra.mxu0 0
        %1612 = vmatprep.subr.bf16.mxu0 0
        %1613 = vmatpush1.bf16.xpose.msra.mxu0 0
        %1614 = vmatprep.subr.bf16.mxu0 0
        %1615 = vmatpush1.bf16.xpose.msra.mxu0 0
        %1616 = vmatprep.subr.bf16.mxu0 0
        %1617 = vmatpush1.bf16.xpose.msra.mxu0 0
        %1618 = vmatprep.subr.bf16.mxu0 0
        %1619 = vmatpush1.bf16.xpose.msra.mxu0 0
        %1620 = vmatprep.subr.bf16.mxu0 0
        %1621 = vmatpush1.bf16.xpose.msra.mxu0 0
        %1622 = vmatprep.subr.bf16.mxu0 0
        %1623 = vmatpush1.bf16.xpose.msra.mxu0 0
        %1624 = vmatprep.mubr.bf16.mxu0 0
        %1625 = vmatmul.mubr.bf16.gmra.mrb[0].mxu0 %v1587
        %v1626 = vpop.f32.mrb[0].mxu0
        %v1627 = vadd.f32 %v1531, %v1626
        %v1628 = vpop.f32.mrb[0].mxu0
        %v1629 = vpop.f32.mrb[0].mxu0
        %v1630 = vpop.f32.mrb[0].mxu0
        %1631 = vdwg.mxu0
        %1633 = vrot.lane.b32.xlu0 %v1525, 96
        %v1634 = vpop.permute.xlu0 %1633
        %v1636 = vsel %vm1536, %v1525, 0
        %v1639 = vsel %vm1536, %v1634, 0
        %1641 = vmatprep.subr.bf16.mxu0 0
        %1642 = vmatpush1.bf16.xpose.msra.mxu0 %v1639
        %1643 = vmatprep.subr.bf16.mxu0 0
        %1644 = vmatpush1.bf16.xpose.msra.mxu0 0
        %1645 = vmatprep.subr.bf16.mxu0 0
        %1646 = vmatpush1.bf16.xpose.msra.mxu0 0
        %1647 = vmatprep.subr.bf16.mxu0 0
        %1648 = vmatpush1.bf16.xpose.msra.mxu0 0
        %1649 = vmatprep.subr.bf16.mxu0 0
        %1650 = vmatpush1.bf16.xpose.msra.mxu0 0
        %1651 = vmatprep.subr.bf16.mxu0 0
        %1652 = vmatpush1.bf16.xpose.msra.mxu0 0
        %1653 = vmatprep.subr.bf16.mxu0 0
        %1654 = vmatpush1.bf16.xpose.msra.mxu0 0
        %1655 = vmatprep.subr.bf16.mxu0 0
        %1656 = vmatpush1.bf16.xpose.msra.mxu0 0
        %1657 = vmatprep.subr.bf16.mxu0 0
        %1658 = vmatpush1.bf16.xpose.msra.mxu0 0
        %1659 = vmatprep.subr.bf16.mxu0 0
        %1660 = vmatpush1.bf16.xpose.msra.mxu0 0
        %1661 = vmatprep.subr.bf16.mxu0 0
        %1662 = vmatpush1.bf16.xpose.msra.mxu0 0
        %1663 = vmatprep.subr.bf16.mxu0 0
        %1664 = vmatpush1.bf16.xpose.msra.mxu0 0
        %1665 = vmatprep.subr.bf16.mxu0 0
        %1666 = vmatpush1.bf16.xpose.msra.mxu0 0
        %1667 = vmatprep.subr.bf16.mxu0 0
        %1668 = vmatpush1.bf16.xpose.msra.mxu0 0
        %1669 = vmatprep.subr.bf16.mxu0 0
        %1670 = vmatpush1.bf16.xpose.msra.mxu0 0
        %1671 = vmatprep.subr.bf16.mxu0 0
        %1672 = vmatpush1.bf16.xpose.msra.mxu0 0
        %1673 = vmatprep.mubr.bf16.mxu0 0
        %1674 = vmatmul.mubr.bf16.gmra.mrb[0].mxu0 %v1636
        %v1675 = vpop.f32.mrb[0].mxu0
        %v1676 = vadd.f32 %v1531, %v1675
        %v1677 = vpop.f32.mrb[0].mxu0
        %v1678 = vpop.f32.mrb[0].mxu0
        %v1679 = vpop.f32.mrb[0].mxu0
        %1680 = vdwg.mxu0
        %1682 = vrot.lane.b32.xlu0 %v1526, 96
        %v1683 = vpop.permute.xlu0 %1682
        %v1685 = vsel %vm1536, %v1526, 0
        %v1688 = vsel %vm1536, %v1683, 0
        %1690 = vmatprep.subr.bf16.mxu0 0
        %1691 = vmatpush1.bf16.xpose.msra.mxu0 %v1688
        %1692 = vmatprep.subr.bf16.mxu0 0
        %1693 = vmatpush1.bf16.xpose.msra.mxu0 0
        %1694 = vmatprep.subr.bf16.mxu0 0
        %1695 = vmatpush1.bf16.xpose.msra.mxu0 0
        %1696 = vmatprep.subr.bf16.mxu0 0
        %1697 = vmatpush1.bf16.xpose.msra.mxu0 0
        %1698 = vmatprep.subr.bf16.mxu0 0
        %1699 = vmatpush1.bf16.xpose.msra.mxu0 0
        %1700 = vmatprep.subr.bf16.mxu0 0
        %1701 = vmatpush1.bf16.xpose.msra.mxu0 0
        %1702 = vmatprep.subr.bf16.mxu0 0
        %1703 = vmatpush1.bf16.xpose.msra.mxu0 0
        %1704 = vmatprep.subr.bf16.mxu0 0
        %1705 = vmatpush1.bf16.xpose.msra.mxu0 0
        %1706 = vmatprep.subr.bf16.mxu0 0
        %1707 = vmatpush1.bf16.xpose.msra.mxu0 0
        %1708 = vmatprep.subr.bf16.mxu0 0
        %1709 = vmatpush1.bf16.xpose.msra.mxu0 0
        %1710 = vmatprep.subr.bf16.mxu0 0
        %1711 = vmatpush1.bf16.xpose.msra.mxu0 0
        %1712 = vmatprep.subr.bf16.mxu0 0
        %1713 = vmatpush1.bf16.xpose.msra.mxu0 0
        %1714 = vmatprep.subr.bf16.mxu0 0
        %1715 = vmatpush1.bf16.xpose.msra.mxu0 0
        %1716 = vmatprep.subr.bf16.mxu0 0
        %1717 = vmatpush1.bf16.xpose.msra.mxu0 0
        %1718 = vmatprep.subr.bf16.mxu0 0
        %1719 = vmatpush1.bf16.xpose.msra.mxu0 0
        %1720 = vmatprep.subr.bf16.mxu0 0
        %1721 = vmatpush1.bf16.xpose.msra.mxu0 0
        %1722 = vmatprep.mubr.bf16.mxu0 0
        %1723 = vmatmul.mubr.bf16.gmra.mrb[0].mxu0 %v1685
        %v1724 = vpop.f32.mrb[0].mxu0
        %v1725 = vadd.f32 %v1531, %v1724
        %v1726 = vpop.f32.mrb[0].mxu0
        %v1727 = vpop.f32.mrb[0].mxu0
        %v1728 = vpop.f32.mrb[0].mxu0
        %1729 = vdwg.mxu0
        %v1730 = vsel %vm1536, %v1578, -inf
        %1731 = vmax.xlane.f32.xlu0 %v1730
        %v1732 = vpop.xlane.xlu0 %1731
        %v1733 = vsel %vm1536, %v1627, -inf
        %1734 = vmax.xlane.f32.xlu0 %v1733
        %v1735 = vpop.xlane.xlu0 %1734
        %v1736 = vsel %vm1536, %v1676, -inf
        %1737 = vmax.xlane.f32.xlu0 %v1736
        %v1738 = vpop.xlane.xlu0 %1737
        %v1739 = vsel %vm1536, %v1725, -inf
        %1740 = vmax.xlane.f32.xlu0 %v1739
        %v1741 = vpop.xlane.xlu0 %1740
        %v1742 = vsub.f32 %v1578, %v1732
        %v1743 = vsub.f32 %v1627, %v1735
        %v1744 = vsub.f32 %v1676, %v1738
        %v1745 = vsub.f32 %v1725, %v1741
        %v1746 = vmul.f32 %v1742, 1.442695
        %v1747 = vpow.pop %v1746
        %v1748 = vmul.f32 %v1743, 1.442695
        %v1749 = vpow.pop %v1748
        %v1750 = vmul.f32 %v1744, 1.442695
        %v1751 = vpow.pop %v1750
        %v1752 = vmul.f32 %v1745, 1.442695
        %v1753 = vpow.pop %v1752
        %v1754 = vsel %vm1536, %v1747, 0.0
        %1755 = vadd.xlane.f32.xlu0 %v1754
        %v1756 = vpop.xlane.xlu0 %1755
        %v1757 = vsel %vm1536, %v1749, 0.0
        %1758 = vadd.xlane.f32.xlu0 %v1757
        %v1759 = vpop.xlane.xlu0 %1758
        %v1760 = vsel %vm1536, %v1751, 0.0
        %1761 = vadd.xlane.f32.xlu0 %v1760
        %v1762 = vpop.xlane.xlu0 %1761
        %v1763 = vsel %vm1536, %v1753, 0.0
        %1764 = vadd.xlane.f32.xlu0 %v1763
        %v1765 = vpop.xlane.xlu0 %1764
        %v1766 = vrcp.pop %v1756
        %v1767 = vrcp.pop %v1759
        %v1768 = vrcp.pop %v1762
        %v1769 = vrcp.pop %v1765
        %v1770 = vmul.f32 %v1747, %v1766
        %v1771 = vmul.f32 %v1749, %v1767
        %v1772 = vmul.f32 %v1751, %v1768
        %v1773 = vmul.f32 %v1753, %v1769
        %v1774 = vpack.c.bf16 %v1770, %v1770
        %v1775 = vpack.c.bf16 %v1771, %v1771
        %v1776 = vpack.c.bf16 %v1772, %v1772
        %v1777 = vpack.c.bf16 %v1773, %v1773
        %1778 = vrot.lane.b32.xlu0 %v1523, 64
        %v1779 = vpop.permute.xlu0 %1778
        %v1781 = vsel %vm1536, %v1774, 0
        %vm1783 = vcmask 1043456
        %v1785 = vsel %vm1783, %v1779, 0
        %1787 = vmatprep.subr.bf16.mxu0 0
        %1788 = vmatpush1.bf16.msra.mxu0 %v1785
        %1789 = vmatprep.subr.bf16.mxu0 0
        %1790 = vmatpush1.bf16.msra.mxu0 0
        %1791 = vmatprep.subr.bf16.mxu0 0
        %1792 = vmatpush1.bf16.msra.mxu0 0
        %1793 = vmatprep.subr.bf16.mxu0 0
        %1794 = vmatpush1.bf16.msra.mxu0 0
        %1795 = vmatprep.subr.bf16.mxu0 0
        %1796 = vmatpush1.bf16.msra.mxu0 0
        %1797 = vmatprep.subr.bf16.mxu0 0
        %1798 = vmatpush1.bf16.msra.mxu0 0
        %1799 = vmatprep.subr.bf16.mxu0 0
        %1800 = vmatpush1.bf16.msra.mxu0 0
        %1801 = vmatprep.subr.bf16.mxu0 0
        %1802 = vmatpush1.bf16.msra.mxu0 0
        %1803 = vmatprep.subr.bf16.mxu0 0
        %1804 = vmatpush1.bf16.msra.mxu0 0
        %1805 = vmatprep.subr.bf16.mxu0 0
        %1806 = vmatpush1.bf16.msra.mxu0 0
        %1807 = vmatprep.subr.bf16.mxu0 0
        %1808 = vmatpush1.bf16.msra.mxu0 0
        %1809 = vmatprep.subr.bf16.mxu0 0
        %1810 = vmatpush1.bf16.msra.mxu0 0
        %1811 = vmatprep.subr.bf16.mxu0 0
        %1812 = vmatpush1.bf16.msra.mxu0 0
        %1813 = vmatprep.subr.bf16.mxu0 0
        %1814 = vmatpush1.bf16.msra.mxu0 0
        %1815 = vmatprep.subr.bf16.mxu0 0
        %1816 = vmatpush1.bf16.msra.mxu0 0
        %1817 = vmatprep.subr.bf16.mxu0 0
        %1818 = vmatpush1.bf16.msra.mxu0 0
        %1819 = vmatprep.mubr.bf16.mxu0 0
        %1820 = vmatmul.mubr.bf16.gmra.mrb[0].mxu0 %v1781
        %v1821 = vpop.f32.mrb[0].mxu0
        %v1822 = vadd.f32 0.0, %v1821
        %v1823 = vpop.f32.mrb[0].mxu0
        %v1824 = vpop.f32.mrb[0].mxu0
        %v1825 = vpop.f32.mrb[0].mxu0
        %1826 = vdwg.mxu0
        %1827 = vrot.lane.b32.xlu0 %v1524, 64
        %v1828 = vpop.permute.xlu0 %1827
        %v1830 = vsel %vm1536, %v1775, 0
        %v1833 = vsel %vm1783, %v1828, 0
        %1835 = vmatprep.subr.bf16.mxu0 0
        %1836 = vmatpush1.bf16.msra.mxu0 %v1833
        %1837 = vmatprep.subr.bf16.mxu0 0
        %1838 = vmatpush1.bf16.msra.mxu0 0
        %1839 = vmatprep.subr.bf16.mxu0 0
        %1840 = vmatpush1.bf16.msra.mxu0 0
        %1841 = vmatprep.subr.bf16.mxu0 0
        %1842 = vmatpush1.bf16.msra.mxu0 0
        %1843 = vmatprep.subr.bf16.mxu0 0
        %1844 = vmatpush1.bf16.msra.mxu0 0
        %1845 = vmatprep.subr.bf16.mxu0 0
        %1846 = vmatpush1.bf16.msra.mxu0 0
        %1847 = vmatprep.subr.bf16.mxu0 0
        %1848 = vmatpush1.bf16.msra.mxu0 0
        %1849 = vmatprep.subr.bf16.mxu0 0
        %1850 = vmatpush1.bf16.msra.mxu0 0
        %1851 = vmatprep.subr.bf16.mxu0 0
        %1852 = vmatpush1.bf16.msra.mxu0 0
        %1853 = vmatprep.subr.bf16.mxu0 0
        %1854 = vmatpush1.bf16.msra.mxu0 0
        %1855 = vmatprep.subr.bf16.mxu0 0
        %1856 = vmatpush1.bf16.msra.mxu0 0
        %1857 = vmatprep.subr.bf16.mxu0 0
        %1858 = vmatpush1.bf16.msra.mxu0 0
        %1859 = vmatprep.subr.bf16.mxu0 0
        %1860 = vmatpush1.bf16.msra.mxu0 0
        %1861 = vmatprep.subr.bf16.mxu0 0
        %1862 = vmatpush1.bf16.msra.mxu0 0
        %1863 = vmatprep.subr.bf16.mxu0 0
        %1864 = vmatpush1.bf16.msra.mxu0 0
        %1865 = vmatprep.subr.bf16.mxu0 0
        %1866 = vmatpush1.bf16.msra.mxu0 0
        %1867 = vmatprep.mubr.bf16.mxu0 0
        %1868 = vmatmul.mubr.bf16.gmra.mrb[0].mxu0 %v1830
        %v1869 = vpop.f32.mrb[0].mxu0
        %v1870 = vadd.f32 0.0, %v1869
        %v1871 = vpop.f32.mrb[0].mxu0
        %v1872 = vpop.f32.mrb[0].mxu0
        %v1873 = vpop.f32.mrb[0].mxu0
        %1874 = vdwg.mxu0
        %1875 = vrot.lane.b32.xlu0 %v1525, 64
        %v1876 = vpop.permute.xlu0 %1875
        %v1878 = vsel %vm1536, %v1776, 0
        %v1881 = vsel %vm1783, %v1876, 0
        %1883 = vmatprep.subr.bf16.mxu0 0
        %1884 = vmatpush1.bf16.msra.mxu0 %v1881
        %1885 = vmatprep.subr.bf16.mxu0 0
        %1886 = vmatpush1.bf16.msra.mxu0 0
        %1887 = vmatprep.subr.bf16.mxu0 0
        %1888 = vmatpush1.bf16.msra.mxu0 0
        %1889 = vmatprep.subr.bf16.mxu0 0
        %1890 = vmatpush1.bf16.msra.mxu0 0
        %1891 = vmatprep.subr.bf16.mxu0 0
        %1892 = vmatpush1.bf16.msra.mxu0 0
        %1893 = vmatprep.subr.bf16.mxu0 0
        %1894 = vmatpush1.bf16.msra.mxu0 0
        %1895 = vmatprep.subr.bf16.mxu0 0
        %1896 = vmatpush1.bf16.msra.mxu0 0
        %1897 = vmatprep.subr.bf16.mxu0 0
        %1898 = vmatpush1.bf16.msra.mxu0 0
        %1899 = vmatprep.subr.bf16.mxu0 0
        %1900 = vmatpush1.bf16.msra.mxu0 0
        %1901 = vmatprep.subr.bf16.mxu0 0
        %1902 = vmatpush1.bf16.msra.mxu0 0
        %1903 = vmatprep.subr.bf16.mxu0 0
        %1904 = vmatpush1.bf16.msra.mxu0 0
        %1905 = vmatprep.subr.bf16.mxu0 0
        %1906 = vmatpush1.bf16.msra.mxu0 0
        %1907 = vmatprep.subr.bf16.mxu0 0
        %1908 = vmatpush1.bf16.msra.mxu0 0
        %1909 = vmatprep.subr.bf16.mxu0 0
        %1910 = vmatpush1.bf16.msra.mxu0 0
        %1911 = vmatprep.subr.bf16.mxu0 0
        %1912 = vmatpush1.bf16.msra.mxu0 0
        %1913 = vmatprep.subr.bf16.mxu0 0
        %1914 = vmatpush1.bf16.msra.mxu0 0
        %1915 = vmatprep.mubr.bf16.mxu0 0
        %1916 = vmatmul.mubr.bf16.gmra.mrb[0].mxu0 %v1878
        %v1917 = vpop.f32.mrb[0].mxu0
        %v1918 = vadd.f32 0.0, %v1917
        %v1919 = vpop.f32.mrb[0].mxu0
        %v1920 = vpop.f32.mrb[0].mxu0
        %v1921 = vpop.f32.mrb[0].mxu0
        %1922 = vdwg.mxu0
        %1923 = vrot.lane.b32.xlu0 %v1526, 64
        %v1924 = vpop.permute.xlu0 %1923
        %v1926 = vsel %vm1536, %v1777, 0
        %v1929 = vsel %vm1783, %v1924, 0
        %1931 = vmatprep.subr.bf16.mxu0 0
        %1932 = vmatpush1.bf16.msra.mxu0 %v1929
        %1933 = vmatprep.subr.bf16.mxu0 0
        %1934 = vmatpush1.bf16.msra.mxu0 0
        %1935 = vmatprep.subr.bf16.mxu0 0
        %1936 = vmatpush1.bf16.msra.mxu0 0
        %1937 = vmatprep.subr.bf16.mxu0 0
        %1938 = vmatpush1.bf16.msra.mxu0 0
        %1939 = vmatprep.subr.bf16.mxu0 0
        %1940 = vmatpush1.bf16.msra.mxu0 0
        %1941 = vmatprep.subr.bf16.mxu0 0
        %1942 = vmatpush1.bf16.msra.mxu0 0
        %1943 = vmatprep.subr.bf16.mxu0 0
        %1944 = vmatpush1.bf16.msra.mxu0 0
        %1945 = vmatprep.subr.bf16.mxu0 0
        %1946 = vmatpush1.bf16.msra.mxu0 0
        %1947 = vmatprep.subr.bf16.mxu0 0
        %1948 = vmatpush1.bf16.msra.mxu0 0
        %1949 = vmatprep.subr.bf16.mxu0 0
        %1950 = vmatpush1.bf16.msra.mxu0 0
        %1951 = vmatprep.subr.bf16.mxu0 0
        %1952 = vmatpush1.bf16.msra.mxu0 0
        %1953 = vmatprep.subr.bf16.mxu0 0
        %1954 = vmatpush1.bf16.msra.mxu0 0
        %1955 = vmatprep.subr.bf16.mxu0 0
        %1956 = vmatpush1.bf16.msra.mxu0 0
        %1957 = vmatprep.subr.bf16.mxu0 0
        %1958 = vmatpush1.bf16.msra.mxu0 0
        %1959 = vmatprep.subr.bf16.mxu0 0
        %1960 = vmatpush1.bf16.msra.mxu0 0
        %1961 = vmatprep.subr.bf16.mxu0 0
        %1962 = vmatpush1.bf16.msra.mxu0 0
        %1963 = vmatprep.mubr.bf16.mxu0 0
        %1964 = vmatmul.mubr.bf16.gmra.mrb[0].mxu0 %v1926
        %v1965 = vpop.f32.mrb[0].mxu0
        %v1966 = vadd.f32 0.0, %v1965
        %v1967 = vpop.f32.mrb[0].mxu0
        %v1968 = vpop.f32.mrb[0].mxu0
        %v1969 = vpop.f32.mrb[0].mxu0
        %1970 = vdwg.mxu0
        %1972 = vrot.lane.b32.xlu0 %v1870, 8
        %v1973 = vpop.permute.xlu0 %1972
        %1976 = vrot.lane.b32.xlu0 %v1918, 16
        %v1977 = vpop.permute.xlu0 %1976
        %1980 = vrot.lane.b32.xlu0 %v1966, 24
        %v1981 = vpop.permute.xlu0 %1980
        %v1983 = vsel %vm1536, %v1822, %v1973
        %vm1984 = vcmask 130048
        %v1985 = vsel %vm1984, %v1983, %v1977
        %vm1986 = vcmask 195584
        %v1987 = vsel %vm1986, %v1985, %v1981
        %v1988 = vld [vmem:[%s21] sm:$0xf]
        %v1989 = vld [vmem:[%s21 + $0x4] sm:$0xf]
        %v1990 = vld [vmem:[%s21 + $0x8] sm:$0xf]
        %v1991 = vld [vmem:[%s21 + $0xc] sm:$0xf]
        %v1992 = vld [vmem:[%s23] sm:$0x1]
        %v1993 = vpack.c.bf16 %v1987, %v1987
        %v1995 = vlaneseq
        %v1996 = vshrl.u32 %v1995, 7
        %v1997 = vsub.s32 0, %v1996
        %v1998 = vrot.slane %v1992, %v1997
        %v2004 = vunpack.c.l.b16 %v1988
        %v2005 = vunpack.c.l.b16 %v1989
        %v2006 = vunpack.c.l.b16 %v1990
        %v2007 = vunpack.c.l.b16 %v1991
        %v2008 = vpack.c.b16 %v2005, %v2004
        %v2009 = vpack.c.b16 %v2007, %v2006
        %v2013 = vsel %vm1417, %v1993, 0
        %2015 = vmatprep.subr.bf16.mxu0 0
        %2016 = vmatpush1.bf16.msra.mxu0 %v2008
        %2017 = vmatprep.subr.bf16.mxu0 0
        %2018 = vmatpush1.bf16.msra.mxu0 %v2009
        %2019 = vmatprep.subr.bf16.mxu0 0
        %2020 = vmatpush1.bf16.msra.mxu0 0
        %2021 = vmatprep.subr.bf16.mxu0 0
        %2022 = vmatpush1.bf16.msra.mxu0 0
        %2023 = vmatprep.subr.bf16.mxu0 0
        %2024 = vmatpush1.bf16.msra.mxu0 0
        %2025 = vmatprep.subr.bf16.mxu0 0
        %2026 = vmatpush1.bf16.msra.mxu0 0
        %2027 = vmatprep.subr.bf16.mxu0 0
        %2028 = vmatpush1.bf16.msra.mxu0 0
        %2029 = vmatprep.subr.bf16.mxu0 0
        %2030 = vmatpush1.bf16.msra.mxu0 0
        %2031 = vmatprep.subr.bf16.mxu0 0
        %2032 = vmatpush1.bf16.msra.mxu0 0
        %2033 = vmatprep.subr.bf16.mxu0 0
        %2034 = vmatpush1.bf16.msra.mxu0 0
        %2035 = vmatprep.subr.bf16.mxu0 0
        %2036 = vmatpush1.bf16.msra.mxu0 0
        %2037 = vmatprep.subr.bf16.mxu0 0
        %2038 = vmatpush1.bf16.msra.mxu0 0
        %2039 = vmatprep.subr.bf16.mxu0 0
        %2040 = vmatpush1.bf16.msra.mxu0 0
        %2041 = vmatprep.subr.bf16.mxu0 0
        %2042 = vmatpush1.bf16.msra.mxu0 0
        %2043 = vmatprep.subr.bf16.mxu0 0
        %2044 = vmatpush1.bf16.msra.mxu0 0
        %2045 = vmatprep.subr.bf16.mxu0 0
        %2046 = vmatpush1.bf16.msra.mxu0 0
        %2047 = vmatprep.mubr.bf16.mxu0 0
        %2048 = vmatmul.mubr.bf16.gmra.mrb[0].mxu0 %v2013
        %v2049 = vpop.f32.mrb[0].mxu0
        %v2050 = vadd.f32 %v1998, %v2049
        %v2051 = vpop.f32.mrb[0].mxu0
        %v2052 = vpop.f32.mrb[0].mxu0
        %v2053 = vpop.f32.mrb[0].mxu0
        %2054 = vdwg.mxu0
        %v2055 = vadd.f32 %v1410, %v2050
        %v2056 = vld [vmem:[%s25] sm:$0x1]
        %v2057 = vld [vmem:[%s27] sm:$0x1]
        %v2058 = vsel %vm1417, %v2055, 0.0
        %2059 = vadd.xlane.f32.xlu0 %v2058
        %v2060 = vpop.xlane.xlu0 %2059
        %v2061 = vmul.f32 %v2060, %v1421
        %v2062 = vsub.f32 %v2055, %v2061
        %v2063 = vmul.f32 %v2062, %v2062
        %v2064 = vsel %vm1417, %v2063, 0.0
        %2065 = vadd.xlane.f32.xlu0 %v2064
        %v2066 = vpop.xlane.xlu0 %2065
        %v2067 = vmul.f32 %v2066, %v1421
        %v2068 = vadd.f32 %v2067, 1e-05
        %v2069 = vrsqrt.pop %v2068
        %v2070 = vmul.f32 %v2062, %v2069
        %v2072 = vlaneseq
        %v2073 = vshrl.u32 %v2072, 7
        %v2074 = vsub.s32 0, %v2073
        %v2075 = vrot.slane %v2056, %v2074
        %v2077 = vmul.f32 %v2070, %v2075
        %v2079 = vlaneseq
        %v2080 = vshrl.u32 %v2079, 7
        %v2081 = vsub.s32 0, %v2080
        %v2082 = vrot.slane %v2057, %v2081
        %v2084 = vadd.f32 %v2077, %v2082
        %v2085 = vld [vmem:[%s29] sm:$0xf]
        %v2086 = vld [vmem:[%s29 + $0x4] sm:$0xf]
        %v2087 = vld [vmem:[%s29 + $0x8] sm:$0xf]
        %v2088 = vld [vmem:[%s29 + $0xc] sm:$0xf]
        %v2089 = vld [vmem:[%s31] sm:$0x1]
        %v2090 = vpack.c.bf16 %v2084, %v2084
        %v2092 = vlaneseq
        %v2093 = vshrl.u32 %v2092, 7
        %v2094 = vsub.s32 0, %v2093
        %v2095 = vrot.slane %v2089, %v2094
        %v2101 = vunpack.c.l.b16 %v2085
        %v2102 = vunpack.c.l.b16 %v2086
        %v2103 = vunpack.c.l.b16 %v2087
        %v2104 = vunpack.c.l.b16 %v2088
        %v2105 = vpack.c.b16 %v2102, %v2101
        %v2106 = vpack.c.b16 %v2104, %v2103
        %v2110 = vsel %vm1417, %v2090, 0
        %2112 = vmatprep.subr.bf16.mxu0 0
        %2113 = vmatpush1.bf16.msra.mxu0 %v2105
        %2114 = vmatprep.subr.bf16.mxu0 0
        %2115 = vmatpush1.bf16.msra.mxu0 %v2106
        %2116 = vmatprep.subr.bf16.mxu0 0
        %2117 = vmatpush1.bf16.msra.mxu0 0
        %2118 = vmatprep.subr.bf16.mxu0 0
        %2119 = vmatpush1.bf16.msra.mxu0 0
        %2120 = vmatprep.subr.bf16.mxu0 0
        %2121 = vmatpush1.bf16.msra.mxu0 0
        %2122 = vmatprep.subr.bf16.mxu0 0
        %2123 = vmatpush1.bf16.msra.mxu0 0
        %2124 = vmatprep.subr.bf16.mxu0 0
        %2125 = vmatpush1.bf16.msra.mxu0 0
        %2126 = vmatprep.subr.bf16.mxu0 0
        %2127 = vmatpush1.bf16.msra.mxu0 0
        %2128 = vmatprep.subr.bf16.mxu0 0
        %2129 = vmatpush1.bf16.msra.mxu0 0
        %2130 = vmatprep.subr.bf16.mxu0 0
        %2131 = vmatpush1.bf16.msra.mxu0 0
        %2132 = vmatprep.subr.bf16.mxu0 0
        %2133 = vmatpush1.bf16.msra.mxu0 0
        %2134 = vmatprep.subr.bf16.mxu0 0
        %2135 = vmatpush1.bf16.msra.mxu0 0
        %2136 = vmatprep.subr.bf16.mxu0 0
        %2137 = vmatpush1.bf16.msra.mxu0 0
        %2138 = vmatprep.subr.bf16.mxu0 0
        %2139 = vmatpush1.bf16.msra.mxu0 0
        %2140 = vmatprep.subr.bf16.mxu0 0
        %2141 = vmatpush1.bf16.msra.mxu0 0
        %2142 = vmatprep.subr.bf16.mxu0 0
        %2143 = vmatpush1.bf16.msra.mxu0 0
        %2144 = vmatprep.mubr.bf16.mxu0 0
        %2145 = vmatmul.mubr.bf16.gmra.mrb[0].mxu0 %v2110
        %v2146 = vpop.f32.mrb[0].mxu0
        %v2147 = vadd.f32 %v2095, %v2146
        %v2148 = vpop.f32.mrb[0].mxu0
        %v2149 = vpop.f32.mrb[0].mxu0
        %v2150 = vpop.f32.mrb[0].mxu0
        %2151 = vdwg.mxu0
        %v2152 = vmax.f32 %v2147, 0.0
        %v2153 = vld [vmem:[%s33] sm:$0xf]
        %v2154 = vld [vmem:[%s33 + $0x4] sm:$0xf]
        %v2155 = vld [vmem:[%s33 + $0x8] sm:$0xf]
        %v2156 = vld [vmem:[%s33 + $0xc] sm:$0xf]
        %v2157 = vld [vmem:[%s33 + $0x10] sm:$0xf]
        %v2158 = vld [vmem:[%s33 + $0x14] sm:$0xf]
        %v2159 = vld [vmem:[%s33 + $0x18] sm:$0xf]
        %v2160 = vld [vmem:[%s33 + $0x1c] sm:$0xf]
        %v2161 = vld [vmem:[%s35] sm:$0x1]
        %v2162 = vpack.c.bf16 %v2152, %v2152
        %v2164 = vlaneseq
        %v2165 = vshrl.u32 %v2164, 7
        %v2166 = vsub.s32 0, %v2165
        %v2167 = vrot.slane %v2161, %v2166
        %v2177 = vunpack.c.l.b16 %v2153
        %v2178 = vunpack.c.l.b16 %v2154
        %v2179 = vunpack.c.l.b16 %v2155
        %v2180 = vunpack.c.l.b16 %v2156
        %v2181 = vunpack.c.l.b16 %v2157
        %v2182 = vunpack.c.l.b16 %v2158
        %v2183 = vunpack.c.l.b16 %v2159
        %v2184 = vunpack.c.l.b16 %v2160
        %v2185 = vpack.c.b16 %v2178, %v2177
        %v2186 = vpack.c.b16 %v2180, %v2179
        %v2187 = vpack.c.b16 %v2182, %v2181
        %v2188 = vpack.c.b16 %v2184, %v2183
        %vm2193 = vcmask 523264
        %v2195 = vsel %vm2193, %v2162, 0
        %2197 = vmatprep.subr.bf16.mxu0 0
        %2198 = vmatpush1.bf16.msra.mxu0 %v2185
        %2199 = vmatprep.subr.bf16.mxu0 0
        %2200 = vmatpush1.bf16.msra.mxu0 %v2186
        %2201 = vmatprep.subr.bf16.mxu0 0
        %2202 = vmatpush1.bf16.msra.mxu0 %v2187
        %2203 = vmatprep.subr.bf16.mxu0 0
        %2204 = vmatpush1.bf16.msra.mxu0 %v2188
        %2205 = vmatprep.subr.bf16.mxu0 0
        %2206 = vmatpush1.bf16.msra.mxu0 0
        %2207 = vmatprep.subr.bf16.mxu0 0
        %2208 = vmatpush1.bf16.msra.mxu0 0
        %2209 = vmatprep.subr.bf16.mxu0 0
        %2210 = vmatpush1.bf16.msra.mxu0 0
        %2211 = vmatprep.subr.bf16.mxu0 0
        %2212 = vmatpush1.bf16.msra.mxu0 0
        %2213 = vmatprep.subr.bf16.mxu0 0
        %2214 = vmatpush1.bf16.msra.mxu0 0
        %2215 = vmatprep.subr.bf16.mxu0 0
        %2216 = vmatpush1.bf16.msra.mxu0 0
        %2217 = vmatprep.subr.bf16.mxu0 0
        %2218 = vmatpush1.bf16.msra.mxu0 0
        %2219 = vmatprep.subr.bf16.mxu0 0
        %2220 = vmatpush1.bf16.msra.mxu0 0
        %2221 = vmatprep.subr.bf16.mxu0 0
        %2222 = vmatpush1.bf16.msra.mxu0 0
        %2223 = vmatprep.subr.bf16.mxu0 0
        %2224 = vmatpush1.bf16.msra.mxu0 0
        %2225 = vmatprep.subr.bf16.mxu0 0
        %2226 = vmatpush1.bf16.msra.mxu0 0
        %2227 = vmatprep.subr.bf16.mxu0 0
        %2228 = vmatpush1.bf16.msra.mxu0 0
        %2229 = vmatprep.mubr.bf16.mxu0 0
        %2230 = vmatmul.mubr.bf16.gmra.mrb[0].mxu0 %v2195
        %v2231 = vpop.f32.mrb[0].mxu0
        %v2232 = vadd.f32 %v2167, %v2231
        %v2233 = vpop.f32.mrb[0].mxu0
        %v2234 = vpop.f32.mrb[0].mxu0
        %v2235 = vpop.f32.mrb[0].mxu0
        %2236 = vdwg.mxu0
        %v2237 = vadd.f32 %v2055, %v2232
        %s2238 = scalar_lea.vmem %s13, 1
        %v2239 = vld [vmem:[%s2238] sm:$0x1]
        %s2240 = scalar_lea.vmem %s15, 1
        %v2241 = vld [vmem:[%s2240] sm:$0x1]
        %v2242 = vsel %vm1417, %v2237, 0.0
        %2243 = vadd.xlane.f32.xlu0 %v2242
        %v2244 = vpop.xlane.xlu0 %2243
        %v2245 = vmul.f32 %v2244, %v1421
        %v2246 = vsub.f32 %v2237, %v2245
        %v2247 = vmul.f32 %v2246, %v2246
        %v2248 = vsel %vm1417, %v2247, 0.0
        %2249 = vadd.xlane.f32.xlu0 %v2248
        %v2250 = vpop.xlane.xlu0 %2249
        %v2251 = vmul.f32 %v2250, %v1421
        %v2252 = vadd.f32 %v2251, 1e-05
        %v2253 = vrsqrt.pop %v2252
        %v2254 = vmul.f32 %v2246, %v2253
        %v2256 = vlaneseq
        %v2257 = vshrl.u32 %v2256, 7
        %v2258 = vsub.s32 0, %v2257
        %v2259 = vrot.slane %v2239, %v2258
        %v2261 = vmul.f32 %v2254, %v2259
        %v2263 = vlaneseq
        %v2264 = vshrl.u32 %v2263, 7
        %v2265 = vsub.s32 0, %v2264
        %v2266 = vrot.slane %v2241, %v2265
        %v2268 = vadd.f32 %v2261, %v2266
        %s2269 = scalar_lea.vmem %s17, 16
        %v2270 = vld [vmem:[%s2269] sm:$0xf]
        %v2271 = vld [vmem:[%s2269 + $0x4] sm:$0xf]
        %v2272 = vld [vmem:[%s2269 + $0x8] sm:$0xf]
        %v2273 = vld [vmem:[%s2269 + $0xc] sm:$0xf]
        %s2274 = scalar_lea.vmem %s19, 1
        %v2275 = vld [vmem:[%s2274] sm:$0x1]
        %v2276 = vpack.c.bf16 %v2268, %v2268
        %v2278 = vlaneseq
        %v2279 = vshrl.u32 %v2278, 7
        %v2280 = vsub.s32 0, %v2279
        %v2281 = vrot.slane %v2275, %v2280
        %v2287 = vunpack.c.l.b16 %v2270
        %v2288 = vunpack.c.l.b16 %v2271
        %v2289 = vunpack.c.l.b16 %v2272
        %v2290 = vunpack.c.l.b16 %v2273
        %v2291 = vpack.c.b16 %v2288, %v2287
        %v2292 = vpack.c.b16 %v2290, %v2289
        %v2296 = vsel %vm1417, %v2276, 0
        %2298 = vmatprep.subr.bf16.mxu0 0
        %2299 = vmatpush1.bf16.msra.mxu0 %v2291
        %2300 = vmatprep.subr.bf16.mxu0 0
        %2301 = vmatpush1.bf16.msra.mxu0 %v2292
        %2302 = vmatprep.subr.bf16.mxu0 0
        %2303 = vmatpush1.bf16.msra.mxu0 0
        %2304 = vmatprep.subr.bf16.mxu0 0
        %2305 = vmatpush1.bf16.msra.mxu0 0
        %2306 = vmatprep.subr.bf16.mxu0 0
        %2307 = vmatpush1.bf16.msra.mxu0 0
        %2308 = vmatprep.subr.bf16.mxu0 0
        %2309 = vmatpush1.bf16.msra.mxu0 0
        %2310 = vmatprep.subr.bf16.mxu0 0
        %2311 = vmatpush1.bf16.msra.mxu0 0
        %2312 = vmatprep.subr.bf16.mxu0 0
        %2313 = vmatpush1.bf16.msra.mxu0 0
        %2314 = vmatprep.subr.bf16.mxu0 0
        %2315 = vmatpush1.bf16.msra.mxu0 0
        %2316 = vmatprep.subr.bf16.mxu0 0
        %2317 = vmatpush1.bf16.msra.mxu0 0
        %2318 = vmatprep.subr.bf16.mxu0 0
        %2319 = vmatpush1.bf16.msra.mxu0 0
        %2320 = vmatprep.subr.bf16.mxu0 0
        %2321 = vmatpush1.bf16.msra.mxu0 0
        %2322 = vmatprep.subr.bf16.mxu0 0
        %2323 = vmatpush1.bf16.msra.mxu0 0
        %2324 = vmatprep.subr.bf16.mxu0 0
        %2325 = vmatpush1.bf16.msra.mxu0 0
        %2326 = vmatprep.subr.bf16.mxu0 0
        %2327 = vmatpush1.bf16.msra.mxu0 0
        %2328 = vmatprep.subr.bf16.mxu0 0
        %2329 = vmatpush1.bf16.msra.mxu0 0
        %2330 = vmatprep.mubr.bf16.mxu0 0
        %2331 = vmatmul.mubr.bf16.gmra.mrb[0].mxu0 %v2296
        %v2332 = vpop.f32.mrb[0].mxu0
        %v2333 = vadd.f32 %v2281, %v2332
        %v2334 = vpop.f32.mrb[0].mxu0
        %v2335 = vpop.f32.mrb[0].mxu0
        %v2336 = vpop.f32.mrb[0].mxu0
        %2337 = vdwg.mxu0
        %2339 = vrot.lane.b32.xlu0 %v2333, 120
        %v2340 = vpop.permute.xlu0 %2339
        %2342 = vrot.lane.b32.xlu0 %v2333, 112
        %v2343 = vpop.permute.xlu0 %2342
        %2345 = vrot.lane.b32.xlu0 %v2333, 104
        %v2346 = vpop.permute.xlu0 %2345
        %v2348 = vpack.c.bf16 %v2333, %v2333
        %v2349 = vpack.c.bf16 %v2340, %v2340
        %v2350 = vpack.c.bf16 %v2343, %v2343
        %v2351 = vpack.c.bf16 %v2346, %v2346
        %2353 = vrot.lane.b32.xlu0 %v2348, 96
        %v2354 = vpop.permute.xlu0 %2353
        %v2356 = vsel %vm1536, %v2348, 0
        %v2359 = vsel %vm1536, %v2354, 0
        %2361 = vmatprep.subr.bf16.mxu0 0
        %2362 = vmatpush1.bf16.xpose.msra.mxu0 %v2359
        %2363 = vmatprep.subr.bf16.mxu0 0
        %2364 = vmatpush1.bf16.xpose.msra.mxu0 0
        %2365 = vmatprep.subr.bf16.mxu0 0
        %2366 = vmatpush1.bf16.xpose.msra.mxu0 0
        %2367 = vmatprep.subr.bf16.mxu0 0
        %2368 = vmatpush1.bf16.xpose.msra.mxu0 0
        %2369 = vmatprep.subr.bf16.mxu0 0
        %2370 = vmatpush1.bf16.xpose.msra.mxu0 0
        %2371 = vmatprep.subr.bf16.mxu0 0
        %2372 = vmatpush1.bf16.xpose.msra.mxu0 0
        %2373 = vmatprep.subr.bf16.mxu0 0
        %2374 = vmatpush1.bf16.xpose.msra.mxu0 0
        %2375 = vmatprep.subr.bf16.mxu0 0
        %2376 = vmatpush1.bf16.xpose.msra.mxu0 0
        %2377 = vmatprep.subr.bf16.mxu0 0
        %2378 = vmatpush1.bf16.xpose.msra.mxu0 0
        %2379 = vmatprep.subr.bf16.mxu0 0
        %2380 = vmatpush1.bf16.xpose.msra.mxu0 0
        %2381 = vmatprep.subr.bf16.mxu0 0
        %2382 = vmatpush1.bf16.xpose.msra.mxu0 0
        %2383 = vmatprep.subr.bf16.mxu0 0
        %2384 = vmatpush1.bf16.xpose.msra.mxu0 0
        %2385 = vmatprep.subr.bf16.mxu0 0
        %2386 = vmatpush1.bf16.xpose.msra.mxu0 0
        %2387 = vmatprep.subr.bf16.mxu0 0
        %2388 = vmatpush1.bf16.xpose.msra.mxu0 0
        %2389 = vmatprep.subr.bf16.mxu0 0
        %2390 = vmatpush1.bf16.xpose.msra.mxu0 0
        %2391 = vmatprep.subr.bf16.mxu0 0
        %2392 = vmatpush1.bf16.xpose.msra.mxu0 0
        %2393 = vmatprep.mubr.bf16.mxu0 0
        %2394 = vmatmul.mubr.bf16.gmra.mrb[0].mxu0 %v2356
        %v2395 = vpop.f32.mrb[0].mxu0
        %v2396 = vadd.f32 %v1531, %v2395
        %v2397 = vpop.f32.mrb[0].mxu0
        %v2398 = vpop.f32.mrb[0].mxu0
        %v2399 = vpop.f32.mrb[0].mxu0
        %2400 = vdwg.mxu0
        %2402 = vrot.lane.b32.xlu0 %v2349, 96
        %v2403 = vpop.permute.xlu0 %2402
        %v2405 = vsel %vm1536, %v2349, 0
        %v2408 = vsel %vm1536, %v2403, 0
        %2410 = vmatprep.subr.bf16.mxu0 0
        %2411 = vmatpush1.bf16.xpose.msra.mxu0 %v2408
        %2412 = vmatprep.subr.bf16.mxu0 0
        %2413 = vmatpush1.bf16.xpose.msra.mxu0 0
        %2414 = vmatprep.subr.bf16.mxu0 0
        %2415 = vmatpush1.bf16.xpose.msra.mxu0 0
        %2416 = vmatprep.subr.bf16.mxu0 0
        %2417 = vmatpush1.bf16.xpose.msra.mxu0 0
        %2418 = vmatprep.subr.bf16.mxu0 0
        %2419 = vmatpush1.bf16.xpose.msra.mxu0 0
        %2420 = vmatprep.subr.bf16.mxu0 0
        %2421 = vmatpush1.bf16.xpose.msra.mxu0 0
        %2422 = vmatprep.subr.bf16.mxu0 0
        %2423 = vmatpush1.bf16.xpose.msra.mxu0 0
        %2424 = vmatprep.subr.bf16.mxu0 0
        %2425 = vmatpush1.bf16.xpose.msra.mxu0 0
        %2426 = vmatprep.subr.bf16.mxu0 0
        %2427 = vmatpush1.bf16.xpose.msra.mxu0 0
        %2428 = vmatprep.subr.bf16.mxu0 0
        %2429 = vmatpush1.bf16.xpose.msra.mxu0 0
        %2430 = vmatprep.subr.bf16.mxu0 0
        %2431 = vmatpush1.bf16.xpose.msra.mxu0 0
        %2432 = vmatprep.subr.bf16.mxu0 0
        %2433 = vmatpush1.bf16.xpose.msra.mxu0 0
        %2434 = vmatprep.subr.bf16.mxu0 0
        %2435 = vmatpush1.bf16.xpose.msra.mxu0 0
        %2436 = vmatprep.subr.bf16.mxu0 0
        %2437 = vmatpush1.bf16.xpose.msra.mxu0 0
        %2438 = vmatprep.subr.bf16.mxu0 0
        %2439 = vmatpush1.bf16.xpose.msra.mxu0 0
        %2440 = vmatprep.subr.bf16.mxu0 0
        %2441 = vmatpush1.bf16.xpose.msra.mxu0 0
        %2442 = vmatprep.mubr.bf16.mxu0 0
        %2443 = vmatmul.mubr.bf16.gmra.mrb[0].mxu0 %v2405
        %v2444 = vpop.f32.mrb[0].mxu0
        %v2445 = vadd.f32 %v1531, %v2444
        %v2446 = vpop.f32.mrb[0].mxu0
        %v2447 = vpop.f32.mrb[0].mxu0
        %v2448 = vpop.f32.mrb[0].mxu0
        %2449 = vdwg.mxu0
        %2451 = vrot.lane.b32.xlu0 %v2350, 96
        %v2452 = vpop.permute.xlu0 %2451
        %v2454 = vsel %vm1536, %v2350, 0
        %v2457 = vsel %vm1536, %v2452, 0
        %2459 = vmatprep.subr.bf16.mxu0 0
        %2460 = vmatpush1.bf16.xpose.msra.mxu0 %v2457
        %2461 = vmatprep.subr.bf16.mxu0 0
        %2462 = vmatpush1.bf16.xpose.msra.mxu0 0
        %2463 = vmatprep.subr.bf16.mxu0 0
        %2464 = vmatpush1.bf16.xpose.msra.mxu0 0
        %2465 = vmatprep.subr.bf16.mxu0 0
        %2466 = vmatpush1.bf16.xpose.msra.mxu0 0
        %2467 = vmatprep.subr.bf16.mxu0 0
        %2468 = vmatpush1.bf16.xpose.msra.mxu0 0
        %2469 = vmatprep.subr.bf16.mxu0 0
        %2470 = vmatpush1.bf16.xpose.msra.mxu0 0
        %2471 = vmatprep.subr.bf16.mxu0 0
        %2472 = vmatpush1.bf16.xpose.msra.mxu0 0
        %2473 = vmatprep.subr.bf16.mxu0 0
        %2474 = vmatpush1.bf16.xpose.msra.mxu0 0
        %2475 = vmatprep.subr.bf16.mxu0 0
        %2476 = vmatpush1.bf16.xpose.msra.mxu0 0
        %2477 = vmatprep.subr.bf16.mxu0 0
        %2478 = vmatpush1.bf16.xpose.msra.mxu0 0
        %2479 = vmatprep.subr.bf16.mxu0 0
        %2480 = vmatpush1.bf16.xpose.msra.mxu0 0
        %2481 = vmatprep.subr.bf16.mxu0 0
        %2482 = vmatpush1.bf16.xpose.msra.mxu0 0
        %2483 = vmatprep.subr.bf16.mxu0 0
        %2484 = vmatpush1.bf16.xpose.msra.mxu0 0
        %2485 = vmatprep.subr.bf16.mxu0 0
        %2486 = vmatpush1.bf16.xpose.msra.mxu0 0
        %2487 = vmatprep.subr.bf16.mxu0 0
        %2488 = vmatpush1.bf16.xpose.msra.mxu0 0
        %2489 = vmatprep.subr.bf16.mxu0 0
        %2490 = vmatpush1.bf16.xpose.msra.mxu0 0
        %2491 = vmatprep.mubr.bf16.mxu0 0
        %2492 = vmatmul.mubr.bf16.gmra.mrb[0].mxu0 %v2454
        %v2493 = vpop.f32.mrb[0].mxu0
        %v2494 = vadd.f32 %v1531, %v2493
        %v2495 = vpop.f32.mrb[0].mxu0
        %v2496 = vpop.f32.mrb[0].mxu0
        %v2497 = vpop.f32.mrb[0].mxu0
        %2498 = vdwg.mxu0
        %2500 = vrot.lane.b32.xlu0 %v2351, 96
        %v2501 = vpop.permute.xlu0 %2500
        %v2503 = vsel %vm1536, %v2351, 0
        %v2506 = vsel %vm1536, %v2501, 0
        %2508 = vmatprep.subr.bf16.mxu0 0
        %2509 = vmatpush1.bf16.xpose.msra.mxu0 %v2506
        %2510 = vmatprep.subr.bf16.mxu0 0
        %2511 = vmatpush1.bf16.xpose.msra.mxu0 0
        %2512 = vmatprep.subr.bf16.mxu0 0
        %2513 = vmatpush1.bf16.xpose.msra.mxu0 0
        %2514 = vmatprep.subr.bf16.mxu0 0
        %2515 = vmatpush1.bf16.xpose.msra.mxu0 0
        %2516 = vmatprep.subr.bf16.mxu0 0
        %2517 = vmatpush1.bf16.xpose.msra.mxu0 0
        %2518 = vmatprep.subr.bf16.mxu0 0
        %2519 = vmatpush1.bf16.xpose.msra.mxu0 0
        %2520 = vmatprep.subr.bf16.mxu0 0
        %2521 = vmatpush1.bf16.xpose.msra.mxu0 0
        %2522 = vmatprep.subr.bf16.mxu0 0
        %2523 = vmatpush1.bf16.xpose.msra.mxu0 0
        %2524 = vmatprep.subr.bf16.mxu0 0
        %2525 = vmatpush1.bf16.xpose.msra.mxu0 0
        %2526 = vmatprep.subr.bf16.mxu0 0
        %2527 = vmatpush1.bf16.xpose.msra.mxu0 0
        %2528 = vmatprep.subr.bf16.mxu0 0
        %2529 = vmatpush1.bf16.xpose.msra.mxu0 0
        %2530 = vmatprep.subr.bf16.mxu0 0
        %2531 = vmatpush1.bf16.xpose.msra.mxu0 0
        %2532 = vmatprep.subr.bf16.mxu0 0
        %2533 = vmatpush1.bf16.xpose.msra.mxu0 0
        %2534 = vmatprep.subr.bf16.mxu0 0
        %2535 = vmatpush1.bf16.xpose.msra.mxu0 0
        %2536 = vmatprep.subr.bf16.mxu0 0
        %2537 = vmatpush1.bf16.xpose.msra.mxu0 0
        %2538 = vmatprep.subr.bf16.mxu0 0
        %2539 = vmatpush1.bf16.xpose.msra.mxu0 0
        %2540 = vmatprep.mubr.bf16.mxu0 0
        %2541 = vmatmul.mubr.bf16.gmra.mrb[0].mxu0 %v2503
        %v2542 = vpop.f32.mrb[0].mxu0
        %v2543 = vadd.f32 %v1531, %v2542
        %v2544 = vpop.f32.mrb[0].mxu0
        %v2545 = vpop.f32.mrb[0].mxu0
        %v2546 = vpop.f32.mrb[0].mxu0
        %2547 = vdwg.mxu0
        %v2548 = vsel %vm1536, %v2396, -inf
        %2549 = vmax.xlane.f32.xlu0 %v2548
        %v2550 = vpop.xlane.xlu0 %2549
        %v2551 = vsel %vm1536, %v2445, -inf
        %2552 = vmax.xlane.f32.xlu0 %v2551
        %v2553 = vpop.xlane.xlu0 %2552
        %v2554 = vsel %vm1536, %v2494, -inf
        %2555 = vmax.xlane.f32.xlu0 %v2554
        %v2556 = vpop.xlane.xlu0 %2555
        %v2557 = vsel %vm1536, %v2543, -inf
        %2558 = vmax.xlane.f32.xlu0 %v2557
        %v2559 = vpop.xlane.xlu0 %2558
        %v2560 = vsub.f32 %v2396, %v2550
        %v2561 = vsub.f32 %v2445, %v2553
        %v2562 = vsub.f32 %v2494, %v2556
        %v2563 = vsub.f32 %v2543, %v2559
        %v2564 = vmul.f32 %v2560, 1.442695
        %v2565 = vpow.pop %v2564
        %v2566 = vmul.f32 %v2561, 1.442695
        %v2567 = vpow.pop %v2566
        %v2568 = vmul.f32 %v2562, 1.442695
        %v2569 = vpow.pop %v2568
        %v2570 = vmul.f32 %v2563, 1.442695
        %v2571 = vpow.pop %v2570
        %v2572 = vsel %vm1536, %v2565, 0.0
        %2573 = vadd.xlane.f32.xlu0 %v2572
        %v2574 = vpop.xlane.xlu0 %2573
        %v2575 = vsel %vm1536, %v2567, 0.0
        %2576 = vadd.xlane.f32.xlu0 %v2575
        %v2577 = vpop.xlane.xlu0 %2576
        %v2578 = vsel %vm1536, %v2569, 0.0
        %2579 = vadd.xlane.f32.xlu0 %v2578
        %v2580 = vpop.xlane.xlu0 %2579
        %v2581 = vsel %vm1536, %v2571, 0.0
        %2582 = vadd.xlane.f32.xlu0 %v2581
        %v2583 = vpop.xlane.xlu0 %2582
        %v2584 = vrcp.pop %v2574
        %v2585 = vrcp.pop %v2577
        %v2586 = vrcp.pop %v2580
        %v2587 = vrcp.pop %v2583
        %v2588 = vmul.f32 %v2565, %v2584
        %v2589 = vmul.f32 %v2567, %v2585
        %v2590 = vmul.f32 %v2569, %v2586
        %v2591 = vmul.f32 %v2571, %v2587
        %v2592 = vpack.c.bf16 %v2588, %v2588
        %v2593 = vpack.c.bf16 %v2589, %v2589
        %v2594 = vpack.c.bf16 %v2590, %v2590
        %v2595 = vpack.c.bf16 %v2591, %v2591
        %2596 = vrot.lane.b32.xlu0 %v2348, 64
        %v2597 = vpop.permute.xlu0 %2596
        %v2599 = vsel %vm1536, %v2592, 0
        %v2602 = vsel %vm1783, %v2597, 0
        %2604 = vmatprep.subr.bf16.mxu0 0
        %2605 = vmatpush1.bf16.msra.mxu0 %v2602
        %2606 = vmatprep.subr.bf16.mxu0 0
        %2607 = vmatpush1.bf16.msra.mxu0 0
        %2608 = vmatprep.subr.bf16.mxu0 0
        %2609 = vmatpush1.bf16.msra.mxu0 0
        %2610 = vmatprep.subr.bf16.mxu0 0
        %2611 = vmatpush1.bf16.msra.mxu0 0
        %2612 = vmatprep.subr.bf16.mxu0 0
        %2613 = vmatpush1.bf16.msra.mxu0 0
        %2614 = vmatprep.subr.bf16.mxu0 0
        %2615 = vmatpush1.bf16.msra.mxu0 0
        %2616 = vmatprep.subr.bf16.mxu0 0
        %2617 = vmatpush1.bf16.msra.mxu0 0
        %2618 = vmatprep.subr.bf16.mxu0 0
        %2619 = vmatpush1.bf16.msra.mxu0 0
        %2620 = vmatprep.subr.bf16.mxu0 0
        %2621 = vmatpush1.bf16.msra.mxu0 0
        %2622 = vmatprep.subr.bf16.mxu0 0
        %2623 = vmatpush1.bf16.msra.mxu0 0
        %2624 = vmatprep.subr.bf16.mxu0 0
        %2625 = vmatpush1.bf16.msra.mxu0 0
        %2626 = vmatprep.subr.bf16.mxu0 0
        %2627 = vmatpush1.bf16.msra.mxu0 0
        %2628 = vmatprep.subr.bf16.mxu0 0
        %2629 = vmatpush1.bf16.msra.mxu0 0
        %2630 = vmatprep.subr.bf16.mxu0 0
        %2631 = vmatpush1.bf16.msra.mxu0 0
        %2632 = vmatprep.subr.bf16.mxu0 0
        %2633 = vmatpush1.bf16.msra.mxu0 0
        %2634 = vmatprep.subr.bf16.mxu0 0
        %2635 = vmatpush1.bf16.msra.mxu0 0
        %2636 = vmatprep.mubr.bf16.mxu0 0
        %2637 = vmatmul.mubr.bf16.gmra.mrb[0].mxu0 %v2599
        %v2638 = vpop.f32.mrb[0].mxu0
        %v2639 = vadd.f32 0.0, %v2638
        %v2640 = vpop.f32.mrb[0].mxu0
        %v2641 = vpop.f32.mrb[0].mxu0
        %v2642 = vpop.f32.mrb[0].mxu0
        %2643 = vdwg.mxu0
        %2644 = vrot.lane.b32.xlu0 %v2349, 64
        %v2645 = vpop.permute.xlu0 %2644
        %v2647 = vsel %vm1536, %v2593, 0
        %v2650 = vsel %vm1783, %v2645, 0
        %2652 = vmatprep.subr.bf16.mxu0 0
        %2653 = vmatpush1.bf16.msra.mxu0 %v2650
        %2654 = vmatprep.subr.bf16.mxu0 0
        %2655 = vmatpush1.bf16.msra.mxu0 0
        %2656 = vmatprep.subr.bf16.mxu0 0
        %2657 = vmatpush1.bf16.msra.mxu0 0
        %2658 = vmatprep.subr.bf16.mxu0 0
        %2659 = vmatpush1.bf16.msra.mxu0 0
        %2660 = vmatprep.subr.bf16.mxu0 0
        %2661 = vmatpush1.bf16.msra.mxu0 0
        %2662 = vmatprep.subr.bf16.mxu0 0
        %2663 = vmatpush1.bf16.msra.mxu0 0
        %2664 = vmatprep.subr.bf16.mxu0 0
        %2665 = vmatpush1.bf16.msra.mxu0 0
        %2666 = vmatprep.subr.bf16.mxu0 0
        %2667 = vmatpush1.bf16.msra.mxu0 0
        %2668 = vmatprep.subr.bf16.mxu0 0
        %2669 = vmatpush1.bf16.msra.mxu0 0
        %2670 = vmatprep.subr.bf16.mxu0 0
        %2671 = vmatpush1.bf16.msra.mxu0 0
        %2672 = vmatprep.subr.bf16.mxu0 0
        %2673 = vmatpush1.bf16.msra.mxu0 0
        %2674 = vmatprep.subr.bf16.mxu0 0
        %2675 = vmatpush1.bf16.msra.mxu0 0
        %2676 = vmatprep.subr.bf16.mxu0 0
        %2677 = vmatpush1.bf16.msra.mxu0 0
        %2678 = vmatprep.subr.bf16.mxu0 0
        %2679 = vmatpush1.bf16.msra.mxu0 0
        %2680 = vmatprep.subr.bf16.mxu0 0
        %2681 = vmatpush1.bf16.msra.mxu0 0
        %2682 = vmatprep.subr.bf16.mxu0 0
        %2683 = vmatpush1.bf16.msra.mxu0 0
        %2684 = vmatprep.mubr.bf16.mxu0 0
        %2685 = vmatmul.mubr.bf16.gmra.mrb[0].mxu0 %v2647
        %v2686 = vpop.f32.mrb[0].mxu0
        %v2687 = vadd.f32 0.0, %v2686
        %v2688 = vpop.f32.mrb[0].mxu0
        %v2689 = vpop.f32.mrb[0].mxu0
        %v2690 = vpop.f32.mrb[0].mxu0
        %2691 = vdwg.mxu0
        %2692 = vrot.lane.b32.xlu0 %v2350, 64
        %v2693 = vpop.permute.xlu0 %2692
        %v2695 = vsel %vm1536, %v2594, 0
        %v2698 = vsel %vm1783, %v2693, 0
        %2700 = vmatprep.subr.bf16.mxu0 0
        %2701 = vmatpush1.bf16.msra.mxu0 %v2698
        %2702 = vmatprep.subr.bf16.mxu0 0
        %2703 = vmatpush1.bf16.msra.mxu0 0
        %2704 = vmatprep.subr.bf16.mxu0 0
        %2705 = vmatpush1.bf16.msra.mxu0 0
        %2706 = vmatprep.subr.bf16.mxu0 0
        %2707 = vmatpush1.bf16.msra.mxu0 0
        %2708 = vmatprep.subr.bf16.mxu0 0
        %2709 = vmatpush1.bf16.msra.mxu0 0
        %2710 = vmatprep.subr.bf16.mxu0 0
        %2711 = vmatpush1.bf16.msra.mxu0 0
        %2712 = vmatprep.subr.bf16.mxu0 0
        %2713 = vmatpush1.bf16.msra.mxu0 0
        %2714 = vmatprep.subr.bf16.mxu0 0
        %2715 = vmatpush1.bf16.msra.mxu0 0
        %2716 = vmatprep.subr.bf16.mxu0 0
        %2717 = vmatpush1.bf16.msra.mxu0 0
        %2718 = vmatprep.subr.bf16.mxu0 0
        %2719 = vmatpush1.bf16.msra.mxu0 0
        %2720 = vmatprep.subr.bf16.mxu0 0
        %2721 = vmatpush1.bf16.msra.mxu0 0
        %2722 = vmatprep.subr.bf16.mxu0 0
        %2723 = vmatpush1.bf16.msra.mxu0 0
        %2724 = vmatprep.subr.bf16.mxu0 0
        %2725 = vmatpush1.bf16.msra.mxu0 0
        %2726 = vmatprep.subr.bf16.mxu0 0
        %2727 = vmatpush1.bf16.msra.mxu0 0
        %2728 = vmatprep.subr.bf16.mxu0 0
        %2729 = vmatpush1.bf16.msra.mxu0 0
        %2730 = vmatprep.subr.bf16.mxu0 0
        %2731 = vmatpush1.bf16.msra.mxu0 0
        %2732 = vmatprep.mubr.bf16.mxu0 0
        %2733 = vmatmul.mubr.bf16.gmra.mrb[0].mxu0 %v2695
        %v2734 = vpop.f32.mrb[0].mxu0
        %v2735 = vadd.f32 0.0, %v2734
        %v2736 = vpop.f32.mrb[0].mxu0
        %v2737 = vpop.f32.mrb[0].mxu0
        %v2738 = vpop.f32.mrb[0].mxu0
        %2739 = vdwg.mxu0
        %2740 = vrot.lane.b32.xlu0 %v2351, 64
        %v2741 = vpop.permute.xlu0 %2740
        %v2743 = vsel %vm1536, %v2595, 0
        %v2746 = vsel %vm1783, %v2741, 0
        %2748 = vmatprep.subr.bf16.mxu0 0
        %2749 = vmatpush1.bf16.msra.mxu0 %v2746
        %2750 = vmatprep.subr.bf16.mxu0 0
        %2751 = vmatpush1.bf16.msra.mxu0 0
        %2752 = vmatprep.subr.bf16.mxu0 0
        %2753 = vmatpush1.bf16.msra.mxu0 0
        %2754 = vmatprep.subr.bf16.mxu0 0
        %2755 = vmatpush1.bf16.msra.mxu0 0
        %2756 = vmatprep.subr.bf16.mxu0 0
        %2757 = vmatpush1.bf16.msra.mxu0 0
        %2758 = vmatprep.subr.bf16.mxu0 0
        %2759 = vmatpush1.bf16.msra.mxu0 0
        %2760 = vmatprep.subr.bf16.mxu0 0
        %2761 = vmatpush1.bf16.msra.mxu0 0
        %2762 = vmatprep.subr.bf16.mxu0 0
        %2763 = vmatpush1.bf16.msra.mxu0 0
        %2764 = vmatprep.subr.bf16.mxu0 0
        %2765 = vmatpush1.bf16.msra.mxu0 0
        %2766 = vmatprep.subr.bf16.mxu0 0
        %2767 = vmatpush1.bf16.msra.mxu0 0
        %2768 = vmatprep.subr.bf16.mxu0 0
        %2769 = vmatpush1.bf16.msra.mxu0 0
        %2770 = vmatprep.subr.bf16.mxu0 0
        %2771 = vmatpush1.bf16.msra.mxu0 0
        %2772 = vmatprep.subr.bf16.mxu0 0
        %2773 = vmatpush1.bf16.msra.mxu0 0
        %2774 = vmatprep.subr.bf16.mxu0 0
        %2775 = vmatpush1.bf16.msra.mxu0 0
        %2776 = vmatprep.subr.bf16.mxu0 0
        %2777 = vmatpush1.bf16.msra.mxu0 0
        %2778 = vmatprep.subr.bf16.mxu0 0
        %2779 = vmatpush1.bf16.msra.mxu0 0
        %2780 = vmatprep.mubr.bf16.mxu0 0
        %2781 = vmatmul.mubr.bf16.gmra.mrb[0].mxu0 %v2743
        %v2782 = vpop.f32.mrb[0].mxu0
        %v2783 = vadd.f32 0.0, %v2782
        %v2784 = vpop.f32.mrb[0].mxu0
        %v2785 = vpop.f32.mrb[0].mxu0
        %v2786 = vpop.f32.mrb[0].mxu0
        %2787 = vdwg.mxu0
        %2789 = vrot.lane.b32.xlu0 %v2687, 8
        %v2790 = vpop.permute.xlu0 %2789
        %2793 = vrot.lane.b32.xlu0 %v2735, 16
        %v2794 = vpop.permute.xlu0 %2793
        %2797 = vrot.lane.b32.xlu0 %v2783, 24
        %v2798 = vpop.permute.xlu0 %2797
        %v2800 = vsel %vm1536, %v2639, %v2790
        %v2801 = vsel %vm1984, %v2800, %v2794
        %v2802 = vsel %vm1986, %v2801, %v2798
        %s2803 = scalar_lea.vmem %s21, 16
        %v2804 = vld [vmem:[%s2803] sm:$0xf]
        %v2805 = vld [vmem:[%s2803 + $0x4] sm:$0xf]
        %v2806 = vld [vmem:[%s2803 + $0x8] sm:$0xf]
        %v2807 = vld [vmem:[%s2803 + $0xc] sm:$0xf]
        %s2808 = scalar_lea.vmem %s23, 1
        %v2809 = vld [vmem:[%s2808] sm:$0x1]
        %v2810 = vpack.c.bf16 %v2802, %v2802
        %v2812 = vlaneseq
        %v2813 = vshrl.u32 %v2812, 7
        %v2814 = vsub.s32 0, %v2813
        %v2815 = vrot.slane %v2809, %v2814
        %v2821 = vunpack.c.l.b16 %v2804
        %v2822 = vunpack.c.l.b16 %v2805
        %v2823 = vunpack.c.l.b16 %v2806
        %v2824 = vunpack.c.l.b16 %v2807
        %v2825 = vpack.c.b16 %v2822, %v2821
        %v2826 = vpack.c.b16 %v2824, %v2823
        %v2830 = vsel %vm1417, %v2810, 0
        %2832 = vmatprep.subr.bf16.mxu0 0
        %2833 = vmatpush1.bf16.msra.mxu0 %v2825
        %2834 = vmatprep.subr.bf16.mxu0 0
        %2835 = vmatpush1.bf16.msra.mxu0 %v2826
        %2836 = vmatprep.subr.bf16.mxu0 0
        %2837 = vmatpush1.bf16.msra.mxu0 0
        %2838 = vmatprep.subr.bf16.mxu0 0
        %2839 = vmatpush1.bf16.msra.mxu0 0
        %2840 = vmatprep.subr.bf16.mxu0 0
        %2841 = vmatpush1.bf16.msra.mxu0 0
        %2842 = vmatprep.subr.bf16.mxu0 0
        %2843 = vmatpush1.bf16.msra.mxu0 0
        %2844 = vmatprep.subr.bf16.mxu0 0
        %2845 = vmatpush1.bf16.msra.mxu0 0
        %2846 = vmatprep.subr.bf16.mxu0 0
        %2847 = vmatpush1.bf16.msra.mxu0 0
        %2848 = vmatprep.subr.bf16.mxu0 0
        %2849 = vmatpush1.bf16.msra.mxu0 0
        %2850 = vmatprep.subr.bf16.mxu0 0
        %2851 = vmatpush1.bf16.msra.mxu0 0
        %2852 = vmatprep.subr.bf16.mxu0 0
        %2853 = vmatpush1.bf16.msra.mxu0 0
        %2854 = vmatprep.subr.bf16.mxu0 0
        %2855 = vmatpush1.bf16.msra.mxu0 0
        %2856 = vmatprep.subr.bf16.mxu0 0
        %2857 = vmatpush1.bf16.msra.mxu0 0
        %2858 = vmatprep.subr.bf16.mxu0 0
        %2859 = vmatpush1.bf16.msra.mxu0 0
        %2860 = vmatprep.subr.bf16.mxu0 0
        %2861 = vmatpush1.bf16.msra.mxu0 0
        %2862 = vmatprep.subr.bf16.mxu0 0
        %2863 = vmatpush1.bf16.msra.mxu0 0
        %2864 = vmatprep.mubr.bf16.mxu0 0
        %2865 = vmatmul.mubr.bf16.gmra.mrb[0].mxu0 %v2830
        %v2866 = vpop.f32.mrb[0].mxu0
        %v2867 = vadd.f32 %v2815, %v2866
        %v2868 = vpop.f32.mrb[0].mxu0
        %v2869 = vpop.f32.mrb[0].mxu0
        %v2870 = vpop.f32.mrb[0].mxu0
        %2871 = vdwg.mxu0
        %v2872 = vadd.f32 %v2237, %v2867
        %s2873 = scalar_lea.vmem %s25, 1
        %v2874 = vld [vmem:[%s2873] sm:$0x1]
        %s2875 = scalar_lea.vmem %s27, 1
        %v2876 = vld [vmem:[%s2875] sm:$0x1]
        %v2877 = vsel %vm1417, %v2872, 0.0
        %2878 = vadd.xlane.f32.xlu0 %v2877
        %v2879 = vpop.xlane.xlu0 %2878
        %v2880 = vmul.f32 %v2879, %v1421
        %v2881 = vsub.f32 %v2872, %v2880
        %v2882 = vmul.f32 %v2881, %v2881
        %v2883 = vsel %vm1417, %v2882, 0.0
        %2884 = vadd.xlane.f32.xlu0 %v2883
        %v2885 = vpop.xlane.xlu0 %2884
        %v2886 = vmul.f32 %v2885, %v1421
        %v2887 = vadd.f32 %v2886, 1e-05
        %v2888 = vrsqrt.pop %v2887
        %v2889 = vmul.f32 %v2881, %v2888
        %v2891 = vlaneseq
        %v2892 = vshrl.u32 %v2891, 7
        %v2893 = vsub.s32 0, %v2892
        %v2894 = vrot.slane %v2874, %v2893
        %v2896 = vmul.f32 %v2889, %v2894
        %v2898 = vlaneseq
        %v2899 = vshrl.u32 %v2898, 7
        %v2900 = vsub.s32 0, %v2899
        %v2901 = vrot.slane %v2876, %v2900
        %v2903 = vadd.f32 %v2896, %v2901
        %s2904 = scalar_lea.vmem %s29, 16
        %v2905 = vld [vmem:[%s2904] sm:$0xf]
        %v2906 = vld [vmem:[%s2904 + $0x4] sm:$0xf]
        %v2907 = vld [vmem:[%s2904 + $0x8] sm:$0xf]
        %v2908 = vld [vmem:[%s2904 + $0xc] sm:$0xf]
        %s2909 = scalar_lea.vmem %s31, 1
        %v2910 = vld [vmem:[%s2909] sm:$0x1]
        %v2911 = vpack.c.bf16 %v2903, %v2903
        %v2913 = vlaneseq
        %v2914 = vshrl.u32 %v2913, 7
        %v2915 = vsub.s32 0, %v2914
        %v2916 = vrot.slane %v2910, %v2915
        %v2922 = vunpack.c.l.b16 %v2905
        %v2923 = vunpack.c.l.b16 %v2906
        %v2924 = vunpack.c.l.b16 %v2907
        %v2925 = vunpack.c.l.b16 %v2908
        %v2926 = vpack.c.b16 %v2923, %v2922
        %v2927 = vpack.c.b16 %v2925, %v2924
        %v2931 = vsel %vm1417, %v2911, 0
        %2933 = vmatprep.subr.bf16.mxu0 0
        %2934 = vmatpush1.bf16.msra.mxu0 %v2926
        %2935 = vmatprep.subr.bf16.mxu0 0
        %2936 = vmatpush1.bf16.msra.mxu0 %v2927
        %2937 = vmatprep.subr.bf16.mxu0 0
        %2938 = vmatpush1.bf16.msra.mxu0 0
        %2939 = vmatprep.subr.bf16.mxu0 0
        %2940 = vmatpush1.bf16.msra.mxu0 0
        %2941 = vmatprep.subr.bf16.mxu0 0
        %2942 = vmatpush1.bf16.msra.mxu0 0
        %2943 = vmatprep.subr.bf16.mxu0 0
        %2944 = vmatpush1.bf16.msra.mxu0 0
        %2945 = vmatprep.subr.bf16.mxu0 0
        %2946 = vmatpush1.bf16.msra.mxu0 0
        %2947 = vmatprep.subr.bf16.mxu0 0
        %2948 = vmatpush1.bf16.msra.mxu0 0
        %2949 = vmatprep.subr.bf16.mxu0 0
        %2950 = vmatpush1.bf16.msra.mxu0 0
        %2951 = vmatprep.subr.bf16.mxu0 0
        %2952 = vmatpush1.bf16.msra.mxu0 0
        %2953 = vmatprep.subr.bf16.mxu0 0
        %2954 = vmatpush1.bf16.msra.mxu0 0
        %2955 = vmatprep.subr.bf16.mxu0 0
        %2956 = vmatpush1.bf16.msra.mxu0 0
        %2957 = vmatprep.subr.bf16.mxu0 0
        %2958 = vmatpush1.bf16.msra.mxu0 0
        %2959 = vmatprep.subr.bf16.mxu0 0
        %2960 = vmatpush1.bf16.msra.mxu0 0
        %2961 = vmatprep.subr.bf16.mxu0 0
        %2962 = vmatpush1.bf16.msra.mxu0 0
        %2963 = vmatprep.subr.bf16.mxu0 0
        %2964 = vmatpush1.bf16.msra.mxu0 0
        %2965 = vmatprep.mubr.bf16.mxu0 0
        %2966 = vmatmul.mubr.bf16.gmra.mrb[0].mxu0 %v2931
        %v2967 = vpop.f32.mrb[0].mxu0
        %v2968 = vadd.f32 %v2916, %v2967
        %v2969 = vpop.f32.mrb[0].mxu0
        %v2970 = vpop.f32.mrb[0].mxu0
        %v2971 = vpop.f32.mrb[0].mxu0
        %2972 = vdwg.mxu0
        %v2973 = vmax.f32 %v2968, 0.0
        %s2974 = scalar_lea.vmem %s33, 32
        %v2975 = vld [vmem:[%s2974] sm:$0xf]
        %v2976 = vld [vmem:[%s2974 + $0x4] sm:$0xf]
        %v2977 = vld [vmem:[%s2974 + $0x8] sm:$0xf]
        %v2978 = vld [vmem:[%s2974 + $0xc] sm:$0xf]
        %v2979 = vld [vmem:[%s2974 + $0x10] sm:$0xf]
        %v2980 = vld [vmem:[%s2974 + $0x14] sm:$0xf]
        %v2981 = vld [vmem:[%s2974 + $0x18] sm:$0xf]
        %v2982 = vld [vmem:[%s2974 + $0x1c] sm:$0xf]
        %s2983 = scalar_lea.vmem %s35, 1
        %v2984 = vld [vmem:[%s2983] sm:$0x1]
        %v2985 = vpack.c.bf16 %v2973, %v2973
        %v2987 = vlaneseq
        %v2988 = vshrl.u32 %v2987, 7
        %v2989 = vsub.s32 0, %v2988
        %v2990 = vrot.slane %v2984, %v2989
        %v3000 = vunpack.c.l.b16 %v2975
        %v3001 = vunpack.c.l.b16 %v2976
        %v3002 = vunpack.c.l.b16 %v2977
        %v3003 = vunpack.c.l.b16 %v2978
        %v3004 = vunpack.c.l.b16 %v2979
        %v3005 = vunpack.c.l.b16 %v2980
        %v3006 = vunpack.c.l.b16 %v2981
        %v3007 = vunpack.c.l.b16 %v2982
        %v3008 = vpack.c.b16 %v3001, %v3000
        %v3009 = vpack.c.b16 %v3003, %v3002
        %v3010 = vpack.c.b16 %v3005, %v3004
        %v3011 = vpack.c.b16 %v3007, %v3006
        %v3017 = vsel %vm2193, %v2985, 0
        %3019 = vmatprep.subr.bf16.mxu0 0
        %3020 = vmatpush1.bf16.msra.mxu0 %v3008
        %3021 = vmatprep.subr.bf16.mxu0 0
        %3022 = vmatpush1.bf16.msra.mxu0 %v3009
        %3023 = vmatprep.subr.bf16.mxu0 0
        %3024 = vmatpush1.bf16.msra.mxu0 %v3010
        %3025 = vmatprep.subr.bf16.mxu0 0
        %3026 = vmatpush1.bf16.msra.mxu0 %v3011
        %3027 = vmatprep.subr.bf16.mxu0 0
        %3028 = vmatpush1.bf16.msra.mxu0 0
        %3029 = vmatprep.subr.bf16.mxu0 0
        %3030 = vmatpush1.bf16.msra.mxu0 0
        %3031 = vmatprep.subr.bf16.mxu0 0
        %3032 = vmatpush1.bf16.msra.mxu0 0
        %3033 = vmatprep.subr.bf16.mxu0 0
        %3034 = vmatpush1.bf16.msra.mxu0 0
        %3035 = vmatprep.subr.bf16.mxu0 0
        %3036 = vmatpush1.bf16.msra.mxu0 0
        %3037 = vmatprep.subr.bf16.mxu0 0
        %3038 = vmatpush1.bf16.msra.mxu0 0
        %3039 = vmatprep.subr.bf16.mxu0 0
        %3040 = vmatpush1.bf16.msra.mxu0 0
        %3041 = vmatprep.subr.bf16.mxu0 0
        %3042 = vmatpush1.bf16.msra.mxu0 0
        %3043 = vmatprep.subr.bf16.mxu0 0
        %3044 = vmatpush1.bf16.msra.mxu0 0
        %3045 = vmatprep.subr.bf16.mxu0 0
        %3046 = vmatpush1.bf16.msra.mxu0 0
        %3047 = vmatprep.subr.bf16.mxu0 0
        %3048 = vmatpush1.bf16.msra.mxu0 0
        %3049 = vmatprep.subr.bf16.mxu0 0
        %3050 = vmatpush1.bf16.msra.mxu0 0
        %3051 = vmatprep.mubr.bf16.mxu0 0
        %3052 = vmatmul.mubr.bf16.gmra.mrb[0].mxu0 %v3017
        %v3053 = vpop.f32.mrb[0].mxu0
        %v3054 = vadd.f32 %v2990, %v3053
        %v3055 = vpop.f32.mrb[0].mxu0
        %v3056 = vpop.f32.mrb[0].mxu0
        %v3057 = vpop.f32.mrb[0].mxu0
        %3058 = vdwg.mxu0
        %v3059 = vadd.f32 %v2872, %v3054
        %v3060 = vld [vmem:[%s37] sm:$0x1]
        %v3061 = vld [vmem:[%s39] sm:$0x1]
        %v3062 = vsel %vm1417, %v3059, 0.0
        %3063 = vadd.xlane.f32.xlu0 %v3062
        %v3064 = vpop.xlane.xlu0 %3063
        %v3065 = vmul.f32 %v3064, %v1421
        %v3066 = vsub.f32 %v3059, %v3065
        %v3067 = vmul.f32 %v3066, %v3066
        %v3068 = vsel %vm1417, %v3067, 0.0
        %3069 = vadd.xlane.f32.xlu0 %v3068
        %v3070 = vpop.xlane.xlu0 %3069
        %v3071 = vmul.f32 %v3070, %v1421
        %v3072 = vadd.f32 %v3071, 1e-05
        %v3073 = vrsqrt.pop %v3072
        %v3074 = vmul.f32 %v3066, %v3073
        %v3076 = vlaneseq
        %v3077 = vshrl.u32 %v3076, 7
        %v3078 = vsub.s32 0, %v3077
        %v3079 = vrot.slane %v3060, %v3078
        %v3081 = vmul.f32 %v3074, %v3079
        %v3083 = vlaneseq
        %v3084 = vshrl.u32 %v3083, 7
        %v3085 = vsub.s32 0, %v3084
        %v3086 = vrot.slane %v3061, %v3085
        %v3088 = vadd.f32 %v3081, %v3086
        %v3089 = vld [vmem:[%s1289] sm:$0xff]
        %3090 = vset.pattern.permute.xlu0 0
        %3091 = vperm.xlu0 %3090, %v3089
        %v3092 = vpop.permute.xlu0 %3091
        %vm3093 = vcmp.eq.s32.totalorder %v1300, %v3092
        %v3094 = vsel %vm3093, 5.656854, 0.0
        %v3095 = vpack.c.bf16 %v3094, %v3094
        %v3096 = vld [vmem:[%s11] sm:$0xf]
        %v3097 = vld [vmem:[%s11 + $0x4] sm:$0xf]
        %v3098 = vld [vmem:[%s11 + $0x8] sm:$0xf]
        %v3099 = vld [vmem:[%s11 + $0xc] sm:$0xf]
        %v3100 = vld [vmem:[%s11 + $0x10] sm:$0xf]
        %v3101 = vld [vmem:[%s11 + $0x14] sm:$0xf]
        %v3102 = vld [vmem:[%s11 + $0x18] sm:$0xf]
        %v3103 = vld [vmem:[%s11 + $0x1c] sm:$0xf]
        %v3104 = vld [vmem:[%s11 + $0x20] sm:$0xf]
        %v3105 = vld [vmem:[%s11 + $0x24] sm:$0xf]
        %v3106 = vld [vmem:[%s11 + $0x28] sm:$0xf]
        %v3107 = vld [vmem:[%s11 + $0x2c] sm:$0xf]
        %v3108 = vld [vmem:[%s11 + $0x30] sm:$0xf]
        %v3109 = vld [vmem:[%s11 + $0x34] sm:$0xf]
        %v3110 = vld [vmem:[%s11 + $0x38] sm:$0xf]
        %v3111 = vld [vmem:[%s11 + $0x3c] sm:$0xf]
        %v3112 = vld [vmem:[%s7] sm:$0xff]
        %v3129 = vunpack.c.l.b16 %v3096
        %v3130 = vunpack.c.l.b16 %v3097
        %v3131 = vunpack.c.l.b16 %v3098
        %v3132 = vunpack.c.l.b16 %v3099
        %v3133 = vunpack.c.l.b16 %v3100
        %v3134 = vunpack.c.l.b16 %v3101
        %v3135 = vunpack.c.l.b16 %v3102
        %v3136 = vunpack.c.l.b16 %v3103
        %v3137 = vunpack.c.l.b16 %v3104
        %v3138 = vunpack.c.l.b16 %v3105
        %v3139 = vunpack.c.l.b16 %v3106
        %v3140 = vunpack.c.l.b16 %v3107
        %v3141 = vunpack.c.l.b16 %v3108
        %v3142 = vunpack.c.l.b16 %v3109
        %v3143 = vunpack.c.l.b16 %v3110
        %v3144 = vunpack.c.l.b16 %v3111
        %v3145 = vpack.c.b16 %v3130, %v3129
        %v3146 = vpack.c.b16 %v3132, %v3131
        %v3147 = vpack.c.b16 %v3134, %v3133
        %v3148 = vpack.c.b16 %v3136, %v3135
        %v3149 = vpack.c.b16 %v3138, %v3137
        %v3150 = vpack.c.b16 %v3140, %v3139
        %v3151 = vpack.c.b16 %v3142, %v3141
        %v3152 = vpack.c.b16 %v3144, %v3143
        %3161 = vmatprep.subr.bf16.mxu0 0
        %3162 = vmatpush1.bf16.msra.mxu0 %v3145
        %3163 = vmatprep.subr.bf16.mxu0 0
        %3164 = vmatpush1.bf16.msra.mxu0 %v3146
        %3165 = vmatprep.subr.bf16.mxu0 0
        %3166 = vmatpush1.bf16.msra.mxu0 %v3147
        %3167 = vmatprep.subr.bf16.mxu0 0
        %3168 = vmatpush1.bf16.msra.mxu0 %v3148
        %3169 = vmatprep.subr.bf16.mxu0 0
        %3170 = vmatpush1.bf16.msra.mxu0 %v3149
        %3171 = vmatprep.subr.bf16.mxu0 0
        %3172 = vmatpush1.bf16.msra.mxu0 %v3150
        %3173 = vmatprep.subr.bf16.mxu0 0
        %3174 = vmatpush1.bf16.msra.mxu0 %v3151
        %3175 = vmatprep.subr.bf16.mxu0 0
        %3176 = vmatpush1.bf16.msra.mxu0 %v3152
        %3177 = vmatprep.subr.bf16.mxu0 0
        %3178 = vmatpush1.bf16.msra.mxu0 0
        %3179 = vmatprep.subr.bf16.mxu0 0
        %3180 = vmatpush1.bf16.msra.mxu0 0
        %3181 = vmatprep.subr.bf16.mxu0 0
        %3182 = vmatpush1.bf16.msra.mxu0 0
        %3183 = vmatprep.subr.bf16.mxu0 0
        %3184 = vmatpush1.bf16.msra.mxu0 0
        %3185 = vmatprep.subr.bf16.mxu0 0
        %3186 = vmatpush1.bf16.msra.mxu0 0
        %3187 = vmatprep.subr.bf16.mxu0 0
        %3188 = vmatpush1.bf16.msra.mxu0 0
        %3189 = vmatprep.subr.bf16.mxu0 0
        %3190 = vmatpush1.bf16.msra.mxu0 0
        %3191 = vmatprep.subr.bf16.mxu0 0
        %3192 = vmatpush1.bf16.msra.mxu0 0
        %3193 = vmatprep.mubr.bf16.mxu0 0
        %3194 = vmatmul.mubr.bf16.gmra.mrb[0].mxu0 %v3095
        %v3195 = vpop.f32.mrb[0].mxu0
        %v3196 = vadd.f32 %v3112, %v3195
        %v3197 = vpop.f32.mrb[0].mxu0
        %v3198 = vpop.f32.mrb[0].mxu0
        %v3199 = vpop.f32.mrb[0].mxu0
        %3200 = vdwg.mxu0
        %v3201 = vld [vmem:[%s41] sm:$0x1]
        %v3202 = vld [vmem:[%s43] sm:$0x1]
        %v3203 = vsel %vm1417, %v3196, 0.0
        %3204 = vadd.xlane.f32.xlu0 %v3203
        %v3205 = vpop.xlane.xlu0 %3204
        %v3206 = vmul.f32 %v3205, %v1421
        %v3207 = vsub.f32 %v3196, %v3206
        %v3208 = vmul.f32 %v3207, %v3207
        %v3209 = vsel %vm1417, %v3208, 0.0
        %3210 = vadd.xlane.f32.xlu0 %v3209
        %v3211 = vpop.xlane.xlu0 %3210
        %v3212 = vmul.f32 %v3211, %v1421
        %v3213 = vadd.f32 %v3212, 1e-05
        %v3214 = vrsqrt.pop %v3213
        %v3215 = vmul.f32 %v3207, %v3214
        %v3217 = vlaneseq
        %v3218 = vshrl.u32 %v3217, 7
        %v3219 = vsub.s32 0, %v3218
        %v3220 = vrot.slane %v3201, %v3219
        %v3222 = vmul.f32 %v3215, %v3220
        %v3224 = vlaneseq
        %v3225 = vshrl.u32 %v3224, 7
        %v3226 = vsub.s32 0, %v3225
        %v3227 = vrot.slane %v3202, %v3226
        %v3229 = vadd.f32 %v3222, %v3227
        %v3230 = vld [vmem:[%s45] sm:$0xf]
        %v3231 = vld [vmem:[%s45 + $0x4] sm:$0xf]
        %v3232 = vld [vmem:[%s45 + $0x8] sm:$0xf]
        %v3233 = vld [vmem:[%s45 + $0xc] sm:$0xf]
        %v3234 = vld [vmem:[%s47] sm:$0x1]
        %v3235 = vpack.c.bf16 %v3229, %v3229
        %v3237 = vlaneseq
        %v3238 = vshrl.u32 %v3237, 7
        %v3239 = vsub.s32 0, %v3238
        %v3240 = vrot.slane %v3234, %v3239
        %v3246 = vunpack.c.l.b16 %v3230
        %v3247 = vunpack.c.l.b16 %v3231
        %v3248 = vunpack.c.l.b16 %v3232
        %v3249 = vunpack.c.l.b16 %v3233
        %v3250 = vpack.c.b16 %v3247, %v3246
        %v3251 = vpack.c.b16 %v3249, %v3248
        %v3255 = vsel %vm1417, %v3235, 0
        %3257 = vmatprep.subr.bf16.mxu0 0
        %3258 = vmatpush1.bf16.msra.mxu0 %v3250
        %3259 = vmatprep.subr.bf16.mxu0 0
        %3260 = vmatpush1.bf16.msra.mxu0 %v3251
        %3261 = vmatprep.subr.bf16.mxu0 0
        %3262 = vmatpush1.bf16.msra.mxu0 0
        %3263 = vmatprep.subr.bf16.mxu0 0
        %3264 = vmatpush1.bf16.msra.mxu0 0
        %3265 = vmatprep.subr.bf16.mxu0 0
        %3266 = vmatpush1.bf16.msra.mxu0 0
        %3267 = vmatprep.subr.bf16.mxu0 0
        %3268 = vmatpush1.bf16.msra.mxu0 0
        %3269 = vmatprep.subr.bf16.mxu0 0
        %3270 = vmatpush1.bf16.msra.mxu0 0
        %3271 = vmatprep.subr.bf16.mxu0 0
        %3272 = vmatpush1.bf16.msra.mxu0 0
        %3273 = vmatprep.subr.bf16.mxu0 0
        %3274 = vmatpush1.bf16.msra.mxu0 0
        %3275 = vmatprep.subr.bf16.mxu0 0
        %3276 = vmatpush1.bf16.msra.mxu0 0
        %3277 = vmatprep.subr.bf16.mxu0 0
        %3278 = vmatpush1.bf16.msra.mxu0 0
        %3279 = vmatprep.subr.bf16.mxu0 0
        %3280 = vmatpush1.bf16.msra.mxu0 0
        %3281 = vmatprep.subr.bf16.mxu0 0
        %3282 = vmatpush1.bf16.msra.mxu0 0
        %3283 = vmatprep.subr.bf16.mxu0 0
        %3284 = vmatpush1.bf16.msra.mxu0 0
        %3285 = vmatprep.subr.bf16.mxu0 0
        %3286 = vmatpush1.bf16.msra.mxu0 0
        %3287 = vmatprep.subr.bf16.mxu0 0
        %3288 = vmatpush1.bf16.msra.mxu0 0
        %3289 = vmatprep.mubr.bf16.mxu0 0
        %3290 = vmatmul.mubr.bf16.gmra.mrb[0].mxu0 %v3255
        %v3291 = vpop.f32.mrb[0].mxu0
        %v3292 = vadd.f32 %v3240, %v3291
        %v3293 = vpop.f32.mrb[0].mxu0
        %v3294 = vpop.f32.mrb[0].mxu0
        %v3295 = vpop.f32.mrb[0].mxu0
        %3296 = vdwg.mxu0
        %3298 = vrot.lane.b32.xlu0 %v3292, 120
        %v3299 = vpop.permute.xlu0 %3298
        %3301 = vrot.lane.b32.xlu0 %v3292, 112
        %v3302 = vpop.permute.xlu0 %3301
        %3304 = vrot.lane.b32.xlu0 %v3292, 104
        %v3305 = vpop.permute.xlu0 %3304
        %v3307 = vpack.c.bf16 %v3292, %v3292
        %v3308 = vpack.c.bf16 %v3299, %v3299
        %v3309 = vpack.c.bf16 %v3302, %v3302
        %v3310 = vpack.c.bf16 %v3305, %v3305
        %3312 = vrot.lane.b32.xlu0 %v3307, 96
        %v3313 = vpop.permute.xlu0 %3312
        %v3315 = vsel %vm1536, %v3307, 0
        %v3318 = vsel %vm1536, %v3313, 0
        %3320 = vmatprep.subr.bf16.mxu0 0
        %3321 = vmatpush1.bf16.xpose.msra.mxu0 %v3318
        %3322 = vmatprep.subr.bf16.mxu0 0
        %3323 = vmatpush1.bf16.xpose.msra.mxu0 0
        %3324 = vmatprep.subr.bf16.mxu0 0
        %3325 = vmatpush1.bf16.xpose.msra.mxu0 0
        %3326 = vmatprep.subr.bf16.mxu0 0
        %3327 = vmatpush1.bf16.xpose.msra.mxu0 0
        %3328 = vmatprep.subr.bf16.mxu0 0
        %3329 = vmatpush1.bf16.xpose.msra.mxu0 0
        %3330 = vmatprep.subr.bf16.mxu0 0
        %3331 = vmatpush1.bf16.xpose.msra.mxu0 0
        %3332 = vmatprep.subr.bf16.mxu0 0
        %3333 = vmatpush1.bf16.xpose.msra.mxu0 0
        %3334 = vmatprep.subr.bf16.mxu0 0
        %3335 = vmatpush1.bf16.xpose.msra.mxu0 0
        %3336 = vmatprep.subr.bf16.mxu0 0
        %3337 = vmatpush1.bf16.xpose.msra.mxu0 0
        %3338 = vmatprep.subr.bf16.mxu0 0
        %3339 = vmatpush1.bf16.xpose.msra.mxu0 0
        %3340 = vmatprep.subr.bf16.mxu0 0
        %3341 = vmatpush1.bf16.xpose.msra.mxu0 0
        %3342 = vmatprep.subr.bf16.mxu0 0
        %3343 = vmatpush1.bf16.xpose.msra.mxu0 0
        %3344 = vmatprep.subr.bf16.mxu0 0
        %3345 = vmatpush1.bf16.xpose.msra.mxu0 0
        %3346 = vmatprep.subr.bf16.mxu0 0
        %3347 = vmatpush1.bf16.xpose.msra.mxu0 0
        %3348 = vmatprep.subr.bf16.mxu0 0
        %3349 = vmatpush1.bf16.xpose.msra.mxu0 0
        %3350 = vmatprep.subr.bf16.mxu0 0
        %3351 = vmatpush1.bf16.xpose.msra.mxu0 0
        %3352 = vmatprep.mubr.bf16.mxu0 0
        %3353 = vmatmul.mubr.bf16.gmra.mrb[0].mxu0 %v3315
        %v3354 = vpop.f32.mrb[0].mxu0
        %v3355 = vadd.f32 %v1302, %v3354
        %v3356 = vpop.f32.mrb[0].mxu0
        %v3357 = vpop.f32.mrb[0].mxu0
        %v3358 = vpop.f32.mrb[0].mxu0
        %3359 = vdwg.mxu0
        %3361 = vrot.lane.b32.xlu0 %v3308, 96
        %v3362 = vpop.permute.xlu0 %3361
        %v3364 = vsel %vm1536, %v3308, 0
        %v3367 = vsel %vm1536, %v3362, 0
        %3369 = vmatprep.subr.bf16.mxu0 0
        %3370 = vmatpush1.bf16.xpose.msra.mxu0 %v3367
        %3371 = vmatprep.subr.bf16.mxu0 0
        %3372 = vmatpush1.bf16.xpose.msra.mxu0 0
        %3373 = vmatprep.subr.bf16.mxu0 0
        %3374 = vmatpush1.bf16.xpose.msra.mxu0 0
        %3375 = vmatprep.subr.bf16.mxu0 0
        %3376 = vmatpush1.bf16.xpose.msra.mxu0 0
        %3377 = vmatprep.subr.bf16.mxu0 0
        %3378 = vmatpush1.bf16.xpose.msra.mxu0 0
        %3379 = vmatprep.subr.bf16.mxu0 0
        %3380 = vmatpush1.bf16.xpose.msra.mxu0 0
        %3381 = vmatprep.subr.bf16.mxu0 0
        %3382 = vmatpush1.bf16.xpose.msra.mxu0 0
        %3383 = vmatprep.subr.bf16.mxu0 0
        %3384 = vmatpush1.bf16.xpose.msra.mxu0 0
        %3385 = vmatprep.subr.bf16.mxu0 0
        %3386 = vmatpush1.bf16.xpose.msra.mxu0 0
        %3387 = vmatprep.subr.bf16.mxu0 0
        %3388 = vmatpush1.bf16.xpose.msra.mxu0 0
        %3389 = vmatprep.subr.bf16.mxu0 0
        %3390 = vmatpush1.bf16.xpose.msra.mxu0 0
        %3391 = vmatprep.subr.bf16.mxu0 0
        %3392 = vmatpush1.bf16.xpose.msra.mxu0 0
        %3393 = vmatprep.subr.bf16.mxu0 0
        %3394 = vmatpush1.bf16.xpose.msra.mxu0 0
        %3395 = vmatprep.subr.bf16.mxu0 0
        %3396 = vmatpush1.bf16.xpose.msra.mxu0 0
        %3397 = vmatprep.subr.bf16.mxu0 0
        %3398 = vmatpush1.bf16.xpose.msra.mxu0 0
        %3399 = vmatprep.subr.bf16.mxu0 0
        %3400 = vmatpush1.bf16.xpose.msra.mxu0 0
        %3401 = vmatprep.mubr.bf16.mxu0 0
        %3402 = vmatmul.mubr.bf16.gmra.mrb[0].mxu0 %v3364
        %v3403 = vpop.f32.mrb[0].mxu0
        %v3404 = vadd.f32 %v1302, %v3403
        %v3405 = vpop.f32.mrb[0].mxu0
        %v3406 = vpop.f32.mrb[0].mxu0
        %v3407 = vpop.f32.mrb[0].mxu0
        %3408 = vdwg.mxu0
        %3410 = vrot.lane.b32.xlu0 %v3309, 96
        %v3411 = vpop.permute.xlu0 %3410
        %v3413 = vsel %vm1536, %v3309, 0
        %v3416 = vsel %vm1536, %v3411, 0
        %3418 = vmatprep.subr.bf16.mxu0 0
        %3419 = vmatpush1.bf16.xpose.msra.mxu0 %v3416
        %3420 = vmatprep.subr.bf16.mxu0 0
        %3421 = vmatpush1.bf16.xpose.msra.mxu0 0
        %3422 = vmatprep.subr.bf16.mxu0 0
        %3423 = vmatpush1.bf16.xpose.msra.mxu0 0
        %3424 = vmatprep.subr.bf16.mxu0 0
        %3425 = vmatpush1.bf16.xpose.msra.mxu0 0
        %3426 = vmatprep.subr.bf16.mxu0 0
        %3427 = vmatpush1.bf16.xpose.msra.mxu0 0
        %3428 = vmatprep.subr.bf16.mxu0 0
        %3429 = vmatpush1.bf16.xpose.msra.mxu0 0
        %3430 = vmatprep.subr.bf16.mxu0 0
        %3431 = vmatpush1.bf16.xpose.msra.mxu0 0
        %3432 = vmatprep.subr.bf16.mxu0 0
        %3433 = vmatpush1.bf16.xpose.msra.mxu0 0
        %3434 = vmatprep.subr.bf16.mxu0 0
        %3435 = vmatpush1.bf16.xpose.msra.mxu0 0
        %3436 = vmatprep.subr.bf16.mxu0 0
        %3437 = vmatpush1.bf16.xpose.msra.mxu0 0
        %3438 = vmatprep.subr.bf16.mxu0 0
        %3439 = vmatpush1.bf16.xpose.msra.mxu0 0
        %3440 = vmatprep.subr.bf16.mxu0 0
        %3441 = vmatpush1.bf16.xpose.msra.mxu0 0
        %3442 = vmatprep.subr.bf16.mxu0 0
        %3443 = vmatpush1.bf16.xpose.msra.mxu0 0
        %3444 = vmatprep.subr.bf16.mxu0 0
        %3445 = vmatpush1.bf16.xpose.msra.mxu0 0
        %3446 = vmatprep.subr.bf16.mxu0 0
        %3447 = vmatpush1.bf16.xpose.msra.mxu0 0
        %3448 = vmatprep.subr.bf16.mxu0 0
        %3449 = vmatpush1.bf16.xpose.msra.mxu0 0
        %3450 = vmatprep.mubr.bf16.mxu0 0
        %3451 = vmatmul.mubr.bf16.gmra.mrb[0].mxu0 %v3413
        %v3452 = vpop.f32.mrb[0].mxu0
        %v3453 = vadd.f32 %v1302, %v3452
        %v3454 = vpop.f32.mrb[0].mxu0
        %v3455 = vpop.f32.mrb[0].mxu0
        %v3456 = vpop.f32.mrb[0].mxu0
        %3457 = vdwg.mxu0
        %3459 = vrot.lane.b32.xlu0 %v3310, 96
        %v3460 = vpop.permute.xlu0 %3459
        %v3462 = vsel %vm1536, %v3310, 0
        %v3465 = vsel %vm1536, %v3460, 0
        %3467 = vmatprep.subr.bf16.mxu0 0
        %3468 = vmatpush1.bf16.xpose.msra.mxu0 %v3465
        %3469 = vmatprep.subr.bf16.mxu0 0
        %3470 = vmatpush1.bf16.xpose.msra.mxu0 0
        %3471 = vmatprep.subr.bf16.mxu0 0
        %3472 = vmatpush1.bf16.xpose.msra.mxu0 0
        %3473 = vmatprep.subr.bf16.mxu0 0
        %3474 = vmatpush1.bf16.xpose.msra.mxu0 0
        %3475 = vmatprep.subr.bf16.mxu0 0
        %3476 = vmatpush1.bf16.xpose.msra.mxu0 0
        %3477 = vmatprep.subr.bf16.mxu0 0
        %3478 = vmatpush1.bf16.xpose.msra.mxu0 0
        %3479 = vmatprep.subr.bf16.mxu0 0
        %3480 = vmatpush1.bf16.xpose.msra.mxu0 0
        %3481 = vmatprep.subr.bf16.mxu0 0
        %3482 = vmatpush1.bf16.xpose.msra.mxu0 0
        %3483 = vmatprep.subr.bf16.mxu0 0
        %3484 = vmatpush1.bf16.xpose.msra.mxu0 0
        %3485 = vmatprep.subr.bf16.mxu0 0
        %3486 = vmatpush1.bf16.xpose.msra.mxu0 0
        %3487 = vmatprep.subr.bf16.mxu0 0
        %3488 = vmatpush1.bf16.xpose.msra.mxu0 0
        %3489 = vmatprep.subr.bf16.mxu0 0
        %3490 = vmatpush1.bf16.xpose.msra.mxu0 0
        %3491 = vmatprep.subr.bf16.mxu0 0
        %3492 = vmatpush1.bf16.xpose.msra.mxu0 0
        %3493 = vmatprep.subr.bf16.mxu0 0
        %3494 = vmatpush1.bf16.xpose.msra.mxu0 0
        %3495 = vmatprep.subr.bf16.mxu0 0
        %3496 = vmatpush1.bf16.xpose.msra.mxu0 0
        %3497 = vmatprep.subr.bf16.mxu0 0
        %3498 = vmatpush1.bf16.xpose.msra.mxu0 0
        %3499 = vmatprep.mubr.bf16.mxu0 0
        %3500 = vmatmul.mubr.bf16.gmra.mrb[0].mxu0 %v3462
        %v3501 = vpop.f32.mrb[0].mxu0
        %v3502 = vadd.f32 %v1302, %v3501
        %v3503 = vpop.f32.mrb[0].mxu0
        %v3504 = vpop.f32.mrb[0].mxu0
        %v3505 = vpop.f32.mrb[0].mxu0
        %3506 = vdwg.mxu0
        %v3507 = vsel %vm1536, %v3355, -inf
        %3508 = vmax.xlane.f32.xlu0 %v3507
        %v3509 = vpop.xlane.xlu0 %3508
        %v3510 = vsel %vm1536, %v3404, -inf
        %3511 = vmax.xlane.f32.xlu0 %v3510
        %v3512 = vpop.xlane.xlu0 %3511
        %v3513 = vsel %vm1536, %v3453, -inf
        %3514 = vmax.xlane.f32.xlu0 %v3513
        %v3515 = vpop.xlane.xlu0 %3514
        %v3516 = vsel %vm1536, %v3502, -inf
        %3517 = vmax.xlane.f32.xlu0 %v3516
        %v3518 = vpop.xlane.xlu0 %3517
        %v3519 = vsub.f32 %v3355, %v3509
        %v3520 = vsub.f32 %v3404, %v3512
        %v3521 = vsub.f32 %v3453, %v3515
        %v3522 = vsub.f32 %v3502, %v3518
        %v3523 = vmul.f32 %v3519, 1.442695
        %v3524 = vpow.pop %v3523
        %v3525 = vmul.f32 %v3520, 1.442695
        %v3526 = vpow.pop %v3525
        %v3527 = vmul.f32 %v3521, 1.442695
        %v3528 = vpow.pop %v3527
        %v3529 = vmul.f32 %v3522, 1.442695
        %v3530 = vpow.pop %v3529
        %v3531 = vsel %vm1536, %v3524, 0.0
        %3532 = vadd.xlane.f32.xlu0 %v3531
        %v3533 = vpop.xlane.xlu0 %3532
        %v3534 = vsel %vm1536, %v3526, 0.0
        %3535 = vadd.xlane.f32.xlu0 %v3534
        %v3536 = vpop.xlane.xlu0 %3535
        %v3537 = vsel %vm1536, %v3528, 0.0
        %3538 = vadd.xlane.f32.xlu0 %v3537
        %v3539 = vpop.xlane.xlu0 %3538
        %v3540 = vsel %vm1536, %v3530, 0.0
        %3541 = vadd.xlane.f32.xlu0 %v3540
        %v3542 = vpop.xlane.xlu0 %3541
        %v3543 = vrcp.pop %v3533
        %v3544 = vrcp.pop %v3536
        %v3545 = vrcp.pop %v3539
        %v3546 = vrcp.pop %v3542
        %v3547 = vmul.f32 %v3524, %v3543
        %v3548 = vmul.f32 %v3526, %v3544
        %v3549 = vmul.f32 %v3528, %v3545
        %v3550 = vmul.f32 %v3530, %v3546
        %v3551 = vpack.c.bf16 %v3547, %v3547
        %v3552 = vpack.c.bf16 %v3548, %v3548
        %v3553 = vpack.c.bf16 %v3549, %v3549
        %v3554 = vpack.c.bf16 %v3550, %v3550
        %3555 = vrot.lane.b32.xlu0 %v3307, 64
        %v3556 = vpop.permute.xlu0 %3555
        %v3558 = vsel %vm1536, %v3551, 0
        %v3561 = vsel %vm1783, %v3556, 0
        %3563 = vmatprep.subr.bf16.mxu0 0
        %3564 = vmatpush1.bf16.msra.mxu0 %v3561
        %3565 = vmatprep.subr.bf16.mxu0 0
        %3566 = vmatpush1.bf16.msra.mxu0 0
        %3567 = vmatprep.subr.bf16.mxu0 0
        %3568 = vmatpush1.bf16.msra.mxu0 0
        %3569 = vmatprep.subr.bf16.mxu0 0
        %3570 = vmatpush1.bf16.msra.mxu0 0
        %3571 = vmatprep.subr.bf16.mxu0 0
        %3572 = vmatpush1.bf16.msra.mxu0 0
        %3573 = vmatprep.subr.bf16.mxu0 0
        %3574 = vmatpush1.bf16.msra.mxu0 0
        %3575 = vmatprep.subr.bf16.mxu0 0
        %3576 = vmatpush1.bf16.msra.mxu0 0
        %3577 = vmatprep.subr.bf16.mxu0 0
        %3578 = vmatpush1.bf16.msra.mxu0 0
        %3579 = vmatprep.subr.bf16.mxu0 0
        %3580 = vmatpush1.bf16.msra.mxu0 0
        %3581 = vmatprep.subr.bf16.mxu0 0
        %3582 = vmatpush1.bf16.msra.mxu0 0
        %3583 = vmatprep.subr.bf16.mxu0 0
        %3584 = vmatpush1.bf16.msra.mxu0 0
        %3585 = vmatprep.subr.bf16.mxu0 0
        %3586 = vmatpush1.bf16.msra.mxu0 0
        %3587 = vmatprep.subr.bf16.mxu0 0
        %3588 = vmatpush1.bf16.msra.mxu0 0
        %3589 = vmatprep.subr.bf16.mxu0 0
        %3590 = vmatpush1.bf16.msra.mxu0 0
        %3591 = vmatprep.subr.bf16.mxu0 0
        %3592 = vmatpush1.bf16.msra.mxu0 0
        %3593 = vmatprep.subr.bf16.mxu0 0
        %3594 = vmatpush1.bf16.msra.mxu0 0
        %3595 = vmatprep.mubr.bf16.mxu0 0
        %3596 = vmatmul.mubr.bf16.gmra.mrb[0].mxu0 %v3558
        %v3597 = vpop.f32.mrb[0].mxu0
        %v3598 = vadd.f32 0.0, %v3597
        %v3599 = vpop.f32.mrb[0].mxu0
        %v3600 = vpop.f32.mrb[0].mxu0
        %v3601 = vpop.f32.mrb[0].mxu0
        %3602 = vdwg.mxu0
        %3603 = vrot.lane.b32.xlu0 %v3308, 64
        %v3604 = vpop.permute.xlu0 %3603
        %v3606 = vsel %vm1536, %v3552, 0
        %v3609 = vsel %vm1783, %v3604, 0
        %3611 = vmatprep.subr.bf16.mxu0 0
        %3612 = vmatpush1.bf16.msra.mxu0 %v3609
        %3613 = vmatprep.subr.bf16.mxu0 0
        %3614 = vmatpush1.bf16.msra.mxu0 0
        %3615 = vmatprep.subr.bf16.mxu0 0
        %3616 = vmatpush1.bf16.msra.mxu0 0
        %3617 = vmatprep.subr.bf16.mxu0 0
        %3618 = vmatpush1.bf16.msra.mxu0 0
        %3619 = vmatprep.subr.bf16.mxu0 0
        %3620 = vmatpush1.bf16.msra.mxu0 0
        %3621 = vmatprep.subr.bf16.mxu0 0
        %3622 = vmatpush1.bf16.msra.mxu0 0
        %3623 = vmatprep.subr.bf16.mxu0 0
        %3624 = vmatpush1.bf16.msra.mxu0 0
        %3625 = vmatprep.subr.bf16.mxu0 0
        %3626 = vmatpush1.bf16.msra.mxu0 0
        %3627 = vmatprep.subr.bf16.mxu0 0
        %3628 = vmatpush1.bf16.msra.mxu0 0
        %3629 = vmatprep.subr.bf16.mxu0 0
        %3630 = vmatpush1.bf16.msra.mxu0 0
        %3631 = vmatprep.subr.bf16.mxu0 0
        %3632 = vmatpush1.bf16.msra.mxu0 0
        %3633 = vmatprep.subr.bf16.mxu0 0
        %3634 = vmatpush1.bf16.msra.mxu0 0
        %3635 = vmatprep.subr.bf16.mxu0 0
        %3636 = vmatpush1.bf16.msra.mxu0 0
        %3637 = vmatprep.subr.bf16.mxu0 0
        %3638 = vmatpush1.bf16.msra.mxu0 0
        %3639 = vmatprep.subr.bf16.mxu0 0
        %3640 = vmatpush1.bf16.msra.mxu0 0
        %3641 = vmatprep.subr.bf16.mxu0 0
        %3642 = vmatpush1.bf16.msra.mxu0 0
        %3643 = vmatprep.mubr.bf16.mxu0 0
        %3644 = vmatmul.mubr.bf16.gmra.mrb[0].mxu0 %v3606
        %v3645 = vpop.f32.mrb[0].mxu0
        %v3646 = vadd.f32 0.0, %v3645
        %v3647 = vpop.f32.mrb[0].mxu0
        %v3648 = vpop.f32.mrb[0].mxu0
        %v3649 = vpop.f32.mrb[0].mxu0
        %3650 = vdwg.mxu0
        %3651 = vrot.lane.b32.xlu0 %v3309, 64
        %v3652 = vpop.permute.xlu0 %3651
        %v3654 = vsel %vm1536, %v3553, 0
        %v3657 = vsel %vm1783, %v3652, 0
        %3659 = vmatprep.subr.bf16.mxu0 0
        %3660 = vmatpush1.bf16.msra.mxu0 %v3657
        %3661 = vmatprep.subr.bf16.mxu0 0
        %3662 = vmatpush1.bf16.msra.mxu0 0
        %3663 = vmatprep.subr.bf16.mxu0 0
        %3664 = vmatpush1.bf16.msra.mxu0 0
        %3665 = vmatprep.subr.bf16.mxu0 0
        %3666 = vmatpush1.bf16.msra.mxu0 0
        %3667 = vmatprep.subr.bf16.mxu0 0
        %3668 = vmatpush1.bf16.msra.mxu0 0
        %3669 = vmatprep.subr.bf16.mxu0 0
        %3670 = vmatpush1.bf16.msra.mxu0 0
        %3671 = vmatprep.subr.bf16.mxu0 0
        %3672 = vmatpush1.bf16.msra.mxu0 0
        %3673 = vmatprep.subr.bf16.mxu0 0
        %3674 = vmatpush1.bf16.msra.mxu0 0
        %3675 = vmatprep.subr.bf16.mxu0 0
        %3676 = vmatpush1.bf16.msra.mxu0 0
        %3677 = vmatprep.subr.bf16.mxu0 0
        %3678 = vmatpush1.bf16.msra.mxu0 0
        %3679 = vmatprep.subr.bf16.mxu0 0
        %3680 = vmatpush1.bf16.msra.mxu0 0
        %3681 = vmatprep.subr.bf16.mxu0 0
        %3682 = vmatpush1.bf16.msra.mxu0 0
        %3683 = vmatprep.subr.bf16.mxu0 0
        %3684 = vmatpush1.bf16.msra.mxu0 0
        %3685 = vmatprep.subr.bf16.mxu0 0
        %3686 = vmatpush1.bf16.msra.mxu0 0
        %3687 = vmatprep.subr.bf16.mxu0 0
        %3688 = vmatpush1.bf16.msra.mxu0 0
        %3689 = vmatprep.subr.bf16.mxu0 0
        %3690 = vmatpush1.bf16.msra.mxu0 0
        %3691 = vmatprep.mubr.bf16.mxu0 0
        %3692 = vmatmul.mubr.bf16.gmra.mrb[0].mxu0 %v3654
        %v3693 = vpop.f32.mrb[0].mxu0
        %v3694 = vadd.f32 0.0, %v3693
        %v3695 = vpop.f32.mrb[0].mxu0
        %v3696 = vpop.f32.mrb[0].mxu0
        %v3697 = vpop.f32.mrb[0].mxu0
        %3698 = vdwg.mxu0
        %3699 = vrot.lane.b32.xlu0 %v3310, 64
        %v3700 = vpop.permute.xlu0 %3699
        %v3702 = vsel %vm1536, %v3554, 0
        %v3705 = vsel %vm1783, %v3700, 0
        %3707 = vmatprep.subr.bf16.mxu0 0
        %3708 = vmatpush1.bf16.msra.mxu0 %v3705
        %3709 = vmatprep.subr.bf16.mxu0 0
        %3710 = vmatpush1.bf16.msra.mxu0 0
        %3711 = vmatprep.subr.bf16.mxu0 0
        %3712 = vmatpush1.bf16.msra.mxu0 0
        %3713 = vmatprep.subr.bf16.mxu0 0
        %3714 = vmatpush1.bf16.msra.mxu0 0
        %3715 = vmatprep.subr.bf16.mxu0 0
        %3716 = vmatpush1.bf16.msra.mxu0 0
        %3717 = vmatprep.subr.bf16.mxu0 0
        %3718 = vmatpush1.bf16.msra.mxu0 0
        %3719 = vmatprep.subr.bf16.mxu0 0
        %3720 = vmatpush1.bf16.msra.mxu0 0
        %3721 = vmatprep.subr.bf16.mxu0 0
        %3722 = vmatpush1.bf16.msra.mxu0 0
        %3723 = vmatprep.subr.bf16.mxu0 0
        %3724 = vmatpush1.bf16.msra.mxu0 0
        %3725 = vmatprep.subr.bf16.mxu0 0
        %3726 = vmatpush1.bf16.msra.mxu0 0
        %3727 = vmatprep.subr.bf16.mxu0 0
        %3728 = vmatpush1.bf16.msra.mxu0 0
        %3729 = vmatprep.subr.bf16.mxu0 0
        %3730 = vmatpush1.bf16.msra.mxu0 0
        %3731 = vmatprep.subr.bf16.mxu0 0
        %3732 = vmatpush1.bf16.msra.mxu0 0
        %3733 = vmatprep.subr.bf16.mxu0 0
        %3734 = vmatpush1.bf16.msra.mxu0 0
        %3735 = vmatprep.subr.bf16.mxu0 0
        %3736 = vmatpush1.bf16.msra.mxu0 0
        %3737 = vmatprep.subr.bf16.mxu0 0
        %3738 = vmatpush1.bf16.msra.mxu0 0
        %3739 = vmatprep.mubr.bf16.mxu0 0
        %3740 = vmatmul.mubr.bf16.gmra.mrb[0].mxu0 %v3702
        %v3741 = vpop.f32.mrb[0].mxu0
        %v3742 = vadd.f32 0.0, %v3741
        %v3743 = vpop.f32.mrb[0].mxu0
        %v3744 = vpop.f32.mrb[0].mxu0
        %v3745 = vpop.f32.mrb[0].mxu0
        %3746 = vdwg.mxu0
        %3748 = vrot.lane.b32.xlu0 %v3646, 8
        %v3749 = vpop.permute.xlu0 %3748
        %3752 = vrot.lane.b32.xlu0 %v3694, 16
        %v3753 = vpop.permute.xlu0 %3752
        %3756 = vrot.lane.b32.xlu0 %v3742, 24
        %v3757 = vpop.permute.xlu0 %3756
        %v3759 = vsel %vm1536, %v3598, %v3749
        %v3760 = vsel %vm1984, %v3759, %v3753
        %v3761 = vsel %vm1986, %v3760, %v3757
        %v3762 = vld [vmem:[%s49] sm:$0xf]
        %v3763 = vld [vmem:[%s49 + $0x4] sm:$0xf]
        %v3764 = vld [vmem:[%s49 + $0x8] sm:$0xf]
        %v3765 = vld [vmem:[%s49 + $0xc] sm:$0xf]
        %v3766 = vld [vmem:[%s51] sm:$0x1]
        %v3767 = vpack.c.bf16 %v3761, %v3761
        %v3769 = vlaneseq
        %v3770 = vshrl.u32 %v3769, 7
        %v3771 = vsub.s32 0, %v3770
        %v3772 = vrot.slane %v3766, %v3771
        %v3778 = vunpack.c.l.b16 %v3762
        %v3779 = vunpack.c.l.b16 %v3763
        %v3780 = vunpack.c.l.b16 %v3764
        %v3781 = vunpack.c.l.b16 %v3765
        %v3782 = vpack.c.b16 %v3779, %v3778
        %v3783 = vpack.c.b16 %v3781, %v3780
        %v3787 = vsel %vm1417, %v3767, 0
        %3789 = vmatprep.subr.bf16.mxu0 0
        %3790 = vmatpush1.bf16.msra.mxu0 %v3782
        %3791 = vmatprep.subr.bf16.mxu0 0
        %3792 = vmatpush1.bf16.msra.mxu0 %v3783
        %3793 = vmatprep.subr.bf16.mxu0 0
        %3794 = vmatpush1.bf16.msra.mxu0 0
        %3795 = vmatprep.subr.bf16.mxu0 0
        %3796 = vmatpush1.bf16.msra.mxu0 0
        %3797 = vmatprep.subr.bf16.mxu0 0
        %3798 = vmatpush1.bf16.msra.mxu0 0
        %3799 = vmatprep.subr.bf16.mxu0 0
        %3800 = vmatpush1.bf16.msra.mxu0 0
        %3801 = vmatprep.subr.bf16.mxu0 0
        %3802 = vmatpush1.bf16.msra.mxu0 0
        %3803 = vmatprep.subr.bf16.mxu0 0
        %3804 = vmatpush1.bf16.msra.mxu0 0
        %3805 = vmatprep.subr.bf16.mxu0 0
        %3806 = vmatpush1.bf16.msra.mxu0 0
        %3807 = vmatprep.subr.bf16.mxu0 0
        %3808 = vmatpush1.bf16.msra.mxu0 0
        %3809 = vmatprep.subr.bf16.mxu0 0
        %3810 = vmatpush1.bf16.msra.mxu0 0
        %3811 = vmatprep.subr.bf16.mxu0 0
        %3812 = vmatpush1.bf16.msra.mxu0 0
        %3813 = vmatprep.subr.bf16.mxu0 0
        %3814 = vmatpush1.bf16.msra.mxu0 0
        %3815 = vmatprep.subr.bf16.mxu0 0
        %3816 = vmatpush1.bf16.msra.mxu0 0
        %3817 = vmatprep.subr.bf16.mxu0 0
        %3818 = vmatpush1.bf16.msra.mxu0 0
        %3819 = vmatprep.subr.bf16.mxu0 0
        %3820 = vmatpush1.bf16.msra.mxu0 0
        %3821 = vmatprep.mubr.bf16.mxu0 0
        %3822 = vmatmul.mubr.bf16.gmra.mrb[0].mxu0 %v3787
        %v3823 = vpop.f32.mrb[0].mxu0
        %v3824 = vadd.f32 %v3772, %v3823
        %v3825 = vpop.f32.mrb[0].mxu0
        %v3826 = vpop.f32.mrb[0].mxu0
        %v3827 = vpop.f32.mrb[0].mxu0
        %3828 = vdwg.mxu0
        %v3829 = vadd.f32 %v3196, %v3824
        %v3830 = vld [vmem:[%s53] sm:$0x1]
        %v3831 = vld [vmem:[%s55] sm:$0x1]
        %v3832 = vsel %vm1417, %v3829, 0.0
        %3833 = vadd.xlane.f32.xlu0 %v3832
        %v3834 = vpop.xlane.xlu0 %3833
        %v3835 = vmul.f32 %v3834, %v1421
        %v3836 = vsub.f32 %v3829, %v3835
        %v3837 = vmul.f32 %v3836, %v3836
        %v3838 = vsel %vm1417, %v3837, 0.0
        %3839 = vadd.xlane.f32.xlu0 %v3838
        %v3840 = vpop.xlane.xlu0 %3839
        %v3841 = vmul.f32 %v3840, %v1421
        %v3842 = vadd.f32 %v3841, 1e-05
        %v3843 = vrsqrt.pop %v3842
        %v3844 = vmul.f32 %v3836, %v3843
        %v3846 = vlaneseq
        %v3847 = vshrl.u32 %v3846, 7
        %v3848 = vsub.s32 0, %v3847
        %v3849 = vrot.slane %v3830, %v3848
        %v3851 = vmul.f32 %v3844, %v3849
        %v3853 = vlaneseq
        %v3854 = vshrl.u32 %v3853, 7
        %v3855 = vsub.s32 0, %v3854
        %v3856 = vrot.slane %v3831, %v3855
        %v3858 = vadd.f32 %v3851, %v3856
        %v3859 = vld [vmem:[%s57] sm:$0xf]
        %v3860 = vld [vmem:[%s57 + $0x4] sm:$0xf]
        %v3861 = vld [vmem:[%s57 + $0x8] sm:$0xf]
        %v3862 = vld [vmem:[%s57 + $0xc] sm:$0xf]
        %v3863 = vld [vmem:[%s59] sm:$0x1]
        %v3864 = vpack.c.bf16 %v3858, %v3858
        %v3866 = vlaneseq
        %v3867 = vshrl.u32 %v3866, 7
        %v3868 = vsub.s32 0, %v3867
        %v3869 = vrot.slane %v3863, %v3868
        %v3875 = vunpack.c.l.b16 %v3859
        %v3876 = vunpack.c.l.b16 %v3860
        %v3877 = vunpack.c.l.b16 %v3861
        %v3878 = vunpack.c.l.b16 %v3862
        %v3879 = vpack.c.b16 %v3876, %v3875
        %v3880 = vpack.c.b16 %v3878, %v3877
        %v3884 = vsel %vm1417, %v3864, 0
        %3886 = vmatprep.subr.bf16.mxu0 0
        %3887 = vmatpush1.bf16.msra.mxu0 %v3879
        %3888 = vmatprep.subr.bf16.mxu0 0
        %3889 = vmatpush1.bf16.msra.mxu0 %v3880
        %3890 = vmatprep.subr.bf16.mxu0 0
        %3891 = vmatpush1.bf16.msra.mxu0 0
        %3892 = vmatprep.subr.bf16.mxu0 0
        %3893 = vmatpush1.bf16.msra.mxu0 0
        %3894 = vmatprep.subr.bf16.mxu0 0
        %3895 = vmatpush1.bf16.msra.mxu0 0
        %3896 = vmatprep.subr.bf16.mxu0 0
        %3897 = vmatpush1.bf16.msra.mxu0 0
        %3898 = vmatprep.subr.bf16.mxu0 0
        %3899 = vmatpush1.bf16.msra.mxu0 0
        %3900 = vmatprep.subr.bf16.mxu0 0
        %3901 = vmatpush1.bf16.msra.mxu0 0
        %3902 = vmatprep.subr.bf16.mxu0 0
        %3903 = vmatpush1.bf16.msra.mxu0 0
        %3904 = vmatprep.subr.bf16.mxu0 0
        %3905 = vmatpush1.bf16.msra.mxu0 0
        %3906 = vmatprep.subr.bf16.mxu0 0
        %3907 = vmatpush1.bf16.msra.mxu0 0
        %3908 = vmatprep.subr.bf16.mxu0 0
        %3909 = vmatpush1.bf16.msra.mxu0 0
        %3910 = vmatprep.subr.bf16.mxu0 0
        %3911 = vmatpush1.bf16.msra.mxu0 0
        %3912 = vmatprep.subr.bf16.mxu0 0
        %3913 = vmatpush1.bf16.msra.mxu0 0
        %3914 = vmatprep.subr.bf16.mxu0 0
        %3915 = vmatpush1.bf16.msra.mxu0 0
        %3916 = vmatprep.subr.bf16.mxu0 0
        %3917 = vmatpush1.bf16.msra.mxu0 0
        %3918 = vmatprep.mubr.bf16.mxu0 0
        %3919 = vmatmul.mubr.bf16.gmra.mrb[0].mxu0 %v3884
        %v3920 = vpop.f32.mrb[0].mxu0
        %v3921 = vadd.f32 %v3869, %v3920
        %v3922 = vpop.f32.mrb[0].mxu0
        %v3923 = vpop.f32.mrb[0].mxu0
        %v3924 = vpop.f32.mrb[0].mxu0
        %3925 = vdwg.mxu0
        %v3926 = vld [vmem:[%s61] sm:$0xf]
        %v3927 = vld [vmem:[%s61 + $0x4] sm:$0xf]
        %v3928 = vld [vmem:[%s61 + $0x8] sm:$0xf]
        %v3929 = vld [vmem:[%s61 + $0xc] sm:$0xf]
        %v3930 = vld [vmem:[%s63] sm:$0x1]
        %v3931 = vpack.c.bf16 %v3088, %v3088
        %v3933 = vlaneseq
        %v3934 = vshrl.u32 %v3933, 7
        %v3935 = vsub.s32 0, %v3934
        %v3936 = vrot.slane %v3930, %v3935
        %v3942 = vunpack.c.l.b16 %v3926
        %v3943 = vunpack.c.l.b16 %v3927
        %v3944 = vunpack.c.l.b16 %v3928
        %v3945 = vunpack.c.l.b16 %v3929
        %v3946 = vpack.c.b16 %v3943, %v3942
        %v3947 = vpack.c.b16 %v3945, %v3944
        %v3951 = vsel %vm1417, %v3931, 0
        %3953 = vmatprep.subr.bf16.mxu0 0
        %3954 = vmatpush1.bf16.msra.mxu0 %v3946
        %3955 = vmatprep.subr.bf16.mxu0 0
        %3956 = vmatpush1.bf16.msra.mxu0 %v3947
        %3957 = vmatprep.subr.bf16.mxu0 0
        %3958 = vmatpush1.bf16.msra.mxu0 0
        %3959 = vmatprep.subr.bf16.mxu0 0
        %3960 = vmatpush1.bf16.msra.mxu0 0
        %3961 = vmatprep.subr.bf16.mxu0 0
        %3962 = vmatpush1.bf16.msra.mxu0 0
        %3963 = vmatprep.subr.bf16.mxu0 0
        %3964 = vmatpush1.bf16.msra.mxu0 0
        %3965 = vmatprep.subr.bf16.mxu0 0
        %3966 = vmatpush1.bf16.msra.mxu0 0
        %3967 = vmatprep.subr.bf16.mxu0 0
        %3968 = vmatpush1.bf16.msra.mxu0 0
        %3969 = vmatprep.subr.bf16.mxu0 0
        %3970 = vmatpush1.bf16.msra.mxu0 0
        %3971 = vmatprep.subr.bf16.mxu0 0
        %3972 = vmatpush1.bf16.msra.mxu0 0
        %3973 = vmatprep.subr.bf16.mxu0 0
        %3974 = vmatpush1.bf16.msra.mxu0 0
        %3975 = vmatprep.subr.bf16.mxu0 0
        %3976 = vmatpush1.bf16.msra.mxu0 0
        %3977 = vmatprep.subr.bf16.mxu0 0
        %3978 = vmatpush1.bf16.msra.mxu0 0
        %3979 = vmatprep.subr.bf16.mxu0 0
        %3980 = vmatpush1.bf16.msra.mxu0 0
        %3981 = vmatprep.subr.bf16.mxu0 0
        %3982 = vmatpush1.bf16.msra.mxu0 0
        %3983 = vmatprep.subr.bf16.mxu0 0
        %3984 = vmatpush1.bf16.msra.mxu0 0
        %3985 = vmatprep.mubr.bf16.mxu0 0
        %3986 = vmatmul.mubr.bf16.gmra.mrb[0].mxu0 %v3951
        %v3987 = vpop.f32.mrb[0].mxu0
        %v3988 = vadd.f32 %v3936, %v3987
        %v3989 = vpop.f32.mrb[0].mxu0
        %v3990 = vpop.f32.mrb[0].mxu0
        %v3991 = vpop.f32.mrb[0].mxu0
        %3992 = vdwg.mxu0
        %3994 = vrot.lane.b32.xlu0 %v3921, 120
        %v3995 = vpop.permute.xlu0 %3994
        %3997 = vrot.lane.b32.xlu0 %v3921, 112
        %v3998 = vpop.permute.xlu0 %3997
        %4000 = vrot.lane.b32.xlu0 %v3921, 104
        %v4001 = vpop.permute.xlu0 %4000
        %v4003 = vpack.c.bf16 %v3921, %v3921
        %v4004 = vpack.c.bf16 %v3995, %v3995
        %v4005 = vpack.c.bf16 %v3998, %v3998
        %v4006 = vpack.c.bf16 %v4001, %v4001
        %4008 = vrot.lane.b32.xlu0 %v3988, 120
        %v4009 = vpop.permute.xlu0 %4008
        %4011 = vrot.lane.b32.xlu0 %v3988, 112
        %v4012 = vpop.permute.xlu0 %4011
        %4014 = vrot.lane.b32.xlu0 %v3988, 104
        %v4015 = vpop.permute.xlu0 %4014
        %v4017 = vpack.c.bf16 %v3988, %v3988
        %v4018 = vpack.c.bf16 %v4009, %v4009
        %v4019 = vpack.c.bf16 %v4012, %v4012
        %v4020 = vpack.c.bf16 %v4015, %v4015
        %v4022 = vsel %vm1536, %v4003, 0
        %v4025 = vsel %vm1536, %v4017, 0
        %4027 = vmatprep.subr.bf16.mxu0 0
        %4028 = vmatpush1.bf16.xpose.msra.mxu0 %v4025
        %4029 = vmatprep.subr.bf16.mxu0 0
        %4030 = vmatpush1.bf16.xpose.msra.mxu0 0
        %4031 = vmatprep.subr.bf16.mxu0 0
        %4032 = vmatpush1.bf16.xpose.msra.mxu0 0
        %4033 = vmatprep.subr.bf16.mxu0 0
        %4034 = vmatpush1.bf16.xpose.msra.mxu0 0
        %4035 = vmatprep.subr.bf16.mxu0 0
        %4036 = vmatpush1.bf16.xpose.msra.mxu0 0
        %4037 = vmatprep.subr.bf16.mxu0 0
        %4038 = vmatpush1.bf16.xpose.msra.mxu0 0
        %4039 = vmatprep.subr.bf16.mxu0 0
        %4040 = vmatpush1.bf16.xpose.msra.mxu0 0
        %4041 = vmatprep.subr.bf16.mxu0 0
        %4042 = vmatpush1.bf16.xpose.msra.mxu0 0
        %4043 = vmatprep.subr.bf16.mxu0 0
        %4044 = vmatpush1.bf16.xpose.msra.mxu0 0
        %4045 = vmatprep.subr.bf16.mxu0 0
        %4046 = vmatpush1.bf16.xpose.msra.mxu0 0
        %4047 = vmatprep.subr.bf16.mxu0 0
        %4048 = vmatpush1.bf16.xpose.msra.mxu0 0
        %4049 = vmatprep.subr.bf16.mxu0 0
        %4050 = vmatpush1.bf16.xpose.msra.mxu0 0
        %4051 = vmatprep.subr.bf16.mxu0 0
        %4052 = vmatpush1.bf16.xpose.msra.mxu0 0
        %4053 = vmatprep.subr.bf16.mxu0 0
        %4054 = vmatpush1.bf16.xpose.msra.mxu0 0
        %4055 = vmatprep.subr.bf16.mxu0 0
        %4056 = vmatpush1.bf16.xpose.msra.mxu0 0
        %4057 = vmatprep.subr.bf16.mxu0 0
        %4058 = vmatpush1.bf16.xpose.msra.mxu0 0
        %4059 = vmatprep.mubr.bf16.mxu0 0
        %4060 = vmatmul.mubr.bf16.gmra.mrb[0].mxu0 %v4022
        %v4061 = vpop.f32.mrb[0].mxu0
        %v4062 = vadd.f32 %v1531, %v4061
        %v4063 = vpop.f32.mrb[0].mxu0
        %v4064 = vpop.f32.mrb[0].mxu0
        %v4065 = vpop.f32.mrb[0].mxu0
        %4066 = vdwg.mxu0
        %v4068 = vsel %vm1536, %v4004, 0
        %v4071 = vsel %vm1536, %v4018, 0
        %4073 = vmatprep.subr.bf16.mxu0 0
        %4074 = vmatpush1.bf16.xpose.msra.mxu0 %v4071
        %4075 = vmatprep.subr.bf16.mxu0 0
        %4076 = vmatpush1.bf16.xpose.msra.mxu0 0
        %4077 = vmatprep.subr.bf16.mxu0 0
        %4078 = vmatpush1.bf16.xpose.msra.mxu0 0
        %4079 = vmatprep.subr.bf16.mxu0 0
        %4080 = vmatpush1.bf16.xpose.msra.mxu0 0
        %4081 = vmatprep.subr.bf16.mxu0 0
        %4082 = vmatpush1.bf16.xpose.msra.mxu0 0
        %4083 = vmatprep.subr.bf16.mxu0 0
        %4084 = vmatpush1.bf16.xpose.msra.mxu0 0
        %4085 = vmatprep.subr.bf16.mxu0 0
        %4086 = vmatpush1.bf16.xpose.msra.mxu0 0
        %4087 = vmatprep.subr.bf16.mxu0 0
        %4088 = vmatpush1.bf16.xpose.msra.mxu0 0
        %4089 = vmatprep.subr.bf16.mxu0 0
        %4090 = vmatpush1.bf16.xpose.msra.mxu0 0
        %4091 = vmatprep.subr.bf16.mxu0 0
        %4092 = vmatpush1.bf16.xpose.msra.mxu0 0
        %4093 = vmatprep.subr.bf16.mxu0 0
        %4094 = vmatpush1.bf16.xpose.msra.mxu0 0
        %4095 = vmatprep.subr.bf16.mxu0 0
        %4096 = vmatpush1.bf16.xpose.msra.mxu0 0
        %4097 = vmatprep.subr.bf16.mxu0 0
        %4098 = vmatpush1.bf16.xpose.msra.mxu0 0
        %4099 = vmatprep.subr.bf16.mxu0 0
        %4100 = vmatpush1.bf16.xpose.msra.mxu0 0
        %4101 = vmatprep.subr.bf16.mxu0 0
        %4102 = vmatpush1.bf16.xpose.msra.mxu0 0
        %4103 = vmatprep.subr.bf16.mxu0 0
        %4104 = vmatpush1.bf16.xpose.msra.mxu0 0
        %4105 = vmatprep.mubr.bf16.mxu0 0
        %4106 = vmatmul.mubr.bf16.gmra.mrb[0].mxu0 %v4068
        %v4107 = vpop.f32.mrb[0].mxu0
        %v4108 = vadd.f32 %v1531, %v4107
        %v4109 = vpop.f32.mrb[0].mxu0
        %v4110 = vpop.f32.mrb[0].mxu0
        %v4111 = vpop.f32.mrb[0].mxu0
        %4112 = vdwg.mxu0
        %v4114 = vsel %vm1536, %v4005, 0
        %v4117 = vsel %vm1536, %v4019, 0
        %4119 = vmatprep.subr.bf16.mxu0 0
        %4120 = vmatpush1.bf16.xpose.msra.mxu0 %v4117
        %4121 = vmatprep.subr.bf16.mxu0 0
        %4122 = vmatpush1.bf16.xpose.msra.mxu0 0
        %4123 = vmatprep.subr.bf16.mxu0 0
        %4124 = vmatpush1.bf16.xpose.msra.mxu0 0
        %4125 = vmatprep.subr.bf16.mxu0 0
        %4126 = vmatpush1.bf16.xpose.msra.mxu0 0
        %4127 = vmatprep.subr.bf16.mxu0 0
        %4128 = vmatpush1.bf16.xpose.msra.mxu0 0
        %4129 = vmatprep.subr.bf16.mxu0 0
        %4130 = vmatpush1.bf16.xpose.msra.mxu0 0
        %4131 = vmatprep.subr.bf16.mxu0 0
        %4132 = vmatpush1.bf16.xpose.msra.mxu0 0
        %4133 = vmatprep.subr.bf16.mxu0 0
        %4134 = vmatpush1.bf16.xpose.msra.mxu0 0
        %4135 = vmatprep.subr.bf16.mxu0 0
        %4136 = vmatpush1.bf16.xpose.msra.mxu0 0
        %4137 = vmatprep.subr.bf16.mxu0 0
        %4138 = vmatpush1.bf16.xpose.msra.mxu0 0
        %4139 = vmatprep.subr.bf16.mxu0 0
        %4140 = vmatpush1.bf16.xpose.msra.mxu0 0
        %4141 = vmatprep.subr.bf16.mxu0 0
        %4142 = vmatpush1.bf16.xpose.msra.mxu0 0
        %4143 = vmatprep.subr.bf16.mxu0 0
        %4144 = vmatpush1.bf16.xpose.msra.mxu0 0
        %4145 = vmatprep.subr.bf16.mxu0 0
        %4146 = vmatpush1.bf16.xpose.msra.mxu0 0
        %4147 = vmatprep.subr.bf16.mxu0 0
        %4148 = vmatpush1.bf16.xpose.msra.mxu0 0
        %4149 = vmatprep.subr.bf16.mxu0 0
        %4150 = vmatpush1.bf16.xpose.msra.mxu0 0
        %4151 = vmatprep.mubr.bf16.mxu0 0
        %4152 = vmatmul.mubr.bf16.gmra.mrb[0].mxu0 %v4114
        %v4153 = vpop.f32.mrb[0].mxu0
        %v4154 = vadd.f32 %v1531, %v4153
        %v4155 = vpop.f32.mrb[0].mxu0
        %v4156 = vpop.f32.mrb[0].mxu0
        %v4157 = vpop.f32.mrb[0].mxu0
        %4158 = vdwg.mxu0
        %v4160 = vsel %vm1536, %v4006, 0
        %v4163 = vsel %vm1536, %v4020, 0
        %4165 = vmatprep.subr.bf16.mxu0 0
        %4166 = vmatpush1.bf16.xpose.msra.mxu0 %v4163
        %4167 = vmatprep.subr.bf16.mxu0 0
        %4168 = vmatpush1.bf16.xpose.msra.mxu0 0
        %4169 = vmatprep.subr.bf16.mxu0 0
        %4170 = vmatpush1.bf16.xpose.msra.mxu0 0
        %4171 = vmatprep.subr.bf16.mxu0 0
        %4172 = vmatpush1.bf16.xpose.msra.mxu0 0
        %4173 = vmatprep.subr.bf16.mxu0 0
        %4174 = vmatpush1.bf16.xpose.msra.mxu0 0
        %4175 = vmatprep.subr.bf16.mxu0 0
        %4176 = vmatpush1.bf16.xpose.msra.mxu0 0
        %4177 = vmatprep.subr.bf16.mxu0 0
        %4178 = vmatpush1.bf16.xpose.msra.mxu0 0
        %4179 = vmatprep.subr.bf16.mxu0 0
        %4180 = vmatpush1.bf16.xpose.msra.mxu0 0
        %4181 = vmatprep.subr.bf16.mxu0 0
        %4182 = vmatpush1.bf16.xpose.msra.mxu0 0
        %4183 = vmatprep.subr.bf16.mxu0 0
        %4184 = vmatpush1.bf16.xpose.msra.mxu0 0
        %4185 = vmatprep.subr.bf16.mxu0 0
        %4186 = vmatpush1.bf16.xpose.msra.mxu0 0
        %4187 = vmatprep.subr.bf16.mxu0 0
        %4188 = vmatpush1.bf16.xpose.msra.mxu0 0
        %4189 = vmatprep.subr.bf16.mxu0 0
        %4190 = vmatpush1.bf16.xpose.msra.mxu0 0
        %4191 = vmatprep.subr.bf16.mxu0 0
        %4192 = vmatpush1.bf16.xpose.msra.mxu0 0
        %4193 = vmatprep.subr.bf16.mxu0 0
        %4194 = vmatpush1.bf16.xpose.msra.mxu0 0
        %4195 = vmatprep.subr.bf16.mxu0 0
        %4196 = vmatpush1.bf16.xpose.msra.mxu0 0
        %4197 = vmatprep.mubr.bf16.mxu0 0
        %4198 = vmatmul.mubr.bf16.gmra.mrb[0].mxu0 %v4160
        %v4199 = vpop.f32.mrb[0].mxu0
        %v4200 = vadd.f32 %v1531, %v4199
        %v4201 = vpop.f32.mrb[0].mxu0
        %v4202 = vpop.f32.mrb[0].mxu0
        %v4203 = vpop.f32.mrb[0].mxu0
        %4204 = vdwg.mxu0
        %v4205 = vsel %vm1536, %v4062, -inf
        %4206 = vmax.xlane.f32.xlu0 %v4205
        %v4207 = vpop.xlane.xlu0 %4206
        %v4208 = vsel %vm1536, %v4108, -inf
        %4209 = vmax.xlane.f32.xlu0 %v4208
        %v4210 = vpop.xlane.xlu0 %4209
        %v4211 = vsel %vm1536, %v4154, -inf
        %4212 = vmax.xlane.f32.xlu0 %v4211
        %v4213 = vpop.xlane.xlu0 %4212
        %v4214 = vsel %vm1536, %v4200, -inf
        %4215 = vmax.xlane.f32.xlu0 %v4214
        %v4216 = vpop.xlane.xlu0 %4215
        %v4217 = vsub.f32 %v4062, %v4207
        %v4218 = vsub.f32 %v4108, %v4210
        %v4219 = vsub.f32 %v4154, %v4213
        %v4220 = vsub.f32 %v4200, %v4216
        %v4221 = vmul.f32 %v4217, 1.442695
        %v4222 = vpow.pop %v4221
        %v4223 = vmul.f32 %v4218, 1.442695
        %v4224 = vpow.pop %v4223
        %v4225 = vmul.f32 %v4219, 1.442695
        %v4226 = vpow.pop %v4225
        %v4227 = vmul.f32 %v4220, 1.442695
        %v4228 = vpow.pop %v4227
        %v4229 = vsel %vm1536, %v4222, 0.0
        %4230 = vadd.xlane.f32.xlu0 %v4229
        %v4231 = vpop.xlane.xlu0 %4230
        %v4232 = vsel %vm1536, %v4224, 0.0
        %4233 = vadd.xlane.f32.xlu0 %v4232
        %v4234 = vpop.xlane.xlu0 %4233
        %v4235 = vsel %vm1536, %v4226, 0.0
        %4236 = vadd.xlane.f32.xlu0 %v4235
        %v4237 = vpop.xlane.xlu0 %4236
        %v4238 = vsel %vm1536, %v4228, 0.0
        %4239 = vadd.xlane.f32.xlu0 %v4238
        %v4240 = vpop.xlane.xlu0 %4239
        %v4241 = vrcp.pop %v4231
        %v4242 = vrcp.pop %v4234
        %v4243 = vrcp.pop %v4237
        %v4244 = vrcp.pop %v4240
        %v4245 = vmul.f32 %v4222, %v4241
        %v4246 = vmul.f32 %v4224, %v4242
        %v4247 = vmul.f32 %v4226, %v4243
        %v4248 = vmul.f32 %v4228, %v4244
        %v4249 = vpack.c.bf16 %v4245, %v4245
        %v4250 = vpack.c.bf16 %v4246, %v4246
        %v4251 = vpack.c.bf16 %v4247, %v4247
        %v4252 = vpack.c.bf16 %v4248, %v4248
        %4254 = vrot.lane.b32.xlu0 %v4017, 96
        %v4255 = vpop.permute.xlu0 %4254
        %v4257 = vsel %vm1536, %v4249, 0
        %v4260 = vsel %vm1783, %v4255, 0
        %4262 = vmatprep.subr.bf16.mxu0 0
        %4263 = vmatpush1.bf16.msra.mxu0 %v4260
        %4264 = vmatprep.subr.bf16.mxu0 0
        %4265 = vmatpush1.bf16.msra.mxu0 0
        %4266 = vmatprep.subr.bf16.mxu0 0
        %4267 = vmatpush1.bf16.msra.mxu0 0
        %4268 = vmatprep.subr.bf16.mxu0 0
        %4269 = vmatpush1.bf16.msra.mxu0 0
        %4270 = vmatprep.subr.bf16.mxu0 0
        %4271 = vmatpush1.bf16.msra.mxu0 0
        %4272 = vmatprep.subr.bf16.mxu0 0
        %4273 = vmatpush1.bf16.msra.mxu0 0
        %4274 = vmatprep.subr.bf16.mxu0 0
        %4275 = vmatpush1.bf16.msra.mxu0 0
        %4276 = vmatprep.subr.bf16.mxu0 0
        %4277 = vmatpush1.bf16.msra.mxu0 0
        %4278 = vmatprep.subr.bf16.mxu0 0
        %4279 = vmatpush1.bf16.msra.mxu0 0
        %4280 = vmatprep.subr.bf16.mxu0 0
        %4281 = vmatpush1.bf16.msra.mxu0 0
        %4282 = vmatprep.subr.bf16.mxu0 0
        %4283 = vmatpush1.bf16.msra.mxu0 0
        %4284 = vmatprep.subr.bf16.mxu0 0
        %4285 = vmatpush1.bf16.msra.mxu0 0
        %4286 = vmatprep.subr.bf16.mxu0 0
        %4287 = vmatpush1.bf16.msra.mxu0 0
        %4288 = vmatprep.subr.bf16.mxu0 0
        %4289 = vmatpush1.bf16.msra.mxu0 0
        %4290 = vmatprep.subr.bf16.mxu0 0
        %4291 = vmatpush1.bf16.msra.mxu0 0
        %4292 = vmatprep.subr.bf16.mxu0 0
        %4293 = vmatpush1.bf16.msra.mxu0 0
        %4294 = vmatprep.mubr.bf16.mxu0 0
        %4295 = vmatmul.mubr.bf16.gmra.mrb[0].mxu0 %v4257
        %v4296 = vpop.f32.mrb[0].mxu0
        %v4297 = vadd.f32 0.0, %v4296
        %v4298 = vpop.f32.mrb[0].mxu0
        %v4299 = vpop.f32.mrb[0].mxu0
        %v4300 = vpop.f32.mrb[0].mxu0
        %4301 = vdwg.mxu0
        %4303 = vrot.lane.b32.xlu0 %v4018, 96
        %v4304 = vpop.permute.xlu0 %4303
        %v4306 = vsel %vm1536, %v4250, 0
        %v4309 = vsel %vm1783, %v4304, 0
        %4311 = vmatprep.subr.bf16.mxu0 0
        %4312 = vmatpush1.bf16.msra.mxu0 %v4309
        %4313 = vmatprep.subr.bf16.mxu0 0
        %4314 = vmatpush1.bf16.msra.mxu0 0
        %4315 = vmatprep.subr.bf16.mxu0 0
        %4316 = vmatpush1.bf16.msra.mxu0 0
        %4317 = vmatprep.subr.bf16.mxu0 0
        %4318 = vmatpush1.bf16.msra.mxu0 0
        %4319 = vmatprep.subr.bf16.mxu0 0
        %4320 = vmatpush1.bf16.msra.mxu0 0
        %4321 = vmatprep.subr.bf16.mxu0 0
        %4322 = vmatpush1.bf16.msra.mxu0 0
        %4323 = vmatprep.subr.bf16.mxu0 0
        %4324 = vmatpush1.bf16.msra.mxu0 0
        %4325 = vmatprep.subr.bf16.mxu0 0
        %4326 = vmatpush1.bf16.msra.mxu0 0
        %4327 = vmatprep.subr.bf16.mxu0 0
        %4328 = vmatpush1.bf16.msra.mxu0 0
        %4329 = vmatprep.subr.bf16.mxu0 0
        %4330 = vmatpush1.bf16.msra.mxu0 0
        %4331 = vmatprep.subr.bf16.mxu0 0
        %4332 = vmatpush1.bf16.msra.mxu0 0
        %4333 = vmatprep.subr.bf16.mxu0 0
        %4334 = vmatpush1.bf16.msra.mxu0 0
        %4335 = vmatprep.subr.bf16.mxu0 0
        %4336 = vmatpush1.bf16.msra.mxu0 0
        %4337 = vmatprep.subr.bf16.mxu0 0
        %4338 = vmatpush1.bf16.msra.mxu0 0
        %4339 = vmatprep.subr.bf16.mxu0 0
        %4340 = vmatpush1.bf16.msra.mxu0 0
        %4341 = vmatprep.subr.bf16.mxu0 0
        %4342 = vmatpush1.bf16.msra.mxu0 0
        %4343 = vmatprep.mubr.bf16.mxu0 0
        %4344 = vmatmul.mubr.bf16.gmra.mrb[0].mxu0 %v4306
        %v4345 = vpop.f32.mrb[0].mxu0
        %v4346 = vadd.f32 0.0, %v4345
        %v4347 = vpop.f32.mrb[0].mxu0
        %v4348 = vpop.f32.mrb[0].mxu0
        %v4349 = vpop.f32.mrb[0].mxu0
        %4350 = vdwg.mxu0
        %4352 = vrot.lane.b32.xlu0 %v4019, 96
        %v4353 = vpop.permute.xlu0 %4352
        %v4355 = vsel %vm1536, %v4251, 0
        %v4358 = vsel %vm1783, %v4353, 0
        %4360 = vmatprep.subr.bf16.mxu0 0
        %4361 = vmatpush1.bf16.msra.mxu0 %v4358
        %4362 = vmatprep.subr.bf16.mxu0 0
        %4363 = vmatpush1.bf16.msra.mxu0 0
        %4364 = vmatprep.subr.bf16.mxu0 0
        %4365 = vmatpush1.bf16.msra.mxu0 0
        %4366 = vmatprep.subr.bf16.mxu0 0
        %4367 = vmatpush1.bf16.msra.mxu0 0
        %4368 = vmatprep.subr.bf16.mxu0 0
        %4369 = vmatpush1.bf16.msra.mxu0 0
        %4370 = vmatprep.subr.bf16.mxu0 0
        %4371 = vmatpush1.bf16.msra.mxu0 0
        %4372 = vmatprep.subr.bf16.mxu0 0
        %4373 = vmatpush1.bf16.msra.mxu0 0
        %4374 = vmatprep.subr.bf16.mxu0 0
        %4375 = vmatpush1.bf16.msra.mxu0 0
        %4376 = vmatprep.subr.bf16.mxu0 0
        %4377 = vmatpush1.bf16.msra.mxu0 0
        %4378 = vmatprep.subr.bf16.mxu0 0
        %4379 = vmatpush1.bf16.msra.mxu0 0
        %4380 = vmatprep.subr.bf16.mxu0 0
        %4381 = vmatpush1.bf16.msra.mxu0 0
        %4382 = vmatprep.subr.bf16.mxu0 0
        %4383 = vmatpush1.bf16.msra.mxu0 0
        %4384 = vmatprep.subr.bf16.mxu0 0
        %4385 = vmatpush1.bf16.msra.mxu0 0
        %4386 = vmatprep.subr.bf16.mxu0 0
        %4387 = vmatpush1.bf16.msra.mxu0 0
        %4388 = vmatprep.subr.bf16.mxu0 0
        %4389 = vmatpush1.bf16.msra.mxu0 0
        %4390 = vmatprep.subr.bf16.mxu0 0
        %4391 = vmatpush1.bf16.msra.mxu0 0
        %4392 = vmatprep.mubr.bf16.mxu0 0
        %4393 = vmatmul.mubr.bf16.gmra.mrb[0].mxu0 %v4355
        %v4394 = vpop.f32.mrb[0].mxu0
        %v4395 = vadd.f32 0.0, %v4394
        %v4396 = vpop.f32.mrb[0].mxu0
        %v4397 = vpop.f32.mrb[0].mxu0
        %v4398 = vpop.f32.mrb[0].mxu0
        %4399 = vdwg.mxu0
        %4401 = vrot.lane.b32.xlu0 %v4020, 96
        %v4402 = vpop.permute.xlu0 %4401
        %v4404 = vsel %vm1536, %v4252, 0
        %v4407 = vsel %vm1783, %v4402, 0
        %4409 = vmatprep.subr.bf16.mxu0 0
        %4410 = vmatpush1.bf16.msra.mxu0 %v4407
        %4411 = vmatprep.subr.bf16.mxu0 0
        %4412 = vmatpush1.bf16.msra.mxu0 0
        %4413 = vmatprep.subr.bf16.mxu0 0
        %4414 = vmatpush1.bf16.msra.mxu0 0
        %4415 = vmatprep.subr.bf16.mxu0 0
        %4416 = vmatpush1.bf16.msra.mxu0 0
        %4417 = vmatprep.subr.bf16.mxu0 0
        %4418 = vmatpush1.bf16.msra.mxu0 0
        %4419 = vmatprep.subr.bf16.mxu0 0
        %4420 = vmatpush1.bf16.msra.mxu0 0
        %4421 = vmatprep.subr.bf16.mxu0 0
        %4422 = vmatpush1.bf16.msra.mxu0 0
        %4423 = vmatprep.subr.bf16.mxu0 0
        %4424 = vmatpush1.bf16.msra.mxu0 0
        %4425 = vmatprep.subr.bf16.mxu0 0
        %4426 = vmatpush1.bf16.msra.mxu0 0
        %4427 = vmatprep.subr.bf16.mxu0 0
        %4428 = vmatpush1.bf16.msra.mxu0 0
        %4429 = vmatprep.subr.bf16.mxu0 0
        %4430 = vmatpush1.bf16.msra.mxu0 0
        %4431 = vmatprep.subr.bf16.mxu0 0
        %4432 = vmatpush1.bf16.msra.mxu0 0
        %4433 = vmatprep.subr.bf16.mxu0 0
        %4434 = vmatpush1.bf16.msra.mxu0 0
        %4435 = vmatprep.subr.bf16.mxu0 0
        %4436 = vmatpush1.bf16.msra.mxu0 0
        %4437 = vmatprep.subr.bf16.mxu0 0
        %4438 = vmatpush1.bf16.msra.mxu0 0
        %4439 = vmatprep.subr.bf16.mxu0 0
        %4440 = vmatpush1.bf16.msra.mxu0 0
        %4441 = vmatprep.mubr.bf16.mxu0 0
        %4442 = vmatmul.mubr.bf16.gmra.mrb[0].mxu0 %v4404
        %v4443 = vpop.f32.mrb[0].mxu0
        %v4444 = vadd.f32 0.0, %v4443
        %v4445 = vpop.f32.mrb[0].mxu0
        %v4446 = vpop.f32.mrb[0].mxu0
        %v4447 = vpop.f32.mrb[0].mxu0
        %4448 = vdwg.mxu0
        %4450 = vrot.lane.b32.xlu0 %v4346, 8
        %v4451 = vpop.permute.xlu0 %4450
        %4454 = vrot.lane.b32.xlu0 %v4395, 16
        %v4455 = vpop.permute.xlu0 %4454
        %4458 = vrot.lane.b32.xlu0 %v4444, 24
        %v4459 = vpop.permute.xlu0 %4458
        %v4461 = vsel %vm1536, %v4297, %v4451
        %v4462 = vsel %vm1984, %v4461, %v4455
        %v4463 = vsel %vm1986, %v4462, %v4459
        %v4464 = vld [vmem:[%s65] sm:$0xf]
        %v4465 = vld [vmem:[%s65 + $0x4] sm:$0xf]
        %v4466 = vld [vmem:[%s65 + $0x8] sm:$0xf]
        %v4467 = vld [vmem:[%s65 + $0xc] sm:$0xf]
        %v4468 = vld [vmem:[%s67] sm:$0x1]
        %v4469 = vpack.c.bf16 %v4463, %v4463
        %v4471 = vlaneseq
        %v4472 = vshrl.u32 %v4471, 7
        %v4473 = vsub.s32 0, %v4472
        %v4474 = vrot.slane %v4468, %v4473
        %v4480 = vunpack.c.l.b16 %v4464
        %v4481 = vunpack.c.l.b16 %v4465
        %v4482 = vunpack.c.l.b16 %v4466
        %v4483 = vunpack.c.l.b16 %v4467
        %v4484 = vpack.c.b16 %v4481, %v4480
        %v4485 = vpack.c.b16 %v4483, %v4482
        %v4489 = vsel %vm1417, %v4469, 0
        %4491 = vmatprep.subr.bf16.mxu0 0
        %4492 = vmatpush1.bf16.msra.mxu0 %v4484
        %4493 = vmatprep.subr.bf16.mxu0 0
        %4494 = vmatpush1.bf16.msra.mxu0 %v4485
        %4495 = vmatprep.subr.bf16.mxu0 0
        %4496 = vmatpush1.bf16.msra.mxu0 0
        %4497 = vmatprep.subr.bf16.mxu0 0
        %4498 = vmatpush1.bf16.msra.mxu0 0
        %4499 = vmatprep.subr.bf16.mxu0 0
        %4500 = vmatpush1.bf16.msra.mxu0 0
        %4501 = vmatprep.subr.bf16.mxu0 0
        %4502 = vmatpush1.bf16.msra.mxu0 0
        %4503 = vmatprep.subr.bf16.mxu0 0
        %4504 = vmatpush1.bf16.msra.mxu0 0
        %4505 = vmatprep.subr.bf16.mxu0 0
        %4506 = vmatpush1.bf16.msra.mxu0 0
        %4507 = vmatprep.subr.bf16.mxu0 0
        %4508 = vmatpush1.bf16.msra.mxu0 0
        %4509 = vmatprep.subr.bf16.mxu0 0
        %4510 = vmatpush1.bf16.msra.mxu0 0
        %4511 = vmatprep.subr.bf16.mxu0 0
        %4512 = vmatpush1.bf16.msra.mxu0 0
        %4513 = vmatprep.subr.bf16.mxu0 0
        %4514 = vmatpush1.bf16.msra.mxu0 0
        %4515 = vmatprep.subr.bf16.mxu0 0
        %4516 = vmatpush1.bf16.msra.mxu0 0
        %4517 = vmatprep.subr.bf16.mxu0 0
        %4518 = vmatpush1.bf16.msra.mxu0 0
        %4519 = vmatprep.subr.bf16.mxu0 0
        %4520 = vmatpush1.bf16.msra.mxu0 0
        %4521 = vmatprep.subr.bf16.mxu0 0
        %4522 = vmatpush1.bf16.msra.mxu0 0
        %4523 = vmatprep.mubr.bf16.mxu0 0
        %4524 = vmatmul.mubr.bf16.gmra.mrb[0].mxu0 %v4489
        %v4525 = vpop.f32.mrb[0].mxu0
        %v4526 = vadd.f32 %v4474, %v4525
        %v4527 = vpop.f32.mrb[0].mxu0
        %v4528 = vpop.f32.mrb[0].mxu0
        %v4529 = vpop.f32.mrb[0].mxu0
        %4530 = vdwg.mxu0
        %v4531 = vadd.f32 %v3829, %v4526
        %v4532 = vld [vmem:[%s69] sm:$0x1]
        %v4533 = vld [vmem:[%s71] sm:$0x1]
        %v4534 = vsel %vm1417, %v4531, 0.0
        %4535 = vadd.xlane.f32.xlu0 %v4534
        %v4536 = vpop.xlane.xlu0 %4535
        %v4537 = vmul.f32 %v4536, %v1421
        %v4538 = vsub.f32 %v4531, %v4537
        %v4539 = vmul.f32 %v4538, %v4538
        %v4540 = vsel %vm1417, %v4539, 0.0
        %4541 = vadd.xlane.f32.xlu0 %v4540
        %v4542 = vpop.xlane.xlu0 %4541
        %v4543 = vmul.f32 %v4542, %v1421
        %v4544 = vadd.f32 %v4543, 1e-05
        %v4545 = vrsqrt.pop %v4544
        %v4546 = vmul.f32 %v4538, %v4545
        %v4548 = vlaneseq
        %v4549 = vshrl.u32 %v4548, 7
        %v4550 = vsub.s32 0, %v4549
        %v4551 = vrot.slane %v4532, %v4550
        %v4553 = vmul.f32 %v4546, %v4551
        %v4555 = vlaneseq
        %v4556 = vshrl.u32 %v4555, 7
        %v4557 = vsub.s32 0, %v4556
        %v4558 = vrot.slane %v4533, %v4557
        %v4560 = vadd.f32 %v4553, %v4558
        %v4561 = vld [vmem:[%s73] sm:$0xf]
        %v4562 = vld [vmem:[%s73 + $0x4] sm:$0xf]
        %v4563 = vld [vmem:[%s73 + $0x8] sm:$0xf]
        %v4564 = vld [vmem:[%s73 + $0xc] sm:$0xf]
        %v4565 = vld [vmem:[%s75] sm:$0x1]
        %v4566 = vpack.c.bf16 %v4560, %v4560
        %v4568 = vlaneseq
        %v4569 = vshrl.u32 %v4568, 7
        %v4570 = vsub.s32 0, %v4569
        %v4571 = vrot.slane %v4565, %v4570
        %v4577 = vunpack.c.l.b16 %v4561
        %v4578 = vunpack.c.l.b16 %v4562
        %v4579 = vunpack.c.l.b16 %v4563
        %v4580 = vunpack.c.l.b16 %v4564
        %v4581 = vpack.c.b16 %v4578, %v4577
        %v4582 = vpack.c.b16 %v4580, %v4579
        %v4586 = vsel %vm1417, %v4566, 0
        %4588 = vmatprep.subr.bf16.mxu0 0
        %4589 = vmatpush1.bf16.msra.mxu0 %v4581
        %4590 = vmatprep.subr.bf16.mxu0 0
        %4591 = vmatpush1.bf16.msra.mxu0 %v4582
        %4592 = vmatprep.subr.bf16.mxu0 0
        %4593 = vmatpush1.bf16.msra.mxu0 0
        %4594 = vmatprep.subr.bf16.mxu0 0
        %4595 = vmatpush1.bf16.msra.mxu0 0
        %4596 = vmatprep.subr.bf16.mxu0 0
        %4597 = vmatpush1.bf16.msra.mxu0 0
        %4598 = vmatprep.subr.bf16.mxu0 0
        %4599 = vmatpush1.bf16.msra.mxu0 0
        %4600 = vmatprep.subr.bf16.mxu0 0
        %4601 = vmatpush1.bf16.msra.mxu0 0
        %4602 = vmatprep.subr.bf16.mxu0 0
        %4603 = vmatpush1.bf16.msra.mxu0 0
        %4604 = vmatprep.subr.bf16.mxu0 0
        %4605 = vmatpush1.bf16.msra.mxu0 0
        %4606 = vmatprep.subr.bf16.mxu0 0
        %4607 = vmatpush1.bf16.msra.mxu0 0
        %4608 = vmatprep.subr.bf16.mxu0 0
        %4609 = vmatpush1.bf16.msra.mxu0 0
        %4610 = vmatprep.subr.bf16.mxu0 0
        %4611 = vmatpush1.bf16.msra.mxu0 0
        %4612 = vmatprep.subr.bf16.mxu0 0
        %4613 = vmatpush1.bf16.msra.mxu0 0
        %4614 = vmatprep.subr.bf16.mxu0 0
        %4615 = vmatpush1.bf16.msra.mxu0 0
        %4616 = vmatprep.subr.bf16.mxu0 0
        %4617 = vmatpush1.bf16.msra.mxu0 0
        %4618 = vmatprep.subr.bf16.mxu0 0
        %4619 = vmatpush1.bf16.msra.mxu0 0
        %4620 = vmatprep.mubr.bf16.mxu0 0
        %4621 = vmatmul.mubr.bf16.gmra.mrb[0].mxu0 %v4586
        %v4622 = vpop.f32.mrb[0].mxu0
        %v4623 = vadd.f32 %v4571, %v4622
        %v4624 = vpop.f32.mrb[0].mxu0
        %v4625 = vpop.f32.mrb[0].mxu0
        %v4626 = vpop.f32.mrb[0].mxu0
        %4627 = vdwg.mxu0
        %v4628 = vmax.f32 %v4623, 0.0
        %v4629 = vld [vmem:[%s77] sm:$0xf]
        %v4630 = vld [vmem:[%s77 + $0x4] sm:$0xf]
        %v4631 = vld [vmem:[%s77 + $0x8] sm:$0xf]
        %v4632 = vld [vmem:[%s77 + $0xc] sm:$0xf]
        %v4633 = vld [vmem:[%s77 + $0x10] sm:$0xf]
        %v4634 = vld [vmem:[%s77 + $0x14] sm:$0xf]
        %v4635 = vld [vmem:[%s77 + $0x18] sm:$0xf]
        %v4636 = vld [vmem:[%s77 + $0x1c] sm:$0xf]
        %v4637 = vld [vmem:[%s79] sm:$0x1]
        %v4638 = vpack.c.bf16 %v4628, %v4628
        %v4640 = vlaneseq
        %v4641 = vshrl.u32 %v4640, 7
        %v4642 = vsub.s32 0, %v4641
        %v4643 = vrot.slane %v4637, %v4642
        %v4653 = vunpack.c.l.b16 %v4629
        %v4654 = vunpack.c.l.b16 %v4630
        %v4655 = vunpack.c.l.b16 %v4631
        %v4656 = vunpack.c.l.b16 %v4632
        %v4657 = vunpack.c.l.b16 %v4633
        %v4658 = vunpack.c.l.b16 %v4634
        %v4659 = vunpack.c.l.b16 %v4635
        %v4660 = vunpack.c.l.b16 %v4636
        %v4661 = vpack.c.b16 %v4654, %v4653
        %v4662 = vpack.c.b16 %v4656, %v4655
        %v4663 = vpack.c.b16 %v4658, %v4657
        %v4664 = vpack.c.b16 %v4660, %v4659
        %v4670 = vsel %vm2193, %v4638, 0
        %4672 = vmatprep.subr.bf16.mxu0 0
        %4673 = vmatpush1.bf16.msra.mxu0 %v4661
        %4674 = vmatprep.subr.bf16.mxu0 0
        %4675 = vmatpush1.bf16.msra.mxu0 %v4662
        %4676 = vmatprep.subr.bf16.mxu0 0
        %4677 = vmatpush1.bf16.msra.mxu0 %v4663
        %4678 = vmatprep.subr.bf16.mxu0 0
        %4679 = vmatpush1.bf16.msra.mxu0 %v4664
        %4680 = vmatprep.subr.bf16.mxu0 0
        %4681 = vmatpush1.bf16.msra.mxu0 0
        %4682 = vmatprep.subr.bf16.mxu0 0
        %4683 = vmatpush1.bf16.msra.mxu0 0
        %4684 = vmatprep.subr.bf16.mxu0 0
        %4685 = vmatpush1.bf16.msra.mxu0 0
        %4686 = vmatprep.subr.bf16.mxu0 0
        %4687 = vmatpush1.bf16.msra.mxu0 0
        %4688 = vmatprep.subr.bf16.mxu0 0
        %4689 = vmatpush1.bf16.msra.mxu0 0
        %4690 = vmatprep.subr.bf16.mxu0 0
        %4691 = vmatpush1.bf16.msra.mxu0 0
        %4692 = vmatprep.subr.bf16.mxu0 0
        %4693 = vmatpush1.bf16.msra.mxu0 0
        %4694 = vmatprep.subr.bf16.mxu0 0
        %4695 = vmatpush1.bf16.msra.mxu0 0
        %4696 = vmatprep.subr.bf16.mxu0 0
        %4697 = vmatpush1.bf16.msra.mxu0 0
        %4698 = vmatprep.subr.bf16.mxu0 0
        %4699 = vmatpush1.bf16.msra.mxu0 0
        %4700 = vmatprep.subr.bf16.mxu0 0
        %4701 = vmatpush1.bf16.msra.mxu0 0
        %4702 = vmatprep.subr.bf16.mxu0 0
        %4703 = vmatpush1.bf16.msra.mxu0 0
        %4704 = vmatprep.mubr.bf16.mxu0 0
        %4705 = vmatmul.mubr.bf16.gmra.mrb[0].mxu0 %v4670
        %v4706 = vpop.f32.mrb[0].mxu0
        %v4707 = vadd.f32 %v4643, %v4706
        %v4708 = vpop.f32.mrb[0].mxu0
        %v4709 = vpop.f32.mrb[0].mxu0
        %v4710 = vpop.f32.mrb[0].mxu0
        %4711 = vdwg.mxu0
        %v4712 = vadd.f32 %v4531, %v4707
        %s4713 = scalar_lea.vmem %s41, 1
        %v4714 = vld [vmem:[%s4713] sm:$0x1]
        %s4715 = scalar_lea.vmem %s43, 1
        %v4716 = vld [vmem:[%s4715] sm:$0x1]
        %v4717 = vsel %vm1417, %v4712, 0.0
        %4718 = vadd.xlane.f32.xlu0 %v4717
        %v4719 = vpop.xlane.xlu0 %4718
        %v4720 = vmul.f32 %v4719, %v1421
        %v4721 = vsub.f32 %v4712, %v4720
        %v4722 = vmul.f32 %v4721, %v4721
        %v4723 = vsel %vm1417, %v4722, 0.0
        %4724 = vadd.xlane.f32.xlu0 %v4723
        %v4725 = vpop.xlane.xlu0 %4724
        %v4726 = vmul.f32 %v4725, %v1421
        %v4727 = vadd.f32 %v4726, 1e-05
        %v4728 = vrsqrt.pop %v4727
        %v4729 = vmul.f32 %v4721, %v4728
        %v4731 = vlaneseq
        %v4732 = vshrl.u32 %v4731, 7
        %v4733 = vsub.s32 0, %v4732
        %v4734 = vrot.slane %v4714, %v4733
        %v4736 = vmul.f32 %v4729, %v4734
        %v4738 = vlaneseq
        %v4739 = vshrl.u32 %v4738, 7
        %v4740 = vsub.s32 0, %v4739
        %v4741 = vrot.slane %v4716, %v4740
        %v4743 = vadd.f32 %v4736, %v4741
        %s4744 = scalar_lea.vmem %s45, 16
        %v4745 = vld [vmem:[%s4744] sm:$0xf]
        %v4746 = vld [vmem:[%s4744 + $0x4] sm:$0xf]
        %v4747 = vld [vmem:[%s4744 + $0x8] sm:$0xf]
        %v4748 = vld [vmem:[%s4744 + $0xc] sm:$0xf]
        %s4749 = scalar_lea.vmem %s47, 1
        %v4750 = vld [vmem:[%s4749] sm:$0x1]
        %v4751 = vpack.c.bf16 %v4743, %v4743
        %v4753 = vlaneseq
        %v4754 = vshrl.u32 %v4753, 7
        %v4755 = vsub.s32 0, %v4754
        %v4756 = vrot.slane %v4750, %v4755
        %v4762 = vunpack.c.l.b16 %v4745
        %v4763 = vunpack.c.l.b16 %v4746
        %v4764 = vunpack.c.l.b16 %v4747
        %v4765 = vunpack.c.l.b16 %v4748
        %v4766 = vpack.c.b16 %v4763, %v4762
        %v4767 = vpack.c.b16 %v4765, %v4764
        %v4771 = vsel %vm1417, %v4751, 0
        %4773 = vmatprep.subr.bf16.mxu0 0
        %4774 = vmatpush1.bf16.msra.mxu0 %v4766
        %4775 = vmatprep.subr.bf16.mxu0 0
        %4776 = vmatpush1.bf16.msra.mxu0 %v4767
        %4777 = vmatprep.subr.bf16.mxu0 0
        %4778 = vmatpush1.bf16.msra.mxu0 0
        %4779 = vmatprep.subr.bf16.mxu0 0
        %4780 = vmatpush1.bf16.msra.mxu0 0
        %4781 = vmatprep.subr.bf16.mxu0 0
        %4782 = vmatpush1.bf16.msra.mxu0 0
        %4783 = vmatprep.subr.bf16.mxu0 0
        %4784 = vmatpush1.bf16.msra.mxu0 0
        %4785 = vmatprep.subr.bf16.mxu0 0
        %4786 = vmatpush1.bf16.msra.mxu0 0
        %4787 = vmatprep.subr.bf16.mxu0 0
        %4788 = vmatpush1.bf16.msra.mxu0 0
        %4789 = vmatprep.subr.bf16.mxu0 0
        %4790 = vmatpush1.bf16.msra.mxu0 0
        %4791 = vmatprep.subr.bf16.mxu0 0
        %4792 = vmatpush1.bf16.msra.mxu0 0
        %4793 = vmatprep.subr.bf16.mxu0 0
        %4794 = vmatpush1.bf16.msra.mxu0 0
        %4795 = vmatprep.subr.bf16.mxu0 0
        %4796 = vmatpush1.bf16.msra.mxu0 0
        %4797 = vmatprep.subr.bf16.mxu0 0
        %4798 = vmatpush1.bf16.msra.mxu0 0
        %4799 = vmatprep.subr.bf16.mxu0 0
        %4800 = vmatpush1.bf16.msra.mxu0 0
        %4801 = vmatprep.subr.bf16.mxu0 0
        %4802 = vmatpush1.bf16.msra.mxu0 0
        %4803 = vmatprep.subr.bf16.mxu0 0
        %4804 = vmatpush1.bf16.msra.mxu0 0
        %4805 = vmatprep.mubr.bf16.mxu0 0
        %4806 = vmatmul.mubr.bf16.gmra.mrb[0].mxu0 %v4771
        %v4807 = vpop.f32.mrb[0].mxu0
        %v4808 = vadd.f32 %v4756, %v4807
        %v4809 = vpop.f32.mrb[0].mxu0
        %v4810 = vpop.f32.mrb[0].mxu0
        %v4811 = vpop.f32.mrb[0].mxu0
        %4812 = vdwg.mxu0
        %4814 = vrot.lane.b32.xlu0 %v4808, 120
        %v4815 = vpop.permute.xlu0 %4814
        %4817 = vrot.lane.b32.xlu0 %v4808, 112
        %v4818 = vpop.permute.xlu0 %4817
        %4820 = vrot.lane.b32.xlu0 %v4808, 104
        %v4821 = vpop.permute.xlu0 %4820
        %v4823 = vpack.c.bf16 %v4808, %v4808
        %v4824 = vpack.c.bf16 %v4815, %v4815
        %v4825 = vpack.c.bf16 %v4818, %v4818
        %v4826 = vpack.c.bf16 %v4821, %v4821
        %4828 = vrot.lane.b32.xlu0 %v4823, 96
        %v4829 = vpop.permute.xlu0 %4828
        %v4831 = vsel %vm1536, %v4823, 0
        %v4834 = vsel %vm1536, %v4829, 0
        %4836 = vmatprep.subr.bf16.mxu0 0
        %4837 = vmatpush1.bf16.xpose.msra.mxu0 %v4834
        %4838 = vmatprep.subr.bf16.mxu0 0
        %4839 = vmatpush1.bf16.xpose.msra.mxu0 0
        %4840 = vmatprep.subr.bf16.mxu0 0
        %4841 = vmatpush1.bf16.xpose.msra.mxu0 0
        %4842 = vmatprep.subr.bf16.mxu0 0
        %4843 = vmatpush1.bf16.xpose.msra.mxu0 0
        %4844 = vmatprep.subr.bf16.mxu0 0
        %4845 = vmatpush1.bf16.xpose.msra.mxu0 0
        %4846 = vmatprep.subr.bf16.mxu0 0
        %4847 = vmatpush1.bf16.xpose.msra.mxu0 0
        %4848 = vmatprep.subr.bf16.mxu0 0
        %4849 = vmatpush1.bf16.xpose.msra.mxu0 0
        %4850 = vmatprep.subr.bf16.mxu0 0
        %4851 = vmatpush1.bf16.xpose.msra.mxu0 0
        %4852 = vmatprep.subr.bf16.mxu0 0
        %4853 = vmatpush1.bf16.xpose.msra.mxu0 0
        %4854 = vmatprep.subr.bf16.mxu0 0
        %4855 = vmatpush1.bf16.xpose.msra.mxu0 0
        %4856 = vmatprep.subr.bf16.mxu0 0
        %4857 = vmatpush1.bf16.xpose.msra.mxu0 0
        %4858 = vmatprep.subr.bf16.mxu0 0
        %4859 = vmatpush1.bf16.xpose.msra.mxu0 0
        %4860 = vmatprep.subr.bf16.mxu0 0
        %4861 = vmatpush1.bf16.xpose.msra.mxu0 0
        %4862 = vmatprep.subr.bf16.mxu0 0
        %4863 = vmatpush1.bf16.xpose.msra.mxu0 0
        %4864 = vmatprep.subr.bf16.mxu0 0
        %4865 = vmatpush1.bf16.xpose.msra.mxu0 0
        %4866 = vmatprep.subr.bf16.mxu0 0
        %4867 = vmatpush1.bf16.xpose.msra.mxu0 0
        %4868 = vmatprep.mubr.bf16.mxu0 0
        %4869 = vmatmul.mubr.bf16.gmra.mrb[0].mxu0 %v4831
        %v4870 = vpop.f32.mrb[0].mxu0
        %v4871 = vadd.f32 %v1302, %v4870
        %v4872 = vpop.f32.mrb[0].mxu0
        %v4873 = vpop.f32.mrb[0].mxu0
        %v4874 = vpop.f32.mrb[0].mxu0
        %4875 = vdwg.mxu0
        %4877 = vrot.lane.b32.xlu0 %v4824, 96
        %v4878 = vpop.permute.xlu0 %4877
        %v4880 = vsel %vm1536, %v4824, 0
        %v4883 = vsel %vm1536, %v4878, 0
        %4885 = vmatprep.subr.bf16.mxu0 0
        %4886 = vmatpush1.bf16.xpose.msra.mxu0 %v4883
        %4887 = vmatprep.subr.bf16.mxu0 0
        %4888 = vmatpush1.bf16.xpose.msra.mxu0 0
        %4889 = vmatprep.subr.bf16.mxu0 0
        %4890 = vmatpush1.bf16.xpose.msra.mxu0 0
        %4891 = vmatprep.subr.bf16.mxu0 0
        %4892 = vmatpush1.bf16.xpose.msra.mxu0 0
        %4893 = vmatprep.subr.bf16.mxu0 0
        %4894 = vmatpush1.bf16.xpose.msra.mxu0 0
        %4895 = vmatprep.subr.bf16.mxu0 0
        %4896 = vmatpush1.bf16.xpose.msra.mxu0 0
        %4897 = vmatprep.subr.bf16.mxu0 0
        %4898 = vmatpush1.bf16.xpose.msra.mxu0 0
        %4899 = vmatprep.subr.bf16.mxu0 0
        %4900 = vmatpush1.bf16.xpose.msra.mxu0 0
        %4901 = vmatprep.subr.bf16.mxu0 0
        %4902 = vmatpush1.bf16.xpose.msra.mxu0 0
        %4903 = vmatprep.subr.bf16.mxu0 0
        %4904 = vmatpush1.bf16.xpose.msra.mxu0 0
        %4905 = vmatprep.subr.bf16.mxu0 0
        %4906 = vmatpush1.bf16.xpose.msra.mxu0 0
        %4907 = vmatprep.subr.bf16.mxu0 0
        %4908 = vmatpush1.bf16.xpose.msra.mxu0 0
        %4909 = vmatprep.subr.bf16.mxu0 0
        %4910 = vmatpush1.bf16.xpose.msra.mxu0 0
        %4911 = vmatprep.subr.bf16.mxu0 0
        %4912 = vmatpush1.bf16.xpose.msra.mxu0 0
        %4913 = vmatprep.subr.bf16.mxu0 0
        %4914 = vmatpush1.bf16.xpose.msra.mxu0 0
        %4915 = vmatprep.subr.bf16.mxu0 0
        %4916 = vmatpush1.bf16.xpose.msra.mxu0 0
        %4917 = vmatprep.mubr.bf16.mxu0 0
        %4918 = vmatmul.mubr.bf16.gmra.mrb[0].mxu0 %v4880
        %v4919 = vpop.f32.mrb[0].mxu0
        %v4920 = vadd.f32 %v1302, %v4919
        %v4921 = vpop.f32.mrb[0].mxu0
        %v4922 = vpop.f32.mrb[0].mxu0
        %v4923 = vpop.f32.mrb[0].mxu0
        %4924 = vdwg.mxu0
        %4926 = vrot.lane.b32.xlu0 %v4825, 96
        %v4927 = vpop.permute.xlu0 %4926
        %v4929 = vsel %vm1536, %v4825, 0
        %v4932 = vsel %vm1536, %v4927, 0
        %4934 = vmatprep.subr.bf16.mxu0 0
        %4935 = vmatpush1.bf16.xpose.msra.mxu0 %v4932
        %4936 = vmatprep.subr.bf16.mxu0 0
        %4937 = vmatpush1.bf16.xpose.msra.mxu0 0
        %4938 = vmatprep.subr.bf16.mxu0 0
        %4939 = vmatpush1.bf16.xpose.msra.mxu0 0
        %4940 = vmatprep.subr.bf16.mxu0 0
        %4941 = vmatpush1.bf16.xpose.msra.mxu0 0
        %4942 = vmatprep.subr.bf16.mxu0 0
        %4943 = vmatpush1.bf16.xpose.msra.mxu0 0
        %4944 = vmatprep.subr.bf16.mxu0 0
        %4945 = vmatpush1.bf16.xpose.msra.mxu0 0
        %4946 = vmatprep.subr.bf16.mxu0 0
        %4947 = vmatpush1.bf16.xpose.msra.mxu0 0
        %4948 = vmatprep.subr.bf16.mxu0 0
        %4949 = vmatpush1.bf16.xpose.msra.mxu0 0
        %4950 = vmatprep.subr.bf16.mxu0 0
        %4951 = vmatpush1.bf16.xpose.msra.mxu0 0
        %4952 = vmatprep.subr.bf16.mxu0 0
        %4953 = vmatpush1.bf16.xpose.msra.mxu0 0
        %4954 = vmatprep.subr.bf16.mxu0 0
        %4955 = vmatpush1.bf16.xpose.msra.mxu0 0
        %4956 = vmatprep.subr.bf16.mxu0 0
        %4957 = vmatpush1.bf16.xpose.msra.mxu0 0
        %4958 = vmatprep.subr.bf16.mxu0 0
        %4959 = vmatpush1.bf16.xpose.msra.mxu0 0
        %4960 = vmatprep.subr.bf16.mxu0 0
        %4961 = vmatpush1.bf16.xpose.msra.mxu0 0
        %4962 = vmatprep.subr.bf16.mxu0 0
        %4963 = vmatpush1.bf16.xpose.msra.mxu0 0
        %4964 = vmatprep.subr.bf16.mxu0 0
        %4965 = vmatpush1.bf16.xpose.msra.mxu0 0
        %4966 = vmatprep.mubr.bf16.mxu0 0
        %4967 = vmatmul.mubr.bf16.gmra.mrb[0].mxu0 %v4929
        %v4968 = vpop.f32.mrb[0].mxu0
        %v4969 = vadd.f32 %v1302, %v4968
        %v4970 = vpop.f32.mrb[0].mxu0
        %v4971 = vpop.f32.mrb[0].mxu0
        %v4972 = vpop.f32.mrb[0].mxu0
        %4973 = vdwg.mxu0
        %4975 = vrot.lane.b32.xlu0 %v4826, 96
        %v4976 = vpop.permute.xlu0 %4975
        %v4978 = vsel %vm1536, %v4826, 0
        %v4981 = vsel %vm1536, %v4976, 0
        %4983 = vmatprep.subr.bf16.mxu0 0
        %4984 = vmatpush1.bf16.xpose.msra.mxu0 %v4981
        %4985 = vmatprep.subr.bf16.mxu0 0
        %4986 = vmatpush1.bf16.xpose.msra.mxu0 0
        %4987 = vmatprep.subr.bf16.mxu0 0
        %4988 = vmatpush1.bf16.xpose.msra.mxu0 0
        %4989 = vmatprep.subr.bf16.mxu0 0
        %4990 = vmatpush1.bf16.xpose.msra.mxu0 0
        %4991 = vmatprep.subr.bf16.mxu0 0
        %4992 = vmatpush1.bf16.xpose.msra.mxu0 0
        %4993 = vmatprep.subr.bf16.mxu0 0
        %4994 = vmatpush1.bf16.xpose.msra.mxu0 0
        %4995 = vmatprep.subr.bf16.mxu0 0
        %4996 = vmatpush1.bf16.xpose.msra.mxu0 0
        %4997 = vmatprep.subr.bf16.mxu0 0
        %4998 = vmatpush1.bf16.xpose.msra.mxu0 0
        %4999 = vmatprep.subr.bf16.mxu0 0
        %5000 = vmatpush1.bf16.xpose.msra.mxu0 0
        %5001 = vmatprep.subr.bf16.mxu0 0
        %5002 = vmatpush1.bf16.xpose.msra.mxu0 0
        %5003 = vmatprep.subr.bf16.mxu0 0
        %5004 = vmatpush1.bf16.xpose.msra.mxu0 0
        %5005 = vmatprep.subr.bf16.mxu0 0
        %5006 = vmatpush1.bf16.xpose.msra.mxu0 0
        %5007 = vmatprep.subr.bf16.mxu0 0
        %5008 = vmatpush1.bf16.xpose.msra.mxu0 0
        %5009 = vmatprep.subr.bf16.mxu0 0
        %5010 = vmatpush1.bf16.xpose.msra.mxu0 0
        %5011 = vmatprep.subr.bf16.mxu0 0
        %5012 = vmatpush1.bf16.xpose.msra.mxu0 0
        %5013 = vmatprep.subr.bf16.mxu0 0
        %5014 = vmatpush1.bf16.xpose.msra.mxu0 0
        %5015 = vmatprep.mubr.bf16.mxu0 0
        %5016 = vmatmul.mubr.bf16.gmra.mrb[0].mxu0 %v4978
        %v5017 = vpop.f32.mrb[0].mxu0
        %v5018 = vadd.f32 %v1302, %v5017
        %v5019 = vpop.f32.mrb[0].mxu0
        %v5020 = vpop.f32.mrb[0].mxu0
        %v5021 = vpop.f32.mrb[0].mxu0
        %5022 = vdwg.mxu0
        %v5023 = vsel %vm1536, %v4871, -inf
        %5024 = vmax.xlane.f32.xlu0 %v5023
        %v5025 = vpop.xlane.xlu0 %5024
        %v5026 = vsel %vm1536, %v4920, -inf
        %5027 = vmax.xlane.f32.xlu0 %v5026
        %v5028 = vpop.xlane.xlu0 %5027
        %v5029 = vsel %vm1536, %v4969, -inf
        %5030 = vmax.xlane.f32.xlu0 %v5029
        %v5031 = vpop.xlane.xlu0 %5030
        %v5032 = vsel %vm1536, %v5018, -inf
        %5033 = vmax.xlane.f32.xlu0 %v5032
        %v5034 = vpop.xlane.xlu0 %5033
        %v5035 = vsub.f32 %v4871, %v5025
        %v5036 = vsub.f32 %v4920, %v5028
        %v5037 = vsub.f32 %v4969, %v5031
        %v5038 = vsub.f32 %v5018, %v5034
        %v5039 = vmul.f32 %v5035, 1.442695
        %v5040 = vpow.pop %v5039
        %v5041 = vmul.f32 %v5036, 1.442695
        %v5042 = vpow.pop %v5041
        %v5043 = vmul.f32 %v5037, 1.442695
        %v5044 = vpow.pop %v5043
        %v5045 = vmul.f32 %v5038, 1.442695
        %v5046 = vpow.pop %v5045
        %v5047 = vsel %vm1536, %v5040, 0.0
        %5048 = vadd.xlane.f32.xlu0 %v5047
        %v5049 = vpop.xlane.xlu0 %5048
        %v5050 = vsel %vm1536, %v5042, 0.0
        %5051 = vadd.xlane.f32.xlu0 %v5050
        %v5052 = vpop.xlane.xlu0 %5051
        %v5053 = vsel %vm1536, %v5044, 0.0
        %5054 = vadd.xlane.f32.xlu0 %v5053
        %v5055 = vpop.xlane.xlu0 %5054
        %v5056 = vsel %vm1536, %v5046, 0.0
        %5057 = vadd.xlane.f32.xlu0 %v5056
        %v5058 = vpop.xlane.xlu0 %5057
        %v5059 = vrcp.pop %v5049
        %v5060 = vrcp.pop %v5052
        %v5061 = vrcp.pop %v5055
        %v5062 = vrcp.pop %v5058
        %v5063 = vmul.f32 %v5040, %v5059
        %v5064 = vmul.f32 %v5042, %v5060
        %v5065 = vmul.f32 %v5044, %v5061
        %v5066 = vmul.f32 %v5046, %v5062
        %v5067 = vpack.c.bf16 %v5063, %v5063
        %v5068 = vpack.c.bf16 %v5064, %v5064
        %v5069 = vpack.c.bf16 %v5065, %v5065
        %v5070 = vpack.c.bf16 %v5066, %v5066
        %5071 = vrot.lane.b32.xlu0 %v4823, 64
        %v5072 = vpop.permute.xlu0 %5071
        %v5074 = vsel %vm1536, %v5067, 0
        %v5077 = vsel %vm1783, %v5072, 0
        %5079 = vmatprep.subr.bf16.mxu0 0
        %5080 = vmatpush1.bf16.msra.mxu0 %v5077
        %5081 = vmatprep.subr.bf16.mxu0 0
        %5082 = vmatpush1.bf16.msra.mxu0 0
        %5083 = vmatprep.subr.bf16.mxu0 0
        %5084 = vmatpush1.bf16.msra.mxu0 0
        %5085 = vmatprep.subr.bf16.mxu0 0
        %5086 = vmatpush1.bf16.msra.mxu0 0
        %5087 = vmatprep.subr.bf16.mxu0 0
        %5088 = vmatpush1.bf16.msra.mxu0 0
        %5089 = vmatprep.subr.bf16.mxu0 0
        %5090 = vmatpush1.bf16.msra.mxu0 0
        %5091 = vmatprep.subr.bf16.mxu0 0
        %5092 = vmatpush1.bf16.msra.mxu0 0
        %5093 = vmatprep.subr.bf16.mxu0 0
        %5094 = vmatpush1.bf16.msra.mxu0 0
        %5095 = vmatprep.subr.bf16.mxu0 0
        %5096 = vmatpush1.bf16.msra.mxu0 0
        %5097 = vmatprep.subr.bf16.mxu0 0
        %5098 = vmatpush1.bf16.msra.mxu0 0
        %5099 = vmatprep.subr.bf16.mxu0 0
        %5100 = vmatpush1.bf16.msra.mxu0 0
        %5101 = vmatprep.subr.bf16.mxu0 0
        %5102 = vmatpush1.bf16.msra.mxu0 0
        %5103 = vmatprep.subr.bf16.mxu0 0
        %5104 = vmatpush1.bf16.msra.mxu0 0
        %5105 = vmatprep.subr.bf16.mxu0 0
        %5106 = vmatpush1.bf16.msra.mxu0 0
        %5107 = vmatprep.subr.bf16.mxu0 0
        %5108 = vmatpush1.bf16.msra.mxu0 0
        %5109 = vmatprep.subr.bf16.mxu0 0
        %5110 = vmatpush1.bf16.msra.mxu0 0
        %5111 = vmatprep.mubr.bf16.mxu0 0
        %5112 = vmatmul.mubr.bf16.gmra.mrb[0].mxu0 %v5074
        %v5113 = vpop.f32.mrb[0].mxu0
        %v5114 = vadd.f32 0.0, %v5113
        %v5115 = vpop.f32.mrb[0].mxu0
        %v5116 = vpop.f32.mrb[0].mxu0
        %v5117 = vpop.f32.mrb[0].mxu0
        %5118 = vdwg.mxu0
        %5119 = vrot.lane.b32.xlu0 %v4824, 64
        %v5120 = vpop.permute.xlu0 %5119
        %v5122 = vsel %vm1536, %v5068, 0
        %v5125 = vsel %vm1783, %v5120, 0
        %5127 = vmatprep.subr.bf16.mxu0 0
        %5128 = vmatpush1.bf16.msra.mxu0 %v5125
        %5129 = vmatprep.subr.bf16.mxu0 0
        %5130 = vmatpush1.bf16.msra.mxu0 0
        %5131 = vmatprep.subr.bf16.mxu0 0
        %5132 = vmatpush1.bf16.msra.mxu0 0
        %5133 = vmatprep.subr.bf16.mxu0 0
        %5134 = vmatpush1.bf16.msra.mxu0 0
        %5135 = vmatprep.subr.bf16.mxu0 0
        %5136 = vmatpush1.bf16.msra.mxu0 0
        %5137 = vmatprep.subr.bf16.mxu0 0
        %5138 = vmatpush1.bf16.msra.mxu0 0
        %5139 = vmatprep.subr.bf16.mxu0 0
        %5140 = vmatpush1.bf16.msra.mxu0 0
        %5141 = vmatprep.subr.bf16.mxu0 0
        %5142 = vmatpush1.bf16.msra.mxu0 0
        %5143 = vmatprep.subr.bf16.mxu0 0
        %5144 = vmatpush1.bf16.msra.mxu0 0
        %5145 = vmatprep.subr.bf16.mxu0 0
        %5146 = vmatpush1.bf16.msra.mxu0 0
        %5147 = vmatprep.subr.bf16.mxu0 0
        %5148 = vmatpush1.bf16.msra.mxu0 0
        %5149 = vmatprep.subr.bf16.mxu0 0
        %5150 = vmatpush1.bf16.msra.mxu0 0
        %5151 = vmatprep.subr.bf16.mxu0 0
        %5152 = vmatpush1.bf16.msra.mxu0 0
        %5153 = vmatprep.subr.bf16.mxu0 0
        %5154 = vmatpush1.bf16.msra.mxu0 0
        %5155 = vmatprep.subr.bf16.mxu0 0
        %5156 = vmatpush1.bf16.msra.mxu0 0
        %5157 = vmatprep.subr.bf16.mxu0 0
        %5158 = vmatpush1.bf16.msra.mxu0 0
        %5159 = vmatprep.mubr.bf16.mxu0 0
        %5160 = vmatmul.mubr.bf16.gmra.mrb[0].mxu0 %v5122
        %v5161 = vpop.f32.mrb[0].mxu0
        %v5162 = vadd.f32 0.0, %v5161
        %v5163 = vpop.f32.mrb[0].mxu0
        %v5164 = vpop.f32.mrb[0].mxu0
        %v5165 = vpop.f32.mrb[0].mxu0
        %5166 = vdwg.mxu0
        %5167 = vrot.lane.b32.xlu0 %v4825, 64
        %v5168 = vpop.permute.xlu0 %5167
        %v5170 = vsel %vm1536, %v5069, 0
        %v5173 = vsel %vm1783, %v5168, 0
        %5175 = vmatprep.subr.bf16.mxu0 0
        %5176 = vmatpush1.bf16.msra.mxu0 %v5173
        %5177 = vmatprep.subr.bf16.mxu0 0
        %5178 = vmatpush1.bf16.msra.mxu0 0
        %5179 = vmatprep.subr.bf16.mxu0 0
        %5180 = vmatpush1.bf16.msra.mxu0 0
        %5181 = vmatprep.subr.bf16.mxu0 0
        %5182 = vmatpush1.bf16.msra.mxu0 0
        %5183 = vmatprep.subr.bf16.mxu0 0
        %5184 = vmatpush1.bf16.msra.mxu0 0
        %5185 = vmatprep.subr.bf16.mxu0 0
        %5186 = vmatpush1.bf16.msra.mxu0 0
        %5187 = vmatprep.subr.bf16.mxu0 0
        %5188 = vmatpush1.bf16.msra.mxu0 0
        %5189 = vmatprep.subr.bf16.mxu0 0
        %5190 = vmatpush1.bf16.msra.mxu0 0
        %5191 = vmatprep.subr.bf16.mxu0 0
        %5192 = vmatpush1.bf16.msra.mxu0 0
        %5193 = vmatprep.subr.bf16.mxu0 0
        %5194 = vmatpush1.bf16.msra.mxu0 0
        %5195 = vmatprep.subr.bf16.mxu0 0
        %5196 = vmatpush1.bf16.msra.mxu0 0
        %5197 = vmatprep.subr.bf16.mxu0 0
        %5198 = vmatpush1.bf16.msra.mxu0 0
        %5199 = vmatprep.subr.bf16.mxu0 0
        %5200 = vmatpush1.bf16.msra.mxu0 0
        %5201 = vmatprep.subr.bf16.mxu0 0
        %5202 = vmatpush1.bf16.msra.mxu0 0
        %5203 = vmatprep.subr.bf16.mxu0 0
        %5204 = vmatpush1.bf16.msra.mxu0 0
        %5205 = vmatprep.subr.bf16.mxu0 0
        %5206 = vmatpush1.bf16.msra.mxu0 0
        %5207 = vmatprep.mubr.bf16.mxu0 0
        %5208 = vmatmul.mubr.bf16.gmra.mrb[0].mxu0 %v5170
        %v5209 = vpop.f32.mrb[0].mxu0
        %v5210 = vadd.f32 0.0, %v5209
        %v5211 = vpop.f32.mrb[0].mxu0
        %v5212 = vpop.f32.mrb[0].mxu0
        %v5213 = vpop.f32.mrb[0].mxu0
        %5214 = vdwg.mxu0
        %5215 = vrot.lane.b32.xlu0 %v4826, 64
        %v5216 = vpop.permute.xlu0 %5215
        %v5218 = vsel %vm1536, %v5070, 0
        %v5221 = vsel %vm1783, %v5216, 0
        %5223 = vmatprep.subr.bf16.mxu0 0
        %5224 = vmatpush1.bf16.msra.mxu0 %v5221
        %5225 = vmatprep.subr.bf16.mxu0 0
        %5226 = vmatpush1.bf16.msra.mxu0 0
        %5227 = vmatprep.subr.bf16.mxu0 0
        %5228 = vmatpush1.bf16.msra.mxu0 0
        %5229 = vmatprep.subr.bf16.mxu0 0
        %5230 = vmatpush1.bf16.msra.mxu0 0
        %5231 = vmatprep.subr.bf16.mxu0 0
        %5232 = vmatpush1.bf16.msra.mxu0 0
        %5233 = vmatprep.subr.bf16.mxu0 0
        %5234 = vmatpush1.bf16.msra.mxu0 0
        %5235 = vmatprep.subr.bf16.mxu0 0
        %5236 = vmatpush1.bf16.msra.mxu0 0
        %5237 = vmatprep.subr.bf16.mxu0 0
        %5238 = vmatpush1.bf16.msra.mxu0 0
        %5239 = vmatprep.subr.bf16.mxu0 0
        %5240 = vmatpush1.bf16.msra.mxu0 0
        %5241 = vmatprep.subr.bf16.mxu0 0
        %5242 = vmatpush1.bf16.msra.mxu0 0
        %5243 = vmatprep.subr.bf16.mxu0 0
        %5244 = vmatpush1.bf16.msra.mxu0 0
        %5245 = vmatprep.subr.bf16.mxu0 0
        %5246 = vmatpush1.bf16.msra.mxu0 0
        %5247 = vmatprep.subr.bf16.mxu0 0
        %5248 = vmatpush1.bf16.msra.mxu0 0
        %5249 = vmatprep.subr.bf16.mxu0 0
        %5250 = vmatpush1.bf16.msra.mxu0 0
        %5251 = vmatprep.subr.bf16.mxu0 0
        %5252 = vmatpush1.bf16.msra.mxu0 0
        %5253 = vmatprep.subr.bf16.mxu0 0
        %5254 = vmatpush1.bf16.msra.mxu0 0
        %5255 = vmatprep.mubr.bf16.mxu0 0
        %5256 = vmatmul.mubr.bf16.gmra.mrb[0].mxu0 %v5218
        %v5257 = vpop.f32.mrb[0].mxu0
        %v5258 = vadd.f32 0.0, %v5257
        %v5259 = vpop.f32.mrb[0].mxu0
        %v5260 = vpop.f32.mrb[0].mxu0
        %v5261 = vpop.f32.mrb[0].mxu0
        %5262 = vdwg.mxu0
        %5264 = vrot.lane.b32.xlu0 %v5162, 8
        %v5265 = vpop.permute.xlu0 %5264
        %5268 = vrot.lane.b32.xlu0 %v5210, 16
        %v5269 = vpop.permute.xlu0 %5268
        %5272 = vrot.lane.b32.xlu0 %v5258, 24
        %v5273 = vpop.permute.xlu0 %5272
        %v5275 = vsel %vm1536, %v5114, %v5265
        %v5276 = vsel %vm1984, %v5275, %v5269
        %v5277 = vsel %vm1986, %v5276, %v5273
        %s5278 = scalar_lea.vmem %s49, 16
        %v5279 = vld [vmem:[%s5278] sm:$0xf]
        %v5280 = vld [vmem:[%s5278 + $0x4] sm:$0xf]
        %v5281 = vld [vmem:[%s5278 + $0x8] sm:$0xf]
        %v5282 = vld [vmem:[%s5278 + $0xc] sm:$0xf]
        %s5283 = scalar_lea.vmem %s51, 1
        %v5284 = vld [vmem:[%s5283] sm:$0x1]
        %v5285 = vpack.c.bf16 %v5277, %v5277
        %v5287 = vlaneseq
        %v5288 = vshrl.u32 %v5287, 7
        %v5289 = vsub.s32 0, %v5288
        %v5290 = vrot.slane %v5284, %v5289
        %v5296 = vunpack.c.l.b16 %v5279
        %v5297 = vunpack.c.l.b16 %v5280
        %v5298 = vunpack.c.l.b16 %v5281
        %v5299 = vunpack.c.l.b16 %v5282
        %v5300 = vpack.c.b16 %v5297, %v5296
        %v5301 = vpack.c.b16 %v5299, %v5298
        %v5305 = vsel %vm1417, %v5285, 0
        %5307 = vmatprep.subr.bf16.mxu0 0
        %5308 = vmatpush1.bf16.msra.mxu0 %v5300
        %5309 = vmatprep.subr.bf16.mxu0 0
        %5310 = vmatpush1.bf16.msra.mxu0 %v5301
        %5311 = vmatprep.subr.bf16.mxu0 0
        %5312 = vmatpush1.bf16.msra.mxu0 0
        %5313 = vmatprep.subr.bf16.mxu0 0
        %5314 = vmatpush1.bf16.msra.mxu0 0
        %5315 = vmatprep.subr.bf16.mxu0 0
        %5316 = vmatpush1.bf16.msra.mxu0 0
        %5317 = vmatprep.subr.bf16.mxu0 0
        %5318 = vmatpush1.bf16.msra.mxu0 0
        %5319 = vmatprep.subr.bf16.mxu0 0
        %5320 = vmatpush1.bf16.msra.mxu0 0
        %5321 = vmatprep.subr.bf16.mxu0 0
        %5322 = vmatpush1.bf16.msra.mxu0 0
        %5323 = vmatprep.subr.bf16.mxu0 0
        %5324 = vmatpush1.bf16.msra.mxu0 0
        %5325 = vmatprep.subr.bf16.mxu0 0
        %5326 = vmatpush1.bf16.msra.mxu0 0
        %5327 = vmatprep.subr.bf16.mxu0 0
        %5328 = vmatpush1.bf16.msra.mxu0 0
        %5329 = vmatprep.subr.bf16.mxu0 0
        %5330 = vmatpush1.bf16.msra.mxu0 0
        %5331 = vmatprep.subr.bf16.mxu0 0
        %5332 = vmatpush1.bf16.msra.mxu0 0
        %5333 = vmatprep.subr.bf16.mxu0 0
        %5334 = vmatpush1.bf16.msra.mxu0 0
        %5335 = vmatprep.subr.bf16.mxu0 0
        %5336 = vmatpush1.bf16.msra.mxu0 0
        %5337 = vmatprep.subr.bf16.mxu0 0
        %5338 = vmatpush1.bf16.msra.mxu0 0
        %5339 = vmatprep.mubr.bf16.mxu0 0
        %5340 = vmatmul.mubr.bf16.gmra.mrb[0].mxu0 %v5305
        %v5341 = vpop.f32.mrb[0].mxu0
        %v5342 = vadd.f32 %v5290, %v5341
        %v5343 = vpop.f32.mrb[0].mxu0
        %v5344 = vpop.f32.mrb[0].mxu0
        %v5345 = vpop.f32.mrb[0].mxu0
        %5346 = vdwg.mxu0
        %v5347 = vadd.f32 %v4712, %v5342
        %s5348 = scalar_lea.vmem %s53, 1
        %v5349 = vld [vmem:[%s5348] sm:$0x1]
        %s5350 = scalar_lea.vmem %s55, 1
        %v5351 = vld [vmem:[%s5350] sm:$0x1]
        %v5352 = vsel %vm1417, %v5347, 0.0
        %5353 = vadd.xlane.f32.xlu0 %v5352
        %v5354 = vpop.xlane.xlu0 %5353
        %v5355 = vmul.f32 %v5354, %v1421
        %v5356 = vsub.f32 %v5347, %v5355
        %v5357 = vmul.f32 %v5356, %v5356
        %v5358 = vsel %vm1417, %v5357, 0.0
        %5359 = vadd.xlane.f32.xlu0 %v5358
        %v5360 = vpop.xlane.xlu0 %5359
        %v5361 = vmul.f32 %v5360, %v1421
        %v5362 = vadd.f32 %v5361, 1e-05
        %v5363 = vrsqrt.pop %v5362
        %v5364 = vmul.f32 %v5356, %v5363
        %v5366 = vlaneseq
        %v5367 = vshrl.u32 %v5366, 7
        %v5368 = vsub.s32 0, %v5367
        %v5369 = vrot.slane %v5349, %v5368
        %v5371 = vmul.f32 %v5364, %v5369
        %v5373 = vlaneseq
        %v5374 = vshrl.u32 %v5373, 7
        %v5375 = vsub.s32 0, %v5374
        %v5376 = vrot.slane %v5351, %v5375
        %v5378 = vadd.f32 %v5371, %v5376
        %s5379 = scalar_lea.vmem %s57, 16
        %v5380 = vld [vmem:[%s5379] sm:$0xf]
        %v5381 = vld [vmem:[%s5379 + $0x4] sm:$0xf]
        %v5382 = vld [vmem:[%s5379 + $0x8] sm:$0xf]
        %v5383 = vld [vmem:[%s5379 + $0xc] sm:$0xf]
        %s5384 = scalar_lea.vmem %s59, 1
        %v5385 = vld [vmem:[%s5384] sm:$0x1]
        %v5386 = vpack.c.bf16 %v5378, %v5378
        %v5388 = vlaneseq
        %v5389 = vshrl.u32 %v5388, 7
        %v5390 = vsub.s32 0, %v5389
        %v5391 = vrot.slane %v5385, %v5390
        %v5397 = vunpack.c.l.b16 %v5380
        %v5398 = vunpack.c.l.b16 %v5381
        %v5399 = vunpack.c.l.b16 %v5382
        %v5400 = vunpack.c.l.b16 %v5383
        %v5401 = vpack.c.b16 %v5398, %v5397
        %v5402 = vpack.c.b16 %v5400, %v5399
        %v5406 = vsel %vm1417, %v5386, 0
        %5408 = vmatprep.subr.bf16.mxu0 0
        %5409 = vmatpush1.bf16.msra.mxu0 %v5401
        %5410 = vmatprep.subr.bf16.mxu0 0
        %5411 = vmatpush1.bf16.msra.mxu0 %v5402
        %5412 = vmatprep.subr.bf16.mxu0 0
        %5413 = vmatpush1.bf16.msra.mxu0 0
        %5414 = vmatprep.subr.bf16.mxu0 0
        %5415 = vmatpush1.bf16.msra.mxu0 0
        %5416 = vmatprep.subr.bf16.mxu0 0
        %5417 = vmatpush1.bf16.msra.mxu0 0
        %5418 = vmatprep.subr.bf16.mxu0 0
        %5419 = vmatpush1.bf16.msra.mxu0 0
        %5420 = vmatprep.subr.bf16.mxu0 0
        %5421 = vmatpush1.bf16.msra.mxu0 0
        %5422 = vmatprep.subr.bf16.mxu0 0
        %5423 = vmatpush1.bf16.msra.mxu0 0
        %5424 = vmatprep.subr.bf16.mxu0 0
        %5425 = vmatpush1.bf16.msra.mxu0 0
        %5426 = vmatprep.subr.bf16.mxu0 0
        %5427 = vmatpush1.bf16.msra.mxu0 0
        %5428 = vmatprep.subr.bf16.mxu0 0
        %5429 = vmatpush1.bf16.msra.mxu0 0
        %5430 = vmatprep.subr.bf16.mxu0 0
        %5431 = vmatpush1.bf16.msra.mxu0 0
        %5432 = vmatprep.subr.bf16.mxu0 0
        %5433 = vmatpush1.bf16.msra.mxu0 0
        %5434 = vmatprep.subr.bf16.mxu0 0
        %5435 = vmatpush1.bf16.msra.mxu0 0
        %5436 = vmatprep.subr.bf16.mxu0 0
        %5437 = vmatpush1.bf16.msra.mxu0 0
        %5438 = vmatprep.subr.bf16.mxu0 0
        %5439 = vmatpush1.bf16.msra.mxu0 0
        %5440 = vmatprep.mubr.bf16.mxu0 0
        %5441 = vmatmul.mubr.bf16.gmra.mrb[0].mxu0 %v5406
        %v5442 = vpop.f32.mrb[0].mxu0
        %v5443 = vadd.f32 %v5391, %v5442
        %v5444 = vpop.f32.mrb[0].mxu0
        %v5445 = vpop.f32.mrb[0].mxu0
        %v5446 = vpop.f32.mrb[0].mxu0
        %5447 = vdwg.mxu0
        %s5448 = scalar_lea.vmem %s61, 16
        %v5449 = vld [vmem:[%s5448] sm:$0xf]
        %v5450 = vld [vmem:[%s5448 + $0x4] sm:$0xf]
        %v5451 = vld [vmem:[%s5448 + $0x8] sm:$0xf]
        %v5452 = vld [vmem:[%s5448 + $0xc] sm:$0xf]
        %s5453 = scalar_lea.vmem %s63, 1
        %v5454 = vld [vmem:[%s5453] sm:$0x1]
        %v5456 = vlaneseq
        %v5457 = vshrl.u32 %v5456, 7
        %v5458 = vsub.s32 0, %v5457
        %v5459 = vrot.slane %v5454, %v5458
        %v5465 = vunpack.c.l.b16 %v5449
        %v5466 = vunpack.c.l.b16 %v5450
        %v5467 = vunpack.c.l.b16 %v5451
        %v5468 = vunpack.c.l.b16 %v5452
        %v5469 = vpack.c.b16 %v5466, %v5465
        %v5470 = vpack.c.b16 %v5468, %v5467
        %5473 = vmatprep.subr.bf16.mxu0 0
        %5474 = vmatpush1.bf16.msra.mxu0 %v5469
        %5475 = vmatprep.subr.bf16.mxu0 0
        %5476 = vmatpush1.bf16.msra.mxu0 %v5470
        %5477 = vmatprep.subr.bf16.mxu0 0
        %5478 = vmatpush1.bf16.msra.mxu0 0
        %5479 = vmatprep.subr.bf16.mxu0 0
        %5480 = vmatpush1.bf16.msra.mxu0 0
        %5481 = vmatprep.subr.bf16.mxu0 0
        %5482 = vmatpush1.bf16.msra.mxu0 0
        %5483 = vmatprep.subr.bf16.mxu0 0
        %5484 = vmatpush1.bf16.msra.mxu0 0
        %5485 = vmatprep.subr.bf16.mxu0 0
        %5486 = vmatpush1.bf16.msra.mxu0 0
        %5487 = vmatprep.subr.bf16.mxu0 0
        %5488 = vmatpush1.bf16.msra.mxu0 0
        %5489 = vmatprep.subr.bf16.mxu0 0
        %5490 = vmatpush1.bf16.msra.mxu0 0
        %5491 = vmatprep.subr.bf16.mxu0 0
        %5492 = vmatpush1.bf16.msra.mxu0 0
        %5493 = vmatprep.subr.bf16.mxu0 0
        %5494 = vmatpush1.bf16.msra.mxu0 0
        %5495 = vmatprep.subr.bf16.mxu0 0
        %5496 = vmatpush1.bf16.msra.mxu0 0
        %5497 = vmatprep.subr.bf16.mxu0 0
        %5498 = vmatpush1.bf16.msra.mxu0 0
        %5499 = vmatprep.subr.bf16.mxu0 0
        %5500 = vmatpush1.bf16.msra.mxu0 0
        %5501 = vmatprep.subr.bf16.mxu0 0
        %5502 = vmatpush1.bf16.msra.mxu0 0
        %5503 = vmatprep.subr.bf16.mxu0 0
        %5504 = vmatpush1.bf16.msra.mxu0 0
        %5505 = vmatprep.mubr.bf16.mxu0 0
        %5506 = vmatmul.mubr.bf16.gmra.mrb[0].mxu0 %v3951
        %v5507 = vpop.f32.mrb[0].mxu0
        %v5508 = vadd.f32 %v5459, %v5507
        %v5509 = vpop.f32.mrb[0].mxu0
        %v5510 = vpop.f32.mrb[0].mxu0
        %v5511 = vpop.f32.mrb[0].mxu0
        %5512 = vdwg.mxu0
        %5514 = vrot.lane.b32.xlu0 %v5443, 120
        %v5515 = vpop.permute.xlu0 %5514
        %5517 = vrot.lane.b32.xlu0 %v5443, 112
        %v5518 = vpop.permute.xlu0 %5517
        %5520 = vrot.lane.b32.xlu0 %v5443, 104
        %v5521 = vpop.permute.xlu0 %5520
        %v5523 = vpack.c.bf16 %v5443, %v5443
        %v5524 = vpack.c.bf16 %v5515, %v5515
        %v5525 = vpack.c.bf16 %v5518, %v5518
        %v5526 = vpack.c.bf16 %v5521, %v5521
        %5528 = vrot.lane.b32.xlu0 %v5508, 120
        %v5529 = vpop.permute.xlu0 %5528
        %5531 = vrot.lane.b32.xlu0 %v5508, 112
        %v5532 = vpop.permute.xlu0 %5531
        %5534 = vrot.lane.b32.xlu0 %v5508, 104
        %v5535 = vpop.permute.xlu0 %5534
        %v5537 = vpack.c.bf16 %v5508, %v5508
        %v5538 = vpack.c.bf16 %v5529, %v5529
        %v5539 = vpack.c.bf16 %v5532, %v5532
        %v5540 = vpack.c.bf16 %v5535, %v5535
        %v5542 = vsel %vm1536, %v5523, 0
        %v5545 = vsel %vm1536, %v5537, 0
        %5547 = vmatprep.subr.bf16.mxu0 0
        %5548 = vmatpush1.bf16.xpose.msra.mxu0 %v5545
        %5549 = vmatprep.subr.bf16.mxu0 0
        %5550 = vmatpush1.bf16.xpose.msra.mxu0 0
        %5551 = vmatprep.subr.bf16.mxu0 0
        %5552 = vmatpush1.bf16.xpose.msra.mxu0 0
        %5553 = vmatprep.subr.bf16.mxu0 0
        %5554 = vmatpush1.bf16.xpose.msra.mxu0 0
        %5555 = vmatprep.subr.bf16.mxu0 0
        %5556 = vmatpush1.bf16.xpose.msra.mxu0 0
        %5557 = vmatprep.subr.bf16.mxu0 0
        %5558 = vmatpush1.bf16.xpose.msra.mxu0 0
        %5559 = vmatprep.subr.bf16.mxu0 0
        %5560 = vmatpush1.bf16.xpose.msra.mxu0 0
        %5561 = vmatprep.subr.bf16.mxu0 0
        %5562 = vmatpush1.bf16.xpose.msra.mxu0 0
        %5563 = vmatprep.subr.bf16.mxu0 0
        %5564 = vmatpush1.bf16.xpose.msra.mxu0 0
        %5565 = vmatprep.subr.bf16.mxu0 0
        %5566 = vmatpush1.bf16.xpose.msra.mxu0 0
        %5567 = vmatprep.subr.bf16.mxu0 0
        %5568 = vmatpush1.bf16.xpose.msra.mxu0 0
        %5569 = vmatprep.subr.bf16.mxu0 0
        %5570 = vmatpush1.bf16.xpose.msra.mxu0 0
        %5571 = vmatprep.subr.bf16.mxu0 0
        %5572 = vmatpush1.bf16.xpose.msra.mxu0 0
        %5573 = vmatprep.subr.bf16.mxu0 0
        %5574 = vmatpush1.bf16.xpose.msra.mxu0 0
        %5575 = vmatprep.subr.bf16.mxu0 0
        %5576 = vmatpush1.bf16.xpose.msra.mxu0 0
        %5577 = vmatprep.subr.bf16.mxu0 0
        %5578 = vmatpush1.bf16.xpose.msra.mxu0 0
        %5579 = vmatprep.mubr.bf16.mxu0 0
        %5580 = vmatmul.mubr.bf16.gmra.mrb[0].mxu0 %v5542
        %v5581 = vpop.f32.mrb[0].mxu0
        %v5582 = vadd.f32 %v1531, %v5581
        %v5583 = vpop.f32.mrb[0].mxu0
        %v5584 = vpop.f32.mrb[0].mxu0
        %v5585 = vpop.f32.mrb[0].mxu0
        %5586 = vdwg.mxu0
        %v5588 = vsel %vm1536, %v5524, 0
        %v5591 = vsel %vm1536, %v5538, 0
        %5593 = vmatprep.subr.bf16.mxu0 0
        %5594 = vmatpush1.bf16.xpose.msra.mxu0 %v5591
        %5595 = vmatprep.subr.bf16.mxu0 0
        %5596 = vmatpush1.bf16.xpose.msra.mxu0 0
        %5597 = vmatprep.subr.bf16.mxu0 0
        %5598 = vmatpush1.bf16.xpose.msra.mxu0 0
        %5599 = vmatprep.subr.bf16.mxu0 0
        %5600 = vmatpush1.bf16.xpose.msra.mxu0 0
        %5601 = vmatprep.subr.bf16.mxu0 0
        %5602 = vmatpush1.bf16.xpose.msra.mxu0 0
        %5603 = vmatprep.subr.bf16.mxu0 0
        %5604 = vmatpush1.bf16.xpose.msra.mxu0 0
        %5605 = vmatprep.subr.bf16.mxu0 0
        %5606 = vmatpush1.bf16.xpose.msra.mxu0 0
        %5607 = vmatprep.subr.bf16.mxu0 0
        %5608 = vmatpush1.bf16.xpose.msra.mxu0 0
        %5609 = vmatprep.subr.bf16.mxu0 0
        %5610 = vmatpush1.bf16.xpose.msra.mxu0 0
        %5611 = vmatprep.subr.bf16.mxu0 0
        %5612 = vmatpush1.bf16.xpose.msra.mxu0 0
        %5613 = vmatprep.subr.bf16.mxu0 0
        %5614 = vmatpush1.bf16.xpose.msra.mxu0 0
        %5615 = vmatprep.subr.bf16.mxu0 0
        %5616 = vmatpush1.bf16.xpose.msra.mxu0 0
        %5617 = vmatprep.subr.bf16.mxu0 0
        %5618 = vmatpush1.bf16.xpose.msra.mxu0 0
        %5619 = vmatprep.subr.bf16.mxu0 0
        %5620 = vmatpush1.bf16.xpose.msra.mxu0 0
        %5621 = vmatprep.subr.bf16.mxu0 0
        %5622 = vmatpush1.bf16.xpose.msra.mxu0 0
        %5623 = vmatprep.subr.bf16.mxu0 0
        %5624 = vmatpush1.bf16.xpose.msra.mxu0 0
        %5625 = vmatprep.mubr.bf16.mxu0 0
        %5626 = vmatmul.mubr.bf16.gmra.mrb[0].mxu0 %v5588
        %v5627 = vpop.f32.mrb[0].mxu0
        %v5628 = vadd.f32 %v1531, %v5627
        %v5629 = vpop.f32.mrb[0].mxu0
        %v5630 = vpop.f32.mrb[0].mxu0
        %v5631 = vpop.f32.mrb[0].mxu0
        %5632 = vdwg.mxu0
        %v5634 = vsel %vm1536, %v5525, 0
        %v5637 = vsel %vm1536, %v5539, 0
        %5639 = vmatprep.subr.bf16.mxu0 0
        %5640 = vmatpush1.bf16.xpose.msra.mxu0 %v5637
        %5641 = vmatprep.subr.bf16.mxu0 0
        %5642 = vmatpush1.bf16.xpose.msra.mxu0 0
        %5643 = vmatprep.subr.bf16.mxu0 0
        %5644 = vmatpush1.bf16.xpose.msra.mxu0 0
        %5645 = vmatprep.subr.bf16.mxu0 0
        %5646 = vmatpush1.bf16.xpose.msra.mxu0 0
        %5647 = vmatprep.subr.bf16.mxu0 0
        %5648 = vmatpush1.bf16.xpose.msra.mxu0 0
        %5649 = vmatprep.subr.bf16.mxu0 0
        %5650 = vmatpush1.bf16.xpose.msra.mxu0 0
        %5651 = vmatprep.subr.bf16.mxu0 0
        %5652 = vmatpush1.bf16.xpose.msra.mxu0 0
        %5653 = vmatprep.subr.bf16.mxu0 0
        %5654 = vmatpush1.bf16.xpose.msra.mxu0 0
        %5655 = vmatprep.subr.bf16.mxu0 0
        %5656 = vmatpush1.bf16.xpose.msra.mxu0 0
        %5657 = vmatprep.subr.bf16.mxu0 0
        %5658 = vmatpush1.bf16.xpose.msra.mxu0 0
        %5659 = vmatprep.subr.bf16.mxu0 0
        %5660 = vmatpush1.bf16.xpose.msra.mxu0 0
        %5661 = vmatprep.subr.bf16.mxu0 0
        %5662 = vmatpush1.bf16.xpose.msra.mxu0 0
        %5663 = vmatprep.subr.bf16.mxu0 0
        %5664 = vmatpush1.bf16.xpose.msra.mxu0 0
        %5665 = vmatprep.subr.bf16.mxu0 0
        %5666 = vmatpush1.bf16.xpose.msra.mxu0 0
        %5667 = vmatprep.subr.bf16.mxu0 0
        %5668 = vmatpush1.bf16.xpose.msra.mxu0 0
        %5669 = vmatprep.subr.bf16.mxu0 0
        %5670 = vmatpush1.bf16.xpose.msra.mxu0 0
        %5671 = vmatprep.mubr.bf16.mxu0 0
        %5672 = vmatmul.mubr.bf16.gmra.mrb[0].mxu0 %v5634
        %v5673 = vpop.f32.mrb[0].mxu0
        %v5674 = vadd.f32 %v1531, %v5673
        %v5675 = vpop.f32.mrb[0].mxu0
        %v5676 = vpop.f32.mrb[0].mxu0
        %v5677 = vpop.f32.mrb[0].mxu0
        %5678 = vdwg.mxu0
        %v5680 = vsel %vm1536, %v5526, 0
        %v5683 = vsel %vm1536, %v5540, 0
        %5685 = vmatprep.subr.bf16.mxu0 0
        %5686 = vmatpush1.bf16.xpose.msra.mxu0 %v5683
        %5687 = vmatprep.subr.bf16.mxu0 0
        %5688 = vmatpush1.bf16.xpose.msra.mxu0 0
        %5689 = vmatprep.subr.bf16.mxu0 0
        %5690 = vmatpush1.bf16.xpose.msra.mxu0 0
        %5691 = vmatprep.subr.bf16.mxu0 0
        %5692 = vmatpush1.bf16.xpose.msra.mxu0 0
        %5693 = vmatprep.subr.bf16.mxu0 0
        %5694 = vmatpush1.bf16.xpose.msra.mxu0 0
        %5695 = vmatprep.subr.bf16.mxu0 0
        %5696 = vmatpush1.bf16.xpose.msra.mxu0 0
        %5697 = vmatprep.subr.bf16.mxu0 0
        %5698 = vmatpush1.bf16.xpose.msra.mxu0 0
        %5699 = vmatprep.subr.bf16.mxu0 0
        %5700 = vmatpush1.bf16.xpose.msra.mxu0 0
        %5701 = vmatprep.subr.bf16.mxu0 0
        %5702 = vmatpush1.bf16.xpose.msra.mxu0 0
        %5703 = vmatprep.subr.bf16.mxu0 0
        %5704 = vmatpush1.bf16.xpose.msra.mxu0 0
        %5705 = vmatprep.subr.bf16.mxu0 0
        %5706 = vmatpush1.bf16.xpose.msra.mxu0 0
        %5707 = vmatprep.subr.bf16.mxu0 0
        %5708 = vmatpush1.bf16.xpose.msra.mxu0 0
        %5709 = vmatprep.subr.bf16.mxu0 0
        %5710 = vmatpush1.bf16.xpose.msra.mxu0 0
        %5711 = vmatprep.subr.bf16.mxu0 0
        %5712 = vmatpush1.bf16.xpose.msra.mxu0 0
        %5713 = vmatprep.subr.bf16.mxu0 0
        %5714 = vmatpush1.bf16.xpose.msra.mxu0 0
        %5715 = vmatprep.subr.bf16.mxu0 0
        %5716 = vmatpush1.bf16.xpose.msra.mxu0 0
        %5717 = vmatprep.mubr.bf16.mxu0 0
        %5718 = vmatmul.mubr.bf16.gmra.mrb[0].mxu0 %v5680
        %v5719 = vpop.f32.mrb[0].mxu0
        %v5720 = vadd.f32 %v1531, %v5719
        %v5721 = vpop.f32.mrb[0].mxu0
        %v5722 = vpop.f32.mrb[0].mxu0
        %v5723 = vpop.f32.mrb[0].mxu0
        %5724 = vdwg.mxu0
        %v5725 = vsel %vm1536, %v5582, -inf
        %5726 = vmax.xlane.f32.xlu0 %v5725
        %v5727 = vpop.xlane.xlu0 %5726
        %v5728 = vsel %vm1536, %v5628, -inf
        %5729 = vmax.xlane.f32.xlu0 %v5728
        %v5730 = vpop.xlane.xlu0 %5729
        %v5731 = vsel %vm1536, %v5674, -inf
        %5732 = vmax.xlane.f32.xlu0 %v5731
        %v5733 = vpop.xlane.xlu0 %5732
        %v5734 = vsel %vm1536, %v5720, -inf
        %5735 = vmax.xlane.f32.xlu0 %v5734
        %v5736 = vpop.xlane.xlu0 %5735
        %v5737 = vsub.f32 %v5582, %v5727
        %v5738 = vsub.f32 %v5628, %v5730
        %v5739 = vsub.f32 %v5674, %v5733
        %v5740 = vsub.f32 %v5720, %v5736
        %v5741 = vmul.f32 %v5737, 1.442695
        %v5742 = vpow.pop %v5741
        %v5743 = vmul.f32 %v5738, 1.442695
        %v5744 = vpow.pop %v5743
        %v5745 = vmul.f32 %v5739, 1.442695
        %v5746 = vpow.pop %v5745
        %v5747 = vmul.f32 %v5740, 1.442695
        %v5748 = vpow.pop %v5747
        %v5749 = vsel %vm1536, %v5742, 0.0
        %5750 = vadd.xlane.f32.xlu0 %v5749
        %v5751 = vpop.xlane.xlu0 %5750
        %v5752 = vsel %vm1536, %v5744, 0.0
        %5753 = vadd.xlane.f32.xlu0 %v5752
        %v5754 = vpop.xlane.xlu0 %5753
        %v5755 = vsel %vm1536, %v5746, 0.0
        %5756 = vadd.xlane.f32.xlu0 %v5755
        %v5757 = vpop.xlane.xlu0 %5756
        %v5758 = vsel %vm1536, %v5748, 0.0
        %5759 = vadd.xlane.f32.xlu0 %v5758
        %v5760 = vpop.xlane.xlu0 %5759
        %v5761 = vrcp.pop %v5751
        %v5762 = vrcp.pop %v5754
        %v5763 = vrcp.pop %v5757
        %v5764 = vrcp.pop %v5760
        %v5765 = vmul.f32 %v5742, %v5761
        %v5766 = vmul.f32 %v5744, %v5762
        %v5767 = vmul.f32 %v5746, %v5763
        %v5768 = vmul.f32 %v5748, %v5764
        %v5769 = vpack.c.bf16 %v5765, %v5765
        %v5770 = vpack.c.bf16 %v5766, %v5766
        %v5771 = vpack.c.bf16 %v5767, %v5767
        %v5772 = vpack.c.bf16 %v5768, %v5768
        %5774 = vrot.lane.b32.xlu0 %v5537, 96
        %v5775 = vpop.permute.xlu0 %5774
        %v5777 = vsel %vm1536, %v5769, 0
        %v5780 = vsel %vm1783, %v5775, 0
        %5782 = vmatprep.subr.bf16.mxu0 0
        %5783 = vmatpush1.bf16.msra.mxu0 %v5780
        %5784 = vmatprep.subr.bf16.mxu0 0
        %5785 = vmatpush1.bf16.msra.mxu0 0
        %5786 = vmatprep.subr.bf16.mxu0 0
        %5787 = vmatpush1.bf16.msra.mxu0 0
        %5788 = vmatprep.subr.bf16.mxu0 0
        %5789 = vmatpush1.bf16.msra.mxu0 0
        %5790 = vmatprep.subr.bf16.mxu0 0
        %5791 = vmatpush1.bf16.msra.mxu0 0
        %5792 = vmatprep.subr.bf16.mxu0 0
        %5793 = vmatpush1.bf16.msra.mxu0 0
        %5794 = vmatprep.subr.bf16.mxu0 0
        %5795 = vmatpush1.bf16.msra.mxu0 0
        %5796 = vmatprep.subr.bf16.mxu0 0
        %5797 = vmatpush1.bf16.msra.mxu0 0
        %5798 = vmatprep.subr.bf16.mxu0 0
        %5799 = vmatpush1.bf16.msra.mxu0 0
        %5800 = vmatprep.subr.bf16.mxu0 0
        %5801 = vmatpush1.bf16.msra.mxu0 0
        %5802 = vmatprep.subr.bf16.mxu0 0
        %5803 = vmatpush1.bf16.msra.mxu0 0
        %5804 = vmatprep.subr.bf16.mxu0 0
        %5805 = vmatpush1.bf16.msra.mxu0 0
        %5806 = vmatprep.subr.bf16.mxu0 0
        %5807 = vmatpush1.bf16.msra.mxu0 0
        %5808 = vmatprep.subr.bf16.mxu0 0
        %5809 = vmatpush1.bf16.msra.mxu0 0
        %5810 = vmatprep.subr.bf16.mxu0 0
        %5811 = vmatpush1.bf16.msra.mxu0 0
        %5812 = vmatprep.subr.bf16.mxu0 0
        %5813 = vmatpush1.bf16.msra.mxu0 0
        %5814 = vmatprep.mubr.bf16.mxu0 0
        %5815 = vmatmul.mubr.bf16.gmra.mrb[0].mxu0 %v5777
        %v5816 = vpop.f32.mrb[0].mxu0
        %v5817 = vadd.f32 0.0, %v5816
        %v5818 = vpop.f32.mrb[0].mxu0
        %v5819 = vpop.f32.mrb[0].mxu0
        %v5820 = vpop.f32.mrb[0].mxu0
        %5821 = vdwg.mxu0
        %5823 = vrot.lane.b32.xlu0 %v5538, 96
        %v5824 = vpop.permute.xlu0 %5823
        %v5826 = vsel %vm1536, %v5770, 0
        %v5829 = vsel %vm1783, %v5824, 0
        %5831 = vmatprep.subr.bf16.mxu0 0
        %5832 = vmatpush1.bf16.msra.mxu0 %v5829
        %5833 = vmatprep.subr.bf16.mxu0 0
        %5834 = vmatpush1.bf16.msra.mxu0 0
        %5835 = vmatprep.subr.bf16.mxu0 0
        %5836 = vmatpush1.bf16.msra.mxu0 0
        %5837 = vmatprep.subr.bf16.mxu0 0
        %5838 = vmatpush1.bf16.msra.mxu0 0
        %5839 = vmatprep.subr.bf16.mxu0 0
        %5840 = vmatpush1.bf16.msra.mxu0 0
        %5841 = vmatprep.subr.bf16.mxu0 0
        %5842 = vmatpush1.bf16.msra.mxu0 0
        %5843 = vmatprep.subr.bf16.mxu0 0
        %5844 = vmatpush1.bf16.msra.mxu0 0
        %5845 = vmatprep.subr.bf16.mxu0 0
        %5846 = vmatpush1.bf16.msra.mxu0 0
        %5847 = vmatprep.subr.bf16.mxu0 0
        %5848 = vmatpush1.bf16.msra.mxu0 0
        %5849 = vmatprep.subr.bf16.mxu0 0
        %5850 = vmatpush1.bf16.msra.mxu0 0
        %5851 = vmatprep.subr.bf16.mxu0 0
        %5852 = vmatpush1.bf16.msra.mxu0 0
        %5853 = vmatprep.subr.bf16.mxu0 0
        %5854 = vmatpush1.bf16.msra.mxu0 0
        %5855 = vmatprep.subr.bf16.mxu0 0
        %5856 = vmatpush1.bf16.msra.mxu0 0
        %5857 = vmatprep.subr.bf16.mxu0 0
        %5858 = vmatpush1.bf16.msra.mxu0 0
        %5859 = vmatprep.subr.bf16.mxu0 0
        %5860 = vmatpush1.bf16.msra.mxu0 0
        %5861 = vmatprep.subr.bf16.mxu0 0
        %5862 = vmatpush1.bf16.msra.mxu0 0
        %5863 = vmatprep.mubr.bf16.mxu0 0
        %5864 = vmatmul.mubr.bf16.gmra.mrb[0].mxu0 %v5826
        %v5865 = vpop.f32.mrb[0].mxu0
        %v5866 = vadd.f32 0.0, %v5865
        %v5867 = vpop.f32.mrb[0].mxu0
        %v5868 = vpop.f32.mrb[0].mxu0
        %v5869 = vpop.f32.mrb[0].mxu0
        %5870 = vdwg.mxu0
        %5872 = vrot.lane.b32.xlu0 %v5539, 96
        %v5873 = vpop.permute.xlu0 %5872
        %v5875 = vsel %vm1536, %v5771, 0
        %v5878 = vsel %vm1783, %v5873, 0
        %5880 = vmatprep.subr.bf16.mxu0 0
        %5881 = vmatpush1.bf16.msra.mxu0 %v5878
        %5882 = vmatprep.subr.bf16.mxu0 0
        %5883 = vmatpush1.bf16.msra.mxu0 0
        %5884 = vmatprep.subr.bf16.mxu0 0
        %5885 = vmatpush1.bf16.msra.mxu0 0
        %5886 = vmatprep.subr.bf16.mxu0 0
        %5887 = vmatpush1.bf16.msra.mxu0 0
        %5888 = vmatprep.subr.bf16.mxu0 0
        %5889 = vmatpush1.bf16.msra.mxu0 0
        %5890 = vmatprep.subr.bf16.mxu0 0
        %5891 = vmatpush1.bf16.msra.mxu0 0
        %5892 = vmatprep.subr.bf16.mxu0 0
        %5893 = vmatpush1.bf16.msra.mxu0 0
        %5894 = vmatprep.subr.bf16.mxu0 0
        %5895 = vmatpush1.bf16.msra.mxu0 0
        %5896 = vmatprep.subr.bf16.mxu0 0
        %5897 = vmatpush1.bf16.msra.mxu0 0
        %5898 = vmatprep.subr.bf16.mxu0 0
        %5899 = vmatpush1.bf16.msra.mxu0 0
        %5900 = vmatprep.subr.bf16.mxu0 0
        %5901 = vmatpush1.bf16.msra.mxu0 0
        %5902 = vmatprep.subr.bf16.mxu0 0
        %5903 = vmatpush1.bf16.msra.mxu0 0
        %5904 = vmatprep.subr.bf16.mxu0 0
        %5905 = vmatpush1.bf16.msra.mxu0 0
        %5906 = vmatprep.subr.bf16.mxu0 0
        %5907 = vmatpush1.bf16.msra.mxu0 0
        %5908 = vmatprep.subr.bf16.mxu0 0
        %5909 = vmatpush1.bf16.msra.mxu0 0
        %5910 = vmatprep.subr.bf16.mxu0 0
        %5911 = vmatpush1.bf16.msra.mxu0 0
        %5912 = vmatprep.mubr.bf16.mxu0 0
        %5913 = vmatmul.mubr.bf16.gmra.mrb[0].mxu0 %v5875
        %v5914 = vpop.f32.mrb[0].mxu0
        %v5915 = vadd.f32 0.0, %v5914
        %v5916 = vpop.f32.mrb[0].mxu0
        %v5917 = vpop.f32.mrb[0].mxu0
        %v5918 = vpop.f32.mrb[0].mxu0
        %5919 = vdwg.mxu0
        %5921 = vrot.lane.b32.xlu0 %v5540, 96
        %v5922 = vpop.permute.xlu0 %5921
        %v5924 = vsel %vm1536, %v5772, 0
        %v5927 = vsel %vm1783, %v5922, 0
        %5929 = vmatprep.subr.bf16.mxu0 0
        %5930 = vmatpush1.bf16.msra.mxu0 %v5927
        %5931 = vmatprep.subr.bf16.mxu0 0
        %5932 = vmatpush1.bf16.msra.mxu0 0
        %5933 = vmatprep.subr.bf16.mxu0 0
        %5934 = vmatpush1.bf16.msra.mxu0 0
        %5935 = vmatprep.subr.bf16.mxu0 0
        %5936 = vmatpush1.bf16.msra.mxu0 0
        %5937 = vmatprep.subr.bf16.mxu0 0
        %5938 = vmatpush1.bf16.msra.mxu0 0
        %5939 = vmatprep.subr.bf16.mxu0 0
        %5940 = vmatpush1.bf16.msra.mxu0 0
        %5941 = vmatprep.subr.bf16.mxu0 0
        %5942 = vmatpush1.bf16.msra.mxu0 0
        %5943 = vmatprep.subr.bf16.mxu0 0
        %5944 = vmatpush1.bf16.msra.mxu0 0
        %5945 = vmatprep.subr.bf16.mxu0 0
        %5946 = vmatpush1.bf16.msra.mxu0 0
        %5947 = vmatprep.subr.bf16.mxu0 0
        %5948 = vmatpush1.bf16.msra.mxu0 0
        %5949 = vmatprep.subr.bf16.mxu0 0
        %5950 = vmatpush1.bf16.msra.mxu0 0
        %5951 = vmatprep.subr.bf16.mxu0 0
        %5952 = vmatpush1.bf16.msra.mxu0 0
        %5953 = vmatprep.subr.bf16.mxu0 0
        %5954 = vmatpush1.bf16.msra.mxu0 0
        %5955 = vmatprep.subr.bf16.mxu0 0
        %5956 = vmatpush1.bf16.msra.mxu0 0
        %5957 = vmatprep.subr.bf16.mxu0 0
        %5958 = vmatpush1.bf16.msra.mxu0 0
        %5959 = vmatprep.subr.bf16.mxu0 0
        %5960 = vmatpush1.bf16.msra.mxu0 0
        %5961 = vmatprep.mubr.bf16.mxu0 0
        %5962 = vmatmul.mubr.bf16.gmra.mrb[0].mxu0 %v5924
        %v5963 = vpop.f32.mrb[0].mxu0
        %v5964 = vadd.f32 0.0, %v5963
        %v5965 = vpop.f32.mrb[0].mxu0
        %v5966 = vpop.f32.mrb[0].mxu0
        %v5967 = vpop.f32.mrb[0].mxu0
        %5968 = vdwg.mxu0
        %5970 = vrot.lane.b32.xlu0 %v5866, 8
        %v5971 = vpop.permute.xlu0 %5970
        %5974 = vrot.lane.b32.xlu0 %v5915, 16
        %v5975 = vpop.permute.xlu0 %5974
        %5978 = vrot.lane.b32.xlu0 %v5964, 24
        %v5979 = vpop.permute.xlu0 %5978
        %v5981 = vsel %vm1536, %v5817, %v5971
        %v5982 = vsel %vm1984, %v5981, %v5975
        %v5983 = vsel %vm1986, %v5982, %v5979
        %s5984 = scalar_lea.vmem %s65, 16
        %v5985 = vld [vmem:[%s5984] sm:$0xf]
        %v5986 = vld [vmem:[%s5984 + $0x4] sm:$0xf]
        %v5987 = vld [vmem:[%s5984 + $0x8] sm:$0xf]
        %v5988 = vld [vmem:[%s5984 + $0xc] sm:$0xf]
        %s5989 = scalar_lea.vmem %s67, 1
        %v5990 = vld [vmem:[%s5989] sm:$0x1]
        %v5991 = vpack.c.bf16 %v5983, %v5983
        %v5993 = vlaneseq
        %v5994 = vshrl.u32 %v5993, 7
        %v5995 = vsub.s32 0, %v5994
        %v5996 = vrot.slane %v5990, %v5995
        %v6002 = vunpack.c.l.b16 %v5985
        %v6003 = vunpack.c.l.b16 %v5986
        %v6004 = vunpack.c.l.b16 %v5987
        %v6005 = vunpack.c.l.b16 %v5988
        %v6006 = vpack.c.b16 %v6003, %v6002
        %v6007 = vpack.c.b16 %v6005, %v6004
        %v6011 = vsel %vm1417, %v5991, 0
        %6013 = vmatprep.subr.bf16.mxu0 0
        %6014 = vmatpush1.bf16.msra.mxu0 %v6006
        %6015 = vmatprep.subr.bf16.mxu0 0
        %6016 = vmatpush1.bf16.msra.mxu0 %v6007
        %6017 = vmatprep.subr.bf16.mxu0 0
        %6018 = vmatpush1.bf16.msra.mxu0 0
        %6019 = vmatprep.subr.bf16.mxu0 0
        %6020 = vmatpush1.bf16.msra.mxu0 0
        %6021 = vmatprep.subr.bf16.mxu0 0
        %6022 = vmatpush1.bf16.msra.mxu0 0
        %6023 = vmatprep.subr.bf16.mxu0 0
        %6024 = vmatpush1.bf16.msra.mxu0 0
        %6025 = vmatprep.subr.bf16.mxu0 0
        %6026 = vmatpush1.bf16.msra.mxu0 0
        %6027 = vmatprep.subr.bf16.mxu0 0
        %6028 = vmatpush1.bf16.msra.mxu0 0
        %6029 = vmatprep.subr.bf16.mxu0 0
        %6030 = vmatpush1.bf16.msra.mxu0 0
        %6031 = vmatprep.subr.bf16.mxu0 0
        %6032 = vmatpush1.bf16.msra.mxu0 0
        %6033 = vmatprep.subr.bf16.mxu0 0
        %6034 = vmatpush1.bf16.msra.mxu0 0
        %6035 = vmatprep.subr.bf16.mxu0 0
        %6036 = vmatpush1.bf16.msra.mxu0 0
        %6037 = vmatprep.subr.bf16.mxu0 0
        %6038 = vmatpush1.bf16.msra.mxu0 0
        %6039 = vmatprep.subr.bf16.mxu0 0
        %6040 = vmatpush1.bf16.msra.mxu0 0
        %6041 = vmatprep.subr.bf16.mxu0 0
        %6042 = vmatpush1.bf16.msra.mxu0 0
        %6043 = vmatprep.subr.bf16.mxu0 0
        %6044 = vmatpush1.bf16.msra.mxu0 0
        %6045 = vmatprep.mubr.bf16.mxu0 0
        %6046 = vmatmul.mubr.bf16.gmra.mrb[0].mxu0 %v6011
        %v6047 = vpop.f32.mrb[0].mxu0
        %v6048 = vadd.f32 %v5996, %v6047
        %v6049 = vpop.f32.mrb[0].mxu0
        %v6050 = vpop.f32.mrb[0].mxu0
        %v6051 = vpop.f32.mrb[0].mxu0
        %6052 = vdwg.mxu0
        %v6053 = vadd.f32 %v5347, %v6048
        %s6054 = scalar_lea.vmem %s69, 1
        %v6055 = vld [vmem:[%s6054] sm:$0x1]
        %s6056 = scalar_lea.vmem %s71, 1
        %v6057 = vld [vmem:[%s6056] sm:$0x1]
        %v6058 = vsel %vm1417, %v6053, 0.0
        %6059 = vadd.xlane.f32.xlu0 %v6058
        %v6060 = vpop.xlane.xlu0 %6059
        %v6061 = vmul.f32 %v6060, %v1421
        %v6062 = vsub.f32 %v6053, %v6061
        %v6063 = vmul.f32 %v6062, %v6062
        %v6064 = vsel %vm1417, %v6063, 0.0
        %6065 = vadd.xlane.f32.xlu0 %v6064
        %v6066 = vpop.xlane.xlu0 %6065
        %v6067 = vmul.f32 %v6066, %v1421
        %v6068 = vadd.f32 %v6067, 1e-05
        %v6069 = vrsqrt.pop %v6068
        %v6070 = vmul.f32 %v6062, %v6069
        %v6072 = vlaneseq
        %v6073 = vshrl.u32 %v6072, 7
        %v6074 = vsub.s32 0, %v6073
        %v6075 = vrot.slane %v6055, %v6074
        %v6077 = vmul.f32 %v6070, %v6075
        %v6079 = vlaneseq
        %v6080 = vshrl.u32 %v6079, 7
        %v6081 = vsub.s32 0, %v6080
        %v6082 = vrot.slane %v6057, %v6081
        %v6084 = vadd.f32 %v6077, %v6082
        %s6085 = scalar_lea.vmem %s73, 16
        %v6086 = vld [vmem:[%s6085] sm:$0xf]
        %v6087 = vld [vmem:[%s6085 + $0x4] sm:$0xf]
        %v6088 = vld [vmem:[%s6085 + $0x8] sm:$0xf]
        %v6089 = vld [vmem:[%s6085 + $0xc] sm:$0xf]
        %s6090 = scalar_lea.vmem %s75, 1
        %v6091 = vld [vmem:[%s6090] sm:$0x1]
        %v6092 = vpack.c.bf16 %v6084, %v6084
        %v6094 = vlaneseq
        %v6095 = vshrl.u32 %v6094, 7
        %v6096 = vsub.s32 0, %v6095
        %v6097 = vrot.slane %v6091, %v6096
        %v6103 = vunpack.c.l.b16 %v6086
        %v6104 = vunpack.c.l.b16 %v6087
        %v6105 = vunpack.c.l.b16 %v6088
        %v6106 = vunpack.c.l.b16 %v6089
        %v6107 = vpack.c.b16 %v6104, %v6103
        %v6108 = vpack.c.b16 %v6106, %v6105
        %v6112 = vsel %vm1417, %v6092, 0
        %6114 = vmatprep.subr.bf16.mxu0 0
        %6115 = vmatpush1.bf16.msra.mxu0 %v6107
        %6116 = vmatprep.subr.bf16.mxu0 0
        %6117 = vmatpush1.bf16.msra.mxu0 %v6108
        %6118 = vmatprep.subr.bf16.mxu0 0
        %6119 = vmatpush1.bf16.msra.mxu0 0
        %6120 = vmatprep.subr.bf16.mxu0 0
        %6121 = vmatpush1.bf16.msra.mxu0 0
        %6122 = vmatprep.subr.bf16.mxu0 0
        %6123 = vmatpush1.bf16.msra.mxu0 0
        %6124 = vmatprep.subr.bf16.mxu0 0
        %6125 = vmatpush1.bf16.msra.mxu0 0
        %6126 = vmatprep.subr.bf16.mxu0 0
        %6127 = vmatpush1.bf16.msra.mxu0 0
        %6128 = vmatprep.subr.bf16.mxu0 0
        %6129 = vmatpush1.bf16.msra.mxu0 0
        %6130 = vmatprep.subr.bf16.mxu0 0
        %6131 = vmatpush1.bf16.msra.mxu0 0
        %6132 = vmatprep.subr.bf16.mxu0 0
        %6133 = vmatpush1.bf16.msra.mxu0 0
        %6134 = vmatprep.subr.bf16.mxu0 0
        %6135 = vmatpush1.bf16.msra.mxu0 0
        %6136 = vmatprep.subr.bf16.mxu0 0
        %6137 = vmatpush1.bf16.msra.mxu0 0
        %6138 = vmatprep.subr.bf16.mxu0 0
        %6139 = vmatpush1.bf16.msra.mxu0 0
        %6140 = vmatprep.subr.bf16.mxu0 0
        %6141 = vmatpush1.bf16.msra.mxu0 0
        %6142 = vmatprep.subr.bf16.mxu0 0
        %6143 = vmatpush1.bf16.msra.mxu0 0
        %6144 = vmatprep.subr.bf16.mxu0 0
        %6145 = vmatpush1.bf16.msra.mxu0 0
        %6146 = vmatprep.mubr.bf16.mxu0 0
        %6147 = vmatmul.mubr.bf16.gmra.mrb[0].mxu0 %v6112
        %v6148 = vpop.f32.mrb[0].mxu0
        %v6149 = vadd.f32 %v6097, %v6148
        %v6150 = vpop.f32.mrb[0].mxu0
        %v6151 = vpop.f32.mrb[0].mxu0
        %v6152 = vpop.f32.mrb[0].mxu0
        %6153 = vdwg.mxu0
        %v6154 = vmax.f32 %v6149, 0.0
        %s6155 = scalar_lea.vmem %s77, 32
        %v6156 = vld [vmem:[%s6155] sm:$0xf]
        %v6157 = vld [vmem:[%s6155 + $0x4] sm:$0xf]
        %v6158 = vld [vmem:[%s6155 + $0x8] sm:$0xf]
        %v6159 = vld [vmem:[%s6155 + $0xc] sm:$0xf]
        %v6160 = vld [vmem:[%s6155 + $0x10] sm:$0xf]
        %v6161 = vld [vmem:[%s6155 + $0x14] sm:$0xf]
        %v6162 = vld [vmem:[%s6155 + $0x18] sm:$0xf]
        %v6163 = vld [vmem:[%s6155 + $0x1c] sm:$0xf]
        %s6164 = scalar_lea.vmem %s79, 1
        %v6165 = vld [vmem:[%s6164] sm:$0x1]
        %v6166 = vpack.c.bf16 %v6154, %v6154
        %v6168 = vlaneseq
        %v6169 = vshrl.u32 %v6168, 7
        %v6170 = vsub.s32 0, %v6169
        %v6171 = vrot.slane %v6165, %v6170
        %v6181 = vunpack.c.l.b16 %v6156
        %v6182 = vunpack.c.l.b16 %v6157
        %v6183 = vunpack.c.l.b16 %v6158
        %v6184 = vunpack.c.l.b16 %v6159
        %v6185 = vunpack.c.l.b16 %v6160
        %v6186 = vunpack.c.l.b16 %v6161
        %v6187 = vunpack.c.l.b16 %v6162
        %v6188 = vunpack.c.l.b16 %v6163
        %v6189 = vpack.c.b16 %v6182, %v6181
        %v6190 = vpack.c.b16 %v6184, %v6183
        %v6191 = vpack.c.b16 %v6186, %v6185
        %v6192 = vpack.c.b16 %v6188, %v6187
        %v6198 = vsel %vm2193, %v6166, 0
        %6200 = vmatprep.subr.bf16.mxu0 0
        %6201 = vmatpush1.bf16.msra.mxu0 %v6189
        %6202 = vmatprep.subr.bf16.mxu0 0
        %6203 = vmatpush1.bf16.msra.mxu0 %v6190
        %6204 = vmatprep.subr.bf16.mxu0 0
        %6205 = vmatpush1.bf16.msra.mxu0 %v6191
        %6206 = vmatprep.subr.bf16.mxu0 0
        %6207 = vmatpush1.bf16.msra.mxu0 %v6192
        %6208 = vmatprep.subr.bf16.mxu0 0
        %6209 = vmatpush1.bf16.msra.mxu0 0
        %6210 = vmatprep.subr.bf16.mxu0 0
        %6211 = vmatpush1.bf16.msra.mxu0 0
        %6212 = vmatprep.subr.bf16.mxu0 0
        %6213 = vmatpush1.bf16.msra.mxu0 0
        %6214 = vmatprep.subr.bf16.mxu0 0
        %6215 = vmatpush1.bf16.msra.mxu0 0
        %6216 = vmatprep.subr.bf16.mxu0 0
        %6217 = vmatpush1.bf16.msra.mxu0 0
        %6218 = vmatprep.subr.bf16.mxu0 0
        %6219 = vmatpush1.bf16.msra.mxu0 0
        %6220 = vmatprep.subr.bf16.mxu0 0
        %6221 = vmatpush1.bf16.msra.mxu0 0
        %6222 = vmatprep.subr.bf16.mxu0 0
        %6223 = vmatpush1.bf16.msra.mxu0 0
        %6224 = vmatprep.subr.bf16.mxu0 0
        %6225 = vmatpush1.bf16.msra.mxu0 0
        %6226 = vmatprep.subr.bf16.mxu0 0
        %6227 = vmatpush1.bf16.msra.mxu0 0
        %6228 = vmatprep.subr.bf16.mxu0 0
        %6229 = vmatpush1.bf16.msra.mxu0 0
        %6230 = vmatprep.subr.bf16.mxu0 0
        %6231 = vmatpush1.bf16.msra.mxu0 0
        %6232 = vmatprep.mubr.bf16.mxu0 0
        %6233 = vmatmul.mubr.bf16.gmra.mrb[0].mxu0 %v6198
        %v6234 = vpop.f32.mrb[0].mxu0
        %v6235 = vadd.f32 %v6171, %v6234
        %v6236 = vpop.f32.mrb[0].mxu0
        %v6237 = vpop.f32.mrb[0].mxu0
        %v6238 = vpop.f32.mrb[0].mxu0
        %6239 = vdwg.mxu0
        %v6240 = vadd.f32 %v6053, %v6235
        %v6241 = vld [vmem:[%s81] sm:$0x1]
        %v6242 = vld [vmem:[%s83] sm:$0x1]
        %v6243 = vsel %vm1417, %v6240, 0.0
        %6244 = vadd.xlane.f32.xlu0 %v6243
        %v6245 = vpop.xlane.xlu0 %6244
        %v6246 = vmul.f32 %v6245, %v1421
        %v6247 = vsub.f32 %v6240, %v6246
        %v6248 = vmul.f32 %v6247, %v6247
        %v6249 = vsel %vm1417, %v6248, 0.0
        %6250 = vadd.xlane.f32.xlu0 %v6249
        %v6251 = vpop.xlane.xlu0 %6250
        %v6252 = vmul.f32 %v6251, %v1421
        %v6253 = vadd.f32 %v6252, 1e-05
        %v6254 = vrsqrt.pop %v6253
        %v6255 = vmul.f32 %v6247, %v6254
        %v6257 = vlaneseq
        %v6258 = vshrl.u32 %v6257, 7
        %v6259 = vsub.s32 0, %v6258
        %v6260 = vrot.slane %v6241, %v6259
        %v6262 = vmul.f32 %v6255, %v6260
        %v6264 = vlaneseq
        %v6265 = vshrl.u32 %v6264, 7
        %v6266 = vsub.s32 0, %v6265
        %v6267 = vrot.slane %v6242, %v6266
        %v6269 = vadd.f32 %v6262, %v6267
        %v6270 = vpack.c.bf16 %v6269, %v6269
        %v6271 = vld [vmem:[%s11] sm:$0xf]
        %v6272 = vld [vmem:[%s11 + $0x4] sm:$0xf]
        %v6273 = vld [vmem:[%s11 + $0x8] sm:$0xf]
        %v6274 = vld [vmem:[%s11 + $0xc] sm:$0xf]
        %v6275 = vld [vmem:[%s11 + $0x10] sm:$0xf]
        %v6276 = vld [vmem:[%s11 + $0x14] sm:$0xf]
        %v6277 = vld [vmem:[%s11 + $0x18] sm:$0xf]
        %v6278 = vld [vmem:[%s11 + $0x1c] sm:$0xf]
        %v6279 = vld [vmem:[%s11 + $0x20] sm:$0xf]
        %v6280 = vld [vmem:[%s11 + $0x24] sm:$0xf]
        %v6281 = vld [vmem:[%s11 + $0x28] sm:$0xf]
        %v6282 = vld [vmem:[%s11 + $0x2c] sm:$0xf]
        %v6283 = vld [vmem:[%s11 + $0x30] sm:$0xf]
        %v6284 = vld [vmem:[%s11 + $0x34] sm:$0xf]
        %v6285 = vld [vmem:[%s11 + $0x38] sm:$0xf]
        %v6286 = vld [vmem:[%s11 + $0x3c] sm:$0xf]
        %v6303 = vunpack.c.l.b16 %v6271
        %v6304 = vunpack.c.l.b16 %v6272
        %v6305 = vunpack.c.l.b16 %v6273
        %v6306 = vunpack.c.l.b16 %v6274
        %v6307 = vunpack.c.l.b16 %v6275
        %v6308 = vunpack.c.l.b16 %v6276
        %v6309 = vunpack.c.l.b16 %v6277
        %v6310 = vunpack.c.l.b16 %v6278
        %v6311 = vunpack.c.l.b16 %v6279
        %v6312 = vunpack.c.l.b16 %v6280
        %v6313 = vunpack.c.l.b16 %v6281
        %v6314 = vunpack.c.l.b16 %v6282
        %v6315 = vunpack.c.l.b16 %v6283
        %v6316 = vunpack.c.l.b16 %v6284
        %v6317 = vunpack.c.l.b16 %v6285
        %v6318 = vunpack.c.l.b16 %v6286
        %v6319 = vpack.c.b16 %v6304, %v6303
        %v6320 = vpack.c.b16 %v6306, %v6305
        %v6321 = vpack.c.b16 %v6308, %v6307
        %v6322 = vpack.c.b16 %v6310, %v6309
        %v6323 = vpack.c.b16 %v6312, %v6311
        %v6324 = vpack.c.b16 %v6314, %v6313
        %v6325 = vpack.c.b16 %v6316, %v6315
        %v6326 = vpack.c.b16 %v6318, %v6317
        %v6328 = vsel %vm1417, %v6270, 0
        %v6331 = vsel %vm1417, %v6319, 0
        %v6334 = vsel %vm1417, %v6320, 0
        %v6337 = vsel %vm1417, %v6321, 0
        %v6340 = vsel %vm1417, %v6322, 0
        %v6343 = vsel %vm1417, %v6323, 0
        %v6346 = vsel %vm1417, %v6324, 0
        %v6349 = vsel %vm1417, %v6325, 0
        %v6352 = vsel %vm1417, %v6326, 0
        %6354 = vmatprep.subr.bf16.mxu0 0
        %6355 = vmatpush1.bf16.xpose.msra.mxu0 %v6331
        %6356 = vmatprep.subr.bf16.mxu0 0
        %6357 = vmatpush1.bf16.xpose.msra.mxu0 %v6334
        %6358 = vmatprep.subr.bf16.mxu0 0
        %6359 = vmatpush1.bf16.xpose.msra.mxu0 %v6337
        %6360 = vmatprep.subr.bf16.mxu0 0
        %6361 = vmatpush1.bf16.xpose.msra.mxu0 %v6340
        %6362 = vmatprep.subr.bf16.mxu0 0
        %6363 = vmatpush1.bf16.xpose.msra.mxu0 %v6343
        %6364 = vmatprep.subr.bf16.mxu0 0
        %6365 = vmatpush1.bf16.xpose.msra.mxu0 %v6346
        %6366 = vmatprep.subr.bf16.mxu0 0
        %6367 = vmatpush1.bf16.xpose.msra.mxu0 %v6349
        %6368 = vmatprep.subr.bf16.mxu0 0
        %6369 = vmatpush1.bf16.xpose.msra.mxu0 %v6352
        %6370 = vmatprep.subr.bf16.mxu0 0
        %6371 = vmatpush1.bf16.xpose.msra.mxu0 0
        %6372 = vmatprep.subr.bf16.mxu0 0
        %6373 = vmatpush1.bf16.xpose.msra.mxu0 0
        %6374 = vmatprep.subr.bf16.mxu0 0
        %6375 = vmatpush1.bf16.xpose.msra.mxu0 0
        %6376 = vmatprep.subr.bf16.mxu0 0
        %6377 = vmatpush1.bf16.xpose.msra.mxu0 0
        %6378 = vmatprep.subr.bf16.mxu0 0
        %6379 = vmatpush1.bf16.xpose.msra.mxu0 0
        %6380 = vmatprep.subr.bf16.mxu0 0
        %6381 = vmatpush1.bf16.xpose.msra.mxu0 0
        %6382 = vmatprep.subr.bf16.mxu0 0
        %6383 = vmatpush1.bf16.xpose.msra.mxu0 0
        %6384 = vmatprep.subr.bf16.mxu0 0
        %6385 = vmatpush1.bf16.xpose.msra.mxu0 0
        %6386 = vmatprep.mubr.bf16.mxu0 0
        %6387 = vmatmul.mubr.bf16.gmra.mrb[0].mxu0 %v6328
        %v6388 = vpop.f32.mrb[0].mxu0
        %v6389 = vadd.f32 0.0, %v6388
        %v6390 = vpop.f32.mrb[0].mxu0
        %v6391 = vpop.f32.mrb[0].mxu0
        %v6392 = vpop.f32.mrb[0].mxu0
        %6393 = vdwg.mxu0
        %6394 = vst [vmem:[%s1281] sm:$0xff] %v6389
        %s6395 = sand.u32 %s1004, 1
        %s6396 = scalar_lea.sflag [#allocation3], %s6395
        %s6397 = sand.u32 %s1004, 1
        %s6398 = smul.addr %s6397, 8
        %s6399 = scalar_lea.vmem [#allocation2], %s6398
        // Predicated region
        $region189: #{m2m100_forward.1} parent=187 // pred_check
          %p6400 = pneg %p1014
        $region190: #{m2m100_forward.1} parent=187 // pred_check_branch
          %6402 = sbr.rel (%p6400) target = $region192
        $region191: #{m2m100_forward.1} parent=187 // pred_region
          %s6404 = ssub.s32 128, 128
          %6405 = vsyncadd %s6396, %s6404
          %s6406 = smul.addr %s99, 128
          %s6407 = scalar_lea.hbm %s85, %s6406
          %s6409 = sshll.u32 %s6399, 4
          %s6410 = int_to_ptr.vmem [resolvable:$true] %s6409
          %6412 = dma.vmem_to_hbm [thread:$0]  %s6410, 128, %s6407, %s6396
        $region192: #{m2m100_forward.1} parent=187 // pred_fallthru
          _
      $region188: #{m2m100_forward.1} parent=5 // pred_fallthru
        _
      %p6413 = scmp.le.s32.totalorder 2, %s94
      // Predicated region
      $region193: #{m2m100_forward.1} parent=5 // pred_check
        %p6414 = pneg %p6413
      $region194: #{m2m100_forward.1} parent=5 // pred_check_branch
        %6416 = sbr.rel (%p6414) target = $region196
      $region195: #{m2m100_forward.1} parent=5 // pred_region
        %s6417 = ssub.s32 %s94, 2
        // Predicated region
        $region197: #{m2m100_forward.1} parent=195 // pred_check
          %p6418 = pneg %p1020
        $region198: #{m2m100_forward.1} parent=195 // pred_check_branch
          %6420 = sbr.rel (%p6418) target = $region200
        $region199: #{m2m100_forward.1} parent=195 // pred_region
          %s6421 = sand.u32 %s1005, 1
          %s6422 = scalar_lea.sflag [#allocation3], %s6421
          %s6423 = sand.u32 %s1005, 1
          %s6424 = smul.addr %s6423, 8
          %s6425 = scalar_lea.vmem [#allocation2], %s6424
          %6426 = dma.done %s6422, 128
        $region200: #{m2m100_forward.1} parent=195 // pred_fallthru
          _
      $region196: #{m2m100_forward.1} parent=5 // pred_fallthru
        _
    $region6: #{m2m100_forward.1} parent=1 // loop_footer
      %s98 = sadd.s32 1, %s94
    $region7: #{m2m100_forward.1} parent=1 // loop_footer_branch
      %93 = sbr.rel target = $region3
    $region8: #{m2m100_forward.1} parent=1 // loop_exit
      _
    %6427 = vsyncpa [#allocation3], 1
    %s6428 = scalar_lea.sflag [#allocation3], 1
    %6429 = vsyncpa %s6428, 1

</llo_original>
